<compile_context>
chip_gen: v7x
topology: tpu7x:2x2x1
jax: 0.10.0
libtpu: 0.0.40
codegen_flags: <defaults>
</compile_context>

<pallas_src>
import functools

import jax
import jax.numpy as jnp
from jax import lax
from jax.experimental import pallas as pl
from jax.experimental.pallas import tpu as pltpu

EPS = 1e-4  # norm_layer(..., eps=0.0001)


# ----------------------------------------------------------------------------
# Fused Pallas kernel: the ENTIRE REDBlock for a single batch sample.
# ----------------------------------------------------------------------------
def _red_block_kernel(x_ref, dw_ref, pw_ref, pb_ref, s2_ref, b2_ref, o_ref,
                      xp0, xp1, *, n_convs, H, W, C, HS):
    # x_ref : (1, H, W, C)        input, channel-padded to C with zeros
    # dw_ref: (n_convs, 9, C)     depthwise 3x3 weights, row k = ky*3 + kx
    # pw_ref: (n_convs, C, C)     1x1 weights with dw-bias + BN1 folded in
    # pb_ref: (n_convs, 1, C)     folded 1x1 bias
    # s2_ref: (n_convs, 1, C)     BN2 scale (unused for the last layer)
    # b2_ref: (n_convs, 1, C)     BN2 shift (unused for the last layer)
    # o_ref : (1, H, W, C)
    # xp0/1 : (H+2, W+2, C) f32   ping-pong padded activation scratch (VMEM)

    # Zero both padded scratch buffers once. Borders stay zero for every layer
    # because only the interior is rewritten -> in-kernel "same" padding.
    xp0[...] = jnp.zeros(xp0.shape, jnp.float32)
    xp1[...] = jnp.zeros(xp1.shape, jnp.float32)
    xp0[1:H + 1, 1:W + 1, :] = x_ref[0].astype(jnp.float32)

    bufs = (xp0, xp1)
    for l in range(n_convs):                      # static unroll over layers
        src = bufs[l % 2]
        dst = bufs[(l + 1) % 2]
        last = l == n_convs - 1

        dw_l = dw_ref[l].astype(jnp.float32)      # (9, C)
        pw_l = pw_ref[l].astype(jnp.float32)      # (C, C)
        pb_l = pb_ref[l].astype(jnp.float32)      # (1, C)

        # Process H in strips of HS rows to bound vreg pressure (no spills).
        for h0 in range(0, H, HS):
            # Depthwise 3x3 conv (VPU): 9 shifted multiply-accumulates reading
            # directly from the padded VMEM scratch.
            acc = jnp.zeros((HS, W, C), jnp.float32)
            for ky in range(3):
                for kx in range(3):
                    tap = src[h0 + ky:h0 + ky + HS, kx:kx + W, :]
                    acc = acc + tap * dw_l[ky * 3 + kx]

            # Pointwise 1x1 conv == channel matmul (MXU). dw-bias + BN1 are
            # already folded into pw_l / pb_l.
            z = jnp.dot(acc.reshape(HS * W, C), pw_l,
                        preferred_element_type=jnp.float32) + pb_l

            if not last:
                z = jnp.maximum(z, 0.0)                       # ReLU
                z = (z * s2_ref[l].astype(jnp.float32)        # BN2 affine
                     + b2_ref[l].astype(jnp.float32))
                # Write next layer's input into the interior of the other buffer.
                dst[h0 + 1:h0 + 1 + HS, 1:W + 1, :] = z.reshape(HS, W, C)
            else:
                o_ref[0, h0:h0 + HS, :, :] = z.reshape(HS, W, C).astype(o_ref.dtype)


# ----------------------------------------------------------------------------
# Parameter init (PyTorch-layout shapes), deterministic.
# ----------------------------------------------------------------------------
def init_params(key, input_nc, ngf, n_convs):
    params = []
    cin = input_nc
    for i in range(n_convs):
        cout = ngf
        last = (i == n_convs - 1)
        key, *ks = jax.random.split(key, 9)
        p = dict(
            # nn.Conv2d(cin, cin, 3, padding=1, groups=cin): weight (cin,1,3,3)
            dw_w=0.2 * jax.random.normal(ks[0], (cin, 1, 3, 3), jnp.float32),
            dw_b=0.1 * jax.random.normal(ks[1], (cin,), jnp.float32),
            # BatchNorm2d(cin, eps=1e-4) affine
            g1=1.0 + 0.1 * jax.random.normal(ks[2], (cin,), jnp.float32),
            bt1=0.1 * jax.random.normal(ks[3], (cin,), jnp.float32),
            # nn.Conv2d(cin, cout, 1): weight (cout,cin,1,1)
            pw_w=(0.5 / jnp.sqrt(cin)) * jax.random.normal(
                ks[4], (cout, cin, 1, 1), jnp.float32),
            pw_b=0.1 * jax.random.normal(ks[5], (cout,), jnp.float32),
            g2=None, bt2=None, last=last,
        )
        if not last:
            p["g2"] = 1.0 + 0.1 * jax.random.normal(ks[6], (cout,), jnp.float32)
            p["bt2"] = 0.1 * jax.random.normal(ks[7], (cout,), jnp.float32)
        params.append(p)
        cin = cout
    return params


# ----------------------------------------------------------------------------
# Full REDBlock forward using the fused Pallas kernel (NCHW in, NCHW out).
# ----------------------------------------------------------------------------
def red_block_pallas(x_nchw, params):
    N, c_in0, H, W = x_nchw.shape
    n_convs = len(params)
    # Common padded channel width for the fused kernel.
    C = max([p["dw_w"].shape[0] for p in params]
            + [p["pw_w"].shape[0] for p in params])
    c_out_last = params[-1]["pw_w"].shape[0]

    dw_all, pw_all, pb_all, s2_all, b2_all = [], [], [], [], []
    for p in params:
        cin = p["dw_w"].shape[0]
        cout = p["pw_w"].shape[0]
        # Fold depthwise bias + BN1 (running_mean=0, running_var=1) into the 1x1 conv.
        s1 = p["g1"] / jnp.sqrt(1.0 + EPS)
        b1 = p["dw_b"] * s1 + p["bt1"]
        dw9 = jnp.transpose(p["dw_w"][:, 0], (1, 2, 0)).reshape(9, cin)   # (9, cin)
        pw = jnp.transpose(p["pw_w"][:, :, 0, 0], (1, 0))                 # (cin, cout)
        pw_f = s1[:, None] * pw
        pb_f = p["pw_b"] + b1 @ pw
        if p["g2"] is not None:
            s2 = p["g2"] / jnp.sqrt(1.0 + EPS)
            b2 = p["bt2"]
        else:  # last unit: no ReLU / BN2 (kernel skips them; pad for shape only)
            s2 = jnp.ones((cout,), jnp.float32)
            b2 = jnp.zeros((cout,), jnp.float32)
        # Zero-pad every per-layer tensor to the common channel width C.
        dw_all.append(jnp.pad(dw9, ((0, 0), (0, C - cin))))
        pw_all.append(jnp.pad(pw_f, ((0, C - cin), (0, C - cout))))
        pb_all.append(jnp.pad(pb_f, ((0, C - cout),)).reshape(1, C))
        s2_all.append(jnp.pad(s2, ((0, C - cout),)).reshape(1, C))
        b2_all.append(jnp.pad(b2, ((0, C - cout),)).reshape(1, C))

    dw_all = jnp.stack(dw_all)    # (n_convs, 9, C)
    pw_all = jnp.stack(pw_all)    # (n_convs, C, C)
    pb_all = jnp.stack(pb_all)    # (n_convs, 1, C)
    s2_all = jnp.stack(s2_all)    # (n_convs, 1, C)
    b2_all = jnp.stack(b2_all)    # (n_convs, 1, C)

    # NCHW -> NHWC, zero-pad channels to C (padded channels carry zero weights).
    x = jnp.transpose(x_nchw, (0, 2, 3, 1))
    x = jnp.pad(x, ((0, 0), (0, 0), (0, 0), (0, C - c_in0)))

    HS = 8 if H % 8 == 0 else H   # H-strip size (bounds vreg pressure)
    kernel = functools.partial(_red_block_kernel, n_convs=n_convs,
                               H=H, W=W, C=C, HS=HS)

    out = pl.pallas_call(
        kernel,
        out_shape=jax.ShapeDtypeStruct((N, H, W, C), x_nchw.dtype),
        grid=(N,),
        in_specs=[
            pl.BlockSpec((1, H, W, C), lambda n: (n, 0, 0, 0)),
            pl.BlockSpec((n_convs, 9, C), lambda n: (0, 0, 0)),
            pl.BlockSpec((n_convs, C, C), lambda n: (0, 0, 0)),
            pl.BlockSpec((n_convs, 1, C), lambda n: (0, 0, 0)),
            pl.BlockSpec((n_convs, 1, C), lambda n: (0, 0, 0)),
            pl.BlockSpec((n_convs, 1, C), lambda n: (0, 0, 0)),
        ],
        out_specs=pl.BlockSpec((1, H, W, C), lambda n: (n, 0, 0, 0)),
        scratch_shapes=[pltpu.VMEM((H + 2, W + 2, C), jnp.float32),
                        pltpu.VMEM((H + 2, W + 2, C), jnp.float32)],
        compiler_params=pltpu.CompilerParams(
            # Keep a 2-way parallel batch axis so both v7x TensorCores are used;
            # on single-TC v5e/v6e this is just a 2-step serial loop.
            dimension_semantics=("parallel",)),
    )(x, dw_all, pw_all, pb_all, s2_all, b2_all)

    out = out[..., :c_out_last]
    return jnp.transpose(out, (0, 3, 1, 2))  # -> NCHW


# ----------------------------------------------------------------------------
# Pure-JAX reference (lax.conv), mirrors PyTorch eval-mode semantics.
# ----------------------------------------------------------------------------
def red_block_ref(x_nchw, params):
    x = jnp.transpose(x_nchw, (0, 2, 3, 1))  # NHWC
    for p in params:
        cin = p["dw_w"].shape[0]
        rhs = jnp.transpose(p["dw_w"], (2, 3, 1, 0))  # (3,3,1,cin) HWIO
        y = lax.conv_general_dilated(
            x, rhs, window_strides=(1, 1), padding="SAME",
            dimension_numbers=("NHWC", "HWIO", "NHWC"),
            feature_group_count=cin,
            precision=lax.Precision.HIGHEST) + p["dw_b"]
        y = p["g1"] * y / jnp.sqrt(1.0 + EPS) + p["bt1"]
        w = jnp.transpose(p["pw_w"][:, :, 0, 0], (1, 0))  # (cin, cout)
        z = jnp.einsum("nhwc,cd->nhwd", y, w,
                       precision=lax.Precision.HIGHEST) + p["pw_b"]
        if p["g2"] is not None:
            z = jnp.maximum(z, 0.0)
            z = p["g2"] * z / jnp.sqrt(1.0 + EPS) + p["bt2"]
        x = z
    return jnp.transpose(x, (0, 3, 1, 2))


if __name__ == "__main__":
    # Small shapes consistent with the module: REDBlock(input_nc=4, ngf=32, n_convs=4)
    N, C, H, W = 2, 4, 16, 16
    NGF, N_CONVS = 32, 4

    key = jax.random.PRNGKey(0)
    kx, kp = jax.random.split(key)
    x = jax.random.normal(kx, (N, C, H, W), jnp.float32)
    params = init_params(kp, input_nc=C, ngf=NGF, n_convs=N_CONVS)

    out = red_block_pallas(x, params)
    out = jax.block_until_ready(out)

    ref = jax.block_until_ready(red_block_ref(x, params))

    assert out.shape == (N, NGF, H, W), out.shape
    assert jnp.allclose(out, ref, rtol=1e-2, atol=1e-2), (
        float(jnp.max(jnp.abs(out - ref))))

    print("KERNEL_OK")
</pallas_src>

<mosaic_0001>
module attributes {stable_mosaic.version = 11 : i64} {
  func.func @_red_block_kernel(%arg0: i32, %arg1: memref<1x16x16x32xf32, #tpu.memory_space<vmem>>, %arg2: memref<4x9x32xf32, #tpu.memory_space<vmem>>, %arg3: memref<4x32x32xf32, #tpu.memory_space<vmem>>, %arg4: memref<4x1x32xf32, #tpu.memory_space<vmem>>, %arg5: memref<4x1x32xf32, #tpu.memory_space<vmem>>, %arg6: memref<4x1x32xf32, #tpu.memory_space<vmem>>, %arg7: memref<1x16x16x32xf32, #tpu.memory_space<vmem>>, %arg8: memref<18x18x32xf32, #tpu.memory_space<vmem>>, %arg9: memref<18x18x32xf32, #tpu.memory_space<vmem>>) attributes {dimension_semantics = [#tpu.dimension_semantics<parallel>], iteration_bounds = array<i64: 2>, scalar_prefetch = 0 : i64, scratch_operands = 2 : i64, tpu.core_type = #tpu.core_type<tc>, window_params = [{transform_indices = @transform_0, window_bounds = array<i64: 1, 16, 16, 32>}, {pipeline_mode = #tpu.pipeline_mode<synchronous>, transform_indices = @transform_1, window_bounds = array<i64: 4, 9, 32>}, {pipeline_mode = #tpu.pipeline_mode<synchronous>, transform_indices = @transform_2, window_bounds = array<i64: 4, 32, 32>}, {pipeline_mode = #tpu.pipeline_mode<synchronous>, transform_indices = @transform_3, window_bounds = array<i64: 4, 1, 32>}, {pipeline_mode = #tpu.pipeline_mode<synchronous>, transform_indices = @transform_4, window_bounds = array<i64: 4, 1, 32>}, {pipeline_mode = #tpu.pipeline_mode<synchronous>, transform_indices = @transform_5, window_bounds = array<i64: 4, 1, 32>}, {transform_indices = @transform_6, window_bounds = array<i64: 1, 16, 16, 32>}]} {
    %cst = arith.constant 0.000000e+00 : f32
    %0 = vector.broadcast %cst : f32 to vector<18x18x32xf32>
    %c0 = arith.constant 0 : index
    %c0_0 = arith.constant 0 : index
    %c0_1 = arith.constant 0 : index
    %1 = vector.load %arg8[%c0, %c0_0, %c0_1] : memref<18x18x32xf32, #tpu.memory_space<vmem>>, vector<18x18x32xf32>
    tpu.vector_store %arg8[%c0, %c0_0, %c0_1], %0 {strides = array<i32>} : memref<18x18x32xf32, #tpu.memory_space<vmem>>, vector<18x18x32xf32>,
    %cst_2 = arith.constant 0.000000e+00 : f32
    %2 = vector.broadcast %cst_2 : f32 to vector<18x18x32xf32>
    %c0_3 = arith.constant 0 : index
    %c0_4 = arith.constant 0 : index
    %c0_5 = arith.constant 0 : index
    %3 = vector.load %arg9[%c0_3, %c0_4, %c0_5] : memref<18x18x32xf32, #tpu.memory_space<vmem>>, vector<18x18x32xf32>
    tpu.vector_store %arg9[%c0_3, %c0_4, %c0_5], %2 {strides = array<i32>} : memref<18x18x32xf32, #tpu.memory_space<vmem>>, vector<18x18x32xf32>,
    %c0_6 = arith.constant 0 : index
    %c0_7 = arith.constant 0 : index
    %c0_8 = arith.constant 0 : index
    %c0_9 = arith.constant 0 : index
    %4 = vector.load %arg1[%c0_6, %c0_7, %c0_8, %c0_9] : memref<1x16x16x32xf32, #tpu.memory_space<vmem>>, vector<1x16x16x32xf32>
    %5 = vector.shape_cast %4 : vector<1x16x16x32xf32> to vector<16x16x32xf32>
    %c1 = arith.constant 1 : index
    %c1_10 = arith.constant 1 : index
    %c0_11 = arith.constant 0 : index
    %6 = vector.load %arg8[%c1, %c1_10, %c0_11] : memref<18x18x32xf32, #tpu.memory_space<vmem>>, vector<16x16x32xf32>
    tpu.vector_store %arg8[%c1, %c1_10, %c0_11], %5 {strides = array<i32>} : memref<18x18x32xf32, #tpu.memory_space<vmem>>, vector<16x16x32xf32>,
    %c0_12 = arith.constant 0 : index
    %c0_13 = arith.constant 0 : index
    %c0_14 = arith.constant 0 : index
    %7 = vector.load %arg2[%c0_12, %c0_13, %c0_14] : memref<4x9x32xf32, #tpu.memory_space<vmem>>, vector<1x9x32xf32>
    %8 = vector.shape_cast %7 : vector<1x9x32xf32> to vector<9x32xf32>
    %c0_15 = arith.constant 0 : index
    %c0_16 = arith.constant 0 : index
    %c0_17 = arith.constant 0 : index
    %9 = vector.load %arg3[%c0_15, %c0_16, %c0_17] : memref<4x32x32xf32, #tpu.memory_space<vmem>>, vector<1x32x32xf32>
    %10 = vector.shape_cast %9 : vector<1x32x32xf32> to vector<32x32xf32>
    %c0_18 = arith.constant 0 : index
    %c0_19 = arith.constant 0 : index
    %c0_20 = arith.constant 0 : index
    %11 = vector.load %arg4[%c0_18, %c0_19, %c0_20] : memref<4x1x32xf32, #tpu.memory_space<vmem>>, vector<1x1x32xf32>
    %12 = vector.shape_cast %11 : vector<1x1x32xf32> to vector<1x32xf32>
    %cst_21 = arith.constant 0.000000e+00 : f32
    %13 = vector.broadcast %cst_21 : f32 to vector<8x16x32xf32>
    %c0_22 = arith.constant 0 : index
    %c0_23 = arith.constant 0 : index
    %c0_24 = arith.constant 0 : index
    %14 = vector.load %arg8[%c0_22, %c0_23, %c0_24] : memref<18x18x32xf32, #tpu.memory_space<vmem>>, vector<8x16x32xf32>
    %15 = vector.extract_strided_slice %8 {offsets = [0, 0], sizes = [1, 32], strides = [1, 1]} : vector<9x32xf32> to vector<1x32xf32>
    %16 = vector.shape_cast %15 : vector<1x32xf32> to vector<32xf32>
    %17 = vector.shape_cast %16 : vector<32xf32> to vector<1x1x32xf32>
    %18 = vector.broadcast %17 : vector<1x1x32xf32> to vector<8x16x32xf32>
    %19 = arith.mulf %14, %18 : vector<8x16x32xf32>
    %20 = arith.addf %13, %19 : vector<8x16x32xf32>
    %c0_25 = arith.constant 0 : index
    %c1_26 = arith.constant 1 : index
    %c0_27 = arith.constant 0 : index
    %21 = vector.load %arg8[%c0_25, %c1_26, %c0_27] : memref<18x18x32xf32, #tpu.memory_space<vmem>>, vector<8x16x32xf32>
    %22 = vector.extract_strided_slice %8 {offsets = [1, 0], sizes = [1, 32], strides = [1, 1]} : vector<9x32xf32> to vector<1x32xf32>
    %23 = vector.shape_cast %22 : vector<1x32xf32> to vector<32xf32>
    %24 = vector.shape_cast %23 : vector<32xf32> to vector<1x1x32xf32>
    %25 = vector.broadcast %24 : vector<1x1x32xf32> to vector<8x16x32xf32>
    %26 = arith.mulf %21, %25 : vector<8x16x32xf32>
    %27 = arith.addf %20, %26 : vector<8x16x32xf32>
    %c0_28 = arith.constant 0 : index
    %c2 = arith.constant 2 : index
    %c0_29 = arith.constant 0 : index
    %28 = vector.load %arg8[%c0_28, %c2, %c0_29] : memref<18x18x32xf32, #tpu.memory_space<vmem>>, vector<8x16x32xf32>
    %29 = vector.extract_strided_slice %8 {offsets = [2, 0], sizes = [1, 32], strides = [1, 1]} : vector<9x32xf32> to vector<1x32xf32>
    %30 = vector.shape_cast %29 : vector<1x32xf32> to vector<32xf32>
    %31 = vector.shape_cast %30 : vector<32xf32> to vector<1x1x32xf32>
    %32 = vector.broadcast %31 : vector<1x1x32xf32> to vector<8x16x32xf32>
    %33 = arith.mulf %28, %32 : vector<8x16x32xf32>
    %34 = arith.addf %27, %33 : vector<8x16x32xf32>
    %c1_30 = arith.constant 1 : index
    %c0_31 = arith.constant 0 : index
    %c0_32 = arith.constant 0 : index
    %35 = vector.load %arg8[%c1_30, %c0_31, %c0_32] : memref<18x18x32xf32, #tpu.memory_space<vmem>>, vector<8x16x32xf32>
    %36 = vector.extract_strided_slice %8 {offsets = [3, 0], sizes = [1, 32], strides = [1, 1]} : vector<9x32xf32> to vector<1x32xf32>
    %37 = vector.shape_cast %36 : vector<1x32xf32> to vector<32xf32>
    %38 = vector.shape_cast %37 : vector<32xf32> to vector<1x1x32xf32>
    %39 = vector.broadcast %38 : vector<1x1x32xf32> to vector<8x16x32xf32>
    %40 = arith.mulf %35, %39 : vector<8x16x32xf32>
    %41 = arith.addf %34, %40 : vector<8x16x32xf32>
    %c1_33 = arith.constant 1 : index
    %c1_34 = arith.constant 1 : index
    %c0_35 = arith.constant 0 : index
    %42 = vector.load %arg8[%c1_33, %c1_34, %c0_35] : memref<18x18x32xf32, #tpu.memory_space<vmem>>, vector<8x16x32xf32>
    %43 = vector.extract_strided_slice %8 {offsets = [4, 0], sizes = [1, 32], strides = [1, 1]} : vector<9x32xf32> to vector<1x32xf32>
    %44 = vector.shape_cast %43 : vector<1x32xf32> to vector<32xf32>
    %45 = vector.shape_cast %44 : vector<32xf32> to vector<1x1x32xf32>
    %46 = vector.broadcast %45 : vector<1x1x32xf32> to vector<8x16x32xf32>
    %47 = arith.mulf %42, %46 : vector<8x16x32xf32>
    %48 = arith.addf %41, %47 : vector<8x16x32xf32>
    %c1_36 = arith.constant 1 : index
    %c2_37 = arith.constant 2 : index
    %c0_38 = arith.constant 0 : index
    %49 = vector.load %arg8[%c1_36, %c2_37, %c0_38] : memref<18x18x32xf32, #tpu.memory_space<vmem>>, vector<8x16x32xf32>
    %50 = vector.extract_strided_slice %8 {offsets = [5, 0], sizes = [1, 32], strides = [1, 1]} : vector<9x32xf32> to vector<1x32xf32>
    %51 = vector.shape_cast %50 : vector<1x32xf32> to vector<32xf32>
    %52 = vector.shape_cast %51 : vector<32xf32> to vector<1x1x32xf32>
    %53 = vector.broadcast %52 : vector<1x1x32xf32> to vector<8x16x32xf32>
    %54 = arith.mulf %49, %53 : vector<8x16x32xf32>
    %55 = arith.addf %48, %54 : vector<8x16x32xf32>
    %c2_39 = arith.constant 2 : index
    %c0_40 = arith.constant 0 : index
    %c0_41 = arith.constant 0 : index
    %56 = vector.load %arg8[%c2_39, %c0_40, %c0_41] : memref<18x18x32xf32, #tpu.memory_space<vmem>>, vector<8x16x32xf32>
    %57 = vector.extract_strided_slice %8 {offsets = [6, 0], sizes = [1, 32], strides = [1, 1]} : vector<9x32xf32> to vector<1x32xf32>
    %58 = vector.shape_cast %57 : vector<1x32xf32> to vector<32xf32>
    %59 = vector.shape_cast %58 : vector<32xf32> to vector<1x1x32xf32>
    %60 = vector.broadcast %59 : vector<1x1x32xf32> to vector<8x16x32xf32>
    %61 = arith.mulf %56, %60 : vector<8x16x32xf32>
    %62 = arith.addf %55, %61 : vector<8x16x32xf32>
    %c2_42 = arith.constant 2 : index
    %c1_43 = arith.constant 1 : index
    %c0_44 = arith.constant 0 : index
    %63 = vector.load %arg8[%c2_42, %c1_43, %c0_44] : memref<18x18x32xf32, #tpu.memory_space<vmem>>, vector<8x16x32xf32>
    %64 = vector.extract_strided_slice %8 {offsets = [7, 0], sizes = [1, 32], strides = [1, 1]} : vector<9x32xf32> to vector<1x32xf32>
    %65 = vector.shape_cast %64 : vector<1x32xf32> to vector<32xf32>
    %66 = vector.shape_cast %65 : vector<32xf32> to vector<1x1x32xf32>
    %67 = vector.broadcast %66 : vector<1x1x32xf32> to vector<8x16x32xf32>
    %68 = arith.mulf %63, %67 : vector<8x16x32xf32>
    %69 = arith.addf %62, %68 : vector<8x16x32xf32>
    %c2_45 = arith.constant 2 : index
    %c2_46 = arith.constant 2 : index
    %c0_47 = arith.constant 0 : index
    %70 = vector.load %arg8[%c2_45, %c2_46, %c0_47] : memref<18x18x32xf32, #tpu.memory_space<vmem>>, vector<8x16x32xf32>
    %71 = vector.extract_strided_slice %8 {offsets = [8, 0], sizes = [1, 32], strides = [1, 1]} : vector<9x32xf32> to vector<1x32xf32>
    %72 = vector.shape_cast %71 : vector<1x32xf32> to vector<32xf32>
    %73 = vector.shape_cast %72 : vector<32xf32> to vector<1x1x32xf32>
    %74 = vector.broadcast %73 : vector<1x1x32xf32> to vector<8x16x32xf32>
    %75 = arith.mulf %70, %74 : vector<8x16x32xf32>
    %76 = arith.addf %69, %75 : vector<8x16x32xf32>
    %77 = vector.shape_cast %76 : vector<8x16x32xf32> to vector<128x32xf32>
    %cst_48 = arith.constant dense<0.000000e+00> : vector<128x32xf32>
    %78 = tpu.matmul %77, %10, %cst_48 {dimension_numbers = #tpu.dot_dimension_numbers<[1], [0], [0], [1], [0, 0, 1, 1], [], []>} : vector<128x32xf32>, vector<32x32xf32>, vector<128x32xf32> -> vector<128x32xf32>
    %79 = vector.broadcast %12 : vector<1x32xf32> to vector<128x32xf32>
    %80 = arith.addf %78, %79 : vector<128x32xf32>
    %cst_49 = arith.constant 0.000000e+00 : f32
    %81 = vector.broadcast %cst_49 : f32 to vector<128x32xf32>
    %82 = arith.maximumf %80, %81 : vector<128x32xf32>
    %c0_50 = arith.constant 0 : index
    %c0_51 = arith.constant 0 : index
    %c0_52 = arith.constant 0 : index
    %83 = vector.load %arg5[%c0_50, %c0_51, %c0_52] : memref<4x1x32xf32, #tpu.memory_space<vmem>>, vector<1x1x32xf32>
    %84 = vector.shape_cast %83 : vector<1x1x32xf32> to vector<1x32xf32>
    %85 = vector.broadcast %84 : vector<1x32xf32> to vector<128x32xf32>
    %86 = arith.mulf %82, %85 : vector<128x32xf32>
    %c0_53 = arith.constant 0 : index
    %c0_54 = arith.constant 0 : index
    %c0_55 = arith.constant 0 : index
    %87 = vector.load %arg6[%c0_53, %c0_54, %c0_55] : memref<4x1x32xf32, #tpu.memory_space<vmem>>, vector<1x1x32xf32>
    %88 = vector.shape_cast %87 : vector<1x1x32xf32> to vector<1x32xf32>
    %89 = vector.broadcast %88 : vector<1x32xf32> to vector<128x32xf32>
    %90 = arith.addf %86, %89 : vector<128x32xf32>
    %91 = vector.shape_cast %90 : vector<128x32xf32> to vector<8x16x32xf32>
    %c1_56 = arith.constant 1 : index
    %c1_57 = arith.constant 1 : index
    %c0_58 = arith.constant 0 : index
    %92 = vector.load %arg9[%c1_56, %c1_57, %c0_58] : memref<18x18x32xf32, #tpu.memory_space<vmem>>, vector<8x16x32xf32>
    tpu.vector_store %arg9[%c1_56, %c1_57, %c0_58], %91 {strides = array<i32>} : memref<18x18x32xf32, #tpu.memory_space<vmem>>, vector<8x16x32xf32>,
    %cst_59 = arith.constant 0.000000e+00 : f32
    %93 = vector.broadcast %cst_59 : f32 to vector<8x16x32xf32>
    %c8 = arith.constant 8 : index
    %c0_60 = arith.constant 0 : index
    %c0_61 = arith.constant 0 : index
    %94 = vector.load %arg8[%c8, %c0_60, %c0_61] : memref<18x18x32xf32, #tpu.memory_space<vmem>>, vector<8x16x32xf32>
    %95 = vector.extract_strided_slice %8 {offsets = [0, 0], sizes = [1, 32], strides = [1, 1]} : vector<9x32xf32> to vector<1x32xf32>
    %96 = vector.shape_cast %95 : vector<1x32xf32> to vector<32xf32>
    %97 = vector.shape_cast %96 : vector<32xf32> to vector<1x1x32xf32>
    %98 = vector.broadcast %97 : vector<1x1x32xf32> to vector<8x16x32xf32>
    %99 = arith.mulf %94, %98 : vector<8x16x32xf32>
    %100 = arith.addf %93, %99 : vector<8x16x32xf32>
    %c8_62 = arith.constant 8 : index
    %c1_63 = arith.constant 1 : index
    %c0_64 = arith.constant 0 : index
    %101 = vector.load %arg8[%c8_62, %c1_63, %c0_64] : memref<18x18x32xf32, #tpu.memory_space<vmem>>, vector<8x16x32xf32>
    %102 = vector.extract_strided_slice %8 {offsets = [1, 0], sizes = [1, 32], strides = [1, 1]} : vector<9x32xf32> to vector<1x32xf32>
    %103 = vector.shape_cast %102 : vector<1x32xf32> to vector<32xf32>
    %104 = vector.shape_cast %103 : vector<32xf32> to vector<1x1x32xf32>
    %105 = vector.broadcast %104 : vector<1x1x32xf32> to vector<8x16x32xf32>
    %106 = arith.mulf %101, %105 : vector<8x16x32xf32>
    %107 = arith.addf %100, %106 : vector<8x16x32xf32>
    %c8_65 = arith.constant 8 : index
    %c2_66 = arith.constant 2 : index
    %c0_67 = arith.constant 0 : index
    %108 = vector.load %arg8[%c8_65, %c2_66, %c0_67] : memref<18x18x32xf32, #tpu.memory_space<vmem>>, vector<8x16x32xf32>
    %109 = vector.extract_strided_slice %8 {offsets = [2, 0], sizes = [1, 32], strides = [1, 1]} : vector<9x32xf32> to vector<1x32xf32>
    %110 = vector.shape_cast %109 : vector<1x32xf32> to vector<32xf32>
    %111 = vector.shape_cast %110 : vector<32xf32> to vector<1x1x32xf32>
    %112 = vector.broadcast %111 : vector<1x1x32xf32> to vector<8x16x32xf32>
    %113 = arith.mulf %108, %112 : vector<8x16x32xf32>
    %114 = arith.addf %107, %113 : vector<8x16x32xf32>
    %c9 = arith.constant 9 : index
    %c0_68 = arith.constant 0 : index
    %c0_69 = arith.constant 0 : index
    %115 = vector.load %arg8[%c9, %c0_68, %c0_69] : memref<18x18x32xf32, #tpu.memory_space<vmem>>, vector<8x16x32xf32>
    %116 = vector.extract_strided_slice %8 {offsets = [3, 0], sizes = [1, 32], strides = [1, 1]} : vector<9x32xf32> to vector<1x32xf32>
    %117 = vector.shape_cast %116 : vector<1x32xf32> to vector<32xf32>
    %118 = vector.shape_cast %117 : vector<32xf32> to vector<1x1x32xf32>
    %119 = vector.broadcast %118 : vector<1x1x32xf32> to vector<8x16x32xf32>
    %120 = arith.mulf %115, %119 : vector<8x16x32xf32>
    %121 = arith.addf %114, %120 : vector<8x16x32xf32>
    %c9_70 = arith.constant 9 : index
    %c1_71 = arith.constant 1 : index
    %c0_72 = arith.constant 0 : index
    %122 = vector.load %arg8[%c9_70, %c1_71, %c0_72] : memref<18x18x32xf32, #tpu.memory_space<vmem>>, vector<8x16x32xf32>
    %123 = vector.extract_strided_slice %8 {offsets = [4, 0], sizes = [1, 32], strides = [1, 1]} : vector<9x32xf32> to vector<1x32xf32>
    %124 = vector.shape_cast %123 : vector<1x32xf32> to vector<32xf32>
    %125 = vector.shape_cast %124 : vector<32xf32> to vector<1x1x32xf32>
    %126 = vector.broadcast %125 : vector<1x1x32xf32> to vector<8x16x32xf32>
    %127 = arith.mulf %122, %126 : vector<8x16x32xf32>
    %128 = arith.addf %121, %127 : vector<8x16x32xf32>
    %c9_73 = arith.constant 9 : index
    %c2_74 = arith.constant 2 : index
    %c0_75 = arith.constant 0 : index
    %129 = vector.load %arg8[%c9_73, %c2_74, %c0_75] : memref<18x18x32xf32, #tpu.memory_space<vmem>>, vector<8x16x32xf32>
    %130 = vector.extract_strided_slice %8 {offsets = [5, 0], sizes = [1, 32], strides = [1, 1]} : vector<9x32xf32> to vector<1x32xf32>
    %131 = vector.shape_cast %130 : vector<1x32xf32> to vector<32xf32>
    %132 = vector.shape_cast %131 : vector<32xf32> to vector<1x1x32xf32>
    %133 = vector.broadcast %132 : vector<1x1x32xf32> to vector<8x16x32xf32>
    %134 = arith.mulf %129, %133 : vector<8x16x32xf32>
    %135 = arith.addf %128, %134 : vector<8x16x32xf32>
    %c10 = arith.constant 10 : index
    %c0_76 = arith.constant 0 : index
    %c0_77 = arith.constant 0 : index
    %136 = vector.load %arg8[%c10, %c0_76, %c0_77] : memref<18x18x32xf32, #tpu.memory_space<vmem>>, vector<8x16x32xf32>
    %137 = vector.extract_strided_slice %8 {offsets = [6, 0], sizes = [1, 32], strides = [1, 1]} : vector<9x32xf32> to vector<1x32xf32>
    %138 = vector.shape_cast %137 : vector<1x32xf32> to vector<32xf32>
    %139 = vector.shape_cast %138 : vector<32xf32> to vector<1x1x32xf32>
    %140 = vector.broadcast %139 : vector<1x1x32xf32> to vector<8x16x32xf32>
    %141 = arith.mulf %136, %140 : vector<8x16x32xf32>
    %142 = arith.addf %135, %141 : vector<8x16x32xf32>
    %c10_78 = arith.constant 10 : index
    %c1_79 = arith.constant 1 : index
    %c0_80 = arith.constant 0 : index
    %143 = vector.load %arg8[%c10_78, %c1_79, %c0_80] : memref<18x18x32xf32, #tpu.memory_space<vmem>>, vector<8x16x32xf32>
    %144 = vector.extract_strided_slice %8 {offsets = [7, 0], sizes = [1, 32], strides = [1, 1]} : vector<9x32xf32> to vector<1x32xf32>
    %145 = vector.shape_cast %144 : vector<1x32xf32> to vector<32xf32>
    %146 = vector.shape_cast %145 : vector<32xf32> to vector<1x1x32xf32>
    %147 = vector.broadcast %146 : vector<1x1x32xf32> to vector<8x16x32xf32>
    %148 = arith.mulf %143, %147 : vector<8x16x32xf32>
    %149 = arith.addf %142, %148 : vector<8x16x32xf32>
    %c10_81 = arith.constant 10 : index
    %c2_82 = arith.constant 2 : index
    %c0_83 = arith.constant 0 : index
    %150 = vector.load %arg8[%c10_81, %c2_82, %c0_83] : memref<18x18x32xf32, #tpu.memory_space<vmem>>, vector<8x16x32xf32>
    %151 = vector.extract_strided_slice %8 {offsets = [8, 0], sizes = [1, 32], strides = [1, 1]} : vector<9x32xf32> to vector<1x32xf32>
    %152 = vector.shape_cast %151 : vector<1x32xf32> to vector<32xf32>
    %153 = vector.shape_cast %152 : vector<32xf32> to vector<1x1x32xf32>
    %154 = vector.broadcast %153 : vector<1x1x32xf32> to vector<8x16x32xf32>
    %155 = arith.mulf %150, %154 : vector<8x16x32xf32>
    %156 = arith.addf %149, %155 : vector<8x16x32xf32>
    %157 = vector.shape_cast %156 : vector<8x16x32xf32> to vector<128x32xf32>
    %cst_84 = arith.constant dense<0.000000e+00> : vector<128x32xf32>
    %158 = tpu.matmul %157, %10, %cst_84 {dimension_numbers = #tpu.dot_dimension_numbers<[1], [0], [0], [1], [0, 0, 1, 1], [], []>} : vector<128x32xf32>, vector<32x32xf32>, vector<128x32xf32> -> vector<128x32xf32>
    %159 = vector.broadcast %12 : vector<1x32xf32> to vector<128x32xf32>
    %160 = arith.addf %158, %159 : vector<128x32xf32>
    %cst_85 = arith.constant 0.000000e+00 : f32
    %161 = vector.broadcast %cst_85 : f32 to vector<128x32xf32>
    %162 = arith.maximumf %160, %161 : vector<128x32xf32>
    %c0_86 = arith.constant 0 : index
    %c0_87 = arith.constant 0 : index
    %c0_88 = arith.constant 0 : index
    %163 = vector.load %arg5[%c0_86, %c0_87, %c0_88] : memref<4x1x32xf32, #tpu.memory_space<vmem>>, vector<1x1x32xf32>
    %164 = vector.shape_cast %163 : vector<1x1x32xf32> to vector<1x32xf32>
    %165 = vector.broadcast %164 : vector<1x32xf32> to vector<128x32xf32>
    %166 = arith.mulf %162, %165 : vector<128x32xf32>
    %c0_89 = arith.constant 0 : index
    %c0_90 = arith.constant 0 : index
    %c0_91 = arith.constant 0 : index
    %167 = vector.load %arg6[%c0_89, %c0_90, %c0_91] : memref<4x1x32xf32, #tpu.memory_space<vmem>>, vector<1x1x32xf32>
    %168 = vector.shape_cast %167 : vector<1x1x32xf32> to vector<1x32xf32>
    %169 = vector.broadcast %168 : vector<1x32xf32> to vector<128x32xf32>
    %170 = arith.addf %166, %169 : vector<128x32xf32>
    %171 = vector.shape_cast %170 : vector<128x32xf32> to vector<8x16x32xf32>
    %c9_92 = arith.constant 9 : index
    %c1_93 = arith.constant 1 : index
    %c0_94 = arith.constant 0 : index
    %172 = vector.load %arg9[%c9_92, %c1_93, %c0_94] : memref<18x18x32xf32, #tpu.memory_space<vmem>>, vector<8x16x32xf32>
    tpu.vector_store %arg9[%c9_92, %c1_93, %c0_94], %171 {strides = array<i32>} : memref<18x18x32xf32, #tpu.memory_space<vmem>>, vector<8x16x32xf32>,
    %c1_95 = arith.constant 1 : index
    %c0_96 = arith.constant 0 : index
    %c0_97 = arith.constant 0 : index
    %173 = vector.load %arg2[%c1_95, %c0_96, %c0_97] : memref<4x9x32xf32, #tpu.memory_space<vmem>>, vector<1x9x32xf32>
    %174 = vector.shape_cast %173 : vector<1x9x32xf32> to vector<9x32xf32>
    %c1_98 = arith.constant 1 : index
    %c0_99 = arith.constant 0 : index
    %c0_100 = arith.constant 0 : index
    %175 = vector.load %arg3[%c1_98, %c0_99, %c0_100] : memref<4x32x32xf32, #tpu.memory_space<vmem>>, vector<1x32x32xf32>
    %176 = vector.shape_cast %175 : vector<1x32x32xf32> to vector<32x32xf32>
    %c1_101 = arith.constant 1 : index
    %c0_102 = arith.constant 0 : index
    %c0_103 = arith.constant 0 : index
    %177 = vector.load %arg4[%c1_101, %c0_102, %c0_103] : memref<4x1x32xf32, #tpu.memory_space<vmem>>, vector<1x1x32xf32>
    %178 = vector.shape_cast %177 : vector<1x1x32xf32> to vector<1x32xf32>
    %cst_104 = arith.constant 0.000000e+00 : f32
    %179 = vector.broadcast %cst_104 : f32 to vector<8x16x32xf32>
    %c0_105 = arith.constant 0 : index
    %c0_106 = arith.constant 0 : index
    %c0_107 = arith.constant 0 : index
    %180 = vector.load %arg9[%c0_105, %c0_106, %c0_107] : memref<18x18x32xf32, #tpu.memory_space<vmem>>, vector<8x16x32xf32>
    %181 = vector.extract_strided_slice %174 {offsets = [0, 0], sizes = [1, 32], strides = [1, 1]} : vector<9x32xf32> to vector<1x32xf32>
    %182 = vector.shape_cast %181 : vector<1x32xf32> to vector<32xf32>
    %183 = vector.shape_cast %182 : vector<32xf32> to vector<1x1x32xf32>
    %184 = vector.broadcast %183 : vector<1x1x32xf32> to vector<8x16x32xf32>
    %185 = arith.mulf %180, %184 : vector<8x16x32xf32>
    %186 = arith.addf %179, %185 : vector<8x16x32xf32>
    %c0_108 = arith.constant 0 : index
    %c1_109 = arith.constant 1 : index
    %c0_110 = arith.constant 0 : index
    %187 = vector.load %arg9[%c0_108, %c1_109, %c0_110] : memref<18x18x32xf32, #tpu.memory_space<vmem>>, vector<8x16x32xf32>
    %188 = vector.extract_strided_slice %174 {offsets = [1, 0], sizes = [1, 32], strides = [1, 1]} : vector<9x32xf32> to vector<1x32xf32>
    %189 = vector.shape_cast %188 : vector<1x32xf32> to vector<32xf32>
    %190 = vector.shape_cast %189 : vector<32xf32> to vector<1x1x32xf32>
    %191 = vector.broadcast %190 : vector<1x1x32xf32> to vector<8x16x32xf32>
    %192 = arith.mulf %187, %191 : vector<8x16x32xf32>
    %193 = arith.addf %186, %192 : vector<8x16x32xf32>
    %c0_111 = arith.constant 0 : index
    %c2_112 = arith.constant 2 : index
    %c0_113 = arith.constant 0 : index
    %194 = vector.load %arg9[%c0_111, %c2_112, %c0_113] : memref<18x18x32xf32, #tpu.memory_space<vmem>>, vector<8x16x32xf32>
    %195 = vector.extract_strided_slice %174 {offsets = [2, 0], sizes = [1, 32], strides = [1, 1]} : vector<9x32xf32> to vector<1x32xf32>
    %196 = vector.shape_cast %195 : vector<1x32xf32> to vector<32xf32>
    %197 = vector.shape_cast %196 : vector<32xf32> to vector<1x1x32xf32>
    %198 = vector.broadcast %197 : vector<1x1x32xf32> to vector<8x16x32xf32>
    %199 = arith.mulf %194, %198 : vector<8x16x32xf32>
    %200 = arith.addf %193, %199 : vector<8x16x32xf32>
    %c1_114 = arith.constant 1 : index
    %c0_115 = arith.constant 0 : index
    %c0_116 = arith.constant 0 : index
    %201 = vector.load %arg9[%c1_114, %c0_115, %c0_116] : memref<18x18x32xf32, #tpu.memory_space<vmem>>, vector<8x16x32xf32>
    %202 = vector.extract_strided_slice %174 {offsets = [3, 0], sizes = [1, 32], strides = [1, 1]} : vector<9x32xf32> to vector<1x32xf32>
    %203 = vector.shape_cast %202 : vector<1x32xf32> to vector<32xf32>
    %204 = vector.shape_cast %203 : vector<32xf32> to vector<1x1x32xf32>
    %205 = vector.broadcast %204 : vector<1x1x32xf32> to vector<8x16x32xf32>
    %206 = arith.mulf %201, %205 : vector<8x16x32xf32>
    %207 = arith.addf %200, %206 : vector<8x16x32xf32>
    %c1_117 = arith.constant 1 : index
    %c1_118 = arith.constant 1 : index
    %c0_119 = arith.constant 0 : index
    %208 = vector.load %arg9[%c1_117, %c1_118, %c0_119] : memref<18x18x32xf32, #tpu.memory_space<vmem>>, vector<8x16x32xf32>
    %209 = vector.extract_strided_slice %174 {offsets = [4, 0], sizes = [1, 32], strides = [1, 1]} : vector<9x32xf32> to vector<1x32xf32>
    %210 = vector.shape_cast %209 : vector<1x32xf32> to vector<32xf32>
    %211 = vector.shape_cast %210 : vector<32xf32> to vector<1x1x32xf32>
    %212 = vector.broadcast %211 : vector<1x1x32xf32> to vector<8x16x32xf32>
    %213 = arith.mulf %208, %212 : vector<8x16x32xf32>
    %214 = arith.addf %207, %213 : vector<8x16x32xf32>
    %c1_120 = arith.constant 1 : index
    %c2_121 = arith.constant 2 : index
    %c0_122 = arith.constant 0 : index
    %215 = vector.load %arg9[%c1_120, %c2_121, %c0_122] : memref<18x18x32xf32, #tpu.memory_space<vmem>>, vector<8x16x32xf32>
    %216 = vector.extract_strided_slice %174 {offsets = [5, 0], sizes = [1, 32], strides = [1, 1]} : vector<9x32xf32> to vector<1x32xf32>
    %217 = vector.shape_cast %216 : vector<1x32xf32> to vector<32xf32>
    %218 = vector.shape_cast %217 : vector<32xf32> to vector<1x1x32xf32>
    %219 = vector.broadcast %218 : vector<1x1x32xf32> to vector<8x16x32xf32>
    %220 = arith.mulf %215, %219 : vector<8x16x32xf32>
    %221 = arith.addf %214, %220 : vector<8x16x32xf32>
    %c2_123 = arith.constant 2 : index
    %c0_124 = arith.constant 0 : index
    %c0_125 = arith.constant 0 : index
    %222 = vector.load %arg9[%c2_123, %c0_124, %c0_125] : memref<18x18x32xf32, #tpu.memory_space<vmem>>, vector<8x16x32xf32>
    %223 = vector.extract_strided_slice %174 {offsets = [6, 0], sizes = [1, 32], strides = [1, 1]} : vector<9x32xf32> to vector<1x32xf32>
    %224 = vector.shape_cast %223 : vector<1x32xf32> to vector<32xf32>
    %225 = vector.shape_cast %224 : vector<32xf32> to vector<1x1x32xf32>
    %226 = vector.broadcast %225 : vector<1x1x32xf32> to vector<8x16x32xf32>
    %227 = arith.mulf %222, %226 : vector<8x16x32xf32>
    %228 = arith.addf %221, %227 : vector<8x16x32xf32>
    %c2_126 = arith.constant 2 : index
    %c1_127 = arith.constant 1 : index
    %c0_128 = arith.constant 0 : index
    %229 = vector.load %arg9[%c2_126, %c1_127, %c0_128] : memref<18x18x32xf32, #tpu.memory_space<vmem>>, vector<8x16x32xf32>
    %230 = vector.extract_strided_slice %174 {offsets = [7, 0], sizes = [1, 32], strides = [1, 1]} : vector<9x32xf32> to vector<1x32xf32>
    %231 = vector.shape_cast %230 : vector<1x32xf32> to vector<32xf32>
    %232 = vector.shape_cast %231 : vector<32xf32> to vector<1x1x32xf32>
    %233 = vector.broadcast %232 : vector<1x1x32xf32> to vector<8x16x32xf32>
    %234 = arith.mulf %229, %233 : vector<8x16x32xf32>
    %235 = arith.addf %228, %234 : vector<8x16x32xf32>
    %c2_129 = arith.constant 2 : index
    %c2_130 = arith.constant 2 : index
    %c0_131 = arith.constant 0 : index
    %236 = vector.load %arg9[%c2_129, %c2_130, %c0_131] : memref<18x18x32xf32, #tpu.memory_space<vmem>>, vector<8x16x32xf32>
    %237 = vector.extract_strided_slice %174 {offsets = [8, 0], sizes = [1, 32], strides = [1, 1]} : vector<9x32xf32> to vector<1x32xf32>
    %238 = vector.shape_cast %237 : vector<1x32xf32> to vector<32xf32>
    %239 = vector.shape_cast %238 : vector<32xf32> to vector<1x1x32xf32>
    %240 = vector.broadcast %239 : vector<1x1x32xf32> to vector<8x16x32xf32>
    %241 = arith.mulf %236, %240 : vector<8x16x32xf32>
    %242 = arith.addf %235, %241 : vector<8x16x32xf32>
    %243 = vector.shape_cast %242 : vector<8x16x32xf32> to vector<128x32xf32>
    %cst_132 = arith.constant dense<0.000000e+00> : vector<128x32xf32>
    %244 = tpu.matmul %243, %176, %cst_132 {dimension_numbers = #tpu.dot_dimension_numbers<[1], [0], [0], [1], [0, 0, 1, 1], [], []>} : vector<128x32xf32>, vector<32x32xf32>, vector<128x32xf32> -> vector<128x32xf32>
    %245 = vector.broadcast %178 : vector<1x32xf32> to vector<128x32xf32>
    %246 = arith.addf %244, %245 : vector<128x32xf32>
    %cst_133 = arith.constant 0.000000e+00 : f32
    %247 = vector.broadcast %cst_133 : f32 to vector<128x32xf32>
    %248 = arith.maximumf %246, %247 : vector<128x32xf32>
    %c1_134 = arith.constant 1 : index
    %c0_135 = arith.constant 0 : index
    %c0_136 = arith.constant 0 : index
    %249 = vector.load %arg5[%c1_134, %c0_135, %c0_136] : memref<4x1x32xf32, #tpu.memory_space<vmem>>, vector<1x1x32xf32>
    %250 = vector.shape_cast %249 : vector<1x1x32xf32> to vector<1x32xf32>
    %251 = vector.broadcast %250 : vector<1x32xf32> to vector<128x32xf32>
    %252 = arith.mulf %248, %251 : vector<128x32xf32>
    %c1_137 = arith.constant 1 : index
    %c0_138 = arith.constant 0 : index
    %c0_139 = arith.constant 0 : index
    %253 = vector.load %arg6[%c1_137, %c0_138, %c0_139] : memref<4x1x32xf32, #tpu.memory_space<vmem>>, vector<1x1x32xf32>
    %254 = vector.shape_cast %253 : vector<1x1x32xf32> to vector<1x32xf32>
    %255 = vector.broadcast %254 : vector<1x32xf32> to vector<128x32xf32>
    %256 = arith.addf %252, %255 : vector<128x32xf32>
    %257 = vector.shape_cast %256 : vector<128x32xf32> to vector<8x16x32xf32>
    %c1_140 = arith.constant 1 : index
    %c1_141 = arith.constant 1 : index
    %c0_142 = arith.constant 0 : index
    %258 = vector.load %arg8[%c1_140, %c1_141, %c0_142] : memref<18x18x32xf32, #tpu.memory_space<vmem>>, vector<8x16x32xf32>
    tpu.vector_store %arg8[%c1_140, %c1_141, %c0_142], %257 {strides = array<i32>} : memref<18x18x32xf32, #tpu.memory_space<vmem>>, vector<8x16x32xf32>,
    %cst_143 = arith.constant 0.000000e+00 : f32
    %259 = vector.broadcast %cst_143 : f32 to vector<8x16x32xf32>
    %c8_144 = arith.constant 8 : index
    %c0_145 = arith.constant 0 : index
    %c0_146 = arith.constant 0 : index
    %260 = vector.load %arg9[%c8_144, %c0_145, %c0_146] : memref<18x18x32xf32, #tpu.memory_space<vmem>>, vector<8x16x32xf32>
    %261 = vector.extract_strided_slice %174 {offsets = [0, 0], sizes = [1, 32], strides = [1, 1]} : vector<9x32xf32> to vector<1x32xf32>
    %262 = vector.shape_cast %261 : vector<1x32xf32> to vector<32xf32>
    %263 = vector.shape_cast %262 : vector<32xf32> to vector<1x1x32xf32>
    %264 = vector.broadcast %263 : vector<1x1x32xf32> to vector<8x16x32xf32>
    %265 = arith.mulf %260, %264 : vector<8x16x32xf32>
    %266 = arith.addf %259, %265 : vector<8x16x32xf32>
    %c8_147 = arith.constant 8 : index
    %c1_148 = arith.constant 1 : index
    %c0_149 = arith.constant 0 : index
    %267 = vector.load %arg9[%c8_147, %c1_148, %c0_149] : memref<18x18x32xf32, #tpu.memory_space<vmem>>, vector<8x16x32xf32>
    %268 = vector.extract_strided_slice %174 {offsets = [1, 0], sizes = [1, 32], strides = [1, 1]} : vector<9x32xf32> to vector<1x32xf32>
    %269 = vector.shape_cast %268 : vector<1x32xf32> to vector<32xf32>
    %270 = vector.shape_cast %269 : vector<32xf32> to vector<1x1x32xf32>
    %271 = vector.broadcast %270 : vector<1x1x32xf32> to vector<8x16x32xf32>
    %272 = arith.mulf %267, %271 : vector<8x16x32xf32>
    %273 = arith.addf %266, %272 : vector<8x16x32xf32>
    %c8_150 = arith.constant 8 : index
    %c2_151 = arith.constant 2 : index
    %c0_152 = arith.constant 0 : index
    %274 = vector.load %arg9[%c8_150, %c2_151, %c0_152] : memref<18x18x32xf32, #tpu.memory_space<vmem>>, vector<8x16x32xf32>
    %275 = vector.extract_strided_slice %174 {offsets = [2, 0], sizes = [1, 32], strides = [1, 1]} : vector<9x32xf32> to vector<1x32xf32>
    %276 = vector.shape_cast %275 : vector<1x32xf32> to vector<32xf32>
    %277 = vector.shape_cast %276 : vector<32xf32> to vector<1x1x32xf32>
    %278 = vector.broadcast %277 : vector<1x1x32xf32> to vector<8x16x32xf32>
    %279 = arith.mulf %274, %278 : vector<8x16x32xf32>
    %280 = arith.addf %273, %279 : vector<8x16x32xf32>
    %c9_153 = arith.constant 9 : index
    %c0_154 = arith.constant 0 : index
    %c0_155 = arith.constant 0 : index
    %281 = vector.load %arg9[%c9_153, %c0_154, %c0_155] : memref<18x18x32xf32, #tpu.memory_space<vmem>>, vector<8x16x32xf32>
    %282 = vector.extract_strided_slice %174 {offsets = [3, 0], sizes = [1, 32], strides = [1, 1]} : vector<9x32xf32> to vector<1x32xf32>
    %283 = vector.shape_cast %282 : vector<1x32xf32> to vector<32xf32>
    %284 = vector.shape_cast %283 : vector<32xf32> to vector<1x1x32xf32>
    %285 = vector.broadcast %284 : vector<1x1x32xf32> to vector<8x16x32xf32>
    %286 = arith.mulf %281, %285 : vector<8x16x32xf32>
    %287 = arith.addf %280, %286 : vector<8x16x32xf32>
    %c9_156 = arith.constant 9 : index
    %c1_157 = arith.constant 1 : index
    %c0_158 = arith.constant 0 : index
    %288 = vector.load %arg9[%c9_156, %c1_157, %c0_158] : memref<18x18x32xf32, #tpu.memory_space<vmem>>, vector<8x16x32xf32>
    %289 = vector.extract_strided_slice %174 {offsets = [4, 0], sizes = [1, 32], strides = [1, 1]} : vector<9x32xf32> to vector<1x32xf32>
    %290 = vector.shape_cast %289 : vector<1x32xf32> to vector<32xf32>
    %291 = vector.shape_cast %290 : vector<32xf32> to vector<1x1x32xf32>
    %292 = vector.broadcast %291 : vector<1x1x32xf32> to vector<8x16x32xf32>
    %293 = arith.mulf %288, %292 : vector<8x16x32xf32>
    %294 = arith.addf %287, %293 : vector<8x16x32xf32>
    %c9_159 = arith.constant 9 : index
    %c2_160 = arith.constant 2 : index
    %c0_161 = arith.constant 0 : index
    %295 = vector.load %arg9[%c9_159, %c2_160, %c0_161] : memref<18x18x32xf32, #tpu.memory_space<vmem>>, vector<8x16x32xf32>
    %296 = vector.extract_strided_slice %174 {offsets = [5, 0], sizes = [1, 32], strides = [1, 1]} : vector<9x32xf32> to vector<1x32xf32>
    %297 = vector.shape_cast %296 : vector<1x32xf32> to vector<32xf32>
    %298 = vector.shape_cast %297 : vector<32xf32> to vector<1x1x32xf32>
    %299 = vector.broadcast %298 : vector<1x1x32xf32> to vector<8x16x32xf32>
    %300 = arith.mulf %295, %299 : vector<8x16x32xf32>
    %301 = arith.addf %294, %300 : vector<8x16x32xf32>
    %c10_162 = arith.constant 10 : index
    %c0_163 = arith.constant 0 : index
    %c0_164 = arith.constant 0 : index
    %302 = vector.load %arg9[%c10_162, %c0_163, %c0_164] : memref<18x18x32xf32, #tpu.memory_space<vmem>>, vector<8x16x32xf32>
    %303 = vector.extract_strided_slice %174 {offsets = [6, 0], sizes = [1, 32], strides = [1, 1]} : vector<9x32xf32> to vector<1x32xf32>
    %304 = vector.shape_cast %303 : vector<1x32xf32> to vector<32xf32>
    %305 = vector.shape_cast %304 : vector<32xf32> to vector<1x1x32xf32>
    %306 = vector.broadcast %305 : vector<1x1x32xf32> to vector<8x16x32xf32>
    %307 = arith.mulf %302, %306 : vector<8x16x32xf32>
    %308 = arith.addf %301, %307 : vector<8x16x32xf32>
    %c10_165 = arith.constant 10 : index
    %c1_166 = arith.constant 1 : index
    %c0_167 = arith.constant 0 : index
    %309 = vector.load %arg9[%c10_165, %c1_166, %c0_167] : memref<18x18x32xf32, #tpu.memory_space<vmem>>, vector<8x16x32xf32>
    %310 = vector.extract_strided_slice %174 {offsets = [7, 0], sizes = [1, 32], strides = [1, 1]} : vector<9x32xf32> to vector<1x32xf32>
    %311 = vector.shape_cast %310 : vector<1x32xf32> to vector<32xf32>
    %312 = vector.shape_cast %311 : vector<32xf32> to vector<1x1x32xf32>
    %313 = vector.broadcast %312 : vector<1x1x32xf32> to vector<8x16x32xf32>
    %314 = arith.mulf %309, %313 : vector<8x16x32xf32>
    %315 = arith.addf %308, %314 : vector<8x16x32xf32>
    %c10_168 = arith.constant 10 : index
    %c2_169 = arith.constant 2 : index
    %c0_170 = arith.constant 0 : index
    %316 = vector.load %arg9[%c10_168, %c2_169, %c0_170] : memref<18x18x32xf32, #tpu.memory_space<vmem>>, vector<8x16x32xf32>
    %317 = vector.extract_strided_slice %174 {offsets = [8, 0], sizes = [1, 32], strides = [1, 1]} : vector<9x32xf32> to vector<1x32xf32>
    %318 = vector.shape_cast %317 : vector<1x32xf32> to vector<32xf32>
    %319 = vector.shape_cast %318 : vector<32xf32> to vector<1x1x32xf32>
    %320 = vector.broadcast %319 : vector<1x1x32xf32> to vector<8x16x32xf32>
    %321 = arith.mulf %316, %320 : vector<8x16x32xf32>
    %322 = arith.addf %315, %321 : vector<8x16x32xf32>
    %323 = vector.shape_cast %322 : vector<8x16x32xf32> to vector<128x32xf32>
    %cst_171 = arith.constant dense<0.000000e+00> : vector<128x32xf32>
    %324 = tpu.matmul %323, %176, %cst_171 {dimension_numbers = #tpu.dot_dimension_numbers<[1], [0], [0], [1], [0, 0, 1, 1], [], []>} : vector<128x32xf32>, vector<32x32xf32>, vector<128x32xf32> -> vector<128x32xf32>
    %325 = vector.broadcast %178 : vector<1x32xf32> to vector<128x32xf32>
    %326 = arith.addf %324, %325 : vector<128x32xf32>
    %cst_172 = arith.constant 0.000000e+00 : f32
    %327 = vector.broadcast %cst_172 : f32 to vector<128x32xf32>
    %328 = arith.maximumf %326, %327 : vector<128x32xf32>
    %c1_173 = arith.constant 1 : index
    %c0_174 = arith.constant 0 : index
    %c0_175 = arith.constant 0 : index
    %329 = vector.load %arg5[%c1_173, %c0_174, %c0_175] : memref<4x1x32xf32, #tpu.memory_space<vmem>>, vector<1x1x32xf32>
    %330 = vector.shape_cast %329 : vector<1x1x32xf32> to vector<1x32xf32>
    %331 = vector.broadcast %330 : vector<1x32xf32> to vector<128x32xf32>
    %332 = arith.mulf %328, %331 : vector<128x32xf32>
    %c1_176 = arith.constant 1 : index
    %c0_177 = arith.constant 0 : index
    %c0_178 = arith.constant 0 : index
    %333 = vector.load %arg6[%c1_176, %c0_177, %c0_178] : memref<4x1x32xf32, #tpu.memory_space<vmem>>, vector<1x1x32xf32>
    %334 = vector.shape_cast %333 : vector<1x1x32xf32> to vector<1x32xf32>
    %335 = vector.broadcast %334 : vector<1x32xf32> to vector<128x32xf32>
    %336 = arith.addf %332, %335 : vector<128x32xf32>
    %337 = vector.shape_cast %336 : vector<128x32xf32> to vector<8x16x32xf32>
    %c9_179 = arith.constant 9 : index
    %c1_180 = arith.constant 1 : index
    %c0_181 = arith.constant 0 : index
    %338 = vector.load %arg8[%c9_179, %c1_180, %c0_181] : memref<18x18x32xf32, #tpu.memory_space<vmem>>, vector<8x16x32xf32>
    tpu.vector_store %arg8[%c9_179, %c1_180, %c0_181], %337 {strides = array<i32>} : memref<18x18x32xf32, #tpu.memory_space<vmem>>, vector<8x16x32xf32>,
    %c2_182 = arith.constant 2 : index
    %c0_183 = arith.constant 0 : index
    %c0_184 = arith.constant 0 : index
    %339 = vector.load %arg2[%c2_182, %c0_183, %c0_184] : memref<4x9x32xf32, #tpu.memory_space<vmem>>, vector<1x9x32xf32>
    %340 = vector.shape_cast %339 : vector<1x9x32xf32> to vector<9x32xf32>
    %c2_185 = arith.constant 2 : index
    %c0_186 = arith.constant 0 : index
    %c0_187 = arith.constant 0 : index
    %341 = vector.load %arg3[%c2_185, %c0_186, %c0_187] : memref<4x32x32xf32, #tpu.memory_space<vmem>>, vector<1x32x32xf32>
    %342 = vector.shape_cast %341 : vector<1x32x32xf32> to vector<32x32xf32>
    %c2_188 = arith.constant 2 : index
    %c0_189 = arith.constant 0 : index
    %c0_190 = arith.constant 0 : index
    %343 = vector.load %arg4[%c2_188, %c0_189, %c0_190] : memref<4x1x32xf32, #tpu.memory_space<vmem>>, vector<1x1x32xf32>
    %344 = vector.shape_cast %343 : vector<1x1x32xf32> to vector<1x32xf32>
    %cst_191 = arith.constant 0.000000e+00 : f32
    %345 = vector.broadcast %cst_191 : f32 to vector<8x16x32xf32>
    %c0_192 = arith.constant 0 : index
    %c0_193 = arith.constant 0 : index
    %c0_194 = arith.constant 0 : index
    %346 = vector.load %arg8[%c0_192, %c0_193, %c0_194] : memref<18x18x32xf32, #tpu.memory_space<vmem>>, vector<8x16x32xf32>
    %347 = vector.extract_strided_slice %340 {offsets = [0, 0], sizes = [1, 32], strides = [1, 1]} : vector<9x32xf32> to vector<1x32xf32>
    %348 = vector.shape_cast %347 : vector<1x32xf32> to vector<32xf32>
    %349 = vector.shape_cast %348 : vector<32xf32> to vector<1x1x32xf32>
    %350 = vector.broadcast %349 : vector<1x1x32xf32> to vector<8x16x32xf32>
    %351 = arith.mulf %346, %350 : vector<8x16x32xf32>
    %352 = arith.addf %345, %351 : vector<8x16x32xf32>
    %c0_195 = arith.constant 0 : index
    %c1_196 = arith.constant 1 : index
    %c0_197 = arith.constant 0 : index
    %353 = vector.load %arg8[%c0_195, %c1_196, %c0_197] : memref<18x18x32xf32, #tpu.memory_space<vmem>>, vector<8x16x32xf32>
    %354 = vector.extract_strided_slice %340 {offsets = [1, 0], sizes = [1, 32], strides = [1, 1]} : vector<9x32xf32> to vector<1x32xf32>
    %355 = vector.shape_cast %354 : vector<1x32xf32> to vector<32xf32>
    %356 = vector.shape_cast %355 : vector<32xf32> to vector<1x1x32xf32>
    %357 = vector.broadcast %356 : vector<1x1x32xf32> to vector<8x16x32xf32>
    %358 = arith.mulf %353, %357 : vector<8x16x32xf32>
    %359 = arith.addf %352, %358 : vector<8x16x32xf32>
    %c0_198 = arith.constant 0 : index
    %c2_199 = arith.constant 2 : index
    %c0_200 = arith.constant 0 : index
    %360 = vector.load %arg8[%c0_198, %c2_199, %c0_200] : memref<18x18x32xf32, #tpu.memory_space<vmem>>, vector<8x16x32xf32>
    %361 = vector.extract_strided_slice %340 {offsets = [2, 0], sizes = [1, 32], strides = [1, 1]} : vector<9x32xf32> to vector<1x32xf32>
    %362 = vector.shape_cast %361 : vector<1x32xf32> to vector<32xf32>
    %363 = vector.shape_cast %362 : vector<32xf32> to vector<1x1x32xf32>
    %364 = vector.broadcast %363 : vector<1x1x32xf32> to vector<8x16x32xf32>
    %365 = arith.mulf %360, %364 : vector<8x16x32xf32>
    %366 = arith.addf %359, %365 : vector<8x16x32xf32>
    %c1_201 = arith.constant 1 : index
    %c0_202 = arith.constant 0 : index
    %c0_203 = arith.constant 0 : index
    %367 = vector.load %arg8[%c1_201, %c0_202, %c0_203] : memref<18x18x32xf32, #tpu.memory_space<vmem>>, vector<8x16x32xf32>
    %368 = vector.extract_strided_slice %340 {offsets = [3, 0], sizes = [1, 32], strides = [1, 1]} : vector<9x32xf32> to vector<1x32xf32>
    %369 = vector.shape_cast %368 : vector<1x32xf32> to vector<32xf32>
    %370 = vector.shape_cast %369 : vector<32xf32> to vector<1x1x32xf32>
    %371 = vector.broadcast %370 : vector<1x1x32xf32> to vector<8x16x32xf32>
    %372 = arith.mulf %367, %371 : vector<8x16x32xf32>
    %373 = arith.addf %366, %372 : vector<8x16x32xf32>
    %c1_204 = arith.constant 1 : index
    %c1_205 = arith.constant 1 : index
    %c0_206 = arith.constant 0 : index
    %374 = vector.load %arg8[%c1_204, %c1_205, %c0_206] : memref<18x18x32xf32, #tpu.memory_space<vmem>>, vector<8x16x32xf32>
    %375 = vector.extract_strided_slice %340 {offsets = [4, 0], sizes = [1, 32], strides = [1, 1]} : vector<9x32xf32> to vector<1x32xf32>
    %376 = vector.shape_cast %375 : vector<1x32xf32> to vector<32xf32>
    %377 = vector.shape_cast %376 : vector<32xf32> to vector<1x1x32xf32>
    %378 = vector.broadcast %377 : vector<1x1x32xf32> to vector<8x16x32xf32>
    %379 = arith.mulf %374, %378 : vector<8x16x32xf32>
    %380 = arith.addf %373, %379 : vector<8x16x32xf32>
    %c1_207 = arith.constant 1 : index
    %c2_208 = arith.constant 2 : index
    %c0_209 = arith.constant 0 : index
    %381 = vector.load %arg8[%c1_207, %c2_208, %c0_209] : memref<18x18x32xf32, #tpu.memory_space<vmem>>, vector<8x16x32xf32>
    %382 = vector.extract_strided_slice %340 {offsets = [5, 0], sizes = [1, 32], strides = [1, 1]} : vector<9x32xf32> to vector<1x32xf32>
    %383 = vector.shape_cast %382 : vector<1x32xf32> to vector<32xf32>
    %384 = vector.shape_cast %383 : vector<32xf32> to vector<1x1x32xf32>
    %385 = vector.broadcast %384 : vector<1x1x32xf32> to vector<8x16x32xf32>
    %386 = arith.mulf %381, %385 : vector<8x16x32xf32>
    %387 = arith.addf %380, %386 : vector<8x16x32xf32>
    %c2_210 = arith.constant 2 : index
    %c0_211 = arith.constant 0 : index
    %c0_212 = arith.constant 0 : index
    %388 = vector.load %arg8[%c2_210, %c0_211, %c0_212] : memref<18x18x32xf32, #tpu.memory_space<vmem>>, vector<8x16x32xf32>
    %389 = vector.extract_strided_slice %340 {offsets = [6, 0], sizes = [1, 32], strides = [1, 1]} : vector<9x32xf32> to vector<1x32xf32>
    %390 = vector.shape_cast %389 : vector<1x32xf32> to vector<32xf32>
    %391 = vector.shape_cast %390 : vector<32xf32> to vector<1x1x32xf32>
    %392 = vector.broadcast %391 : vector<1x1x32xf32> to vector<8x16x32xf32>
    %393 = arith.mulf %388, %392 : vector<8x16x32xf32>
    %394 = arith.addf %387, %393 : vector<8x16x32xf32>
    %c2_213 = arith.constant 2 : index
    %c1_214 = arith.constant 1 : index
    %c0_215 = arith.constant 0 : index
    %395 = vector.load %arg8[%c2_213, %c1_214, %c0_215] : memref<18x18x32xf32, #tpu.memory_space<vmem>>, vector<8x16x32xf32>
    %396 = vector.extract_strided_slice %340 {offsets = [7, 0], sizes = [1, 32], strides = [1, 1]} : vector<9x32xf32> to vector<1x32xf32>
    %397 = vector.shape_cast %396 : vector<1x32xf32> to vector<32xf32>
    %398 = vector.shape_cast %397 : vector<32xf32> to vector<1x1x32xf32>
    %399 = vector.broadcast %398 : vector<1x1x32xf32> to vector<8x16x32xf32>
    %400 = arith.mulf %395, %399 : vector<8x16x32xf32>
    %401 = arith.addf %394, %400 : vector<8x16x32xf32>
    %c2_216 = arith.constant 2 : index
    %c2_217 = arith.constant 2 : index
    %c0_218 = arith.constant 0 : index
    %402 = vector.load %arg8[%c2_216, %c2_217, %c0_218] : memref<18x18x32xf32, #tpu.memory_space<vmem>>, vector<8x16x32xf32>
    %403 = vector.extract_strided_slice %340 {offsets = [8, 0], sizes = [1, 32], strides = [1, 1]} : vector<9x32xf32> to vector<1x32xf32>
    %404 = vector.shape_cast %403 : vector<1x32xf32> to vector<32xf32>
    %405 = vector.shape_cast %404 : vector<32xf32> to vector<1x1x32xf32>
    %406 = vector.broadcast %405 : vector<1x1x32xf32> to vector<8x16x32xf32>
    %407 = arith.mulf %402, %406 : vector<8x16x32xf32>
    %408 = arith.addf %401, %407 : vector<8x16x32xf32>
    %409 = vector.shape_cast %408 : vector<8x16x32xf32> to vector<128x32xf32>
    %cst_219 = arith.constant dense<0.000000e+00> : vector<128x32xf32>
    %410 = tpu.matmul %409, %342, %cst_219 {dimension_numbers = #tpu.dot_dimension_numbers<[1], [0], [0], [1], [0, 0, 1, 1], [], []>} : vector<128x32xf32>, vector<32x32xf32>, vector<128x32xf32> -> vector<128x32xf32>
    %411 = vector.broadcast %344 : vector<1x32xf32> to vector<128x32xf32>
    %412 = arith.addf %410, %411 : vector<128x32xf32>
    %cst_220 = arith.constant 0.000000e+00 : f32
    %413 = vector.broadcast %cst_220 : f32 to vector<128x32xf32>
    %414 = arith.maximumf %412, %413 : vector<128x32xf32>
    %c2_221 = arith.constant 2 : index
    %c0_222 = arith.constant 0 : index
    %c0_223 = arith.constant 0 : index
    %415 = vector.load %arg5[%c2_221, %c0_222, %c0_223] : memref<4x1x32xf32, #tpu.memory_space<vmem>>, vector<1x1x32xf32>
    %416 = vector.shape_cast %415 : vector<1x1x32xf32> to vector<1x32xf32>
    %417 = vector.broadcast %416 : vector<1x32xf32> to vector<128x32xf32>
    %418 = arith.mulf %414, %417 : vector<128x32xf32>
    %c2_224 = arith.constant 2 : index
    %c0_225 = arith.constant 0 : index
    %c0_226 = arith.constant 0 : index
    %419 = vector.load %arg6[%c2_224, %c0_225, %c0_226] : memref<4x1x32xf32, #tpu.memory_space<vmem>>, vector<1x1x32xf32>
    %420 = vector.shape_cast %419 : vector<1x1x32xf32> to vector<1x32xf32>
    %421 = vector.broadcast %420 : vector<1x32xf32> to vector<128x32xf32>
    %422 = arith.addf %418, %421 : vector<128x32xf32>
    %423 = vector.shape_cast %422 : vector<128x32xf32> to vector<8x16x32xf32>
    %c1_227 = arith.constant 1 : index
    %c1_228 = arith.constant 1 : index
    %c0_229 = arith.constant 0 : index
    %424 = vector.load %arg9[%c1_227, %c1_228, %c0_229] : memref<18x18x32xf32, #tpu.memory_space<vmem>>, vector<8x16x32xf32>
    tpu.vector_store %arg9[%c1_227, %c1_228, %c0_229], %423 {strides = array<i32>} : memref<18x18x32xf32, #tpu.memory_space<vmem>>, vector<8x16x32xf32>,
    %cst_230 = arith.constant 0.000000e+00 : f32
    %425 = vector.broadcast %cst_230 : f32 to vector<8x16x32xf32>
    %c8_231 = arith.constant 8 : index
    %c0_232 = arith.constant 0 : index
    %c0_233 = arith.constant 0 : index
    %426 = vector.load %arg8[%c8_231, %c0_232, %c0_233] : memref<18x18x32xf32, #tpu.memory_space<vmem>>, vector<8x16x32xf32>
    %427 = vector.extract_strided_slice %340 {offsets = [0, 0], sizes = [1, 32], strides = [1, 1]} : vector<9x32xf32> to vector<1x32xf32>
    %428 = vector.shape_cast %427 : vector<1x32xf32> to vector<32xf32>
    %429 = vector.shape_cast %428 : vector<32xf32> to vector<1x1x32xf32>
    %430 = vector.broadcast %429 : vector<1x1x32xf32> to vector<8x16x32xf32>
    %431 = arith.mulf %426, %430 : vector<8x16x32xf32>
    %432 = arith.addf %425, %431 : vector<8x16x32xf32>
    %c8_234 = arith.constant 8 : index
    %c1_235 = arith.constant 1 : index
    %c0_236 = arith.constant 0 : index
    %433 = vector.load %arg8[%c8_234, %c1_235, %c0_236] : memref<18x18x32xf32, #tpu.memory_space<vmem>>, vector<8x16x32xf32>
    %434 = vector.extract_strided_slice %340 {offsets = [1, 0], sizes = [1, 32], strides = [1, 1]} : vector<9x32xf32> to vector<1x32xf32>
    %435 = vector.shape_cast %434 : vector<1x32xf32> to vector<32xf32>
    %436 = vector.shape_cast %435 : vector<32xf32> to vector<1x1x32xf32>
    %437 = vector.broadcast %436 : vector<1x1x32xf32> to vector<8x16x32xf32>
    %438 = arith.mulf %433, %437 : vector<8x16x32xf32>
    %439 = arith.addf %432, %438 : vector<8x16x32xf32>
    %c8_237 = arith.constant 8 : index
    %c2_238 = arith.constant 2 : index
    %c0_239 = arith.constant 0 : index
    %440 = vector.load %arg8[%c8_237, %c2_238, %c0_239] : memref<18x18x32xf32, #tpu.memory_space<vmem>>, vector<8x16x32xf32>
    %441 = vector.extract_strided_slice %340 {offsets = [2, 0], sizes = [1, 32], strides = [1, 1]} : vector<9x32xf32> to vector<1x32xf32>
    %442 = vector.shape_cast %441 : vector<1x32xf32> to vector<32xf32>
    %443 = vector.shape_cast %442 : vector<32xf32> to vector<1x1x32xf32>
    %444 = vector.broadcast %443 : vector<1x1x32xf32> to vector<8x16x32xf32>
    %445 = arith.mulf %440, %444 : vector<8x16x32xf32>
    %446 = arith.addf %439, %445 : vector<8x16x32xf32>
    %c9_240 = arith.constant 9 : index
    %c0_241 = arith.constant 0 : index
    %c0_242 = arith.constant 0 : index
    %447 = vector.load %arg8[%c9_240, %c0_241, %c0_242] : memref<18x18x32xf32, #tpu.memory_space<vmem>>, vector<8x16x32xf32>
    %448 = vector.extract_strided_slice %340 {offsets = [3, 0], sizes = [1, 32], strides = [1, 1]} : vector<9x32xf32> to vector<1x32xf32>
    %449 = vector.shape_cast %448 : vector<1x32xf32> to vector<32xf32>
    %450 = vector.shape_cast %449 : vector<32xf32> to vector<1x1x32xf32>
    %451 = vector.broadcast %450 : vector<1x1x32xf32> to vector<8x16x32xf32>
    %452 = arith.mulf %447, %451 : vector<8x16x32xf32>
    %453 = arith.addf %446, %452 : vector<8x16x32xf32>
    %c9_243 = arith.constant 9 : index
    %c1_244 = arith.constant 1 : index
    %c0_245 = arith.constant 0 : index
    %454 = vector.load %arg8[%c9_243, %c1_244, %c0_245] : memref<18x18x32xf32, #tpu.memory_space<vmem>>, vector<8x16x32xf32>
    %455 = vector.extract_strided_slice %340 {offsets = [4, 0], sizes = [1, 32], strides = [1, 1]} : vector<9x32xf32> to vector<1x32xf32>
    %456 = vector.shape_cast %455 : vector<1x32xf32> to vector<32xf32>
    %457 = vector.shape_cast %456 : vector<32xf32> to vector<1x1x32xf32>
    %458 = vector.broadcast %457 : vector<1x1x32xf32> to vector<8x16x32xf32>
    %459 = arith.mulf %454, %458 : vector<8x16x32xf32>
    %460 = arith.addf %453, %459 : vector<8x16x32xf32>
    %c9_246 = arith.constant 9 : index
    %c2_247 = arith.constant 2 : index
    %c0_248 = arith.constant 0 : index
    %461 = vector.load %arg8[%c9_246, %c2_247, %c0_248] : memref<18x18x32xf32, #tpu.memory_space<vmem>>, vector<8x16x32xf32>
    %462 = vector.extract_strided_slice %340 {offsets = [5, 0], sizes = [1, 32], strides = [1, 1]} : vector<9x32xf32> to vector<1x32xf32>
    %463 = vector.shape_cast %462 : vector<1x32xf32> to vector<32xf32>
    %464 = vector.shape_cast %463 : vector<32xf32> to vector<1x1x32xf32>
    %465 = vector.broadcast %464 : vector<1x1x32xf32> to vector<8x16x32xf32>
    %466 = arith.mulf %461, %465 : vector<8x16x32xf32>
    %467 = arith.addf %460, %466 : vector<8x16x32xf32>
    %c10_249 = arith.constant 10 : index
    %c0_250 = arith.constant 0 : index
    %c0_251 = arith.constant 0 : index
    %468 = vector.load %arg8[%c10_249, %c0_250, %c0_251] : memref<18x18x32xf32, #tpu.memory_space<vmem>>, vector<8x16x32xf32>
    %469 = vector.extract_strided_slice %340 {offsets = [6, 0], sizes = [1, 32], strides = [1, 1]} : vector<9x32xf32> to vector<1x32xf32>
    %470 = vector.shape_cast %469 : vector<1x32xf32> to vector<32xf32>
    %471 = vector.shape_cast %470 : vector<32xf32> to vector<1x1x32xf32>
    %472 = vector.broadcast %471 : vector<1x1x32xf32> to vector<8x16x32xf32>
    %473 = arith.mulf %468, %472 : vector<8x16x32xf32>
    %474 = arith.addf %467, %473 : vector<8x16x32xf32>
    %c10_252 = arith.constant 10 : index
    %c1_253 = arith.constant 1 : index
    %c0_254 = arith.constant 0 : index
    %475 = vector.load %arg8[%c10_252, %c1_253, %c0_254] : memref<18x18x32xf32, #tpu.memory_space<vmem>>, vector<8x16x32xf32>
    %476 = vector.extract_strided_slice %340 {offsets = [7, 0], sizes = [1, 32], strides = [1, 1]} : vector<9x32xf32> to vector<1x32xf32>
    %477 = vector.shape_cast %476 : vector<1x32xf32> to vector<32xf32>
    %478 = vector.shape_cast %477 : vector<32xf32> to vector<1x1x32xf32>
    %479 = vector.broadcast %478 : vector<1x1x32xf32> to vector<8x16x32xf32>
    %480 = arith.mulf %475, %479 : vector<8x16x32xf32>
    %481 = arith.addf %474, %480 : vector<8x16x32xf32>
    %c10_255 = arith.constant 10 : index
    %c2_256 = arith.constant 2 : index
    %c0_257 = arith.constant 0 : index
    %482 = vector.load %arg8[%c10_255, %c2_256, %c0_257] : memref<18x18x32xf32, #tpu.memory_space<vmem>>, vector<8x16x32xf32>
    %483 = vector.extract_strided_slice %340 {offsets = [8, 0], sizes = [1, 32], strides = [1, 1]} : vector<9x32xf32> to vector<1x32xf32>
    %484 = vector.shape_cast %483 : vector<1x32xf32> to vector<32xf32>
    %485 = vector.shape_cast %484 : vector<32xf32> to vector<1x1x32xf32>
    %486 = vector.broadcast %485 : vector<1x1x32xf32> to vector<8x16x32xf32>
    %487 = arith.mulf %482, %486 : vector<8x16x32xf32>
    %488 = arith.addf %481, %487 : vector<8x16x32xf32>
    %489 = vector.shape_cast %488 : vector<8x16x32xf32> to vector<128x32xf32>
    %cst_258 = arith.constant dense<0.000000e+00> : vector<128x32xf32>
    %490 = tpu.matmul %489, %342, %cst_258 {dimension_numbers = #tpu.dot_dimension_numbers<[1], [0], [0], [1], [0, 0, 1, 1], [], []>} : vector<128x32xf32>, vector<32x32xf32>, vector<128x32xf32> -> vector<128x32xf32>
    %491 = vector.broadcast %344 : vector<1x32xf32> to vector<128x32xf32>
    %492 = arith.addf %490, %491 : vector<128x32xf32>
    %cst_259 = arith.constant 0.000000e+00 : f32
    %493 = vector.broadcast %cst_259 : f32 to vector<128x32xf32>
    %494 = arith.maximumf %492, %493 : vector<128x32xf32>
    %c2_260 = arith.constant 2 : index
    %c0_261 = arith.constant 0 : index
    %c0_262 = arith.constant 0 : index
    %495 = vector.load %arg5[%c2_260, %c0_261, %c0_262] : memref<4x1x32xf32, #tpu.memory_space<vmem>>, vector<1x1x32xf32>
    %496 = vector.shape_cast %495 : vector<1x1x32xf32> to vector<1x32xf32>
    %497 = vector.broadcast %496 : vector<1x32xf32> to vector<128x32xf32>
    %498 = arith.mulf %494, %497 : vector<128x32xf32>
    %c2_263 = arith.constant 2 : index
    %c0_264 = arith.constant 0 : index
    %c0_265 = arith.constant 0 : index
    %499 = vector.load %arg6[%c2_263, %c0_264, %c0_265] : memref<4x1x32xf32, #tpu.memory_space<vmem>>, vector<1x1x32xf32>
    %500 = vector.shape_cast %499 : vector<1x1x32xf32> to vector<1x32xf32>
    %501 = vector.broadcast %500 : vector<1x32xf32> to vector<128x32xf32>
    %502 = arith.addf %498, %501 : vector<128x32xf32>
    %503 = vector.shape_cast %502 : vector<128x32xf32> to vector<8x16x32xf32>
    %c9_266 = arith.constant 9 : index
    %c1_267 = arith.constant 1 : index
    %c0_268 = arith.constant 0 : index
    %504 = vector.load %arg9[%c9_266, %c1_267, %c0_268] : memref<18x18x32xf32, #tpu.memory_space<vmem>>, vector<8x16x32xf32>
    tpu.vector_store %arg9[%c9_266, %c1_267, %c0_268], %503 {strides = array<i32>} : memref<18x18x32xf32, #tpu.memory_space<vmem>>, vector<8x16x32xf32>,
    %c3 = arith.constant 3 : index
    %c0_269 = arith.constant 0 : index
    %c0_270 = arith.constant 0 : index
    %505 = vector.load %arg2[%c3, %c0_269, %c0_270] : memref<4x9x32xf32, #tpu.memory_space<vmem>>, vector<1x9x32xf32>
    %506 = vector.shape_cast %505 : vector<1x9x32xf32> to vector<9x32xf32>
    %c3_271 = arith.constant 3 : index
    %c0_272 = arith.constant 0 : index
    %c0_273 = arith.constant 0 : index
    %507 = vector.load %arg3[%c3_271, %c0_272, %c0_273] : memref<4x32x32xf32, #tpu.memory_space<vmem>>, vector<1x32x32xf32>
    %508 = vector.shape_cast %507 : vector<1x32x32xf32> to vector<32x32xf32>
    %c3_274 = arith.constant 3 : index
    %c0_275 = arith.constant 0 : index
    %c0_276 = arith.constant 0 : index
    %509 = vector.load %arg4[%c3_274, %c0_275, %c0_276] : memref<4x1x32xf32, #tpu.memory_space<vmem>>, vector<1x1x32xf32>
    %510 = vector.shape_cast %509 : vector<1x1x32xf32> to vector<1x32xf32>
    %cst_277 = arith.constant 0.000000e+00 : f32
    %511 = vector.broadcast %cst_277 : f32 to vector<8x16x32xf32>
    %c0_278 = arith.constant 0 : index
    %c0_279 = arith.constant 0 : index
    %c0_280 = arith.constant 0 : index
    %512 = vector.load %arg9[%c0_278, %c0_279, %c0_280] : memref<18x18x32xf32, #tpu.memory_space<vmem>>, vector<8x16x32xf32>
    %513 = vector.extract_strided_slice %506 {offsets = [0, 0], sizes = [1, 32], strides = [1, 1]} : vector<9x32xf32> to vector<1x32xf32>
    %514 = vector.shape_cast %513 : vector<1x32xf32> to vector<32xf32>
    %515 = vector.shape_cast %514 : vector<32xf32> to vector<1x1x32xf32>
    %516 = vector.broadcast %515 : vector<1x1x32xf32> to vector<8x16x32xf32>
    %517 = arith.mulf %512, %516 : vector<8x16x32xf32>
    %518 = arith.addf %511, %517 : vector<8x16x32xf32>
    %c0_281 = arith.constant 0 : index
    %c1_282 = arith.constant 1 : index
    %c0_283 = arith.constant 0 : index
    %519 = vector.load %arg9[%c0_281, %c1_282, %c0_283] : memref<18x18x32xf32, #tpu.memory_space<vmem>>, vector<8x16x32xf32>
    %520 = vector.extract_strided_slice %506 {offsets = [1, 0], sizes = [1, 32], strides = [1, 1]} : vector<9x32xf32> to vector<1x32xf32>
    %521 = vector.shape_cast %520 : vector<1x32xf32> to vector<32xf32>
    %522 = vector.shape_cast %521 : vector<32xf32> to vector<1x1x32xf32>
    %523 = vector.broadcast %522 : vector<1x1x32xf32> to vector<8x16x32xf32>
    %524 = arith.mulf %519, %523 : vector<8x16x32xf32>
    %525 = arith.addf %518, %524 : vector<8x16x32xf32>
    %c0_284 = arith.constant 0 : index
    %c2_285 = arith.constant 2 : index
    %c0_286 = arith.constant 0 : index
    %526 = vector.load %arg9[%c0_284, %c2_285, %c0_286] : memref<18x18x32xf32, #tpu.memory_space<vmem>>, vector<8x16x32xf32>
    %527 = vector.extract_strided_slice %506 {offsets = [2, 0], sizes = [1, 32], strides = [1, 1]} : vector<9x32xf32> to vector<1x32xf32>
    %528 = vector.shape_cast %527 : vector<1x32xf32> to vector<32xf32>
    %529 = vector.shape_cast %528 : vector<32xf32> to vector<1x1x32xf32>
    %530 = vector.broadcast %529 : vector<1x1x32xf32> to vector<8x16x32xf32>
    %531 = arith.mulf %526, %530 : vector<8x16x32xf32>
    %532 = arith.addf %525, %531 : vector<8x16x32xf32>
    %c1_287 = arith.constant 1 : index
    %c0_288 = arith.constant 0 : index
    %c0_289 = arith.constant 0 : index
    %533 = vector.load %arg9[%c1_287, %c0_288, %c0_289] : memref<18x18x32xf32, #tpu.memory_space<vmem>>, vector<8x16x32xf32>
    %534 = vector.extract_strided_slice %506 {offsets = [3, 0], sizes = [1, 32], strides = [1, 1]} : vector<9x32xf32> to vector<1x32xf32>
    %535 = vector.shape_cast %534 : vector<1x32xf32> to vector<32xf32>
    %536 = vector.shape_cast %535 : vector<32xf32> to vector<1x1x32xf32>
    %537 = vector.broadcast %536 : vector<1x1x32xf32> to vector<8x16x32xf32>
    %538 = arith.mulf %533, %537 : vector<8x16x32xf32>
    %539 = arith.addf %532, %538 : vector<8x16x32xf32>
    %c1_290 = arith.constant 1 : index
    %c1_291 = arith.constant 1 : index
    %c0_292 = arith.constant 0 : index
    %540 = vector.load %arg9[%c1_290, %c1_291, %c0_292] : memref<18x18x32xf32, #tpu.memory_space<vmem>>, vector<8x16x32xf32>
    %541 = vector.extract_strided_slice %506 {offsets = [4, 0], sizes = [1, 32], strides = [1, 1]} : vector<9x32xf32> to vector<1x32xf32>
    %542 = vector.shape_cast %541 : vector<1x32xf32> to vector<32xf32>
    %543 = vector.shape_cast %542 : vector<32xf32> to vector<1x1x32xf32>
    %544 = vector.broadcast %543 : vector<1x1x32xf32> to vector<8x16x32xf32>
    %545 = arith.mulf %540, %544 : vector<8x16x32xf32>
    %546 = arith.addf %539, %545 : vector<8x16x32xf32>
    %c1_293 = arith.constant 1 : index
    %c2_294 = arith.constant 2 : index
    %c0_295 = arith.constant 0 : index
    %547 = vector.load %arg9[%c1_293, %c2_294, %c0_295] : memref<18x18x32xf32, #tpu.memory_space<vmem>>, vector<8x16x32xf32>
    %548 = vector.extract_strided_slice %506 {offsets = [5, 0], sizes = [1, 32], strides = [1, 1]} : vector<9x32xf32> to vector<1x32xf32>
    %549 = vector.shape_cast %548 : vector<1x32xf32> to vector<32xf32>
    %550 = vector.shape_cast %549 : vector<32xf32> to vector<1x1x32xf32>
    %551 = vector.broadcast %550 : vector<1x1x32xf32> to vector<8x16x32xf32>
    %552 = arith.mulf %547, %551 : vector<8x16x32xf32>
    %553 = arith.addf %546, %552 : vector<8x16x32xf32>
    %c2_296 = arith.constant 2 : index
    %c0_297 = arith.constant 0 : index
    %c0_298 = arith.constant 0 : index
    %554 = vector.load %arg9[%c2_296, %c0_297, %c0_298] : memref<18x18x32xf32, #tpu.memory_space<vmem>>, vector<8x16x32xf32>
    %555 = vector.extract_strided_slice %506 {offsets = [6, 0], sizes = [1, 32], strides = [1, 1]} : vector<9x32xf32> to vector<1x32xf32>
    %556 = vector.shape_cast %555 : vector<1x32xf32> to vector<32xf32>
    %557 = vector.shape_cast %556 : vector<32xf32> to vector<1x1x32xf32>
    %558 = vector.broadcast %557 : vector<1x1x32xf32> to vector<8x16x32xf32>
    %559 = arith.mulf %554, %558 : vector<8x16x32xf32>
    %560 = arith.addf %553, %559 : vector<8x16x32xf32>
    %c2_299 = arith.constant 2 : index
    %c1_300 = arith.constant 1 : index
    %c0_301 = arith.constant 0 : index
    %561 = vector.load %arg9[%c2_299, %c1_300, %c0_301] : memref<18x18x32xf32, #tpu.memory_space<vmem>>, vector<8x16x32xf32>
    %562 = vector.extract_strided_slice %506 {offsets = [7, 0], sizes = [1, 32], strides = [1, 1]} : vector<9x32xf32> to vector<1x32xf32>
    %563 = vector.shape_cast %562 : vector<1x32xf32> to vector<32xf32>
    %564 = vector.shape_cast %563 : vector<32xf32> to vector<1x1x32xf32>
    %565 = vector.broadcast %564 : vector<1x1x32xf32> to vector<8x16x32xf32>
    %566 = arith.mulf %561, %565 : vector<8x16x32xf32>
    %567 = arith.addf %560, %566 : vector<8x16x32xf32>
    %c2_302 = arith.constant 2 : index
    %c2_303 = arith.constant 2 : index
    %c0_304 = arith.constant 0 : index
    %568 = vector.load %arg9[%c2_302, %c2_303, %c0_304] : memref<18x18x32xf32, #tpu.memory_space<vmem>>, vector<8x16x32xf32>
    %569 = vector.extract_strided_slice %506 {offsets = [8, 0], sizes = [1, 32], strides = [1, 1]} : vector<9x32xf32> to vector<1x32xf32>
    %570 = vector.shape_cast %569 : vector<1x32xf32> to vector<32xf32>
    %571 = vector.shape_cast %570 : vector<32xf32> to vector<1x1x32xf32>
    %572 = vector.broadcast %571 : vector<1x1x32xf32> to vector<8x16x32xf32>
    %573 = arith.mulf %568, %572 : vector<8x16x32xf32>
    %574 = arith.addf %567, %573 : vector<8x16x32xf32>
    %575 = vector.shape_cast %574 : vector<8x16x32xf32> to vector<128x32xf32>
    %cst_305 = arith.constant dense<0.000000e+00> : vector<128x32xf32>
    %576 = tpu.matmul %575, %508, %cst_305 {dimension_numbers = #tpu.dot_dimension_numbers<[1], [0], [0], [1], [0, 0, 1, 1], [], []>} : vector<128x32xf32>, vector<32x32xf32>, vector<128x32xf32> -> vector<128x32xf32>
    %577 = vector.broadcast %510 : vector<1x32xf32> to vector<128x32xf32>
    %578 = arith.addf %576, %577 : vector<128x32xf32>
    %579 = vector.shape_cast %578 : vector<128x32xf32> to vector<8x16x32xf32>
    %c0_306 = arith.constant 0 : index
    %c0_307 = arith.constant 0 : index
    %c0_308 = arith.constant 0 : index
    %c0_309 = arith.constant 0 : index
    %580 = vector.load %arg7[%c0_306, %c0_307, %c0_308, %c0_309] : memref<1x16x16x32xf32, #tpu.memory_space<vmem>>, vector<1x8x16x32xf32>
    %581 = vector.shape_cast %580 : vector<1x8x16x32xf32> to vector<8x16x32xf32>
    %582 = vector.shape_cast %579 : vector<8x16x32xf32> to vector<1x8x16x32xf32>
    tpu.vector_store %arg7[%c0_306, %c0_307, %c0_308, %c0_309], %582 {strides = array<i32>} : memref<1x16x16x32xf32, #tpu.memory_space<vmem>>, vector<1x8x16x32xf32>,
    %cst_310 = arith.constant 0.000000e+00 : f32
    %583 = vector.broadcast %cst_310 : f32 to vector<8x16x32xf32>
    %c8_311 = arith.constant 8 : index
    %c0_312 = arith.constant 0 : index
    %c0_313 = arith.constant 0 : index
    %584 = vector.load %arg9[%c8_311, %c0_312, %c0_313] : memref<18x18x32xf32, #tpu.memory_space<vmem>>, vector<8x16x32xf32>
    %585 = vector.extract_strided_slice %506 {offsets = [0, 0], sizes = [1, 32], strides = [1, 1]} : vector<9x32xf32> to vector<1x32xf32>
    %586 = vector.shape_cast %585 : vector<1x32xf32> to vector<32xf32>
    %587 = vector.shape_cast %586 : vector<32xf32> to vector<1x1x32xf32>
    %588 = vector.broadcast %587 : vector<1x1x32xf32> to vector<8x16x32xf32>
    %589 = arith.mulf %584, %588 : vector<8x16x32xf32>
    %590 = arith.addf %583, %589 : vector<8x16x32xf32>
    %c8_314 = arith.constant 8 : index
    %c1_315 = arith.constant 1 : index
    %c0_316 = arith.constant 0 : index
    %591 = vector.load %arg9[%c8_314, %c1_315, %c0_316] : memref<18x18x32xf32, #tpu.memory_space<vmem>>, vector<8x16x32xf32>
    %592 = vector.extract_strided_slice %506 {offsets = [1, 0], sizes = [1, 32], strides = [1, 1]} : vector<9x32xf32> to vector<1x32xf32>
    %593 = vector.shape_cast %592 : vector<1x32xf32> to vector<32xf32>
    %594 = vector.shape_cast %593 : vector<32xf32> to vector<1x1x32xf32>
    %595 = vector.broadcast %594 : vector<1x1x32xf32> to vector<8x16x32xf32>
    %596 = arith.mulf %591, %595 : vector<8x16x32xf32>
    %597 = arith.addf %590, %596 : vector<8x16x32xf32>
    %c8_317 = arith.constant 8 : index
    %c2_318 = arith.constant 2 : index
    %c0_319 = arith.constant 0 : index
    %598 = vector.load %arg9[%c8_317, %c2_318, %c0_319] : memref<18x18x32xf32, #tpu.memory_space<vmem>>, vector<8x16x32xf32>
    %599 = vector.extract_strided_slice %506 {offsets = [2, 0], sizes = [1, 32], strides = [1, 1]} : vector<9x32xf32> to vector<1x32xf32>
    %600 = vector.shape_cast %599 : vector<1x32xf32> to vector<32xf32>
    %601 = vector.shape_cast %600 : vector<32xf32> to vector<1x1x32xf32>
    %602 = vector.broadcast %601 : vector<1x1x32xf32> to vector<8x16x32xf32>
    %603 = arith.mulf %598, %602 : vector<8x16x32xf32>
    %604 = arith.addf %597, %603 : vector<8x16x32xf32>
    %c9_320 = arith.constant 9 : index
    %c0_321 = arith.constant 0 : index
    %c0_322 = arith.constant 0 : index
    %605 = vector.load %arg9[%c9_320, %c0_321, %c0_322] : memref<18x18x32xf32, #tpu.memory_space<vmem>>, vector<8x16x32xf32>
    %606 = vector.extract_strided_slice %506 {offsets = [3, 0], sizes = [1, 32], strides = [1, 1]} : vector<9x32xf32> to vector<1x32xf32>
    %607 = vector.shape_cast %606 : vector<1x32xf32> to vector<32xf32>
    %608 = vector.shape_cast %607 : vector<32xf32> to vector<1x1x32xf32>
    %609 = vector.broadcast %608 : vector<1x1x32xf32> to vector<8x16x32xf32>
    %610 = arith.mulf %605, %609 : vector<8x16x32xf32>
    %611 = arith.addf %604, %610 : vector<8x16x32xf32>
    %c9_323 = arith.constant 9 : index
    %c1_324 = arith.constant 1 : index
    %c0_325 = arith.constant 0 : index
    %612 = vector.load %arg9[%c9_323, %c1_324, %c0_325] : memref<18x18x32xf32, #tpu.memory_space<vmem>>, vector<8x16x32xf32>
    %613 = vector.extract_strided_slice %506 {offsets = [4, 0], sizes = [1, 32], strides = [1, 1]} : vector<9x32xf32> to vector<1x32xf32>
    %614 = vector.shape_cast %613 : vector<1x32xf32> to vector<32xf32>
    %615 = vector.shape_cast %614 : vector<32xf32> to vector<1x1x32xf32>
    %616 = vector.broadcast %615 : vector<1x1x32xf32> to vector<8x16x32xf32>
    %617 = arith.mulf %612, %616 : vector<8x16x32xf32>
    %618 = arith.addf %611, %617 : vector<8x16x32xf32>
    %c9_326 = arith.constant 9 : index
    %c2_327 = arith.constant 2 : index
    %c0_328 = arith.constant 0 : index
    %619 = vector.load %arg9[%c9_326, %c2_327, %c0_328] : memref<18x18x32xf32, #tpu.memory_space<vmem>>, vector<8x16x32xf32>
    %620 = vector.extract_strided_slice %506 {offsets = [5, 0], sizes = [1, 32], strides = [1, 1]} : vector<9x32xf32> to vector<1x32xf32>
    %621 = vector.shape_cast %620 : vector<1x32xf32> to vector<32xf32>
    %622 = vector.shape_cast %621 : vector<32xf32> to vector<1x1x32xf32>
    %623 = vector.broadcast %622 : vector<1x1x32xf32> to vector<8x16x32xf32>
    %624 = arith.mulf %619, %623 : vector<8x16x32xf32>
    %625 = arith.addf %618, %624 : vector<8x16x32xf32>
    %c10_329 = arith.constant 10 : index
    %c0_330 = arith.constant 0 : index
    %c0_331 = arith.constant 0 : index
    %626 = vector.load %arg9[%c10_329, %c0_330, %c0_331] : memref<18x18x32xf32, #tpu.memory_space<vmem>>, vector<8x16x32xf32>
    %627 = vector.extract_strided_slice %506 {offsets = [6, 0], sizes = [1, 32], strides = [1, 1]} : vector<9x32xf32> to vector<1x32xf32>
    %628 = vector.shape_cast %627 : vector<1x32xf32> to vector<32xf32>
    %629 = vector.shape_cast %628 : vector<32xf32> to vector<1x1x32xf32>
    %630 = vector.broadcast %629 : vector<1x1x32xf32> to vector<8x16x32xf32>
    %631 = arith.mulf %626, %630 : vector<8x16x32xf32>
    %632 = arith.addf %625, %631 : vector<8x16x32xf32>
    %c10_332 = arith.constant 10 : index
    %c1_333 = arith.constant 1 : index
    %c0_334 = arith.constant 0 : index
    %633 = vector.load %arg9[%c10_332, %c1_333, %c0_334] : memref<18x18x32xf32, #tpu.memory_space<vmem>>, vector<8x16x32xf32>
    %634 = vector.extract_strided_slice %506 {offsets = [7, 0], sizes = [1, 32], strides = [1, 1]} : vector<9x32xf32> to vector<1x32xf32>
    %635 = vector.shape_cast %634 : vector<1x32xf32> to vector<32xf32>
    %636 = vector.shape_cast %635 : vector<32xf32> to vector<1x1x32xf32>
    %637 = vector.broadcast %636 : vector<1x1x32xf32> to vector<8x16x32xf32>
    %638 = arith.mulf %633, %637 : vector<8x16x32xf32>
    %639 = arith.addf %632, %638 : vector<8x16x32xf32>
    %c10_335 = arith.constant 10 : index
    %c2_336 = arith.constant 2 : index
    %c0_337 = arith.constant 0 : index
    %640 = vector.load %arg9[%c10_335, %c2_336, %c0_337] : memref<18x18x32xf32, #tpu.memory_space<vmem>>, vector<8x16x32xf32>
    %641 = vector.extract_strided_slice %506 {offsets = [8, 0], sizes = [1, 32], strides = [1, 1]} : vector<9x32xf32> to vector<1x32xf32>
    %642 = vector.shape_cast %641 : vector<1x32xf32> to vector<32xf32>
    %643 = vector.shape_cast %642 : vector<32xf32> to vector<1x1x32xf32>
    %644 = vector.broadcast %643 : vector<1x1x32xf32> to vector<8x16x32xf32>
    %645 = arith.mulf %640, %644 : vector<8x16x32xf32>
    %646 = arith.addf %639, %645 : vector<8x16x32xf32>
    %647 = vector.shape_cast %646 : vector<8x16x32xf32> to vector<128x32xf32>
    %cst_338 = arith.constant dense<0.000000e+00> : vector<128x32xf32>
    %648 = tpu.matmul %647, %508, %cst_338 {dimension_numbers = #tpu.dot_dimension_numbers<[1], [0], [0], [1], [0, 0, 1, 1], [], []>} : vector<128x32xf32>, vector<32x32xf32>, vector<128x32xf32> -> vector<128x32xf32>
    %649 = vector.broadcast %510 : vector<1x32xf32> to vector<128x32xf32>
    %650 = arith.addf %648, %649 : vector<128x32xf32>
    %651 = vector.shape_cast %650 : vector<128x32xf32> to vector<8x16x32xf32>
    %c0_339 = arith.constant 0 : index
    %c8_340 = arith.constant 8 : index
    %c0_341 = arith.constant 0 : index
    %c0_342 = arith.constant 0 : index
    %652 = vector.load %arg7[%c0_339, %c8_340, %c0_341, %c0_342] : memref<1x16x16x32xf32, #tpu.memory_space<vmem>>, vector<1x8x16x32xf32>
    %653 = vector.shape_cast %652 : vector<1x8x16x32xf32> to vector<8x16x32xf32>
    %654 = vector.shape_cast %651 : vector<8x16x32xf32> to vector<1x8x16x32xf32>
    tpu.vector_store %arg7[%c0_339, %c8_340, %c0_341, %c0_342], %654 {strides = array<i32>} : memref<1x16x16x32xf32, #tpu.memory_space<vmem>>, vector<1x8x16x32xf32>,
    return
  }
  func.func @transform_0(%arg0: i32) -> (i32, i32, i32, i32) {
    %c0_i32 = arith.constant 0 : i32
    %c0_i32_0 = arith.constant 0 : i32
    %c0_i32_1 = arith.constant 0 : i32
    %c0_i32_2 = arith.constant 0 : i32
    return %arg0, %c0_i32, %c0_i32_0, %c0_i32_1 : i32, i32, i32, i32
  }
  func.func @transform_1(%arg0: i32) -> (i32, i32, i32) {
    %c0_i32 = arith.constant 0 : i32
    %c0_i32_0 = arith.constant 0 : i32
    %c0_i32_1 = arith.constant 0 : i32
    %c0_i32_2 = arith.constant 0 : i32
    return %c0_i32, %c0_i32_0, %c0_i32_1 : i32, i32, i32
  }
  func.func @transform_2(%arg0: i32) -> (i32, i32, i32) {
    %c0_i32 = arith.constant 0 : i32
    %c0_i32_0 = arith.constant 0 : i32
    %c0_i32_1 = arith.constant 0 : i32
    %c0_i32_2 = arith.constant 0 : i32
    return %c0_i32, %c0_i32_0, %c0_i32_1 : i32, i32, i32
  }
  func.func @transform_3(%arg0: i32) -> (i32, i32, i32) {
    %c0_i32 = arith.constant 0 : i32
    %c0_i32_0 = arith.constant 0 : i32
    %c0_i32_1 = arith.constant 0 : i32
    %c0_i32_2 = arith.constant 0 : i32
    return %c0_i32, %c0_i32_0, %c0_i32_1 : i32, i32, i32
  }
  func.func @transform_4(%arg0: i32) -> (i32, i32, i32) {
    %c0_i32 = arith.constant 0 : i32
    %c0_i32_0 = arith.constant 0 : i32
    %c0_i32_1 = arith.constant 0 : i32
    %c0_i32_2 = arith.constant 0 : i32
    return %c0_i32, %c0_i32_0, %c0_i32_1 : i32, i32, i32
  }
  func.func @transform_5(%arg0: i32) -> (i32, i32, i32) {
    %c0_i32 = arith.constant 0 : i32
    %c0_i32_0 = arith.constant 0 : i32
    %c0_i32_1 = arith.constant 0 : i32
    %c0_i32_2 = arith.constant 0 : i32
    return %c0_i32, %c0_i32_0, %c0_i32_1 : i32, i32, i32
  }
  func.func @transform_6(%arg0: i32) -> (i32, i32, i32, i32) {
    %c0_i32 = arith.constant 0 : i32
    %c0_i32_0 = arith.constant 0 : i32
    %c0_i32_1 = arith.constant 0 : i32
    %c0_i32_2 = arith.constant 0 : i32
    return %arg0, %c0_i32, %c0_i32_0, %c0_i32_1 : i32, i32, i32, i32
  }
}

</mosaic_0001>

<llo_original>
// kernel: tpu_custom_call.1
$region0: #{tpu_custom_call.1}
  #allocation0 [shape = 'u32[]', space=smem, size = 0x4, offset = 0x4, fixed_abs, tag = 'smem constant byte address 0x4 - core index']
  #allocation1 [shape = 'u32[144,128]{1,0:T(1,128)}', space=vmem, size = 0x12000, scoped, tag = 'internal scratch']
  #allocation2 [shape = 'f32[18,18,32]{2,1,0:T(8,128)}', space=vmem, size = 0x36000, scoped, tag = 'scratch operand']
  #allocation3 [shape = 'f32[18,18,32]{2,1,0:T(8,128)}', space=vmem, size = 0x36000, scoped, tag = 'scratch operand']
  %s0 = inlined_call_operand.hbm [shape: f32[2,16,16,32], index: 0, kind: input, shape index: {}]
  %s1 = inlined_call_operand.vmem [shape: f32[4,9,32], index: 1, kind: input, shape index: {}]
  %s2 = inlined_call_operand.hbm [shape: f32[4,32,32], index: 2, kind: input, shape index: {}]
  %s3 = inlined_call_operand.vmem [shape: f32[4,1,32], index: 3, kind: input, shape index: {}]
  %s4 = inlined_call_operand.vmem [shape: f32[4,1,32], index: 4, kind: input, shape index: {}]
  %s5 = inlined_call_operand.vmem [shape: f32[4,1,32], index: 5, kind: input, shape index: {}]
  %s6 = inlined_call_operand.hbm [shape: f32[2,16,16,32], index: 6, kind: output, shape index: {}]
  %s7 = sld [smem:[#allocation0]]
  $region65: #{tpu_custom_call.1} parent=0
    _
  %s9 = ssub.s32 1, %s7
  %s10 = scalar_select 0, %s9, %s7
  $region1: #{tpu_custom_call.1} parent=0
    #allocation4 [shape = 'u8[262144]{0}', space=vmem, size = 0x40000, scoped, tag = 'input window, operand 0']
    #allocation5 [shape = 's32[2]{0}', space=sflag, size = 0x8, scoped, tag = 'scoped memory for tpu_custom_call.1']
    #allocation6 [shape = 's32[2]{0}', space=sflag, size = 0x8, scoped, tag = 'scoped memory for tpu_custom_call.1']
    #allocation7 [shape = 'u8[65536]{0}', space=vmem, size = 0x10000, scoped, tag = 'input window, operand 2, single buffered']
    #allocation8 [shape = 's32[1]{0}', space=sflag, size = 0x4, scoped, tag = 'scoped memory for tpu_custom_call.1']
    #allocation9 [shape = 'u8[262144]{0}', space=vmem, size = 0x40000, scoped, tag = 'output window, operand 0']
    %11 = vsyncpa [#allocation5], 0
    %s12 = scalar_lea.sflag [#allocation5], 1
    %13 = vsyncpa %s12, 0
    %14 = vsyncpa [#allocation8], 0
    %15 = vsyncpa [#allocation6], 0
    %s16 = scalar_lea.sflag [#allocation6], 1
    %17 = vsyncpa %s16, 0
    loop: start=0, step=1, limit=4
    $region2: #{tpu_custom_call.1} parent=1 // loop_pre_header
      _
    $region3: #{tpu_custom_call.1} parent=1 // loop_header
      %s19 = sphi 0, %s23
      %p20 = scmp.ge.s32.totalorder %s19, 4
      %s29 = sphi 0, %s31
      %s32 = sphi 0, %s29
      %s33 = sphi 0, %s32
      %s49 = sphi 0, %s33
      %s53 = sphi 0, %s53
      %s55 = sphi 0, %s53
      %s56 = sphi 0, %s55
      %s70 = sphi 0, %s56
      %s74 = sphi 0, %s74
      %s76 = sphi 0, %s74
      %s77 = sphi 0, %s76
      %s91 = sphi 0, %s77
      %s95 = sphi 0, %s95
      %s97 = sphi 0, %s95
      %s98 = sphi 0, %s97
      %s112 = sphi 0, %s98
      %s116 = sphi 0, %s116
      %s118 = sphi 0, %s116
      %s119 = sphi 0, %s118
      %s133 = sphi 0, %s119
      %s137 = sphi 0, %s137
      %s139 = sphi 0, %s137
      %s140 = sphi 0, %s139
      %s154 = sphi 0, %s140
      %s160 = sphi 0, %s162
      %s163 = sphi 0, %s160
      %s164 = sphi 0, %s163
      %s180 = sphi 0, %s164
    $region4: #{tpu_custom_call.1} parent=1 // loop_header_branch
      %22 = sbr.rel (%p20) target = $region8
    $region5: #{tpu_custom_call.1} parent=1 // loop_body
      %s24 = ssub.s32 %s19, 1
      %s25 = ssub.s32 %s19, 2
      %s26 = sadd.s32 %s19, 1
      %s27 = ssub.s32 %s19, %s26
      %p28 = scmp.eq.s32.totalorder %s27, 0
      %s30 = sadd.s32 %s29, 1
      %s31 = scalar_select %p28, %s29, %s30
      %p34 = pneg %p28
      %p35 = scmp.eq.s32.totalorder %s19, 1
      %p36 = por %p34, %p35
      %p37 = scmp.ne.s32.totalorder %s29, %s32
      %p38 = scmp.eq.s32.totalorder %s19, 0
      %p39 = por %p37, %p38
      %p40 = scmp.ne.s32.totalorder %s29, %s32
      %p41 = scmp.eq.s32.totalorder %s24, 1
      %p42 = por %p40, %p41
      %p43 = scmp.ne.s32.totalorder %s32, %s33
      %p44 = scmp.eq.s32.totalorder %s24, 0
      %p45 = por %p43, %p44
      %p46 = scmp.ne.s32.totalorder %s32, %s33
      %p47 = scmp.eq.s32.totalorder %s25, 1
      %p48 = por %p46, %p47
      %p50 = scmp.ne.s32.totalorder %s33, %s49
      %p51 = scmp.eq.s32.totalorder %s25, 0
      %p52 = por %p50, %p51
      %s54 = sadd.s32 %s53, 1
      %p57 = scmp.eq.s32.totalorder %s19, 1
      %p58 = scmp.ne.s32.totalorder %s53, %s55
      %p59 = scmp.eq.s32.totalorder %s19, 0
      %p60 = por %p58, %p59
      %p61 = scmp.ne.s32.totalorder %s53, %s55
      %p62 = scmp.eq.s32.totalorder %s24, 1
      %p63 = por %p61, %p62
      %p64 = scmp.ne.s32.totalorder %s55, %s56
      %p65 = scmp.eq.s32.totalorder %s24, 0
      %p66 = por %p64, %p65
      %p67 = scmp.ne.s32.totalorder %s55, %s56
      %p68 = scmp.eq.s32.totalorder %s25, 1
      %p69 = por %p67, %p68
      %p71 = scmp.ne.s32.totalorder %s56, %s70
      %p72 = scmp.eq.s32.totalorder %s25, 0
      %p73 = por %p71, %p72
      %s75 = sadd.s32 %s74, 1
      %p78 = scmp.eq.s32.totalorder %s19, 1
      %p79 = scmp.ne.s32.totalorder %s74, %s76
      %p80 = scmp.eq.s32.totalorder %s19, 0
      %p81 = por %p79, %p80
      %p82 = scmp.ne.s32.totalorder %s74, %s76
      %p83 = scmp.eq.s32.totalorder %s24, 1
      %p84 = por %p82, %p83
      %p85 = scmp.ne.s32.totalorder %s76, %s77
      %p86 = scmp.eq.s32.totalorder %s24, 0
      %p87 = por %p85, %p86
      %p88 = scmp.ne.s32.totalorder %s76, %s77
      %p89 = scmp.eq.s32.totalorder %s25, 1
      %p90 = por %p88, %p89
      %p92 = scmp.ne.s32.totalorder %s77, %s91
      %p93 = scmp.eq.s32.totalorder %s25, 0
      %p94 = por %p92, %p93
      %s96 = sadd.s32 %s95, 1
      %p99 = scmp.eq.s32.totalorder %s19, 1
      %p100 = scmp.ne.s32.totalorder %s95, %s97
      %p101 = scmp.eq.s32.totalorder %s19, 0
      %p102 = por %p100, %p101
      %p103 = scmp.ne.s32.totalorder %s95, %s97
      %p104 = scmp.eq.s32.totalorder %s24, 1
      %p105 = por %p103, %p104
      %p106 = scmp.ne.s32.totalorder %s97, %s98
      %p107 = scmp.eq.s32.totalorder %s24, 0
      %p108 = por %p106, %p107
      %p109 = scmp.ne.s32.totalorder %s97, %s98
      %p110 = scmp.eq.s32.totalorder %s25, 1
      %p111 = por %p109, %p110
      %p113 = scmp.ne.s32.totalorder %s98, %s112
      %p114 = scmp.eq.s32.totalorder %s25, 0
      %p115 = por %p113, %p114
      %s117 = sadd.s32 %s116, 1
      %p120 = scmp.eq.s32.totalorder %s19, 1
      %p121 = scmp.ne.s32.totalorder %s116, %s118
      %p122 = scmp.eq.s32.totalorder %s19, 0
      %p123 = por %p121, %p122
      %p124 = scmp.ne.s32.totalorder %s116, %s118
      %p125 = scmp.eq.s32.totalorder %s24, 1
      %p126 = por %p124, %p125
      %p127 = scmp.ne.s32.totalorder %s118, %s119
      %p128 = scmp.eq.s32.totalorder %s24, 0
      %p129 = por %p127, %p128
      %p130 = scmp.ne.s32.totalorder %s118, %s119
      %p131 = scmp.eq.s32.totalorder %s25, 1
      %p132 = por %p130, %p131
      %p134 = scmp.ne.s32.totalorder %s119, %s133
      %p135 = scmp.eq.s32.totalorder %s25, 0
      %p136 = por %p134, %p135
      %s138 = sadd.s32 %s137, 1
      %p141 = scmp.eq.s32.totalorder %s19, 1
      %p142 = scmp.ne.s32.totalorder %s137, %s139
      %p143 = scmp.eq.s32.totalorder %s19, 0
      %p144 = por %p142, %p143
      %p145 = scmp.ne.s32.totalorder %s137, %s139
      %p146 = scmp.eq.s32.totalorder %s24, 1
      %p147 = por %p145, %p146
      %p148 = scmp.ne.s32.totalorder %s139, %s140
      %p149 = scmp.eq.s32.totalorder %s24, 0
      %p150 = por %p148, %p149
      %p151 = scmp.ne.s32.totalorder %s139, %s140
      %p152 = scmp.eq.s32.totalorder %s25, 1
      %p153 = por %p151, %p152
      %p155 = scmp.ne.s32.totalorder %s140, %s154
      %p156 = scmp.eq.s32.totalorder %s25, 0
      %p157 = por %p155, %p156
      %s158 = ssub.s32 %s19, %s26
      %p159 = scmp.eq.s32.totalorder %s158, 0
      %s161 = sadd.s32 %s160, 1
      %s162 = scalar_select %p159, %s160, %s161
      %p165 = pneg %p159
      %p166 = scmp.eq.s32.totalorder %s19, 1
      %p167 = por %p165, %p166
      %p168 = scmp.ne.s32.totalorder %s160, %s163
      %p169 = scmp.eq.s32.totalorder %s19, 0
      %p170 = por %p168, %p169
      %p171 = scmp.ne.s32.totalorder %s160, %s163
      %p172 = scmp.eq.s32.totalorder %s24, 1
      %p173 = por %p171, %p172
      %p174 = scmp.ne.s32.totalorder %s163, %s164
      %p175 = scmp.eq.s32.totalorder %s24, 0
      %p176 = por %p174, %p175
      %p177 = scmp.ne.s32.totalorder %s163, %s164
      %p178 = scmp.eq.s32.totalorder %s25, 1
      %p179 = por %p177, %p178
      %p181 = scmp.ne.s32.totalorder %s164, %s180
      %p182 = scmp.eq.s32.totalorder %s25, 0
      %p183 = por %p181, %p182
      %p184 = scmp.le.s32.totalorder 1, %s19
      %p185 = scmp.lt.s32.totalorder %s19, 3
      %p186 = pnand %p184, %p185
      %p187 = pneg %p186
      // Predicated region
      $region9: #{tpu_custom_call.1} parent=5 // pred_check
        _
      $region10: #{tpu_custom_call.1} parent=5 // pred_check_branch
        %189 = sbr.rel (%p186) target = $region12
      $region11: #{tpu_custom_call.1} parent=5 // pred_region
        %s190 = ssub.s32 %s19, 1
        // Predicated region
        $region13: #{tpu_custom_call.1} parent=11 // pred_check
          %p191 = pneg %p66
        $region14: #{tpu_custom_call.1} parent=11 // pred_check_branch
          %193 = sbr.rel (%p191) target = $region16
        $region15: #{tpu_custom_call.1} parent=11 // pred_region
          _
        $region16: #{tpu_custom_call.1} parent=11 // pred_fallthru
          _
        // Predicated region
        $region17: #{tpu_custom_call.1} parent=11 // pred_check
          %p194 = pneg %p87
        $region18: #{tpu_custom_call.1} parent=11 // pred_check_branch
          %196 = sbr.rel (%p194) target = $region20
        $region19: #{tpu_custom_call.1} parent=11 // pred_region
          %s198 = ssub.s32 2048, 2048
          %199 = vsyncadd [#allocation8], %s198
          %s200 = sshll.u32 [#allocation7], 4
          %s201 = int_to_ptr.vmem [resolvable:$true] %s200
          %206 = dma.hbm_to_vmem [thread:$0]  %s2, 2048, %s201, [#allocation8], 128, 128, 8
        $region20: #{tpu_custom_call.1} parent=11 // pred_fallthru
          _
        // Predicated region
        $region21: #{tpu_custom_call.1} parent=11 // pred_check
          %p207 = pneg %p108
        $region22: #{tpu_custom_call.1} parent=11 // pred_check_branch
          %209 = sbr.rel (%p207) target = $region24
        $region23: #{tpu_custom_call.1} parent=11 // pred_region
          _
        $region24: #{tpu_custom_call.1} parent=11 // pred_fallthru
          _
        // Predicated region
        $region25: #{tpu_custom_call.1} parent=11 // pred_check
          %p210 = pneg %p129
        $region26: #{tpu_custom_call.1} parent=11 // pred_check_branch
          %212 = sbr.rel (%p210) target = $region28
        $region27: #{tpu_custom_call.1} parent=11 // pred_region
          _
        $region28: #{tpu_custom_call.1} parent=11 // pred_fallthru
          _
        // Predicated region
        $region29: #{tpu_custom_call.1} parent=11 // pred_check
          %p213 = pneg %p150
        $region30: #{tpu_custom_call.1} parent=11 // pred_check_branch
          %215 = sbr.rel (%p213) target = $region32
        $region31: #{tpu_custom_call.1} parent=11 // pred_region
          _
        $region32: #{tpu_custom_call.1} parent=11 // pred_fallthru
          _
      $region12: #{tpu_custom_call.1} parent=5 // pred_fallthru
        _
      %p216 = scmp.lt.s32.totalorder %s19, 2
      // Predicated region
      $region33: #{tpu_custom_call.1} parent=5 // pred_check
        %p217 = pneg %p216
      $region34: #{tpu_custom_call.1} parent=5 // pred_check_branch
        %219 = sbr.rel (%p217) target = $region36
      $region35: #{tpu_custom_call.1} parent=5 // pred_region
        // Predicated region
        $region37: #{tpu_custom_call.1} parent=35 // pred_check
          %p220 = pneg %p39
        $region38: #{tpu_custom_call.1} parent=35 // pred_check_branch
          %222 = sbr.rel (%p220) target = $region40
        $region39: #{tpu_custom_call.1} parent=35 // pred_region
          %s223 = sand.u32 %s29, 1
          %s224 = scalar_lea.sflag [#allocation5], %s223
          %s225 = sand.u32 %s29, 1
          %s226 = smul.addr %s225, 256
          %s227 = scalar_lea.vmem [#allocation4], %s226
          %s229 = ssub.s32 4096, 4096
          %230 = vsyncadd %s224, %s229
          %s231 = smul.addr %s19, 32
          %s232 = smul.addr %s231, 128
          %s233 = scalar_lea.hbm %s0, %s232
          %s234 = sshll.u32 %s227, 4
          %s235 = int_to_ptr.vmem [resolvable:$true] %s234
          %240 = dma.hbm_to_vmem [thread:$0]  %s233, 4096, %s235, %s224, 128, 128, 8
        $region40: #{tpu_custom_call.1} parent=35 // pred_fallthru
          _
      $region36: #{tpu_custom_call.1} parent=5 // pred_fallthru
        _
      %p241 = scmp.le.s32.totalorder 1, %s19
      %p242 = scmp.lt.s32.totalorder %s19, 3
      %p243 = pnand %p241, %p242
      %p244 = pneg %p243
      // Predicated region
      $region41: #{tpu_custom_call.1} parent=5 // pred_check
        _
      $region42: #{tpu_custom_call.1} parent=5 // pred_check_branch
        %246 = sbr.rel (%p243) target = $region44
      $region43: #{tpu_custom_call.1} parent=5 // pred_region
        %s247 = ssub.s32 %s19, 1
        %s248 = sand.u32 %s32, 1
        %s249 = scalar_lea.sflag [#allocation5], %s248
        %s250 = sand.u32 %s32, 1
        %s251 = smul.addr %s250, 256
        %s252 = scalar_lea.vmem [#allocation4], %s251
        // Predicated region
        $region45: #{tpu_custom_call.1} parent=43 // pred_check
          %p253 = pneg %p45
        $region46: #{tpu_custom_call.1} parent=43 // pred_check_branch
          %255 = sbr.rel (%p253) target = $region48
        $region47: #{tpu_custom_call.1} parent=43 // pred_region
          %256 = dma.done %s249, 4096
        $region48: #{tpu_custom_call.1} parent=43 // pred_fallthru
          _
        // Predicated region
        $region49: #{tpu_custom_call.1} parent=43 // pred_check
          %p257 = pneg %p87
        $region50: #{tpu_custom_call.1} parent=43 // pred_check_branch
          %259 = sbr.rel (%p257) target = $region52
        $region51: #{tpu_custom_call.1} parent=43 // pred_region
          %260 = dma.done [#allocation8], 2048
        $region52: #{tpu_custom_call.1} parent=43 // pred_fallthru
          _
        %s261 = sand.u32 %s32, 1
        %s262 = scalar_lea.sflag [#allocation5], %s261
        %s263 = sand.u32 %s32, 1
        %s264 = smul.addr %s263, 256
        %s265 = scalar_lea.vmem [#allocation4], %s264
        %p266 = pneg %p45
        %p267 = pneg %p42
        %p268 = pneg %p66
        %p269 = pneg %p63
        %p270 = pneg %p87
        %p271 = pneg %p84
        %p272 = pneg %p108
        %p273 = pneg %p105
        %p274 = pneg %p129
        %p275 = pneg %p126
        %p276 = pneg %p150
        %p277 = pneg %p147
        %p278 = pneg %p176
        %p279 = pneg %p173
        %s280 = sand.u32 %s163, 1
        %s281 = scalar_lea.sflag [#allocation6], %s280
        %s282 = sand.u32 %s163, 1
        %s283 = smul.addr %s282, 256
        %s284 = scalar_lea.vmem [#allocation9], %s283
        %vm285 = vcmask 261120
        %286 = vst.msk [vmem:[#allocation2] sm:$0xff] %vm285, 0.0
        %287 = vst.msk [vmem:[#allocation2 + $0x8] sm:$0xff] %vm285, 0.0
        %vm288 = vcmask 254976
        %289 = vst.msk [vmem:[#allocation2 + $0x10] sm:$0x3] %vm288, 0.0
        %290 = vst.msk [vmem:[#allocation2 + $0x18] sm:$0xff] %vm285, 0.0
        %291 = vst.msk [vmem:[#allocation2 + $0x20] sm:$0xff] %vm285, 0.0
        %292 = vst.msk [vmem:[#allocation2 + $0x28] sm:$0x3] %vm288, 0.0
        %293 = vst.msk [vmem:[#allocation2 + $0x30] sm:$0xff] %vm285, 0.0
        %294 = vst.msk [vmem:[#allocation2 + $0x38] sm:$0xff] %vm285, 0.0
        %295 = vst.msk [vmem:[#allocation2 + $0x40] sm:$0x3] %vm288, 0.0
        %296 = vst.msk [vmem:[#allocation2 + $0x48] sm:$0xff] %vm285, 0.0
        %297 = vst.msk [vmem:[#allocation2 + $0x50] sm:$0xff] %vm285, 0.0
        %298 = vst.msk [vmem:[#allocation2 + $0x58] sm:$0x3] %vm288, 0.0
        %299 = vst.msk [vmem:[#allocation2 + $0x60] sm:$0xff] %vm285, 0.0
        %300 = vst.msk [vmem:[#allocation2 + $0x68] sm:$0xff] %vm285, 0.0
        %301 = vst.msk [vmem:[#allocation2 + $0x70] sm:$0x3] %vm288, 0.0
        %302 = vst.msk [vmem:[#allocation2 + $0x78] sm:$0xff] %vm285, 0.0
        %303 = vst.msk [vmem:[#allocation2 + $0x80] sm:$0xff] %vm285, 0.0
        %304 = vst.msk [vmem:[#allocation2 + $0x88] sm:$0x3] %vm288, 0.0
        %305 = vst.msk [vmem:[#allocation2 + $0x90] sm:$0xff] %vm285, 0.0
        %306 = vst.msk [vmem:[#allocation2 + $0x98] sm:$0xff] %vm285, 0.0
        %307 = vst.msk [vmem:[#allocation2 + $0xa0] sm:$0x3] %vm288, 0.0
        %308 = vst.msk [vmem:[#allocation2 + $0xa8] sm:$0xff] %vm285, 0.0
        %309 = vst.msk [vmem:[#allocation2 + $0xb0] sm:$0xff] %vm285, 0.0
        %310 = vst.msk [vmem:[#allocation2 + $0xb8] sm:$0x3] %vm288, 0.0
        %311 = vst.msk [vmem:[#allocation2 + $0xc0] sm:$0xff] %vm285, 0.0
        %312 = vst.msk [vmem:[#allocation2 + $0xc8] sm:$0xff] %vm285, 0.0
        %313 = vst.msk [vmem:[#allocation2 + $0xd0] sm:$0x3] %vm288, 0.0
        %314 = vst.msk [vmem:[#allocation2 + $0xd8] sm:$0xff] %vm285, 0.0
        %315 = vst.msk [vmem:[#allocation2 + $0xe0] sm:$0xff] %vm285, 0.0
        %316 = vst.msk [vmem:[#allocation2 + $0xe8] sm:$0x3] %vm288, 0.0
        %317 = vst.msk [vmem:[#allocation2 + $0xf0] sm:$0xff] %vm285, 0.0
        %318 = vst.msk [vmem:[#allocation2 + $0xf8] sm:$0xff] %vm285, 0.0
        %319 = vst.msk [vmem:[#allocation2 + $0x100] sm:$0x3] %vm288, 0.0
        %320 = vst.msk [vmem:[#allocation2 + $0x108] sm:$0xff] %vm285, 0.0
        %321 = vst.msk [vmem:[#allocation2 + $0x110] sm:$0xff] %vm285, 0.0
        %322 = vst.msk [vmem:[#allocation2 + $0x118] sm:$0x3] %vm288, 0.0
        %323 = vst.msk [vmem:[#allocation2 + $0x120] sm:$0xff] %vm285, 0.0
        %324 = vst.msk [vmem:[#allocation2 + $0x128] sm:$0xff] %vm285, 0.0
        %325 = vst.msk [vmem:[#allocation2 + $0x130] sm:$0x3] %vm288, 0.0
        %326 = vst.msk [vmem:[#allocation2 + $0x138] sm:$0xff] %vm285, 0.0
        %327 = vst.msk [vmem:[#allocation2 + $0x140] sm:$0xff] %vm285, 0.0
        %328 = vst.msk [vmem:[#allocation2 + $0x148] sm:$0x3] %vm288, 0.0
        %329 = vst.msk [vmem:[#allocation2 + $0x150] sm:$0xff] %vm285, 0.0
        %330 = vst.msk [vmem:[#allocation2 + $0x158] sm:$0xff] %vm285, 0.0
        %331 = vst.msk [vmem:[#allocation2 + $0x160] sm:$0x3] %vm288, 0.0
        %332 = vst.msk [vmem:[#allocation2 + $0x168] sm:$0xff] %vm285, 0.0
        %333 = vst.msk [vmem:[#allocation2 + $0x170] sm:$0xff] %vm285, 0.0
        %334 = vst.msk [vmem:[#allocation2 + $0x178] sm:$0x3] %vm288, 0.0
        %335 = vst.msk [vmem:[#allocation2 + $0x180] sm:$0xff] %vm285, 0.0
        %336 = vst.msk [vmem:[#allocation2 + $0x188] sm:$0xff] %vm285, 0.0
        %337 = vst.msk [vmem:[#allocation2 + $0x190] sm:$0x3] %vm288, 0.0
        %338 = vst.msk [vmem:[#allocation2 + $0x198] sm:$0xff] %vm285, 0.0
        %339 = vst.msk [vmem:[#allocation2 + $0x1a0] sm:$0xff] %vm285, 0.0
        %340 = vst.msk [vmem:[#allocation2 + $0x1a8] sm:$0x3] %vm288, 0.0
        %341 = vst.msk [vmem:[#allocation3] sm:$0xff] %vm285, 0.0
        %342 = vst.msk [vmem:[#allocation3 + $0x8] sm:$0xff] %vm285, 0.0
        %343 = vst.msk [vmem:[#allocation3 + $0x10] sm:$0x3] %vm288, 0.0
        %344 = vst.msk [vmem:[#allocation3 + $0x18] sm:$0xff] %vm285, 0.0
        %345 = vst.msk [vmem:[#allocation3 + $0x20] sm:$0xff] %vm285, 0.0
        %346 = vst.msk [vmem:[#allocation3 + $0x28] sm:$0x3] %vm288, 0.0
        %347 = vst.msk [vmem:[#allocation3 + $0x30] sm:$0xff] %vm285, 0.0
        %348 = vst.msk [vmem:[#allocation3 + $0x38] sm:$0xff] %vm285, 0.0
        %349 = vst.msk [vmem:[#allocation3 + $0x40] sm:$0x3] %vm288, 0.0
        %350 = vst.msk [vmem:[#allocation3 + $0x48] sm:$0xff] %vm285, 0.0
        %351 = vst.msk [vmem:[#allocation3 + $0x50] sm:$0xff] %vm285, 0.0
        %352 = vst.msk [vmem:[#allocation3 + $0x58] sm:$0x3] %vm288, 0.0
        %353 = vst.msk [vmem:[#allocation3 + $0x60] sm:$0xff] %vm285, 0.0
        %354 = vst.msk [vmem:[#allocation3 + $0x68] sm:$0xff] %vm285, 0.0
        %355 = vst.msk [vmem:[#allocation3 + $0x70] sm:$0x3] %vm288, 0.0
        %356 = vst.msk [vmem:[#allocation3 + $0x78] sm:$0xff] %vm285, 0.0
        %357 = vst.msk [vmem:[#allocation3 + $0x80] sm:$0xff] %vm285, 0.0
        %358 = vst.msk [vmem:[#allocation3 + $0x88] sm:$0x3] %vm288, 0.0
        %359 = vst.msk [vmem:[#allocation3 + $0x90] sm:$0xff] %vm285, 0.0
        %360 = vst.msk [vmem:[#allocation3 + $0x98] sm:$0xff] %vm285, 0.0
        %361 = vst.msk [vmem:[#allocation3 + $0xa0] sm:$0x3] %vm288, 0.0
        %362 = vst.msk [vmem:[#allocation3 + $0xa8] sm:$0xff] %vm285, 0.0
        %363 = vst.msk [vmem:[#allocation3 + $0xb0] sm:$0xff] %vm285, 0.0
        %364 = vst.msk [vmem:[#allocation3 + $0xb8] sm:$0x3] %vm288, 0.0
        %365 = vst.msk [vmem:[#allocation3 + $0xc0] sm:$0xff] %vm285, 0.0
        %366 = vst.msk [vmem:[#allocation3 + $0xc8] sm:$0xff] %vm285, 0.0
        %367 = vst.msk [vmem:[#allocation3 + $0xd0] sm:$0x3] %vm288, 0.0
        %368 = vst.msk [vmem:[#allocation3 + $0xd8] sm:$0xff] %vm285, 0.0
        %369 = vst.msk [vmem:[#allocation3 + $0xe0] sm:$0xff] %vm285, 0.0
        %370 = vst.msk [vmem:[#allocation3 + $0xe8] sm:$0x3] %vm288, 0.0
        %371 = vst.msk [vmem:[#allocation3 + $0xf0] sm:$0xff] %vm285, 0.0
        %372 = vst.msk [vmem:[#allocation3 + $0xf8] sm:$0xff] %vm285, 0.0
        %373 = vst.msk [vmem:[#allocation3 + $0x100] sm:$0x3] %vm288, 0.0
        %374 = vst.msk [vmem:[#allocation3 + $0x108] sm:$0xff] %vm285, 0.0
        %375 = vst.msk [vmem:[#allocation3 + $0x110] sm:$0xff] %vm285, 0.0
        %376 = vst.msk [vmem:[#allocation3 + $0x118] sm:$0x3] %vm288, 0.0
        %377 = vst.msk [vmem:[#allocation3 + $0x120] sm:$0xff] %vm285, 0.0
        %378 = vst.msk [vmem:[#allocation3 + $0x128] sm:$0xff] %vm285, 0.0
        %379 = vst.msk [vmem:[#allocation3 + $0x130] sm:$0x3] %vm288, 0.0
        %380 = vst.msk [vmem:[#allocation3 + $0x138] sm:$0xff] %vm285, 0.0
        %381 = vst.msk [vmem:[#allocation3 + $0x140] sm:$0xff] %vm285, 0.0
        %382 = vst.msk [vmem:[#allocation3 + $0x148] sm:$0x3] %vm288, 0.0
        %383 = vst.msk [vmem:[#allocation3 + $0x150] sm:$0xff] %vm285, 0.0
        %384 = vst.msk [vmem:[#allocation3 + $0x158] sm:$0xff] %vm285, 0.0
        %385 = vst.msk [vmem:[#allocation3 + $0x160] sm:$0x3] %vm288, 0.0
        %386 = vst.msk [vmem:[#allocation3 + $0x168] sm:$0xff] %vm285, 0.0
        %387 = vst.msk [vmem:[#allocation3 + $0x170] sm:$0xff] %vm285, 0.0
        %388 = vst.msk [vmem:[#allocation3 + $0x178] sm:$0x3] %vm288, 0.0
        %389 = vst.msk [vmem:[#allocation3 + $0x180] sm:$0xff] %vm285, 0.0
        %390 = vst.msk [vmem:[#allocation3 + $0x188] sm:$0xff] %vm285, 0.0
        %391 = vst.msk [vmem:[#allocation3 + $0x190] sm:$0x3] %vm288, 0.0
        %392 = vst.msk [vmem:[#allocation3 + $0x198] sm:$0xff] %vm285, 0.0
        %393 = vst.msk [vmem:[#allocation3 + $0x1a0] sm:$0xff] %vm285, 0.0
        %394 = vst.msk [vmem:[#allocation3 + $0x1a8] sm:$0x3] %vm288, 0.0
        %v395 = vld [vmem:[%s252] sm:$0xff]
        %v396 = vld [vmem:[%s252 + $0x8] sm:$0xff]
        %v397 = vld [vmem:[%s252 + $0x10] sm:$0xff]
        %v398 = vld [vmem:[%s252 + $0x18] sm:$0xff]
        %v399 = vld [vmem:[%s252 + $0x20] sm:$0xff]
        %v400 = vld [vmem:[%s252 + $0x28] sm:$0xff]
        %v401 = vld [vmem:[%s252 + $0x30] sm:$0xff]
        %v402 = vld [vmem:[%s252 + $0x38] sm:$0xff]
        %v403 = vld [vmem:[%s252 + $0x40] sm:$0xff]
        %v404 = vld [vmem:[%s252 + $0x48] sm:$0xff]
        %v405 = vld [vmem:[%s252 + $0x50] sm:$0xff]
        %v406 = vld [vmem:[%s252 + $0x58] sm:$0xff]
        %v407 = vld [vmem:[%s252 + $0x60] sm:$0xff]
        %v408 = vld [vmem:[%s252 + $0x68] sm:$0xff]
        %v409 = vld [vmem:[%s252 + $0x70] sm:$0xff]
        %v410 = vld [vmem:[%s252 + $0x78] sm:$0xff]
        %v411 = vld [vmem:[%s252 + $0x80] sm:$0xff]
        %v412 = vld [vmem:[%s252 + $0x88] sm:$0xff]
        %v413 = vld [vmem:[%s252 + $0x90] sm:$0xff]
        %v414 = vld [vmem:[%s252 + $0x98] sm:$0xff]
        %v415 = vld [vmem:[%s252 + $0xa0] sm:$0xff]
        %v416 = vld [vmem:[%s252 + $0xa8] sm:$0xff]
        %v417 = vld [vmem:[%s252 + $0xb0] sm:$0xff]
        %v418 = vld [vmem:[%s252 + $0xb8] sm:$0xff]
        %v419 = vld [vmem:[%s252 + $0xc0] sm:$0xff]
        %v420 = vld [vmem:[%s252 + $0xc8] sm:$0xff]
        %v421 = vld [vmem:[%s252 + $0xd0] sm:$0xff]
        %v422 = vld [vmem:[%s252 + $0xd8] sm:$0xff]
        %v423 = vld [vmem:[%s252 + $0xe0] sm:$0xff]
        %v424 = vld [vmem:[%s252 + $0xe8] sm:$0xff]
        %v425 = vld [vmem:[%s252 + $0xf0] sm:$0xff]
        %v426 = vld [vmem:[%s252 + $0xf8] sm:$0xff]
        %s427 = scalar_lea.vmem [#allocation2], 24
        %428 = vst.msk [vmem:[%s427 + $0x1] sm:$0xff] %vm285, %v395
        %429 = vst.msk [vmem:[%s427 + $0x9] sm:$0xff] %vm285, %v396
        %430 = vst.msk [vmem:[%s427 + $0x19] sm:$0xff] %vm285, %v397
        %431 = vst.msk [vmem:[%s427 + $0x21] sm:$0xff] %vm285, %v398
        %432 = vst.msk [vmem:[%s427 + $0x31] sm:$0xff] %vm285, %v399
        %433 = vst.msk [vmem:[%s427 + $0x39] sm:$0xff] %vm285, %v400
        %434 = vst.msk [vmem:[%s427 + $0x49] sm:$0xff] %vm285, %v401
        %435 = vst.msk [vmem:[%s427 + $0x51] sm:$0xff] %vm285, %v402
        %436 = vst.msk [vmem:[%s427 + $0x61] sm:$0xff] %vm285, %v403
        %437 = vst.msk [vmem:[%s427 + $0x69] sm:$0xff] %vm285, %v404
        %438 = vst.msk [vmem:[%s427 + $0x79] sm:$0xff] %vm285, %v405
        %439 = vst.msk [vmem:[%s427 + $0x81] sm:$0xff] %vm285, %v406
        %440 = vst.msk [vmem:[%s427 + $0x91] sm:$0xff] %vm285, %v407
        %441 = vst.msk [vmem:[%s427 + $0x99] sm:$0xff] %vm285, %v408
        %442 = vst.msk [vmem:[%s427 + $0xa9] sm:$0xff] %vm285, %v409
        %443 = vst.msk [vmem:[%s427 + $0xb1] sm:$0xff] %vm285, %v410
        %444 = vst.msk [vmem:[%s427 + $0xc1] sm:$0xff] %vm285, %v411
        %445 = vst.msk [vmem:[%s427 + $0xc9] sm:$0xff] %vm285, %v412
        %446 = vst.msk [vmem:[%s427 + $0xd9] sm:$0xff] %vm285, %v413
        %447 = vst.msk [vmem:[%s427 + $0xe1] sm:$0xff] %vm285, %v414
        %448 = vst.msk [vmem:[%s427 + $0xf1] sm:$0xff] %vm285, %v415
        %449 = vst.msk [vmem:[%s427 + $0xf9] sm:$0xff] %vm285, %v416
        %450 = vst.msk [vmem:[%s427 + $0x109] sm:$0xff] %vm285, %v417
        %451 = vst.msk [vmem:[%s427 + $0x111] sm:$0xff] %vm285, %v418
        %452 = vst.msk [vmem:[%s427 + $0x121] sm:$0xff] %vm285, %v419
        %453 = vst.msk [vmem:[%s427 + $0x129] sm:$0xff] %vm285, %v420
        %454 = vst.msk [vmem:[%s427 + $0x139] sm:$0xff] %vm285, %v421
        %455 = vst.msk [vmem:[%s427 + $0x141] sm:$0xff] %vm285, %v422
        %456 = vst.msk [vmem:[%s427 + $0x151] sm:$0xff] %vm285, %v423
        %457 = vst.msk [vmem:[%s427 + $0x159] sm:$0xff] %vm285, %v424
        %458 = vst.msk [vmem:[%s427 + $0x169] sm:$0xff] %vm285, %v425
        %459 = vst.msk [vmem:[%s427 + $0x171] sm:$0xff] %vm285, %v426
        %v460 = vld [vmem:[%s1] sm:$0xff]
        %v461 = vld [vmem:[%s1 + $0x8] sm:$0x1]
        %v462 = vld [vmem:[#allocation7] sm:$0xff]
        %v463 = vld [vmem:[#allocation7 + $0x8] sm:$0xff]
        %v464 = vld [vmem:[#allocation7 + $0x10] sm:$0xff]
        %v465 = vld [vmem:[#allocation7 + $0x18] sm:$0xff]
        %v466 = vld [vmem:[%s3] sm:$0x1]
        %v467 = vld [vmem:[#allocation2] sm:$0xff]
        %v468 = vld [vmem:[#allocation2 + $0x8] sm:$0xff]
        %v469 = vld [vmem:[#allocation2 + $0x18] sm:$0xff]
        %v470 = vld [vmem:[#allocation2 + $0x20] sm:$0xff]
        %v471 = vld [vmem:[#allocation2 + $0x30] sm:$0xff]
        %v472 = vld [vmem:[#allocation2 + $0x38] sm:$0xff]
        %v473 = vld [vmem:[#allocation2 + $0x48] sm:$0xff]
        %v474 = vld [vmem:[#allocation2 + $0x50] sm:$0xff]
        %v475 = vld [vmem:[#allocation2 + $0x60] sm:$0xff]
        %v476 = vld [vmem:[#allocation2 + $0x68] sm:$0xff]
        %v477 = vld [vmem:[#allocation2 + $0x78] sm:$0xff]
        %v478 = vld [vmem:[#allocation2 + $0x80] sm:$0xff]
        %v479 = vld [vmem:[#allocation2 + $0x90] sm:$0xff]
        %v480 = vld [vmem:[#allocation2 + $0x98] sm:$0xff]
        %v481 = vld [vmem:[#allocation2 + $0xa8] sm:$0xff]
        %v482 = vld [vmem:[#allocation2 + $0xb0] sm:$0xff]
        %v483 = vlaneseq
        %v484 = vshrl.u32 %v483, 7
        %v485 = vsub.s32 0, %v484
        %v486 = vrot.slane %v460, %v485
        %v487 = vmul.f32 %v467, %v486
        %v488 = vmul.f32 %v468, %v486
        %v489 = vmul.f32 %v469, %v486
        %v490 = vmul.f32 %v470, %v486
        %v491 = vmul.f32 %v471, %v486
        %v492 = vmul.f32 %v472, %v486
        %v493 = vmul.f32 %v473, %v486
        %v494 = vmul.f32 %v474, %v486
        %v495 = vmul.f32 %v475, %v486
        %v496 = vmul.f32 %v476, %v486
        %v497 = vmul.f32 %v477, %v486
        %v498 = vmul.f32 %v478, %v486
        %v499 = vmul.f32 %v479, %v486
        %v500 = vmul.f32 %v480, %v486
        %v501 = vmul.f32 %v481, %v486
        %v502 = vmul.f32 %v482, %v486
        %v503 = vadd.f32 %v487, 0.0
        %v504 = vadd.f32 %v488, 0.0
        %v505 = vadd.f32 %v489, 0.0
        %v506 = vadd.f32 %v490, 0.0
        %v507 = vadd.f32 %v491, 0.0
        %v508 = vadd.f32 %v492, 0.0
        %v509 = vadd.f32 %v493, 0.0
        %v510 = vadd.f32 %v494, 0.0
        %v511 = vadd.f32 %v495, 0.0
        %v512 = vadd.f32 %v496, 0.0
        %v513 = vadd.f32 %v497, 0.0
        %v514 = vadd.f32 %v498, 0.0
        %v515 = vadd.f32 %v499, 0.0
        %v516 = vadd.f32 %v500, 0.0
        %v517 = vadd.f32 %v501, 0.0
        %v518 = vadd.f32 %v502, 0.0
        %v519 = vld [vmem:[#allocation2 + $0x1] sm:$0xff]
        %v520 = vld [vmem:[#allocation2 + $0x9] sm:$0xff]
        %v521 = vld [vmem:[#allocation2 + $0x19] sm:$0xff]
        %v522 = vld [vmem:[#allocation2 + $0x21] sm:$0xff]
        %v523 = vld [vmem:[#allocation2 + $0x31] sm:$0xff]
        %v524 = vld [vmem:[#allocation2 + $0x39] sm:$0xff]
        %v525 = vld [vmem:[#allocation2 + $0x49] sm:$0xff]
        %v526 = vld [vmem:[#allocation2 + $0x51] sm:$0xff]
        %v527 = vld [vmem:[#allocation2 + $0x61] sm:$0xff]
        %v528 = vld [vmem:[#allocation2 + $0x69] sm:$0xff]
        %v529 = vld [vmem:[#allocation2 + $0x79] sm:$0xff]
        %v530 = vld [vmem:[#allocation2 + $0x81] sm:$0xff]
        %v531 = vld [vmem:[#allocation2 + $0x91] sm:$0xff]
        %v532 = vld [vmem:[#allocation2 + $0x99] sm:$0xff]
        %v533 = vld [vmem:[#allocation2 + $0xa9] sm:$0xff]
        %v534 = vld [vmem:[#allocation2 + $0xb1] sm:$0xff]
        %v535 = vlaneseq
        %v536 = vshrl.u32 %v535, 7
        %v537 = vsub.s32 1, %v536
        %v538 = vrot.slane %v460, %v537
        %v539 = vmul.f32 %v519, %v538
        %v540 = vmul.f32 %v520, %v538
        %v541 = vmul.f32 %v521, %v538
        %v542 = vmul.f32 %v522, %v538
        %v543 = vmul.f32 %v523, %v538
        %v544 = vmul.f32 %v524, %v538
        %v545 = vmul.f32 %v525, %v538
        %v546 = vmul.f32 %v526, %v538
        %v547 = vmul.f32 %v527, %v538
        %v548 = vmul.f32 %v528, %v538
        %v549 = vmul.f32 %v529, %v538
        %v550 = vmul.f32 %v530, %v538
        %v551 = vmul.f32 %v531, %v538
        %v552 = vmul.f32 %v532, %v538
        %v553 = vmul.f32 %v533, %v538
        %v554 = vmul.f32 %v534, %v538
        %v555 = vadd.f32 %v503, %v539
        %v556 = vadd.f32 %v504, %v540
        %v557 = vadd.f32 %v505, %v541
        %v558 = vadd.f32 %v506, %v542
        %v559 = vadd.f32 %v507, %v543
        %v560 = vadd.f32 %v508, %v544
        %v561 = vadd.f32 %v509, %v545
        %v562 = vadd.f32 %v510, %v546
        %v563 = vadd.f32 %v511, %v547
        %v564 = vadd.f32 %v512, %v548
        %v565 = vadd.f32 %v513, %v549
        %v566 = vadd.f32 %v514, %v550
        %v567 = vadd.f32 %v515, %v551
        %v568 = vadd.f32 %v516, %v552
        %v569 = vadd.f32 %v517, %v553
        %v570 = vadd.f32 %v518, %v554
        %v571 = vld [vmem:[#allocation2 + $0x2] sm:$0xff]
        %v572 = vld [vmem:[#allocation2 + $0xa] sm:$0xff]
        %v573 = vld [vmem:[#allocation2 + $0x1a] sm:$0xff]
        %v574 = vld [vmem:[#allocation2 + $0x22] sm:$0xff]
        %v575 = vld [vmem:[#allocation2 + $0x32] sm:$0xff]
        %v576 = vld [vmem:[#allocation2 + $0x3a] sm:$0xff]
        %v577 = vld [vmem:[#allocation2 + $0x4a] sm:$0xff]
        %v578 = vld [vmem:[#allocation2 + $0x52] sm:$0xff]
        %v579 = vld [vmem:[#allocation2 + $0x62] sm:$0xff]
        %v580 = vld [vmem:[#allocation2 + $0x6a] sm:$0xff]
        %v581 = vld [vmem:[#allocation2 + $0x7a] sm:$0xff]
        %v582 = vld [vmem:[#allocation2 + $0x82] sm:$0xff]
        %v583 = vld [vmem:[#allocation2 + $0x92] sm:$0xff]
        %v584 = vld [vmem:[#allocation2 + $0x9a] sm:$0xff]
        %v585 = vld [vmem:[#allocation2 + $0xaa] sm:$0xff]
        %v586 = vld [vmem:[#allocation2 + $0xb2] sm:$0xff]
        %v587 = vlaneseq
        %v588 = vshrl.u32 %v587, 7
        %v589 = vsub.s32 2, %v588
        %v590 = vrot.slane %v460, %v589
        %v591 = vmul.f32 %v571, %v590
        %v592 = vmul.f32 %v572, %v590
        %v593 = vmul.f32 %v573, %v590
        %v594 = vmul.f32 %v574, %v590
        %v595 = vmul.f32 %v575, %v590
        %v596 = vmul.f32 %v576, %v590
        %v597 = vmul.f32 %v577, %v590
        %v598 = vmul.f32 %v578, %v590
        %v599 = vmul.f32 %v579, %v590
        %v600 = vmul.f32 %v580, %v590
        %v601 = vmul.f32 %v581, %v590
        %v602 = vmul.f32 %v582, %v590
        %v603 = vmul.f32 %v583, %v590
        %v604 = vmul.f32 %v584, %v590
        %v605 = vmul.f32 %v585, %v590
        %v606 = vmul.f32 %v586, %v590
        %v607 = vadd.f32 %v555, %v591
        %v608 = vadd.f32 %v556, %v592
        %v609 = vadd.f32 %v557, %v593
        %v610 = vadd.f32 %v558, %v594
        %v611 = vadd.f32 %v559, %v595
        %v612 = vadd.f32 %v560, %v596
        %v613 = vadd.f32 %v561, %v597
        %v614 = vadd.f32 %v562, %v598
        %v615 = vadd.f32 %v563, %v599
        %v616 = vadd.f32 %v564, %v600
        %v617 = vadd.f32 %v565, %v601
        %v618 = vadd.f32 %v566, %v602
        %v619 = vadd.f32 %v567, %v603
        %v620 = vadd.f32 %v568, %v604
        %v621 = vadd.f32 %v569, %v605
        %v622 = vadd.f32 %v570, %v606
        %v623 = vld [vmem:[%s427] sm:$0xff]
        %v624 = vld [vmem:[%s427 + $0x8] sm:$0xff]
        %v625 = vld [vmem:[%s427 + $0x18] sm:$0xff]
        %v626 = vld [vmem:[%s427 + $0x20] sm:$0xff]
        %v627 = vld [vmem:[%s427 + $0x30] sm:$0xff]
        %v628 = vld [vmem:[%s427 + $0x38] sm:$0xff]
        %v629 = vld [vmem:[%s427 + $0x48] sm:$0xff]
        %v630 = vld [vmem:[%s427 + $0x50] sm:$0xff]
        %v631 = vld [vmem:[%s427 + $0x60] sm:$0xff]
        %v632 = vld [vmem:[%s427 + $0x68] sm:$0xff]
        %v633 = vld [vmem:[%s427 + $0x78] sm:$0xff]
        %v634 = vld [vmem:[%s427 + $0x80] sm:$0xff]
        %v635 = vld [vmem:[%s427 + $0x90] sm:$0xff]
        %v636 = vld [vmem:[%s427 + $0x98] sm:$0xff]
        %v637 = vld [vmem:[%s427 + $0xa8] sm:$0xff]
        %v638 = vld [vmem:[%s427 + $0xb0] sm:$0xff]
        %v639 = vlaneseq
        %v640 = vshrl.u32 %v639, 7
        %v641 = vsub.s32 3, %v640
        %v642 = vrot.slane %v460, %v641
        %v643 = vmul.f32 %v623, %v642
        %v644 = vmul.f32 %v624, %v642
        %v645 = vmul.f32 %v625, %v642
        %v646 = vmul.f32 %v626, %v642
        %v647 = vmul.f32 %v627, %v642
        %v648 = vmul.f32 %v628, %v642
        %v649 = vmul.f32 %v629, %v642
        %v650 = vmul.f32 %v630, %v642
        %v651 = vmul.f32 %v631, %v642
        %v652 = vmul.f32 %v632, %v642
        %v653 = vmul.f32 %v633, %v642
        %v654 = vmul.f32 %v634, %v642
        %v655 = vmul.f32 %v635, %v642
        %v656 = vmul.f32 %v636, %v642
        %v657 = vmul.f32 %v637, %v642
        %v658 = vmul.f32 %v638, %v642
        %v659 = vadd.f32 %v607, %v643
        %v660 = vadd.f32 %v608, %v644
        %v661 = vadd.f32 %v609, %v645
        %v662 = vadd.f32 %v610, %v646
        %v663 = vadd.f32 %v611, %v647
        %v664 = vadd.f32 %v612, %v648
        %v665 = vadd.f32 %v613, %v649
        %v666 = vadd.f32 %v614, %v650
        %v667 = vadd.f32 %v615, %v651
        %v668 = vadd.f32 %v616, %v652
        %v669 = vadd.f32 %v617, %v653
        %v670 = vadd.f32 %v618, %v654
        %v671 = vadd.f32 %v619, %v655
        %v672 = vadd.f32 %v620, %v656
        %v673 = vadd.f32 %v621, %v657
        %v674 = vadd.f32 %v622, %v658
        %v675 = vld [vmem:[%s427 + $0x1] sm:$0xff]
        %v676 = vld [vmem:[%s427 + $0x9] sm:$0xff]
        %v677 = vld [vmem:[%s427 + $0x19] sm:$0xff]
        %v678 = vld [vmem:[%s427 + $0x21] sm:$0xff]
        %v679 = vld [vmem:[%s427 + $0x31] sm:$0xff]
        %v680 = vld [vmem:[%s427 + $0x39] sm:$0xff]
        %v681 = vld [vmem:[%s427 + $0x49] sm:$0xff]
        %v682 = vld [vmem:[%s427 + $0x51] sm:$0xff]
        %v683 = vld [vmem:[%s427 + $0x61] sm:$0xff]
        %v684 = vld [vmem:[%s427 + $0x69] sm:$0xff]
        %v685 = vld [vmem:[%s427 + $0x79] sm:$0xff]
        %v686 = vld [vmem:[%s427 + $0x81] sm:$0xff]
        %v687 = vld [vmem:[%s427 + $0x91] sm:$0xff]
        %v688 = vld [vmem:[%s427 + $0x99] sm:$0xff]
        %v689 = vld [vmem:[%s427 + $0xa9] sm:$0xff]
        %v690 = vld [vmem:[%s427 + $0xb1] sm:$0xff]
        %v691 = vlaneseq
        %v692 = vshrl.u32 %v691, 7
        %v693 = vsub.s32 4, %v692
        %v694 = vrot.slane %v460, %v693
        %v695 = vmul.f32 %v675, %v694
        %v696 = vmul.f32 %v676, %v694
        %v697 = vmul.f32 %v677, %v694
        %v698 = vmul.f32 %v678, %v694
        %v699 = vmul.f32 %v679, %v694
        %v700 = vmul.f32 %v680, %v694
        %v701 = vmul.f32 %v681, %v694
        %v702 = vmul.f32 %v682, %v694
        %v703 = vmul.f32 %v683, %v694
        %v704 = vmul.f32 %v684, %v694
        %v705 = vmul.f32 %v685, %v694
        %v706 = vmul.f32 %v686, %v694
        %v707 = vmul.f32 %v687, %v694
        %v708 = vmul.f32 %v688, %v694
        %v709 = vmul.f32 %v689, %v694
        %v710 = vmul.f32 %v690, %v694
        %v711 = vadd.f32 %v659, %v695
        %v712 = vadd.f32 %v660, %v696
        %v713 = vadd.f32 %v661, %v697
        %v714 = vadd.f32 %v662, %v698
        %v715 = vadd.f32 %v663, %v699
        %v716 = vadd.f32 %v664, %v700
        %v717 = vadd.f32 %v665, %v701
        %v718 = vadd.f32 %v666, %v702
        %v719 = vadd.f32 %v667, %v703
        %v720 = vadd.f32 %v668, %v704
        %v721 = vadd.f32 %v669, %v705
        %v722 = vadd.f32 %v670, %v706
        %v723 = vadd.f32 %v671, %v707
        %v724 = vadd.f32 %v672, %v708
        %v725 = vadd.f32 %v673, %v709
        %v726 = vadd.f32 %v674, %v710
        %v727 = vld [vmem:[%s427 + $0x2] sm:$0xff]
        %v728 = vld [vmem:[%s427 + $0xa] sm:$0xff]
        %v729 = vld [vmem:[%s427 + $0x1a] sm:$0xff]
        %v730 = vld [vmem:[%s427 + $0x22] sm:$0xff]
        %v731 = vld [vmem:[%s427 + $0x32] sm:$0xff]
        %v732 = vld [vmem:[%s427 + $0x3a] sm:$0xff]
        %v733 = vld [vmem:[%s427 + $0x4a] sm:$0xff]
        %v734 = vld [vmem:[%s427 + $0x52] sm:$0xff]
        %v735 = vld [vmem:[%s427 + $0x62] sm:$0xff]
        %v736 = vld [vmem:[%s427 + $0x6a] sm:$0xff]
        %v737 = vld [vmem:[%s427 + $0x7a] sm:$0xff]
        %v738 = vld [vmem:[%s427 + $0x82] sm:$0xff]
        %v739 = vld [vmem:[%s427 + $0x92] sm:$0xff]
        %v740 = vld [vmem:[%s427 + $0x9a] sm:$0xff]
        %v741 = vld [vmem:[%s427 + $0xaa] sm:$0xff]
        %v742 = vld [vmem:[%s427 + $0xb2] sm:$0xff]
        %v743 = vlaneseq
        %v744 = vshrl.u32 %v743, 7
        %v745 = vsub.s32 5, %v744
        %v746 = vrot.slane %v460, %v745
        %v747 = vmul.f32 %v727, %v746
        %v748 = vmul.f32 %v728, %v746
        %v749 = vmul.f32 %v729, %v746
        %v750 = vmul.f32 %v730, %v746
        %v751 = vmul.f32 %v731, %v746
        %v752 = vmul.f32 %v732, %v746
        %v753 = vmul.f32 %v733, %v746
        %v754 = vmul.f32 %v734, %v746
        %v755 = vmul.f32 %v735, %v746
        %v756 = vmul.f32 %v736, %v746
        %v757 = vmul.f32 %v737, %v746
        %v758 = vmul.f32 %v738, %v746
        %v759 = vmul.f32 %v739, %v746
        %v760 = vmul.f32 %v740, %v746
        %v761 = vmul.f32 %v741, %v746
        %v762 = vmul.f32 %v742, %v746
        %v763 = vadd.f32 %v711, %v747
        %v764 = vadd.f32 %v712, %v748
        %v765 = vadd.f32 %v713, %v749
        %v766 = vadd.f32 %v714, %v750
        %v767 = vadd.f32 %v715, %v751
        %v768 = vadd.f32 %v716, %v752
        %v769 = vadd.f32 %v717, %v753
        %v770 = vadd.f32 %v718, %v754
        %v771 = vadd.f32 %v719, %v755
        %v772 = vadd.f32 %v720, %v756
        %v773 = vadd.f32 %v721, %v757
        %v774 = vadd.f32 %v722, %v758
        %v775 = vadd.f32 %v723, %v759
        %v776 = vadd.f32 %v724, %v760
        %v777 = vadd.f32 %v725, %v761
        %v778 = vadd.f32 %v726, %v762
        %s779 = scalar_lea.vmem [#allocation2], 48
        %v780 = vld [vmem:[%s779] sm:$0xff]
        %v781 = vld [vmem:[%s779 + $0x8] sm:$0xff]
        %v782 = vld [vmem:[%s779 + $0x18] sm:$0xff]
        %v783 = vld [vmem:[%s779 + $0x20] sm:$0xff]
        %v784 = vld [vmem:[%s779 + $0x30] sm:$0xff]
        %v785 = vld [vmem:[%s779 + $0x38] sm:$0xff]
        %v786 = vld [vmem:[%s779 + $0x48] sm:$0xff]
        %v787 = vld [vmem:[%s779 + $0x50] sm:$0xff]
        %v788 = vld [vmem:[%s779 + $0x60] sm:$0xff]
        %v789 = vld [vmem:[%s779 + $0x68] sm:$0xff]
        %v790 = vld [vmem:[%s779 + $0x78] sm:$0xff]
        %v791 = vld [vmem:[%s779 + $0x80] sm:$0xff]
        %v792 = vld [vmem:[%s779 + $0x90] sm:$0xff]
        %v793 = vld [vmem:[%s779 + $0x98] sm:$0xff]
        %v794 = vld [vmem:[%s779 + $0xa8] sm:$0xff]
        %v795 = vld [vmem:[%s779 + $0xb0] sm:$0xff]
        %v796 = vlaneseq
        %v797 = vshrl.u32 %v796, 7
        %v798 = vsub.s32 6, %v797
        %v799 = vrot.slane %v460, %v798
        %v800 = vmul.f32 %v780, %v799
        %v801 = vmul.f32 %v781, %v799
        %v802 = vmul.f32 %v782, %v799
        %v803 = vmul.f32 %v783, %v799
        %v804 = vmul.f32 %v784, %v799
        %v805 = vmul.f32 %v785, %v799
        %v806 = vmul.f32 %v786, %v799
        %v807 = vmul.f32 %v787, %v799
        %v808 = vmul.f32 %v788, %v799
        %v809 = vmul.f32 %v789, %v799
        %v810 = vmul.f32 %v790, %v799
        %v811 = vmul.f32 %v791, %v799
        %v812 = vmul.f32 %v792, %v799
        %v813 = vmul.f32 %v793, %v799
        %v814 = vmul.f32 %v794, %v799
        %v815 = vmul.f32 %v795, %v799
        %v816 = vadd.f32 %v763, %v800
        %v817 = vadd.f32 %v764, %v801
        %v818 = vadd.f32 %v765, %v802
        %v819 = vadd.f32 %v766, %v803
        %v820 = vadd.f32 %v767, %v804
        %v821 = vadd.f32 %v768, %v805
        %v822 = vadd.f32 %v769, %v806
        %v823 = vadd.f32 %v770, %v807
        %v824 = vadd.f32 %v771, %v808
        %v825 = vadd.f32 %v772, %v809
        %v826 = vadd.f32 %v773, %v810
        %v827 = vadd.f32 %v774, %v811
        %v828 = vadd.f32 %v775, %v812
        %v829 = vadd.f32 %v776, %v813
        %v830 = vadd.f32 %v777, %v814
        %v831 = vadd.f32 %v778, %v815
        %v832 = vld [vmem:[%s779 + $0x1] sm:$0xff]
        %v833 = vld [vmem:[%s779 + $0x9] sm:$0xff]
        %v834 = vld [vmem:[%s779 + $0x19] sm:$0xff]
        %v835 = vld [vmem:[%s779 + $0x21] sm:$0xff]
        %v836 = vld [vmem:[%s779 + $0x31] sm:$0xff]
        %v837 = vld [vmem:[%s779 + $0x39] sm:$0xff]
        %v838 = vld [vmem:[%s779 + $0x49] sm:$0xff]
        %v839 = vld [vmem:[%s779 + $0x51] sm:$0xff]
        %v840 = vld [vmem:[%s779 + $0x61] sm:$0xff]
        %v841 = vld [vmem:[%s779 + $0x69] sm:$0xff]
        %v842 = vld [vmem:[%s779 + $0x79] sm:$0xff]
        %v843 = vld [vmem:[%s779 + $0x81] sm:$0xff]
        %v844 = vld [vmem:[%s779 + $0x91] sm:$0xff]
        %v845 = vld [vmem:[%s779 + $0x99] sm:$0xff]
        %v846 = vld [vmem:[%s779 + $0xa9] sm:$0xff]
        %v847 = vld [vmem:[%s779 + $0xb1] sm:$0xff]
        %v848 = vlaneseq
        %v849 = vshrl.u32 %v848, 7
        %v850 = vsub.s32 7, %v849
        %v851 = vrot.slane %v460, %v850
        %v852 = vmul.f32 %v832, %v851
        %v853 = vmul.f32 %v833, %v851
        %v854 = vmul.f32 %v834, %v851
        %v855 = vmul.f32 %v835, %v851
        %v856 = vmul.f32 %v836, %v851
        %v857 = vmul.f32 %v837, %v851
        %v858 = vmul.f32 %v838, %v851
        %v859 = vmul.f32 %v839, %v851
        %v860 = vmul.f32 %v840, %v851
        %v861 = vmul.f32 %v841, %v851
        %v862 = vmul.f32 %v842, %v851
        %v863 = vmul.f32 %v843, %v851
        %v864 = vmul.f32 %v844, %v851
        %v865 = vmul.f32 %v845, %v851
        %v866 = vmul.f32 %v846, %v851
        %v867 = vmul.f32 %v847, %v851
        %v868 = vadd.f32 %v816, %v852
        %v869 = vadd.f32 %v817, %v853
        %v870 = vadd.f32 %v818, %v854
        %v871 = vadd.f32 %v819, %v855
        %v872 = vadd.f32 %v820, %v856
        %v873 = vadd.f32 %v821, %v857
        %v874 = vadd.f32 %v822, %v858
        %v875 = vadd.f32 %v823, %v859
        %v876 = vadd.f32 %v824, %v860
        %v877 = vadd.f32 %v825, %v861
        %v878 = vadd.f32 %v826, %v862
        %v879 = vadd.f32 %v827, %v863
        %v880 = vadd.f32 %v828, %v864
        %v881 = vadd.f32 %v829, %v865
        %v882 = vadd.f32 %v830, %v866
        %v883 = vadd.f32 %v831, %v867
        %v884 = vld [vmem:[%s779 + $0x2] sm:$0xff]
        %v885 = vld [vmem:[%s779 + $0xa] sm:$0xff]
        %v886 = vld [vmem:[%s779 + $0x1a] sm:$0xff]
        %v887 = vld [vmem:[%s779 + $0x22] sm:$0xff]
        %v888 = vld [vmem:[%s779 + $0x32] sm:$0xff]
        %v889 = vld [vmem:[%s779 + $0x3a] sm:$0xff]
        %v890 = vld [vmem:[%s779 + $0x4a] sm:$0xff]
        %v891 = vld [vmem:[%s779 + $0x52] sm:$0xff]
        %v892 = vld [vmem:[%s779 + $0x62] sm:$0xff]
        %v893 = vld [vmem:[%s779 + $0x6a] sm:$0xff]
        %v894 = vld [vmem:[%s779 + $0x7a] sm:$0xff]
        %v895 = vld [vmem:[%s779 + $0x82] sm:$0xff]
        %v896 = vld [vmem:[%s779 + $0x92] sm:$0xff]
        %v897 = vld [vmem:[%s779 + $0x9a] sm:$0xff]
        %v898 = vld [vmem:[%s779 + $0xaa] sm:$0xff]
        %v899 = vld [vmem:[%s779 + $0xb2] sm:$0xff]
        %v900 = vlaneseq
        %v901 = vshrl.u32 %v900, 7
        %v902 = vsub.s32 0, %v901
        %v903 = vrot.slane %v461, %v902
        %v904 = vmul.f32 %v884, %v903
        %v905 = vmul.f32 %v885, %v903
        %v906 = vmul.f32 %v886, %v903
        %v907 = vmul.f32 %v887, %v903
        %v908 = vmul.f32 %v888, %v903
        %v909 = vmul.f32 %v889, %v903
        %v910 = vmul.f32 %v890, %v903
        %v911 = vmul.f32 %v891, %v903
        %v912 = vmul.f32 %v892, %v903
        %v913 = vmul.f32 %v893, %v903
        %v914 = vmul.f32 %v894, %v903
        %v915 = vmul.f32 %v895, %v903
        %v916 = vmul.f32 %v896, %v903
        %v917 = vmul.f32 %v897, %v903
        %v918 = vmul.f32 %v898, %v903
        %v919 = vmul.f32 %v899, %v903
        %v920 = vadd.f32 %v868, %v904
        %v921 = vadd.f32 %v869, %v905
        %v922 = vadd.f32 %v870, %v906
        %v923 = vadd.f32 %v871, %v907
        %v924 = vadd.f32 %v872, %v908
        %v925 = vadd.f32 %v873, %v909
        %v926 = vadd.f32 %v874, %v910
        %v927 = vadd.f32 %v875, %v911
        %v928 = vadd.f32 %v876, %v912
        %v929 = vadd.f32 %v877, %v913
        %v930 = vadd.f32 %v878, %v914
        %v931 = vadd.f32 %v879, %v915
        %v932 = vadd.f32 %v880, %v916
        %v933 = vadd.f32 %v881, %v917
        %v934 = vadd.f32 %v882, %v918
        %v935 = vadd.f32 %v883, %v919
        %v937 = vlaneseq
        %v938 = vshrl.u32 %v937, 7
        %v939 = vsub.s32 0, %v938
        %v940 = vrot.slane %v466, %v939
        %v943 = vsel %vm285, %v920, 0
        %v946 = vsel %vm285, %v921, 0
        %v949 = vsel %vm285, %v922, 0
        %v952 = vsel %vm285, %v923, 0
        %v955 = vsel %vm285, %v924, 0
        %v958 = vsel %vm285, %v925, 0
        %v961 = vsel %vm285, %v926, 0
        %v964 = vsel %vm285, %v927, 0
        %v967 = vsel %vm285, %v928, 0
        %v970 = vsel %vm285, %v929, 0
        %v973 = vsel %vm285, %v930, 0
        %v976 = vsel %vm285, %v931, 0
        %v979 = vsel %vm285, %v932, 0
        %v982 = vsel %vm285, %v933, 0
        %v985 = vsel %vm285, %v934, 0
        %v988 = vsel %vm285, %v935, 0
        %990 = vmatprep.subr.mxu0 0.0
        %991 = vmatpush1.msra.mxu0 %v462
        %992 = vmatprep.subr.mxu0 0.0
        %993 = vmatpush1.msra.mxu0 %v463
        %994 = vmatprep.subr.mxu0 0.0
        %995 = vmatpush1.msra.mxu0 %v464
        %996 = vmatprep.subr.mxu0 0.0
        %997 = vmatpush1.msra.mxu0 %v465
        %998 = vmatprep.subr.mxu0 0.0
        %999 = vmatpush1.msra.mxu0 0.0
        %1000 = vmatprep.subr.mxu0 0.0
        %1001 = vmatpush1.msra.mxu0 0.0
        %1002 = vmatprep.subr.mxu0 0.0
        %1003 = vmatpush1.msra.mxu0 0.0
        %1004 = vmatprep.subr.mxu0 0.0
        %1005 = vmatpush1.msra.mxu0 0.0
        %1006 = vmatprep.subr.mxu0 0.0
        %1007 = vmatpush1.msra.mxu0 0.0
        %1008 = vmatprep.subr.mxu0 0.0
        %1009 = vmatpush1.msra.mxu0 0.0
        %1010 = vmatprep.subr.mxu0 0.0
        %1011 = vmatpush1.msra.mxu0 0.0
        %1012 = vmatprep.subr.mxu0 0.0
        %1013 = vmatpush1.msra.mxu0 0.0
        %1014 = vmatprep.subr.mxu0 0.0
        %1015 = vmatpush1.msra.mxu0 0.0
        %1016 = vmatprep.subr.mxu0 0.0
        %1017 = vmatpush1.msra.mxu0 0.0
        %1018 = vmatprep.subr.mxu0 0.0
        %1019 = vmatpush1.msra.mxu0 0.0
        %1020 = vmatprep.subr.mxu0 0.0
        %1021 = vmatpush1.msra.mxu0 0.0
        %1022 = vmatprep.subr.mxu0 0.0
        %1023 = vmatpush1.msra.mxu0 0.0
        %1024 = vmatprep.subr.mxu0 0.0
        %1025 = vmatpush1.msra.mxu0 0.0
        %1026 = vmatprep.subr.mxu0 0.0
        %1027 = vmatpush1.msra.mxu0 0.0
        %1028 = vmatprep.subr.mxu0 0.0
        %1029 = vmatpush1.msra.mxu0 0.0
        %1030 = vmatprep.subr.mxu0 0.0
        %1031 = vmatpush1.msra.mxu0 0.0
        %1032 = vmatprep.subr.mxu0 0.0
        %1033 = vmatpush1.msra.mxu0 0.0
        %1034 = vmatprep.subr.mxu0 0.0
        %1035 = vmatpush1.msra.mxu0 0.0
        %1036 = vmatprep.subr.mxu0 0.0
        %1037 = vmatpush1.msra.mxu0 0.0
        %1038 = vmatprep.subr.mxu0 0.0
        %1039 = vmatpush1.msra.mxu0 0.0
        %1040 = vmatprep.subr.mxu0 0.0
        %1041 = vmatpush1.msra.mxu0 0.0
        %1042 = vmatprep.subr.mxu0 0.0
        %1043 = vmatpush1.msra.mxu0 0.0
        %1044 = vmatprep.subr.mxu0 0.0
        %1045 = vmatpush1.msra.mxu0 0.0
        %1046 = vmatprep.subr.mxu0 0.0
        %1047 = vmatpush1.msra.mxu0 0.0
        %1048 = vmatprep.subr.mxu0 0.0
        %1049 = vmatpush1.msra.mxu0 0.0
        %1050 = vmatprep.subr.mxu0 0.0
        %1051 = vmatpush1.msra.mxu0 0.0
        %1052 = vmatprep.subr.mxu0 0.0
        %1053 = vmatpush1.msra.mxu0 0.0
        %1054 = vmatprep.mubr.f32.mxu0 0.0
        %1055 = vmatmul.mubr.f32.gmra.mrb[0].mxu0 %v943
        %v1056 = vpop.f32.mrb[0].mxu0
        %v1057 = vadd.f32 %v940, %v1056
        %v1058 = vpop.f32.mrb[0].mxu0
        %1059 = vmatprep.mubr.f32.mxu0 0.0
        %1060 = vmatmul.mubr.f32.gmra.mrb[0].mxu0 %v946
        %v1061 = vpop.f32.mrb[0].mxu0
        %v1062 = vadd.f32 %v940, %v1061
        %v1063 = vpop.f32.mrb[0].mxu0
        %1064 = vmatprep.mubr.f32.mxu0 0.0
        %1065 = vmatmul.mubr.f32.gmra.mrb[0].mxu0 %v949
        %v1066 = vpop.f32.mrb[0].mxu0
        %v1067 = vadd.f32 %v940, %v1066
        %v1068 = vpop.f32.mrb[0].mxu0
        %1069 = vmatprep.mubr.f32.mxu0 0.0
        %1070 = vmatmul.mubr.f32.gmra.mrb[0].mxu0 %v952
        %v1071 = vpop.f32.mrb[0].mxu0
        %v1072 = vadd.f32 %v940, %v1071
        %v1073 = vpop.f32.mrb[0].mxu0
        %1074 = vmatprep.mubr.f32.mxu0 0.0
        %1075 = vmatmul.mubr.f32.gmra.mrb[0].mxu0 %v955
        %v1076 = vpop.f32.mrb[0].mxu0
        %v1077 = vadd.f32 %v940, %v1076
        %v1078 = vpop.f32.mrb[0].mxu0
        %1079 = vmatprep.mubr.f32.mxu0 0.0
        %1080 = vmatmul.mubr.f32.gmra.mrb[0].mxu0 %v958
        %v1081 = vpop.f32.mrb[0].mxu0
        %v1082 = vadd.f32 %v940, %v1081
        %v1083 = vpop.f32.mrb[0].mxu0
        %1084 = vmatprep.mubr.f32.mxu0 0.0
        %1085 = vmatmul.mubr.f32.gmra.mrb[0].mxu0 %v961
        %v1086 = vpop.f32.mrb[0].mxu0
        %v1087 = vadd.f32 %v940, %v1086
        %v1088 = vpop.f32.mrb[0].mxu0
        %1089 = vmatprep.mubr.f32.mxu0 0.0
        %1090 = vmatmul.mubr.f32.gmra.mrb[0].mxu0 %v964
        %v1091 = vpop.f32.mrb[0].mxu0
        %v1092 = vadd.f32 %v940, %v1091
        %v1093 = vpop.f32.mrb[0].mxu0
        %1094 = vmatprep.mubr.f32.mxu0 0.0
        %1095 = vmatmul.mubr.f32.gmra.mrb[0].mxu0 %v967
        %v1096 = vpop.f32.mrb[0].mxu0
        %v1097 = vadd.f32 %v940, %v1096
        %v1098 = vpop.f32.mrb[0].mxu0
        %1099 = vmatprep.mubr.f32.mxu0 0.0
        %1100 = vmatmul.mubr.f32.gmra.mrb[0].mxu0 %v970
        %v1101 = vpop.f32.mrb[0].mxu0
        %v1102 = vadd.f32 %v940, %v1101
        %v1103 = vpop.f32.mrb[0].mxu0
        %1104 = vmatprep.mubr.f32.mxu0 0.0
        %1105 = vmatmul.mubr.f32.gmra.mrb[0].mxu0 %v973
        %v1106 = vpop.f32.mrb[0].mxu0
        %v1107 = vadd.f32 %v940, %v1106
        %v1108 = vpop.f32.mrb[0].mxu0
        %1109 = vmatprep.mubr.f32.mxu0 0.0
        %1110 = vmatmul.mubr.f32.gmra.mrb[0].mxu0 %v976
        %v1111 = vpop.f32.mrb[0].mxu0
        %v1112 = vadd.f32 %v940, %v1111
        %v1113 = vpop.f32.mrb[0].mxu0
        %1114 = vmatprep.mubr.f32.mxu0 0.0
        %1115 = vmatmul.mubr.f32.gmra.mrb[0].mxu0 %v979
        %v1116 = vpop.f32.mrb[0].mxu0
        %v1117 = vadd.f32 %v940, %v1116
        %v1118 = vpop.f32.mrb[0].mxu0
        %1119 = vmatprep.mubr.f32.mxu0 0.0
        %1120 = vmatmul.mubr.f32.gmra.mrb[0].mxu0 %v982
        %v1121 = vpop.f32.mrb[0].mxu0
        %v1122 = vadd.f32 %v940, %v1121
        %v1123 = vpop.f32.mrb[0].mxu0
        %1124 = vmatprep.mubr.f32.mxu0 0.0
        %1125 = vmatmul.mubr.f32.gmra.mrb[0].mxu0 %v985
        %v1126 = vpop.f32.mrb[0].mxu0
        %v1127 = vadd.f32 %v940, %v1126
        %v1128 = vpop.f32.mrb[0].mxu0
        %1129 = vmatprep.mubr.f32.mxu0 0.0
        %1130 = vmatmul.mubr.f32.gmra.mrb[0].mxu0 %v988
        %v1131 = vpop.f32.mrb[0].mxu0
        %v1132 = vadd.f32 %v940, %v1131
        %v1133 = vpop.f32.mrb[0].mxu0
        %1134 = vdwg.mxu0
        %v1135 = vmax.f32 %v1057, 0.0
        %v1136 = vmax.f32 %v1062, 0.0
        %v1137 = vmax.f32 %v1067, 0.0
        %v1138 = vmax.f32 %v1072, 0.0
        %v1139 = vmax.f32 %v1077, 0.0
        %v1140 = vmax.f32 %v1082, 0.0
        %v1141 = vmax.f32 %v1087, 0.0
        %v1142 = vmax.f32 %v1092, 0.0
        %v1143 = vmax.f32 %v1097, 0.0
        %v1144 = vmax.f32 %v1102, 0.0
        %v1145 = vmax.f32 %v1107, 0.0
        %v1146 = vmax.f32 %v1112, 0.0
        %v1147 = vmax.f32 %v1117, 0.0
        %v1148 = vmax.f32 %v1122, 0.0
        %v1149 = vmax.f32 %v1127, 0.0
        %v1150 = vmax.f32 %v1132, 0.0
        %v1151 = vld [vmem:[%s4] sm:$0x1]
        %v1153 = vlaneseq
        %v1154 = vshrl.u32 %v1153, 7
        %v1155 = vsub.s32 0, %v1154
        %v1156 = vrot.slane %v1151, %v1155
        %v1158 = vmul.f32 %v1135, %v1156
        %v1159 = vmul.f32 %v1136, %v1156
        %v1160 = vmul.f32 %v1137, %v1156
        %v1161 = vmul.f32 %v1138, %v1156
        %v1162 = vmul.f32 %v1139, %v1156
        %v1163 = vmul.f32 %v1140, %v1156
        %v1164 = vmul.f32 %v1141, %v1156
        %v1165 = vmul.f32 %v1142, %v1156
        %v1166 = vmul.f32 %v1143, %v1156
        %v1167 = vmul.f32 %v1144, %v1156
        %v1168 = vmul.f32 %v1145, %v1156
        %v1169 = vmul.f32 %v1146, %v1156
        %v1170 = vmul.f32 %v1147, %v1156
        %v1171 = vmul.f32 %v1148, %v1156
        %v1172 = vmul.f32 %v1149, %v1156
        %v1173 = vmul.f32 %v1150, %v1156
        %v1174 = vld [vmem:[%s5] sm:$0x1]
        %v1176 = vlaneseq
        %v1177 = vshrl.u32 %v1176, 7
        %v1178 = vsub.s32 0, %v1177
        %v1179 = vrot.slane %v1174, %v1178
        %v1181 = vadd.f32 %v1158, %v1179
        %v1182 = vadd.f32 %v1159, %v1179
        %v1183 = vadd.f32 %v1160, %v1179
        %v1184 = vadd.f32 %v1161, %v1179
        %v1185 = vadd.f32 %v1162, %v1179
        %v1186 = vadd.f32 %v1163, %v1179
        %v1187 = vadd.f32 %v1164, %v1179
        %v1188 = vadd.f32 %v1165, %v1179
        %v1189 = vadd.f32 %v1166, %v1179
        %v1190 = vadd.f32 %v1167, %v1179
        %v1191 = vadd.f32 %v1168, %v1179
        %v1192 = vadd.f32 %v1169, %v1179
        %v1193 = vadd.f32 %v1170, %v1179
        %v1194 = vadd.f32 %v1171, %v1179
        %v1195 = vadd.f32 %v1172, %v1179
        %v1196 = vadd.f32 %v1173, %v1179
        %s1197 = scalar_lea.vmem [#allocation3], 24
        %1198 = vst.msk [vmem:[%s1197 + $0x1] sm:$0xff] %vm285, %v1181
        %1199 = vst.msk [vmem:[%s1197 + $0x9] sm:$0xff] %vm285, %v1182
        %1200 = vst.msk [vmem:[%s1197 + $0x19] sm:$0xff] %vm285, %v1183
        %1201 = vst.msk [vmem:[%s1197 + $0x21] sm:$0xff] %vm285, %v1184
        %1202 = vst.msk [vmem:[%s1197 + $0x31] sm:$0xff] %vm285, %v1185
        %1203 = vst.msk [vmem:[%s1197 + $0x39] sm:$0xff] %vm285, %v1186
        %1204 = vst.msk [vmem:[%s1197 + $0x49] sm:$0xff] %vm285, %v1187
        %1205 = vst.msk [vmem:[%s1197 + $0x51] sm:$0xff] %vm285, %v1188
        %1206 = vst.msk [vmem:[%s1197 + $0x61] sm:$0xff] %vm285, %v1189
        %1207 = vst.msk [vmem:[%s1197 + $0x69] sm:$0xff] %vm285, %v1190
        %1208 = vst.msk [vmem:[%s1197 + $0x79] sm:$0xff] %vm285, %v1191
        %1209 = vst.msk [vmem:[%s1197 + $0x81] sm:$0xff] %vm285, %v1192
        %1210 = vst.msk [vmem:[%s1197 + $0x91] sm:$0xff] %vm285, %v1193
        %1211 = vst.msk [vmem:[%s1197 + $0x99] sm:$0xff] %vm285, %v1194
        %1212 = vst.msk [vmem:[%s1197 + $0xa9] sm:$0xff] %vm285, %v1195
        %1213 = vst.msk [vmem:[%s1197 + $0xb1] sm:$0xff] %vm285, %v1196
        %s1214 = scalar_lea.vmem [#allocation2], 192
        %v1215 = vld [vmem:[%s1214] sm:$0xff]
        %v1216 = vld [vmem:[%s1214 + $0x8] sm:$0xff]
        %v1217 = vld [vmem:[%s1214 + $0x18] sm:$0xff]
        %v1218 = vld [vmem:[%s1214 + $0x20] sm:$0xff]
        %v1219 = vld [vmem:[%s1214 + $0x30] sm:$0xff]
        %v1220 = vld [vmem:[%s1214 + $0x38] sm:$0xff]
        %v1221 = vld [vmem:[%s1214 + $0x48] sm:$0xff]
        %v1222 = vld [vmem:[%s1214 + $0x50] sm:$0xff]
        %v1223 = vld [vmem:[%s1214 + $0x60] sm:$0xff]
        %v1224 = vld [vmem:[%s1214 + $0x68] sm:$0xff]
        %v1225 = vld [vmem:[%s1214 + $0x78] sm:$0xff]
        %v1226 = vld [vmem:[%s1214 + $0x80] sm:$0xff]
        %v1227 = vld [vmem:[%s1214 + $0x90] sm:$0xff]
        %v1228 = vld [vmem:[%s1214 + $0x98] sm:$0xff]
        %v1229 = vld [vmem:[%s1214 + $0xa8] sm:$0xff]
        %v1230 = vld [vmem:[%s1214 + $0xb0] sm:$0xff]
        %v1231 = vmul.f32 %v1215, %v486
        %v1232 = vmul.f32 %v1216, %v486
        %v1233 = vmul.f32 %v1217, %v486
        %v1234 = vmul.f32 %v1218, %v486
        %v1235 = vmul.f32 %v1219, %v486
        %v1236 = vmul.f32 %v1220, %v486
        %v1237 = vmul.f32 %v1221, %v486
        %v1238 = vmul.f32 %v1222, %v486
        %v1239 = vmul.f32 %v1223, %v486
        %v1240 = vmul.f32 %v1224, %v486
        %v1241 = vmul.f32 %v1225, %v486
        %v1242 = vmul.f32 %v1226, %v486
        %v1243 = vmul.f32 %v1227, %v486
        %v1244 = vmul.f32 %v1228, %v486
        %v1245 = vmul.f32 %v1229, %v486
        %v1246 = vmul.f32 %v1230, %v486
        %v1247 = vadd.f32 %v1231, 0.0
        %v1248 = vadd.f32 %v1232, 0.0
        %v1249 = vadd.f32 %v1233, 0.0
        %v1250 = vadd.f32 %v1234, 0.0
        %v1251 = vadd.f32 %v1235, 0.0
        %v1252 = vadd.f32 %v1236, 0.0
        %v1253 = vadd.f32 %v1237, 0.0
        %v1254 = vadd.f32 %v1238, 0.0
        %v1255 = vadd.f32 %v1239, 0.0
        %v1256 = vadd.f32 %v1240, 0.0
        %v1257 = vadd.f32 %v1241, 0.0
        %v1258 = vadd.f32 %v1242, 0.0
        %v1259 = vadd.f32 %v1243, 0.0
        %v1260 = vadd.f32 %v1244, 0.0
        %v1261 = vadd.f32 %v1245, 0.0
        %v1262 = vadd.f32 %v1246, 0.0
        %v1263 = vld [vmem:[%s1214 + $0x1] sm:$0xff]
        %v1264 = vld [vmem:[%s1214 + $0x9] sm:$0xff]
        %v1265 = vld [vmem:[%s1214 + $0x19] sm:$0xff]
        %v1266 = vld [vmem:[%s1214 + $0x21] sm:$0xff]
        %v1267 = vld [vmem:[%s1214 + $0x31] sm:$0xff]
        %v1268 = vld [vmem:[%s1214 + $0x39] sm:$0xff]
        %v1269 = vld [vmem:[%s1214 + $0x49] sm:$0xff]
        %v1270 = vld [vmem:[%s1214 + $0x51] sm:$0xff]
        %v1271 = vld [vmem:[%s1214 + $0x61] sm:$0xff]
        %v1272 = vld [vmem:[%s1214 + $0x69] sm:$0xff]
        %v1273 = vld [vmem:[%s1214 + $0x79] sm:$0xff]
        %v1274 = vld [vmem:[%s1214 + $0x81] sm:$0xff]
        %v1275 = vld [vmem:[%s1214 + $0x91] sm:$0xff]
        %v1276 = vld [vmem:[%s1214 + $0x99] sm:$0xff]
        %v1277 = vld [vmem:[%s1214 + $0xa9] sm:$0xff]
        %v1278 = vld [vmem:[%s1214 + $0xb1] sm:$0xff]
        %v1279 = vmul.f32 %v1263, %v538
        %v1280 = vmul.f32 %v1264, %v538
        %v1281 = vmul.f32 %v1265, %v538
        %v1282 = vmul.f32 %v1266, %v538
        %v1283 = vmul.f32 %v1267, %v538
        %v1284 = vmul.f32 %v1268, %v538
        %v1285 = vmul.f32 %v1269, %v538
        %v1286 = vmul.f32 %v1270, %v538
        %v1287 = vmul.f32 %v1271, %v538
        %v1288 = vmul.f32 %v1272, %v538
        %v1289 = vmul.f32 %v1273, %v538
        %v1290 = vmul.f32 %v1274, %v538
        %v1291 = vmul.f32 %v1275, %v538
        %v1292 = vmul.f32 %v1276, %v538
        %v1293 = vmul.f32 %v1277, %v538
        %v1294 = vmul.f32 %v1278, %v538
        %v1295 = vadd.f32 %v1247, %v1279
        %v1296 = vadd.f32 %v1248, %v1280
        %v1297 = vadd.f32 %v1249, %v1281
        %v1298 = vadd.f32 %v1250, %v1282
        %v1299 = vadd.f32 %v1251, %v1283
        %v1300 = vadd.f32 %v1252, %v1284
        %v1301 = vadd.f32 %v1253, %v1285
        %v1302 = vadd.f32 %v1254, %v1286
        %v1303 = vadd.f32 %v1255, %v1287
        %v1304 = vadd.f32 %v1256, %v1288
        %v1305 = vadd.f32 %v1257, %v1289
        %v1306 = vadd.f32 %v1258, %v1290
        %v1307 = vadd.f32 %v1259, %v1291
        %v1308 = vadd.f32 %v1260, %v1292
        %v1309 = vadd.f32 %v1261, %v1293
        %v1310 = vadd.f32 %v1262, %v1294
        %v1311 = vld [vmem:[%s1214 + $0x2] sm:$0xff]
        %v1312 = vld [vmem:[%s1214 + $0xa] sm:$0xff]
        %v1313 = vld [vmem:[%s1214 + $0x1a] sm:$0xff]
        %v1314 = vld [vmem:[%s1214 + $0x22] sm:$0xff]
        %v1315 = vld [vmem:[%s1214 + $0x32] sm:$0xff]
        %v1316 = vld [vmem:[%s1214 + $0x3a] sm:$0xff]
        %v1317 = vld [vmem:[%s1214 + $0x4a] sm:$0xff]
        %v1318 = vld [vmem:[%s1214 + $0x52] sm:$0xff]
        %v1319 = vld [vmem:[%s1214 + $0x62] sm:$0xff]
        %v1320 = vld [vmem:[%s1214 + $0x6a] sm:$0xff]
        %v1321 = vld [vmem:[%s1214 + $0x7a] sm:$0xff]
        %v1322 = vld [vmem:[%s1214 + $0x82] sm:$0xff]
        %v1323 = vld [vmem:[%s1214 + $0x92] sm:$0xff]
        %v1324 = vld [vmem:[%s1214 + $0x9a] sm:$0xff]
        %v1325 = vld [vmem:[%s1214 + $0xaa] sm:$0xff]
        %v1326 = vld [vmem:[%s1214 + $0xb2] sm:$0xff]
        %v1327 = vmul.f32 %v1311, %v590
        %v1328 = vmul.f32 %v1312, %v590
        %v1329 = vmul.f32 %v1313, %v590
        %v1330 = vmul.f32 %v1314, %v590
        %v1331 = vmul.f32 %v1315, %v590
        %v1332 = vmul.f32 %v1316, %v590
        %v1333 = vmul.f32 %v1317, %v590
        %v1334 = vmul.f32 %v1318, %v590
        %v1335 = vmul.f32 %v1319, %v590
        %v1336 = vmul.f32 %v1320, %v590
        %v1337 = vmul.f32 %v1321, %v590
        %v1338 = vmul.f32 %v1322, %v590
        %v1339 = vmul.f32 %v1323, %v590
        %v1340 = vmul.f32 %v1324, %v590
        %v1341 = vmul.f32 %v1325, %v590
        %v1342 = vmul.f32 %v1326, %v590
        %v1343 = vadd.f32 %v1295, %v1327
        %v1344 = vadd.f32 %v1296, %v1328
        %v1345 = vadd.f32 %v1297, %v1329
        %v1346 = vadd.f32 %v1298, %v1330
        %v1347 = vadd.f32 %v1299, %v1331
        %v1348 = vadd.f32 %v1300, %v1332
        %v1349 = vadd.f32 %v1301, %v1333
        %v1350 = vadd.f32 %v1302, %v1334
        %v1351 = vadd.f32 %v1303, %v1335
        %v1352 = vadd.f32 %v1304, %v1336
        %v1353 = vadd.f32 %v1305, %v1337
        %v1354 = vadd.f32 %v1306, %v1338
        %v1355 = vadd.f32 %v1307, %v1339
        %v1356 = vadd.f32 %v1308, %v1340
        %v1357 = vadd.f32 %v1309, %v1341
        %v1358 = vadd.f32 %v1310, %v1342
        %s1359 = scalar_lea.vmem [#allocation2], 216
        %v1360 = vld [vmem:[%s1359] sm:$0xff]
        %v1361 = vld [vmem:[%s1359 + $0x8] sm:$0xff]
        %v1362 = vld [vmem:[%s1359 + $0x18] sm:$0xff]
        %v1363 = vld [vmem:[%s1359 + $0x20] sm:$0xff]
        %v1364 = vld [vmem:[%s1359 + $0x30] sm:$0xff]
        %v1365 = vld [vmem:[%s1359 + $0x38] sm:$0xff]
        %v1366 = vld [vmem:[%s1359 + $0x48] sm:$0xff]
        %v1367 = vld [vmem:[%s1359 + $0x50] sm:$0xff]
        %v1368 = vld [vmem:[%s1359 + $0x60] sm:$0xff]
        %v1369 = vld [vmem:[%s1359 + $0x68] sm:$0xff]
        %v1370 = vld [vmem:[%s1359 + $0x78] sm:$0xff]
        %v1371 = vld [vmem:[%s1359 + $0x80] sm:$0xff]
        %v1372 = vld [vmem:[%s1359 + $0x90] sm:$0xff]
        %v1373 = vld [vmem:[%s1359 + $0x98] sm:$0xff]
        %v1374 = vld [vmem:[%s1359 + $0xa8] sm:$0xff]
        %v1375 = vld [vmem:[%s1359 + $0xb0] sm:$0xff]
        %v1376 = vmul.f32 %v1360, %v642
        %v1377 = vmul.f32 %v1361, %v642
        %v1378 = vmul.f32 %v1362, %v642
        %v1379 = vmul.f32 %v1363, %v642
        %v1380 = vmul.f32 %v1364, %v642
        %v1381 = vmul.f32 %v1365, %v642
        %v1382 = vmul.f32 %v1366, %v642
        %v1383 = vmul.f32 %v1367, %v642
        %v1384 = vmul.f32 %v1368, %v642
        %v1385 = vmul.f32 %v1369, %v642
        %v1386 = vmul.f32 %v1370, %v642
        %v1387 = vmul.f32 %v1371, %v642
        %v1388 = vmul.f32 %v1372, %v642
        %v1389 = vmul.f32 %v1373, %v642
        %v1390 = vmul.f32 %v1374, %v642
        %v1391 = vmul.f32 %v1375, %v642
        %v1392 = vadd.f32 %v1343, %v1376
        %v1393 = vadd.f32 %v1344, %v1377
        %v1394 = vadd.f32 %v1345, %v1378
        %v1395 = vadd.f32 %v1346, %v1379
        %v1396 = vadd.f32 %v1347, %v1380
        %v1397 = vadd.f32 %v1348, %v1381
        %v1398 = vadd.f32 %v1349, %v1382
        %v1399 = vadd.f32 %v1350, %v1383
        %v1400 = vadd.f32 %v1351, %v1384
        %v1401 = vadd.f32 %v1352, %v1385
        %v1402 = vadd.f32 %v1353, %v1386
        %v1403 = vadd.f32 %v1354, %v1387
        %v1404 = vadd.f32 %v1355, %v1388
        %v1405 = vadd.f32 %v1356, %v1389
        %v1406 = vadd.f32 %v1357, %v1390
        %v1407 = vadd.f32 %v1358, %v1391
        %v1408 = vld [vmem:[%s1359 + $0x1] sm:$0xff]
        %v1409 = vld [vmem:[%s1359 + $0x9] sm:$0xff]
        %v1410 = vld [vmem:[%s1359 + $0x19] sm:$0xff]
        %v1411 = vld [vmem:[%s1359 + $0x21] sm:$0xff]
        %v1412 = vld [vmem:[%s1359 + $0x31] sm:$0xff]
        %v1413 = vld [vmem:[%s1359 + $0x39] sm:$0xff]
        %v1414 = vld [vmem:[%s1359 + $0x49] sm:$0xff]
        %v1415 = vld [vmem:[%s1359 + $0x51] sm:$0xff]
        %v1416 = vld [vmem:[%s1359 + $0x61] sm:$0xff]
        %v1417 = vld [vmem:[%s1359 + $0x69] sm:$0xff]
        %v1418 = vld [vmem:[%s1359 + $0x79] sm:$0xff]
        %v1419 = vld [vmem:[%s1359 + $0x81] sm:$0xff]
        %v1420 = vld [vmem:[%s1359 + $0x91] sm:$0xff]
        %v1421 = vld [vmem:[%s1359 + $0x99] sm:$0xff]
        %v1422 = vld [vmem:[%s1359 + $0xa9] sm:$0xff]
        %v1423 = vld [vmem:[%s1359 + $0xb1] sm:$0xff]
        %v1424 = vmul.f32 %v1408, %v694
        %v1425 = vmul.f32 %v1409, %v694
        %v1426 = vmul.f32 %v1410, %v694
        %v1427 = vmul.f32 %v1411, %v694
        %v1428 = vmul.f32 %v1412, %v694
        %v1429 = vmul.f32 %v1413, %v694
        %v1430 = vmul.f32 %v1414, %v694
        %v1431 = vmul.f32 %v1415, %v694
        %v1432 = vmul.f32 %v1416, %v694
        %v1433 = vmul.f32 %v1417, %v694
        %v1434 = vmul.f32 %v1418, %v694
        %v1435 = vmul.f32 %v1419, %v694
        %v1436 = vmul.f32 %v1420, %v694
        %v1437 = vmul.f32 %v1421, %v694
        %v1438 = vmul.f32 %v1422, %v694
        %v1439 = vmul.f32 %v1423, %v694
        %v1440 = vadd.f32 %v1392, %v1424
        %v1441 = vadd.f32 %v1393, %v1425
        %v1442 = vadd.f32 %v1394, %v1426
        %v1443 = vadd.f32 %v1395, %v1427
        %v1444 = vadd.f32 %v1396, %v1428
        %v1445 = vadd.f32 %v1397, %v1429
        %v1446 = vadd.f32 %v1398, %v1430
        %v1447 = vadd.f32 %v1399, %v1431
        %v1448 = vadd.f32 %v1400, %v1432
        %v1449 = vadd.f32 %v1401, %v1433
        %v1450 = vadd.f32 %v1402, %v1434
        %v1451 = vadd.f32 %v1403, %v1435
        %v1452 = vadd.f32 %v1404, %v1436
        %v1453 = vadd.f32 %v1405, %v1437
        %v1454 = vadd.f32 %v1406, %v1438
        %v1455 = vadd.f32 %v1407, %v1439
        %v1456 = vld [vmem:[%s1359 + $0x2] sm:$0xff]
        %v1457 = vld [vmem:[%s1359 + $0xa] sm:$0xff]
        %v1458 = vld [vmem:[%s1359 + $0x1a] sm:$0xff]
        %v1459 = vld [vmem:[%s1359 + $0x22] sm:$0xff]
        %v1460 = vld [vmem:[%s1359 + $0x32] sm:$0xff]
        %v1461 = vld [vmem:[%s1359 + $0x3a] sm:$0xff]
        %v1462 = vld [vmem:[%s1359 + $0x4a] sm:$0xff]
        %v1463 = vld [vmem:[%s1359 + $0x52] sm:$0xff]
        %v1464 = vld [vmem:[%s1359 + $0x62] sm:$0xff]
        %v1465 = vld [vmem:[%s1359 + $0x6a] sm:$0xff]
        %v1466 = vld [vmem:[%s1359 + $0x7a] sm:$0xff]
        %v1467 = vld [vmem:[%s1359 + $0x82] sm:$0xff]
        %v1468 = vld [vmem:[%s1359 + $0x92] sm:$0xff]
        %v1469 = vld [vmem:[%s1359 + $0x9a] sm:$0xff]
        %v1470 = vld [vmem:[%s1359 + $0xaa] sm:$0xff]
        %v1471 = vld [vmem:[%s1359 + $0xb2] sm:$0xff]
        %v1472 = vmul.f32 %v1456, %v746
        %v1473 = vmul.f32 %v1457, %v746
        %v1474 = vmul.f32 %v1458, %v746
        %v1475 = vmul.f32 %v1459, %v746
        %v1476 = vmul.f32 %v1460, %v746
        %v1477 = vmul.f32 %v1461, %v746
        %v1478 = vmul.f32 %v1462, %v746
        %v1479 = vmul.f32 %v1463, %v746
        %v1480 = vmul.f32 %v1464, %v746
        %v1481 = vmul.f32 %v1465, %v746
        %v1482 = vmul.f32 %v1466, %v746
        %v1483 = vmul.f32 %v1467, %v746
        %v1484 = vmul.f32 %v1468, %v746
        %v1485 = vmul.f32 %v1469, %v746
        %v1486 = vmul.f32 %v1470, %v746
        %v1487 = vmul.f32 %v1471, %v746
        %v1488 = vadd.f32 %v1440, %v1472
        %v1489 = vadd.f32 %v1441, %v1473
        %v1490 = vadd.f32 %v1442, %v1474
        %v1491 = vadd.f32 %v1443, %v1475
        %v1492 = vadd.f32 %v1444, %v1476
        %v1493 = vadd.f32 %v1445, %v1477
        %v1494 = vadd.f32 %v1446, %v1478
        %v1495 = vadd.f32 %v1447, %v1479
        %v1496 = vadd.f32 %v1448, %v1480
        %v1497 = vadd.f32 %v1449, %v1481
        %v1498 = vadd.f32 %v1450, %v1482
        %v1499 = vadd.f32 %v1451, %v1483
        %v1500 = vadd.f32 %v1452, %v1484
        %v1501 = vadd.f32 %v1453, %v1485
        %v1502 = vadd.f32 %v1454, %v1486
        %v1503 = vadd.f32 %v1455, %v1487
        %s1504 = scalar_lea.vmem [#allocation2], 240
        %v1505 = vld [vmem:[%s1504] sm:$0xff]
        %v1506 = vld [vmem:[%s1504 + $0x8] sm:$0xff]
        %v1507 = vld [vmem:[%s1504 + $0x18] sm:$0xff]
        %v1508 = vld [vmem:[%s1504 + $0x20] sm:$0xff]
        %v1509 = vld [vmem:[%s1504 + $0x30] sm:$0xff]
        %v1510 = vld [vmem:[%s1504 + $0x38] sm:$0xff]
        %v1511 = vld [vmem:[%s1504 + $0x48] sm:$0xff]
        %v1512 = vld [vmem:[%s1504 + $0x50] sm:$0xff]
        %v1513 = vld [vmem:[%s1504 + $0x60] sm:$0xff]
        %v1514 = vld [vmem:[%s1504 + $0x68] sm:$0xff]
        %v1515 = vld [vmem:[%s1504 + $0x78] sm:$0xff]
        %v1516 = vld [vmem:[%s1504 + $0x80] sm:$0xff]
        %v1517 = vld [vmem:[%s1504 + $0x90] sm:$0xff]
        %v1518 = vld [vmem:[%s1504 + $0x98] sm:$0xff]
        %v1519 = vld [vmem:[%s1504 + $0xa8] sm:$0xff]
        %v1520 = vld [vmem:[%s1504 + $0xb0] sm:$0xff]
        %v1521 = vmul.f32 %v1505, %v799
        %v1522 = vmul.f32 %v1506, %v799
        %v1523 = vmul.f32 %v1507, %v799
        %v1524 = vmul.f32 %v1508, %v799
        %v1525 = vmul.f32 %v1509, %v799
        %v1526 = vmul.f32 %v1510, %v799
        %v1527 = vmul.f32 %v1511, %v799
        %v1528 = vmul.f32 %v1512, %v799
        %v1529 = vmul.f32 %v1513, %v799
        %v1530 = vmul.f32 %v1514, %v799
        %v1531 = vmul.f32 %v1515, %v799
        %v1532 = vmul.f32 %v1516, %v799
        %v1533 = vmul.f32 %v1517, %v799
        %v1534 = vmul.f32 %v1518, %v799
        %v1535 = vmul.f32 %v1519, %v799
        %v1536 = vmul.f32 %v1520, %v799
        %v1537 = vadd.f32 %v1488, %v1521
        %v1538 = vadd.f32 %v1489, %v1522
        %v1539 = vadd.f32 %v1490, %v1523
        %v1540 = vadd.f32 %v1491, %v1524
        %v1541 = vadd.f32 %v1492, %v1525
        %v1542 = vadd.f32 %v1493, %v1526
        %v1543 = vadd.f32 %v1494, %v1527
        %v1544 = vadd.f32 %v1495, %v1528
        %v1545 = vadd.f32 %v1496, %v1529
        %v1546 = vadd.f32 %v1497, %v1530
        %v1547 = vadd.f32 %v1498, %v1531
        %v1548 = vadd.f32 %v1499, %v1532
        %v1549 = vadd.f32 %v1500, %v1533
        %v1550 = vadd.f32 %v1501, %v1534
        %v1551 = vadd.f32 %v1502, %v1535
        %v1552 = vadd.f32 %v1503, %v1536
        %v1553 = vld [vmem:[%s1504 + $0x1] sm:$0xff]
        %v1554 = vld [vmem:[%s1504 + $0x9] sm:$0xff]
        %v1555 = vld [vmem:[%s1504 + $0x19] sm:$0xff]
        %v1556 = vld [vmem:[%s1504 + $0x21] sm:$0xff]
        %v1557 = vld [vmem:[%s1504 + $0x31] sm:$0xff]
        %v1558 = vld [vmem:[%s1504 + $0x39] sm:$0xff]
        %v1559 = vld [vmem:[%s1504 + $0x49] sm:$0xff]
        %v1560 = vld [vmem:[%s1504 + $0x51] sm:$0xff]
        %v1561 = vld [vmem:[%s1504 + $0x61] sm:$0xff]
        %v1562 = vld [vmem:[%s1504 + $0x69] sm:$0xff]
        %v1563 = vld [vmem:[%s1504 + $0x79] sm:$0xff]
        %v1564 = vld [vmem:[%s1504 + $0x81] sm:$0xff]
        %v1565 = vld [vmem:[%s1504 + $0x91] sm:$0xff]
        %v1566 = vld [vmem:[%s1504 + $0x99] sm:$0xff]
        %v1567 = vld [vmem:[%s1504 + $0xa9] sm:$0xff]
        %v1568 = vld [vmem:[%s1504 + $0xb1] sm:$0xff]
        %v1569 = vmul.f32 %v1553, %v851
        %v1570 = vmul.f32 %v1554, %v851
        %v1571 = vmul.f32 %v1555, %v851
        %v1572 = vmul.f32 %v1556, %v851
        %v1573 = vmul.f32 %v1557, %v851
        %v1574 = vmul.f32 %v1558, %v851
        %v1575 = vmul.f32 %v1559, %v851
        %v1576 = vmul.f32 %v1560, %v851
        %v1577 = vmul.f32 %v1561, %v851
        %v1578 = vmul.f32 %v1562, %v851
        %v1579 = vmul.f32 %v1563, %v851
        %v1580 = vmul.f32 %v1564, %v851
        %v1581 = vmul.f32 %v1565, %v851
        %v1582 = vmul.f32 %v1566, %v851
        %v1583 = vmul.f32 %v1567, %v851
        %v1584 = vmul.f32 %v1568, %v851
        %v1585 = vadd.f32 %v1537, %v1569
        %v1586 = vadd.f32 %v1538, %v1570
        %v1587 = vadd.f32 %v1539, %v1571
        %v1588 = vadd.f32 %v1540, %v1572
        %v1589 = vadd.f32 %v1541, %v1573
        %v1590 = vadd.f32 %v1542, %v1574
        %v1591 = vadd.f32 %v1543, %v1575
        %v1592 = vadd.f32 %v1544, %v1576
        %v1593 = vadd.f32 %v1545, %v1577
        %v1594 = vadd.f32 %v1546, %v1578
        %v1595 = vadd.f32 %v1547, %v1579
        %v1596 = vadd.f32 %v1548, %v1580
        %v1597 = vadd.f32 %v1549, %v1581
        %v1598 = vadd.f32 %v1550, %v1582
        %v1599 = vadd.f32 %v1551, %v1583
        %v1600 = vadd.f32 %v1552, %v1584
        %v1601 = vld [vmem:[%s1504 + $0x2] sm:$0xff]
        %v1602 = vld [vmem:[%s1504 + $0xa] sm:$0xff]
        %v1603 = vld [vmem:[%s1504 + $0x1a] sm:$0xff]
        %v1604 = vld [vmem:[%s1504 + $0x22] sm:$0xff]
        %v1605 = vld [vmem:[%s1504 + $0x32] sm:$0xff]
        %v1606 = vld [vmem:[%s1504 + $0x3a] sm:$0xff]
        %v1607 = vld [vmem:[%s1504 + $0x4a] sm:$0xff]
        %v1608 = vld [vmem:[%s1504 + $0x52] sm:$0xff]
        %v1609 = vld [vmem:[%s1504 + $0x62] sm:$0xff]
        %v1610 = vld [vmem:[%s1504 + $0x6a] sm:$0xff]
        %v1611 = vld [vmem:[%s1504 + $0x7a] sm:$0xff]
        %v1612 = vld [vmem:[%s1504 + $0x82] sm:$0xff]
        %v1613 = vld [vmem:[%s1504 + $0x92] sm:$0xff]
        %v1614 = vld [vmem:[%s1504 + $0x9a] sm:$0xff]
        %v1615 = vld [vmem:[%s1504 + $0xaa] sm:$0xff]
        %v1616 = vld [vmem:[%s1504 + $0xb2] sm:$0xff]
        %v1617 = vmul.f32 %v1601, %v903
        %v1618 = vmul.f32 %v1602, %v903
        %v1619 = vmul.f32 %v1603, %v903
        %v1620 = vmul.f32 %v1604, %v903
        %v1621 = vmul.f32 %v1605, %v903
        %v1622 = vmul.f32 %v1606, %v903
        %v1623 = vmul.f32 %v1607, %v903
        %v1624 = vmul.f32 %v1608, %v903
        %v1625 = vmul.f32 %v1609, %v903
        %v1626 = vmul.f32 %v1610, %v903
        %v1627 = vmul.f32 %v1611, %v903
        %v1628 = vmul.f32 %v1612, %v903
        %v1629 = vmul.f32 %v1613, %v903
        %v1630 = vmul.f32 %v1614, %v903
        %v1631 = vmul.f32 %v1615, %v903
        %v1632 = vmul.f32 %v1616, %v903
        %v1633 = vadd.f32 %v1585, %v1617
        %v1634 = vadd.f32 %v1586, %v1618
        %v1635 = vadd.f32 %v1587, %v1619
        %v1636 = vadd.f32 %v1588, %v1620
        %v1637 = vadd.f32 %v1589, %v1621
        %v1638 = vadd.f32 %v1590, %v1622
        %v1639 = vadd.f32 %v1591, %v1623
        %v1640 = vadd.f32 %v1592, %v1624
        %v1641 = vadd.f32 %v1593, %v1625
        %v1642 = vadd.f32 %v1594, %v1626
        %v1643 = vadd.f32 %v1595, %v1627
        %v1644 = vadd.f32 %v1596, %v1628
        %v1645 = vadd.f32 %v1597, %v1629
        %v1646 = vadd.f32 %v1598, %v1630
        %v1647 = vadd.f32 %v1599, %v1631
        %v1648 = vadd.f32 %v1600, %v1632
        %v1650 = vsel %vm285, %v1633, 0
        %v1653 = vsel %vm285, %v1634, 0
        %v1656 = vsel %vm285, %v1635, 0
        %v1659 = vsel %vm285, %v1636, 0
        %v1662 = vsel %vm285, %v1637, 0
        %v1665 = vsel %vm285, %v1638, 0
        %v1668 = vsel %vm285, %v1639, 0
        %v1671 = vsel %vm285, %v1640, 0
        %v1674 = vsel %vm285, %v1641, 0
        %v1677 = vsel %vm285, %v1642, 0
        %v1680 = vsel %vm285, %v1643, 0
        %v1683 = vsel %vm285, %v1644, 0
        %v1686 = vsel %vm285, %v1645, 0
        %v1689 = vsel %vm285, %v1646, 0
        %v1692 = vsel %vm285, %v1647, 0
        %v1695 = vsel %vm285, %v1648, 0
        %1697 = vmatprep.subr.mxu0 0.0
        %1698 = vmatpush1.msra.mxu0 %v462
        %1699 = vmatprep.subr.mxu0 0.0
        %1700 = vmatpush1.msra.mxu0 %v463
        %1701 = vmatprep.subr.mxu0 0.0
        %1702 = vmatpush1.msra.mxu0 %v464
        %1703 = vmatprep.subr.mxu0 0.0
        %1704 = vmatpush1.msra.mxu0 %v465
        %1705 = vmatprep.subr.mxu0 0.0
        %1706 = vmatpush1.msra.mxu0 0.0
        %1707 = vmatprep.subr.mxu0 0.0
        %1708 = vmatpush1.msra.mxu0 0.0
        %1709 = vmatprep.subr.mxu0 0.0
        %1710 = vmatpush1.msra.mxu0 0.0
        %1711 = vmatprep.subr.mxu0 0.0
        %1712 = vmatpush1.msra.mxu0 0.0
        %1713 = vmatprep.subr.mxu0 0.0
        %1714 = vmatpush1.msra.mxu0 0.0
        %1715 = vmatprep.subr.mxu0 0.0
        %1716 = vmatpush1.msra.mxu0 0.0
        %1717 = vmatprep.subr.mxu0 0.0
        %1718 = vmatpush1.msra.mxu0 0.0
        %1719 = vmatprep.subr.mxu0 0.0
        %1720 = vmatpush1.msra.mxu0 0.0
        %1721 = vmatprep.subr.mxu0 0.0
        %1722 = vmatpush1.msra.mxu0 0.0
        %1723 = vmatprep.subr.mxu0 0.0
        %1724 = vmatpush1.msra.mxu0 0.0
        %1725 = vmatprep.subr.mxu0 0.0
        %1726 = vmatpush1.msra.mxu0 0.0
        %1727 = vmatprep.subr.mxu0 0.0
        %1728 = vmatpush1.msra.mxu0 0.0
        %1729 = vmatprep.subr.mxu0 0.0
        %1730 = vmatpush1.msra.mxu0 0.0
        %1731 = vmatprep.subr.mxu0 0.0
        %1732 = vmatpush1.msra.mxu0 0.0
        %1733 = vmatprep.subr.mxu0 0.0
        %1734 = vmatpush1.msra.mxu0 0.0
        %1735 = vmatprep.subr.mxu0 0.0
        %1736 = vmatpush1.msra.mxu0 0.0
        %1737 = vmatprep.subr.mxu0 0.0
        %1738 = vmatpush1.msra.mxu0 0.0
        %1739 = vmatprep.subr.mxu0 0.0
        %1740 = vmatpush1.msra.mxu0 0.0
        %1741 = vmatprep.subr.mxu0 0.0
        %1742 = vmatpush1.msra.mxu0 0.0
        %1743 = vmatprep.subr.mxu0 0.0
        %1744 = vmatpush1.msra.mxu0 0.0
        %1745 = vmatprep.subr.mxu0 0.0
        %1746 = vmatpush1.msra.mxu0 0.0
        %1747 = vmatprep.subr.mxu0 0.0
        %1748 = vmatpush1.msra.mxu0 0.0
        %1749 = vmatprep.subr.mxu0 0.0
        %1750 = vmatpush1.msra.mxu0 0.0
        %1751 = vmatprep.subr.mxu0 0.0
        %1752 = vmatpush1.msra.mxu0 0.0
        %1753 = vmatprep.subr.mxu0 0.0
        %1754 = vmatpush1.msra.mxu0 0.0
        %1755 = vmatprep.subr.mxu0 0.0
        %1756 = vmatpush1.msra.mxu0 0.0
        %1757 = vmatprep.subr.mxu0 0.0
        %1758 = vmatpush1.msra.mxu0 0.0
        %1759 = vmatprep.subr.mxu0 0.0
        %1760 = vmatpush1.msra.mxu0 0.0
        %1761 = vmatprep.mubr.f32.mxu0 0.0
        %1762 = vmatmul.mubr.f32.gmra.mrb[0].mxu0 %v1650
        %v1763 = vpop.f32.mrb[0].mxu0
        %v1764 = vadd.f32 %v940, %v1763
        %v1765 = vpop.f32.mrb[0].mxu0
        %1766 = vmatprep.mubr.f32.mxu0 0.0
        %1767 = vmatmul.mubr.f32.gmra.mrb[0].mxu0 %v1653
        %v1768 = vpop.f32.mrb[0].mxu0
        %v1769 = vadd.f32 %v940, %v1768
        %v1770 = vpop.f32.mrb[0].mxu0
        %1771 = vmatprep.mubr.f32.mxu0 0.0
        %1772 = vmatmul.mubr.f32.gmra.mrb[0].mxu0 %v1656
        %v1773 = vpop.f32.mrb[0].mxu0
        %v1774 = vadd.f32 %v940, %v1773
        %v1775 = vpop.f32.mrb[0].mxu0
        %1776 = vmatprep.mubr.f32.mxu0 0.0
        %1777 = vmatmul.mubr.f32.gmra.mrb[0].mxu0 %v1659
        %v1778 = vpop.f32.mrb[0].mxu0
        %v1779 = vadd.f32 %v940, %v1778
        %v1780 = vpop.f32.mrb[0].mxu0
        %1781 = vmatprep.mubr.f32.mxu0 0.0
        %1782 = vmatmul.mubr.f32.gmra.mrb[0].mxu0 %v1662
        %v1783 = vpop.f32.mrb[0].mxu0
        %v1784 = vadd.f32 %v940, %v1783
        %v1785 = vpop.f32.mrb[0].mxu0
        %1786 = vmatprep.mubr.f32.mxu0 0.0
        %1787 = vmatmul.mubr.f32.gmra.mrb[0].mxu0 %v1665
        %v1788 = vpop.f32.mrb[0].mxu0
        %v1789 = vadd.f32 %v940, %v1788
        %v1790 = vpop.f32.mrb[0].mxu0
        %1791 = vmatprep.mubr.f32.mxu0 0.0
        %1792 = vmatmul.mubr.f32.gmra.mrb[0].mxu0 %v1668
        %v1793 = vpop.f32.mrb[0].mxu0
        %v1794 = vadd.f32 %v940, %v1793
        %v1795 = vpop.f32.mrb[0].mxu0
        %1796 = vmatprep.mubr.f32.mxu0 0.0
        %1797 = vmatmul.mubr.f32.gmra.mrb[0].mxu0 %v1671
        %v1798 = vpop.f32.mrb[0].mxu0
        %v1799 = vadd.f32 %v940, %v1798
        %v1800 = vpop.f32.mrb[0].mxu0
        %1801 = vmatprep.mubr.f32.mxu0 0.0
        %1802 = vmatmul.mubr.f32.gmra.mrb[0].mxu0 %v1674
        %v1803 = vpop.f32.mrb[0].mxu0
        %v1804 = vadd.f32 %v940, %v1803
        %v1805 = vpop.f32.mrb[0].mxu0
        %1806 = vmatprep.mubr.f32.mxu0 0.0
        %1807 = vmatmul.mubr.f32.gmra.mrb[0].mxu0 %v1677
        %v1808 = vpop.f32.mrb[0].mxu0
        %v1809 = vadd.f32 %v940, %v1808
        %v1810 = vpop.f32.mrb[0].mxu0
        %1811 = vmatprep.mubr.f32.mxu0 0.0
        %1812 = vmatmul.mubr.f32.gmra.mrb[0].mxu0 %v1680
        %v1813 = vpop.f32.mrb[0].mxu0
        %v1814 = vadd.f32 %v940, %v1813
        %v1815 = vpop.f32.mrb[0].mxu0
        %1816 = vmatprep.mubr.f32.mxu0 0.0
        %1817 = vmatmul.mubr.f32.gmra.mrb[0].mxu0 %v1683
        %v1818 = vpop.f32.mrb[0].mxu0
        %v1819 = vadd.f32 %v940, %v1818
        %v1820 = vpop.f32.mrb[0].mxu0
        %1821 = vmatprep.mubr.f32.mxu0 0.0
        %1822 = vmatmul.mubr.f32.gmra.mrb[0].mxu0 %v1686
        %v1823 = vpop.f32.mrb[0].mxu0
        %v1824 = vadd.f32 %v940, %v1823
        %v1825 = vpop.f32.mrb[0].mxu0
        %1826 = vmatprep.mubr.f32.mxu0 0.0
        %1827 = vmatmul.mubr.f32.gmra.mrb[0].mxu0 %v1689
        %v1828 = vpop.f32.mrb[0].mxu0
        %v1829 = vadd.f32 %v940, %v1828
        %v1830 = vpop.f32.mrb[0].mxu0
        %1831 = vmatprep.mubr.f32.mxu0 0.0
        %1832 = vmatmul.mubr.f32.gmra.mrb[0].mxu0 %v1692
        %v1833 = vpop.f32.mrb[0].mxu0
        %v1834 = vadd.f32 %v940, %v1833
        %v1835 = vpop.f32.mrb[0].mxu0
        %1836 = vmatprep.mubr.f32.mxu0 0.0
        %1837 = vmatmul.mubr.f32.gmra.mrb[0].mxu0 %v1695
        %v1838 = vpop.f32.mrb[0].mxu0
        %v1839 = vadd.f32 %v940, %v1838
        %v1840 = vpop.f32.mrb[0].mxu0
        %1841 = vdwg.mxu0
        %v1842 = vmax.f32 %v1764, 0.0
        %v1843 = vmax.f32 %v1769, 0.0
        %v1844 = vmax.f32 %v1774, 0.0
        %v1845 = vmax.f32 %v1779, 0.0
        %v1846 = vmax.f32 %v1784, 0.0
        %v1847 = vmax.f32 %v1789, 0.0
        %v1848 = vmax.f32 %v1794, 0.0
        %v1849 = vmax.f32 %v1799, 0.0
        %v1850 = vmax.f32 %v1804, 0.0
        %v1851 = vmax.f32 %v1809, 0.0
        %v1852 = vmax.f32 %v1814, 0.0
        %v1853 = vmax.f32 %v1819, 0.0
        %v1854 = vmax.f32 %v1824, 0.0
        %v1855 = vmax.f32 %v1829, 0.0
        %v1856 = vmax.f32 %v1834, 0.0
        %v1857 = vmax.f32 %v1839, 0.0
        %v1858 = vld [vmem:[%s4] sm:$0x1]
        %v1860 = vlaneseq
        %v1861 = vshrl.u32 %v1860, 7
        %v1862 = vsub.s32 0, %v1861
        %v1863 = vrot.slane %v1858, %v1862
        %v1865 = vmul.f32 %v1842, %v1863
        %v1866 = vmul.f32 %v1843, %v1863
        %v1867 = vmul.f32 %v1844, %v1863
        %v1868 = vmul.f32 %v1845, %v1863
        %v1869 = vmul.f32 %v1846, %v1863
        %v1870 = vmul.f32 %v1847, %v1863
        %v1871 = vmul.f32 %v1848, %v1863
        %v1872 = vmul.f32 %v1849, %v1863
        %v1873 = vmul.f32 %v1850, %v1863
        %v1874 = vmul.f32 %v1851, %v1863
        %v1875 = vmul.f32 %v1852, %v1863
        %v1876 = vmul.f32 %v1853, %v1863
        %v1877 = vmul.f32 %v1854, %v1863
        %v1878 = vmul.f32 %v1855, %v1863
        %v1879 = vmul.f32 %v1856, %v1863
        %v1880 = vmul.f32 %v1857, %v1863
        %v1881 = vld [vmem:[%s5] sm:$0x1]
        %v1883 = vlaneseq
        %v1884 = vshrl.u32 %v1883, 7
        %v1885 = vsub.s32 0, %v1884
        %v1886 = vrot.slane %v1881, %v1885
        %v1888 = vadd.f32 %v1865, %v1886
        %v1889 = vadd.f32 %v1866, %v1886
        %v1890 = vadd.f32 %v1867, %v1886
        %v1891 = vadd.f32 %v1868, %v1886
        %v1892 = vadd.f32 %v1869, %v1886
        %v1893 = vadd.f32 %v1870, %v1886
        %v1894 = vadd.f32 %v1871, %v1886
        %v1895 = vadd.f32 %v1872, %v1886
        %v1896 = vadd.f32 %v1873, %v1886
        %v1897 = vadd.f32 %v1874, %v1886
        %v1898 = vadd.f32 %v1875, %v1886
        %v1899 = vadd.f32 %v1876, %v1886
        %v1900 = vadd.f32 %v1877, %v1886
        %v1901 = vadd.f32 %v1878, %v1886
        %v1902 = vadd.f32 %v1879, %v1886
        %v1903 = vadd.f32 %v1880, %v1886
        %s1904 = scalar_lea.vmem [#allocation3], 216
        %1905 = vst.msk [vmem:[%s1904 + $0x1] sm:$0xff] %vm285, %v1888
        %1906 = vst.msk [vmem:[%s1904 + $0x9] sm:$0xff] %vm285, %v1889
        %1907 = vst.msk [vmem:[%s1904 + $0x19] sm:$0xff] %vm285, %v1890
        %1908 = vst.msk [vmem:[%s1904 + $0x21] sm:$0xff] %vm285, %v1891
        %1909 = vst.msk [vmem:[%s1904 + $0x31] sm:$0xff] %vm285, %v1892
        %1910 = vst.msk [vmem:[%s1904 + $0x39] sm:$0xff] %vm285, %v1893
        %1911 = vst.msk [vmem:[%s1904 + $0x49] sm:$0xff] %vm285, %v1894
        %1912 = vst.msk [vmem:[%s1904 + $0x51] sm:$0xff] %vm285, %v1895
        %1913 = vst.msk [vmem:[%s1904 + $0x61] sm:$0xff] %vm285, %v1896
        %1914 = vst.msk [vmem:[%s1904 + $0x69] sm:$0xff] %vm285, %v1897
        %1915 = vst.msk [vmem:[%s1904 + $0x79] sm:$0xff] %vm285, %v1898
        %1916 = vst.msk [vmem:[%s1904 + $0x81] sm:$0xff] %vm285, %v1899
        %1917 = vst.msk [vmem:[%s1904 + $0x91] sm:$0xff] %vm285, %v1900
        %1918 = vst.msk [vmem:[%s1904 + $0x99] sm:$0xff] %vm285, %v1901
        %1919 = vst.msk [vmem:[%s1904 + $0xa9] sm:$0xff] %vm285, %v1902
        %1920 = vst.msk [vmem:[%s1904 + $0xb1] sm:$0xff] %vm285, %v1903
        %s1921 = scalar_lea.vmem %s1, 16
        %v1922 = vld [vmem:[%s1921] sm:$0xff]
        %v1923 = vld [vmem:[%s1921 + $0x8] sm:$0x1]
        %s1924 = scalar_lea.vmem [#allocation7], 32
        %v1925 = vld [vmem:[%s1924] sm:$0xff]
        %v1926 = vld [vmem:[%s1924 + $0x8] sm:$0xff]
        %v1927 = vld [vmem:[%s1924 + $0x10] sm:$0xff]
        %v1928 = vld [vmem:[%s1924 + $0x18] sm:$0xff]
        %s1929 = scalar_lea.vmem %s3, 1
        %v1930 = vld [vmem:[%s1929] sm:$0x1]
        %v1931 = vld [vmem:[#allocation3] sm:$0xff]
        %v1932 = vld [vmem:[#allocation3 + $0x8] sm:$0xff]
        %v1933 = vld [vmem:[#allocation3 + $0x18] sm:$0xff]
        %v1934 = vld [vmem:[#allocation3 + $0x20] sm:$0xff]
        %v1935 = vld [vmem:[#allocation3 + $0x30] sm:$0xff]
        %v1936 = vld [vmem:[#allocation3 + $0x38] sm:$0xff]
        %v1937 = vld [vmem:[#allocation3 + $0x48] sm:$0xff]
        %v1938 = vld [vmem:[#allocation3 + $0x50] sm:$0xff]
        %v1939 = vld [vmem:[#allocation3 + $0x60] sm:$0xff]
        %v1940 = vld [vmem:[#allocation3 + $0x68] sm:$0xff]
        %v1941 = vld [vmem:[#allocation3 + $0x78] sm:$0xff]
        %v1942 = vld [vmem:[#allocation3 + $0x80] sm:$0xff]
        %v1943 = vld [vmem:[#allocation3 + $0x90] sm:$0xff]
        %v1944 = vld [vmem:[#allocation3 + $0x98] sm:$0xff]
        %v1945 = vld [vmem:[#allocation3 + $0xa8] sm:$0xff]
        %v1946 = vld [vmem:[#allocation3 + $0xb0] sm:$0xff]
        %v1947 = vlaneseq
        %v1948 = vshrl.u32 %v1947, 7
        %v1949 = vsub.s32 0, %v1948
        %v1950 = vrot.slane %v1922, %v1949
        %v1951 = vmul.f32 %v1931, %v1950
        %v1952 = vmul.f32 %v1932, %v1950
        %v1953 = vmul.f32 %v1933, %v1950
        %v1954 = vmul.f32 %v1934, %v1950
        %v1955 = vmul.f32 %v1935, %v1950
        %v1956 = vmul.f32 %v1936, %v1950
        %v1957 = vmul.f32 %v1937, %v1950
        %v1958 = vmul.f32 %v1938, %v1950
        %v1959 = vmul.f32 %v1939, %v1950
        %v1960 = vmul.f32 %v1940, %v1950
        %v1961 = vmul.f32 %v1941, %v1950
        %v1962 = vmul.f32 %v1942, %v1950
        %v1963 = vmul.f32 %v1943, %v1950
        %v1964 = vmul.f32 %v1944, %v1950
        %v1965 = vmul.f32 %v1945, %v1950
        %v1966 = vmul.f32 %v1946, %v1950
        %v1967 = vadd.f32 %v1951, 0.0
        %v1968 = vadd.f32 %v1952, 0.0
        %v1969 = vadd.f32 %v1953, 0.0
        %v1970 = vadd.f32 %v1954, 0.0
        %v1971 = vadd.f32 %v1955, 0.0
        %v1972 = vadd.f32 %v1956, 0.0
        %v1973 = vadd.f32 %v1957, 0.0
        %v1974 = vadd.f32 %v1958, 0.0
        %v1975 = vadd.f32 %v1959, 0.0
        %v1976 = vadd.f32 %v1960, 0.0
        %v1977 = vadd.f32 %v1961, 0.0
        %v1978 = vadd.f32 %v1962, 0.0
        %v1979 = vadd.f32 %v1963, 0.0
        %v1980 = vadd.f32 %v1964, 0.0
        %v1981 = vadd.f32 %v1965, 0.0
        %v1982 = vadd.f32 %v1966, 0.0
        %v1983 = vld [vmem:[#allocation3 + $0x1] sm:$0xff]
        %v1984 = vld [vmem:[#allocation3 + $0x9] sm:$0xff]
        %v1985 = vld [vmem:[#allocation3 + $0x19] sm:$0xff]
        %v1986 = vld [vmem:[#allocation3 + $0x21] sm:$0xff]
        %v1987 = vld [vmem:[#allocation3 + $0x31] sm:$0xff]
        %v1988 = vld [vmem:[#allocation3 + $0x39] sm:$0xff]
        %v1989 = vld [vmem:[#allocation3 + $0x49] sm:$0xff]
        %v1990 = vld [vmem:[#allocation3 + $0x51] sm:$0xff]
        %v1991 = vld [vmem:[#allocation3 + $0x61] sm:$0xff]
        %v1992 = vld [vmem:[#allocation3 + $0x69] sm:$0xff]
        %v1993 = vld [vmem:[#allocation3 + $0x79] sm:$0xff]
        %v1994 = vld [vmem:[#allocation3 + $0x81] sm:$0xff]
        %v1995 = vld [vmem:[#allocation3 + $0x91] sm:$0xff]
        %v1996 = vld [vmem:[#allocation3 + $0x99] sm:$0xff]
        %v1997 = vld [vmem:[#allocation3 + $0xa9] sm:$0xff]
        %v1998 = vld [vmem:[#allocation3 + $0xb1] sm:$0xff]
        %v1999 = vlaneseq
        %v2000 = vshrl.u32 %v1999, 7
        %v2001 = vsub.s32 1, %v2000
        %v2002 = vrot.slane %v1922, %v2001
        %v2003 = vmul.f32 %v1983, %v2002
        %v2004 = vmul.f32 %v1984, %v2002
        %v2005 = vmul.f32 %v1985, %v2002
        %v2006 = vmul.f32 %v1986, %v2002
        %v2007 = vmul.f32 %v1987, %v2002
        %v2008 = vmul.f32 %v1988, %v2002
        %v2009 = vmul.f32 %v1989, %v2002
        %v2010 = vmul.f32 %v1990, %v2002
        %v2011 = vmul.f32 %v1991, %v2002
        %v2012 = vmul.f32 %v1992, %v2002
        %v2013 = vmul.f32 %v1993, %v2002
        %v2014 = vmul.f32 %v1994, %v2002
        %v2015 = vmul.f32 %v1995, %v2002
        %v2016 = vmul.f32 %v1996, %v2002
        %v2017 = vmul.f32 %v1997, %v2002
        %v2018 = vmul.f32 %v1998, %v2002
        %v2019 = vadd.f32 %v1967, %v2003
        %v2020 = vadd.f32 %v1968, %v2004
        %v2021 = vadd.f32 %v1969, %v2005
        %v2022 = vadd.f32 %v1970, %v2006
        %v2023 = vadd.f32 %v1971, %v2007
        %v2024 = vadd.f32 %v1972, %v2008
        %v2025 = vadd.f32 %v1973, %v2009
        %v2026 = vadd.f32 %v1974, %v2010
        %v2027 = vadd.f32 %v1975, %v2011
        %v2028 = vadd.f32 %v1976, %v2012
        %v2029 = vadd.f32 %v1977, %v2013
        %v2030 = vadd.f32 %v1978, %v2014
        %v2031 = vadd.f32 %v1979, %v2015
        %v2032 = vadd.f32 %v1980, %v2016
        %v2033 = vadd.f32 %v1981, %v2017
        %v2034 = vadd.f32 %v1982, %v2018
        %v2035 = vld [vmem:[#allocation3 + $0x2] sm:$0xff]
        %v2036 = vld [vmem:[#allocation3 + $0xa] sm:$0xff]
        %v2037 = vld [vmem:[#allocation3 + $0x1a] sm:$0xff]
        %v2038 = vld [vmem:[#allocation3 + $0x22] sm:$0xff]
        %v2039 = vld [vmem:[#allocation3 + $0x32] sm:$0xff]
        %v2040 = vld [vmem:[#allocation3 + $0x3a] sm:$0xff]
        %v2041 = vld [vmem:[#allocation3 + $0x4a] sm:$0xff]
        %v2042 = vld [vmem:[#allocation3 + $0x52] sm:$0xff]
        %v2043 = vld [vmem:[#allocation3 + $0x62] sm:$0xff]
        %v2044 = vld [vmem:[#allocation3 + $0x6a] sm:$0xff]
        %v2045 = vld [vmem:[#allocation3 + $0x7a] sm:$0xff]
        %v2046 = vld [vmem:[#allocation3 + $0x82] sm:$0xff]
        %v2047 = vld [vmem:[#allocation3 + $0x92] sm:$0xff]
        %v2048 = vld [vmem:[#allocation3 + $0x9a] sm:$0xff]
        %v2049 = vld [vmem:[#allocation3 + $0xaa] sm:$0xff]
        %v2050 = vld [vmem:[#allocation3 + $0xb2] sm:$0xff]
        %v2051 = vlaneseq
        %v2052 = vshrl.u32 %v2051, 7
        %v2053 = vsub.s32 2, %v2052
        %v2054 = vrot.slane %v1922, %v2053
        %v2055 = vmul.f32 %v2035, %v2054
        %v2056 = vmul.f32 %v2036, %v2054
        %v2057 = vmul.f32 %v2037, %v2054
        %v2058 = vmul.f32 %v2038, %v2054
        %v2059 = vmul.f32 %v2039, %v2054
        %v2060 = vmul.f32 %v2040, %v2054
        %v2061 = vmul.f32 %v2041, %v2054
        %v2062 = vmul.f32 %v2042, %v2054
        %v2063 = vmul.f32 %v2043, %v2054
        %v2064 = vmul.f32 %v2044, %v2054
        %v2065 = vmul.f32 %v2045, %v2054
        %v2066 = vmul.f32 %v2046, %v2054
        %v2067 = vmul.f32 %v2047, %v2054
        %v2068 = vmul.f32 %v2048, %v2054
        %v2069 = vmul.f32 %v2049, %v2054
        %v2070 = vmul.f32 %v2050, %v2054
        %v2071 = vadd.f32 %v2019, %v2055
        %v2072 = vadd.f32 %v2020, %v2056
        %v2073 = vadd.f32 %v2021, %v2057
        %v2074 = vadd.f32 %v2022, %v2058
        %v2075 = vadd.f32 %v2023, %v2059
        %v2076 = vadd.f32 %v2024, %v2060
        %v2077 = vadd.f32 %v2025, %v2061
        %v2078 = vadd.f32 %v2026, %v2062
        %v2079 = vadd.f32 %v2027, %v2063
        %v2080 = vadd.f32 %v2028, %v2064
        %v2081 = vadd.f32 %v2029, %v2065
        %v2082 = vadd.f32 %v2030, %v2066
        %v2083 = vadd.f32 %v2031, %v2067
        %v2084 = vadd.f32 %v2032, %v2068
        %v2085 = vadd.f32 %v2033, %v2069
        %v2086 = vadd.f32 %v2034, %v2070
        %v2087 = vld [vmem:[%s1197] sm:$0xff]
        %v2088 = vld [vmem:[%s1197 + $0x8] sm:$0xff]
        %v2089 = vld [vmem:[%s1197 + $0x18] sm:$0xff]
        %v2090 = vld [vmem:[%s1197 + $0x20] sm:$0xff]
        %v2091 = vld [vmem:[%s1197 + $0x30] sm:$0xff]
        %v2092 = vld [vmem:[%s1197 + $0x38] sm:$0xff]
        %v2093 = vld [vmem:[%s1197 + $0x48] sm:$0xff]
        %v2094 = vld [vmem:[%s1197 + $0x50] sm:$0xff]
        %v2095 = vld [vmem:[%s1197 + $0x60] sm:$0xff]
        %v2096 = vld [vmem:[%s1197 + $0x68] sm:$0xff]
        %v2097 = vld [vmem:[%s1197 + $0x78] sm:$0xff]
        %v2098 = vld [vmem:[%s1197 + $0x80] sm:$0xff]
        %v2099 = vld [vmem:[%s1197 + $0x90] sm:$0xff]
        %v2100 = vld [vmem:[%s1197 + $0x98] sm:$0xff]
        %v2101 = vld [vmem:[%s1197 + $0xa8] sm:$0xff]
        %v2102 = vld [vmem:[%s1197 + $0xb0] sm:$0xff]
        %v2103 = vlaneseq
        %v2104 = vshrl.u32 %v2103, 7
        %v2105 = vsub.s32 3, %v2104
        %v2106 = vrot.slane %v1922, %v2105
        %v2107 = vmul.f32 %v2087, %v2106
        %v2108 = vmul.f32 %v2088, %v2106
        %v2109 = vmul.f32 %v2089, %v2106
        %v2110 = vmul.f32 %v2090, %v2106
        %v2111 = vmul.f32 %v2091, %v2106
        %v2112 = vmul.f32 %v2092, %v2106
        %v2113 = vmul.f32 %v2093, %v2106
        %v2114 = vmul.f32 %v2094, %v2106
        %v2115 = vmul.f32 %v2095, %v2106
        %v2116 = vmul.f32 %v2096, %v2106
        %v2117 = vmul.f32 %v2097, %v2106
        %v2118 = vmul.f32 %v2098, %v2106
        %v2119 = vmul.f32 %v2099, %v2106
        %v2120 = vmul.f32 %v2100, %v2106
        %v2121 = vmul.f32 %v2101, %v2106
        %v2122 = vmul.f32 %v2102, %v2106
        %v2123 = vadd.f32 %v2071, %v2107
        %v2124 = vadd.f32 %v2072, %v2108
        %v2125 = vadd.f32 %v2073, %v2109
        %v2126 = vadd.f32 %v2074, %v2110
        %v2127 = vadd.f32 %v2075, %v2111
        %v2128 = vadd.f32 %v2076, %v2112
        %v2129 = vadd.f32 %v2077, %v2113
        %v2130 = vadd.f32 %v2078, %v2114
        %v2131 = vadd.f32 %v2079, %v2115
        %v2132 = vadd.f32 %v2080, %v2116
        %v2133 = vadd.f32 %v2081, %v2117
        %v2134 = vadd.f32 %v2082, %v2118
        %v2135 = vadd.f32 %v2083, %v2119
        %v2136 = vadd.f32 %v2084, %v2120
        %v2137 = vadd.f32 %v2085, %v2121
        %v2138 = vadd.f32 %v2086, %v2122
        %v2139 = vld [vmem:[%s1197 + $0x1] sm:$0xff]
        %v2140 = vld [vmem:[%s1197 + $0x9] sm:$0xff]
        %v2141 = vld [vmem:[%s1197 + $0x19] sm:$0xff]
        %v2142 = vld [vmem:[%s1197 + $0x21] sm:$0xff]
        %v2143 = vld [vmem:[%s1197 + $0x31] sm:$0xff]
        %v2144 = vld [vmem:[%s1197 + $0x39] sm:$0xff]
        %v2145 = vld [vmem:[%s1197 + $0x49] sm:$0xff]
        %v2146 = vld [vmem:[%s1197 + $0x51] sm:$0xff]
        %v2147 = vld [vmem:[%s1197 + $0x61] sm:$0xff]
        %v2148 = vld [vmem:[%s1197 + $0x69] sm:$0xff]
        %v2149 = vld [vmem:[%s1197 + $0x79] sm:$0xff]
        %v2150 = vld [vmem:[%s1197 + $0x81] sm:$0xff]
        %v2151 = vld [vmem:[%s1197 + $0x91] sm:$0xff]
        %v2152 = vld [vmem:[%s1197 + $0x99] sm:$0xff]
        %v2153 = vld [vmem:[%s1197 + $0xa9] sm:$0xff]
        %v2154 = vld [vmem:[%s1197 + $0xb1] sm:$0xff]
        %v2155 = vlaneseq
        %v2156 = vshrl.u32 %v2155, 7
        %v2157 = vsub.s32 4, %v2156
        %v2158 = vrot.slane %v1922, %v2157
        %v2159 = vmul.f32 %v2139, %v2158
        %v2160 = vmul.f32 %v2140, %v2158
        %v2161 = vmul.f32 %v2141, %v2158
        %v2162 = vmul.f32 %v2142, %v2158
        %v2163 = vmul.f32 %v2143, %v2158
        %v2164 = vmul.f32 %v2144, %v2158
        %v2165 = vmul.f32 %v2145, %v2158
        %v2166 = vmul.f32 %v2146, %v2158
        %v2167 = vmul.f32 %v2147, %v2158
        %v2168 = vmul.f32 %v2148, %v2158
        %v2169 = vmul.f32 %v2149, %v2158
        %v2170 = vmul.f32 %v2150, %v2158
        %v2171 = vmul.f32 %v2151, %v2158
        %v2172 = vmul.f32 %v2152, %v2158
        %v2173 = vmul.f32 %v2153, %v2158
        %v2174 = vmul.f32 %v2154, %v2158
        %v2175 = vadd.f32 %v2123, %v2159
        %v2176 = vadd.f32 %v2124, %v2160
        %v2177 = vadd.f32 %v2125, %v2161
        %v2178 = vadd.f32 %v2126, %v2162
        %v2179 = vadd.f32 %v2127, %v2163
        %v2180 = vadd.f32 %v2128, %v2164
        %v2181 = vadd.f32 %v2129, %v2165
        %v2182 = vadd.f32 %v2130, %v2166
        %v2183 = vadd.f32 %v2131, %v2167
        %v2184 = vadd.f32 %v2132, %v2168
        %v2185 = vadd.f32 %v2133, %v2169
        %v2186 = vadd.f32 %v2134, %v2170
        %v2187 = vadd.f32 %v2135, %v2171
        %v2188 = vadd.f32 %v2136, %v2172
        %v2189 = vadd.f32 %v2137, %v2173
        %v2190 = vadd.f32 %v2138, %v2174
        %v2191 = vld [vmem:[%s1197 + $0x2] sm:$0xff]
        %v2192 = vld [vmem:[%s1197 + $0xa] sm:$0xff]
        %v2193 = vld [vmem:[%s1197 + $0x1a] sm:$0xff]
        %v2194 = vld [vmem:[%s1197 + $0x22] sm:$0xff]
        %v2195 = vld [vmem:[%s1197 + $0x32] sm:$0xff]
        %v2196 = vld [vmem:[%s1197 + $0x3a] sm:$0xff]
        %v2197 = vld [vmem:[%s1197 + $0x4a] sm:$0xff]
        %v2198 = vld [vmem:[%s1197 + $0x52] sm:$0xff]
        %v2199 = vld [vmem:[%s1197 + $0x62] sm:$0xff]
        %v2200 = vld [vmem:[%s1197 + $0x6a] sm:$0xff]
        %v2201 = vld [vmem:[%s1197 + $0x7a] sm:$0xff]
        %v2202 = vld [vmem:[%s1197 + $0x82] sm:$0xff]
        %v2203 = vld [vmem:[%s1197 + $0x92] sm:$0xff]
        %v2204 = vld [vmem:[%s1197 + $0x9a] sm:$0xff]
        %v2205 = vld [vmem:[%s1197 + $0xaa] sm:$0xff]
        %v2206 = vld [vmem:[%s1197 + $0xb2] sm:$0xff]
        %v2207 = vlaneseq
        %v2208 = vshrl.u32 %v2207, 7
        %v2209 = vsub.s32 5, %v2208
        %v2210 = vrot.slane %v1922, %v2209
        %v2211 = vmul.f32 %v2191, %v2210
        %v2212 = vmul.f32 %v2192, %v2210
        %v2213 = vmul.f32 %v2193, %v2210
        %v2214 = vmul.f32 %v2194, %v2210
        %v2215 = vmul.f32 %v2195, %v2210
        %v2216 = vmul.f32 %v2196, %v2210
        %v2217 = vmul.f32 %v2197, %v2210
        %v2218 = vmul.f32 %v2198, %v2210
        %v2219 = vmul.f32 %v2199, %v2210
        %v2220 = vmul.f32 %v2200, %v2210
        %v2221 = vmul.f32 %v2201, %v2210
        %v2222 = vmul.f32 %v2202, %v2210
        %v2223 = vmul.f32 %v2203, %v2210
        %v2224 = vmul.f32 %v2204, %v2210
        %v2225 = vmul.f32 %v2205, %v2210
        %v2226 = vmul.f32 %v2206, %v2210
        %v2227 = vadd.f32 %v2175, %v2211
        %v2228 = vadd.f32 %v2176, %v2212
        %v2229 = vadd.f32 %v2177, %v2213
        %v2230 = vadd.f32 %v2178, %v2214
        %v2231 = vadd.f32 %v2179, %v2215
        %v2232 = vadd.f32 %v2180, %v2216
        %v2233 = vadd.f32 %v2181, %v2217
        %v2234 = vadd.f32 %v2182, %v2218
        %v2235 = vadd.f32 %v2183, %v2219
        %v2236 = vadd.f32 %v2184, %v2220
        %v2237 = vadd.f32 %v2185, %v2221
        %v2238 = vadd.f32 %v2186, %v2222
        %v2239 = vadd.f32 %v2187, %v2223
        %v2240 = vadd.f32 %v2188, %v2224
        %v2241 = vadd.f32 %v2189, %v2225
        %v2242 = vadd.f32 %v2190, %v2226
        %s2243 = scalar_lea.vmem [#allocation3], 48
        %v2244 = vld [vmem:[%s2243] sm:$0xff]
        %v2245 = vld [vmem:[%s2243 + $0x8] sm:$0xff]
        %v2246 = vld [vmem:[%s2243 + $0x18] sm:$0xff]
        %v2247 = vld [vmem:[%s2243 + $0x20] sm:$0xff]
        %v2248 = vld [vmem:[%s2243 + $0x30] sm:$0xff]
        %v2249 = vld [vmem:[%s2243 + $0x38] sm:$0xff]
        %v2250 = vld [vmem:[%s2243 + $0x48] sm:$0xff]
        %v2251 = vld [vmem:[%s2243 + $0x50] sm:$0xff]
        %v2252 = vld [vmem:[%s2243 + $0x60] sm:$0xff]
        %v2253 = vld [vmem:[%s2243 + $0x68] sm:$0xff]
        %v2254 = vld [vmem:[%s2243 + $0x78] sm:$0xff]
        %v2255 = vld [vmem:[%s2243 + $0x80] sm:$0xff]
        %v2256 = vld [vmem:[%s2243 + $0x90] sm:$0xff]
        %v2257 = vld [vmem:[%s2243 + $0x98] sm:$0xff]
        %v2258 = vld [vmem:[%s2243 + $0xa8] sm:$0xff]
        %v2259 = vld [vmem:[%s2243 + $0xb0] sm:$0xff]
        %v2260 = vlaneseq
        %v2261 = vshrl.u32 %v2260, 7
        %v2262 = vsub.s32 6, %v2261
        %v2263 = vrot.slane %v1922, %v2262
        %v2264 = vmul.f32 %v2244, %v2263
        %v2265 = vmul.f32 %v2245, %v2263
        %v2266 = vmul.f32 %v2246, %v2263
        %v2267 = vmul.f32 %v2247, %v2263
        %v2268 = vmul.f32 %v2248, %v2263
        %v2269 = vmul.f32 %v2249, %v2263
        %v2270 = vmul.f32 %v2250, %v2263
        %v2271 = vmul.f32 %v2251, %v2263
        %v2272 = vmul.f32 %v2252, %v2263
        %v2273 = vmul.f32 %v2253, %v2263
        %v2274 = vmul.f32 %v2254, %v2263
        %v2275 = vmul.f32 %v2255, %v2263
        %v2276 = vmul.f32 %v2256, %v2263
        %v2277 = vmul.f32 %v2257, %v2263
        %v2278 = vmul.f32 %v2258, %v2263
        %v2279 = vmul.f32 %v2259, %v2263
        %v2280 = vadd.f32 %v2227, %v2264
        %v2281 = vadd.f32 %v2228, %v2265
        %v2282 = vadd.f32 %v2229, %v2266
        %v2283 = vadd.f32 %v2230, %v2267
        %v2284 = vadd.f32 %v2231, %v2268
        %v2285 = vadd.f32 %v2232, %v2269
        %v2286 = vadd.f32 %v2233, %v2270
        %v2287 = vadd.f32 %v2234, %v2271
        %v2288 = vadd.f32 %v2235, %v2272
        %v2289 = vadd.f32 %v2236, %v2273
        %v2290 = vadd.f32 %v2237, %v2274
        %v2291 = vadd.f32 %v2238, %v2275
        %v2292 = vadd.f32 %v2239, %v2276
        %v2293 = vadd.f32 %v2240, %v2277
        %v2294 = vadd.f32 %v2241, %v2278
        %v2295 = vadd.f32 %v2242, %v2279
        %v2296 = vld [vmem:[%s2243 + $0x1] sm:$0xff]
        %v2297 = vld [vmem:[%s2243 + $0x9] sm:$0xff]
        %v2298 = vld [vmem:[%s2243 + $0x19] sm:$0xff]
        %v2299 = vld [vmem:[%s2243 + $0x21] sm:$0xff]
        %v2300 = vld [vmem:[%s2243 + $0x31] sm:$0xff]
        %v2301 = vld [vmem:[%s2243 + $0x39] sm:$0xff]
        %v2302 = vld [vmem:[%s2243 + $0x49] sm:$0xff]
        %v2303 = vld [vmem:[%s2243 + $0x51] sm:$0xff]
        %v2304 = vld [vmem:[%s2243 + $0x61] sm:$0xff]
        %v2305 = vld [vmem:[%s2243 + $0x69] sm:$0xff]
        %v2306 = vld [vmem:[%s2243 + $0x79] sm:$0xff]
        %v2307 = vld [vmem:[%s2243 + $0x81] sm:$0xff]
        %v2308 = vld [vmem:[%s2243 + $0x91] sm:$0xff]
        %v2309 = vld [vmem:[%s2243 + $0x99] sm:$0xff]
        %v2310 = vld [vmem:[%s2243 + $0xa9] sm:$0xff]
        %v2311 = vld [vmem:[%s2243 + $0xb1] sm:$0xff]
        %v2312 = vlaneseq
        %v2313 = vshrl.u32 %v2312, 7
        %v2314 = vsub.s32 7, %v2313
        %v2315 = vrot.slane %v1922, %v2314
        %v2316 = vmul.f32 %v2296, %v2315
        %v2317 = vmul.f32 %v2297, %v2315
        %v2318 = vmul.f32 %v2298, %v2315
        %v2319 = vmul.f32 %v2299, %v2315
        %v2320 = vmul.f32 %v2300, %v2315
        %v2321 = vmul.f32 %v2301, %v2315
        %v2322 = vmul.f32 %v2302, %v2315
        %v2323 = vmul.f32 %v2303, %v2315
        %v2324 = vmul.f32 %v2304, %v2315
        %v2325 = vmul.f32 %v2305, %v2315
        %v2326 = vmul.f32 %v2306, %v2315
        %v2327 = vmul.f32 %v2307, %v2315
        %v2328 = vmul.f32 %v2308, %v2315
        %v2329 = vmul.f32 %v2309, %v2315
        %v2330 = vmul.f32 %v2310, %v2315
        %v2331 = vmul.f32 %v2311, %v2315
        %v2332 = vadd.f32 %v2280, %v2316
        %v2333 = vadd.f32 %v2281, %v2317
        %v2334 = vadd.f32 %v2282, %v2318
        %v2335 = vadd.f32 %v2283, %v2319
        %v2336 = vadd.f32 %v2284, %v2320
        %v2337 = vadd.f32 %v2285, %v2321
        %v2338 = vadd.f32 %v2286, %v2322
        %v2339 = vadd.f32 %v2287, %v2323
        %v2340 = vadd.f32 %v2288, %v2324
        %v2341 = vadd.f32 %v2289, %v2325
        %v2342 = vadd.f32 %v2290, %v2326
        %v2343 = vadd.f32 %v2291, %v2327
        %v2344 = vadd.f32 %v2292, %v2328
        %v2345 = vadd.f32 %v2293, %v2329
        %v2346 = vadd.f32 %v2294, %v2330
        %v2347 = vadd.f32 %v2295, %v2331
        %v2348 = vld [vmem:[%s2243 + $0x2] sm:$0xff]
        %v2349 = vld [vmem:[%s2243 + $0xa] sm:$0xff]
        %v2350 = vld [vmem:[%s2243 + $0x1a] sm:$0xff]
        %v2351 = vld [vmem:[%s2243 + $0x22] sm:$0xff]
        %v2352 = vld [vmem:[%s2243 + $0x32] sm:$0xff]
        %v2353 = vld [vmem:[%s2243 + $0x3a] sm:$0xff]
        %v2354 = vld [vmem:[%s2243 + $0x4a] sm:$0xff]
        %v2355 = vld [vmem:[%s2243 + $0x52] sm:$0xff]
        %v2356 = vld [vmem:[%s2243 + $0x62] sm:$0xff]
        %v2357 = vld [vmem:[%s2243 + $0x6a] sm:$0xff]
        %v2358 = vld [vmem:[%s2243 + $0x7a] sm:$0xff]
        %v2359 = vld [vmem:[%s2243 + $0x82] sm:$0xff]
        %v2360 = vld [vmem:[%s2243 + $0x92] sm:$0xff]
        %v2361 = vld [vmem:[%s2243 + $0x9a] sm:$0xff]
        %v2362 = vld [vmem:[%s2243 + $0xaa] sm:$0xff]
        %v2363 = vld [vmem:[%s2243 + $0xb2] sm:$0xff]
        %v2364 = vlaneseq
        %v2365 = vshrl.u32 %v2364, 7
        %v2366 = vsub.s32 0, %v2365
        %v2367 = vrot.slane %v1923, %v2366
        %v2368 = vmul.f32 %v2348, %v2367
        %v2369 = vmul.f32 %v2349, %v2367
        %v2370 = vmul.f32 %v2350, %v2367
        %v2371 = vmul.f32 %v2351, %v2367
        %v2372 = vmul.f32 %v2352, %v2367
        %v2373 = vmul.f32 %v2353, %v2367
        %v2374 = vmul.f32 %v2354, %v2367
        %v2375 = vmul.f32 %v2355, %v2367
        %v2376 = vmul.f32 %v2356, %v2367
        %v2377 = vmul.f32 %v2357, %v2367
        %v2378 = vmul.f32 %v2358, %v2367
        %v2379 = vmul.f32 %v2359, %v2367
        %v2380 = vmul.f32 %v2360, %v2367
        %v2381 = vmul.f32 %v2361, %v2367
        %v2382 = vmul.f32 %v2362, %v2367
        %v2383 = vmul.f32 %v2363, %v2367
        %v2384 = vadd.f32 %v2332, %v2368
        %v2385 = vadd.f32 %v2333, %v2369
        %v2386 = vadd.f32 %v2334, %v2370
        %v2387 = vadd.f32 %v2335, %v2371
        %v2388 = vadd.f32 %v2336, %v2372
        %v2389 = vadd.f32 %v2337, %v2373
        %v2390 = vadd.f32 %v2338, %v2374
        %v2391 = vadd.f32 %v2339, %v2375
        %v2392 = vadd.f32 %v2340, %v2376
        %v2393 = vadd.f32 %v2341, %v2377
        %v2394 = vadd.f32 %v2342, %v2378
        %v2395 = vadd.f32 %v2343, %v2379
        %v2396 = vadd.f32 %v2344, %v2380
        %v2397 = vadd.f32 %v2345, %v2381
        %v2398 = vadd.f32 %v2346, %v2382
        %v2399 = vadd.f32 %v2347, %v2383
        %v2401 = vlaneseq
        %v2402 = vshrl.u32 %v2401, 7
        %v2403 = vsub.s32 0, %v2402
        %v2404 = vrot.slane %v1930, %v2403
        %v2407 = vsel %vm285, %v2384, 0
        %v2410 = vsel %vm285, %v2385, 0
        %v2413 = vsel %vm285, %v2386, 0
        %v2416 = vsel %vm285, %v2387, 0
        %v2419 = vsel %vm285, %v2388, 0
        %v2422 = vsel %vm285, %v2389, 0
        %v2425 = vsel %vm285, %v2390, 0
        %v2428 = vsel %vm285, %v2391, 0
        %v2431 = vsel %vm285, %v2392, 0
        %v2434 = vsel %vm285, %v2393, 0
        %v2437 = vsel %vm285, %v2394, 0
        %v2440 = vsel %vm285, %v2395, 0
        %v2443 = vsel %vm285, %v2396, 0
        %v2446 = vsel %vm285, %v2397, 0
        %v2449 = vsel %vm285, %v2398, 0
        %v2452 = vsel %vm285, %v2399, 0
        %2454 = vmatprep.subr.mxu0 0.0
        %2455 = vmatpush1.msra.mxu0 %v1925
        %2456 = vmatprep.subr.mxu0 0.0
        %2457 = vmatpush1.msra.mxu0 %v1926
        %2458 = vmatprep.subr.mxu0 0.0
        %2459 = vmatpush1.msra.mxu0 %v1927
        %2460 = vmatprep.subr.mxu0 0.0
        %2461 = vmatpush1.msra.mxu0 %v1928
        %2462 = vmatprep.subr.mxu0 0.0
        %2463 = vmatpush1.msra.mxu0 0.0
        %2464 = vmatprep.subr.mxu0 0.0
        %2465 = vmatpush1.msra.mxu0 0.0
        %2466 = vmatprep.subr.mxu0 0.0
        %2467 = vmatpush1.msra.mxu0 0.0
        %2468 = vmatprep.subr.mxu0 0.0
        %2469 = vmatpush1.msra.mxu0 0.0
        %2470 = vmatprep.subr.mxu0 0.0
        %2471 = vmatpush1.msra.mxu0 0.0
        %2472 = vmatprep.subr.mxu0 0.0
        %2473 = vmatpush1.msra.mxu0 0.0
        %2474 = vmatprep.subr.mxu0 0.0
        %2475 = vmatpush1.msra.mxu0 0.0
        %2476 = vmatprep.subr.mxu0 0.0
        %2477 = vmatpush1.msra.mxu0 0.0
        %2478 = vmatprep.subr.mxu0 0.0
        %2479 = vmatpush1.msra.mxu0 0.0
        %2480 = vmatprep.subr.mxu0 0.0
        %2481 = vmatpush1.msra.mxu0 0.0
        %2482 = vmatprep.subr.mxu0 0.0
        %2483 = vmatpush1.msra.mxu0 0.0
        %2484 = vmatprep.subr.mxu0 0.0
        %2485 = vmatpush1.msra.mxu0 0.0
        %2486 = vmatprep.subr.mxu0 0.0
        %2487 = vmatpush1.msra.mxu0 0.0
        %2488 = vmatprep.subr.mxu0 0.0
        %2489 = vmatpush1.msra.mxu0 0.0
        %2490 = vmatprep.subr.mxu0 0.0
        %2491 = vmatpush1.msra.mxu0 0.0
        %2492 = vmatprep.subr.mxu0 0.0
        %2493 = vmatpush1.msra.mxu0 0.0
        %2494 = vmatprep.subr.mxu0 0.0
        %2495 = vmatpush1.msra.mxu0 0.0
        %2496 = vmatprep.subr.mxu0 0.0
        %2497 = vmatpush1.msra.mxu0 0.0
        %2498 = vmatprep.subr.mxu0 0.0
        %2499 = vmatpush1.msra.mxu0 0.0
        %2500 = vmatprep.subr.mxu0 0.0
        %2501 = vmatpush1.msra.mxu0 0.0
        %2502 = vmatprep.subr.mxu0 0.0
        %2503 = vmatpush1.msra.mxu0 0.0
        %2504 = vmatprep.subr.mxu0 0.0
        %2505 = vmatpush1.msra.mxu0 0.0
        %2506 = vmatprep.subr.mxu0 0.0
        %2507 = vmatpush1.msra.mxu0 0.0
        %2508 = vmatprep.subr.mxu0 0.0
        %2509 = vmatpush1.msra.mxu0 0.0
        %2510 = vmatprep.subr.mxu0 0.0
        %2511 = vmatpush1.msra.mxu0 0.0
        %2512 = vmatprep.subr.mxu0 0.0
        %2513 = vmatpush1.msra.mxu0 0.0
        %2514 = vmatprep.subr.mxu0 0.0
        %2515 = vmatpush1.msra.mxu0 0.0
        %2516 = vmatprep.subr.mxu0 0.0
        %2517 = vmatpush1.msra.mxu0 0.0
        %2518 = vmatprep.mubr.f32.mxu0 0.0
        %2519 = vmatmul.mubr.f32.gmra.mrb[0].mxu0 %v2407
        %v2520 = vpop.f32.mrb[0].mxu0
        %v2521 = vadd.f32 %v2404, %v2520
        %v2522 = vpop.f32.mrb[0].mxu0
        %2523 = vmatprep.mubr.f32.mxu0 0.0
        %2524 = vmatmul.mubr.f32.gmra.mrb[0].mxu0 %v2410
        %v2525 = vpop.f32.mrb[0].mxu0
        %v2526 = vadd.f32 %v2404, %v2525
        %v2527 = vpop.f32.mrb[0].mxu0
        %2528 = vmatprep.mubr.f32.mxu0 0.0
        %2529 = vmatmul.mubr.f32.gmra.mrb[0].mxu0 %v2413
        %v2530 = vpop.f32.mrb[0].mxu0
        %v2531 = vadd.f32 %v2404, %v2530
        %v2532 = vpop.f32.mrb[0].mxu0
        %2533 = vmatprep.mubr.f32.mxu0 0.0
        %2534 = vmatmul.mubr.f32.gmra.mrb[0].mxu0 %v2416
        %v2535 = vpop.f32.mrb[0].mxu0
        %v2536 = vadd.f32 %v2404, %v2535
        %v2537 = vpop.f32.mrb[0].mxu0
        %2538 = vmatprep.mubr.f32.mxu0 0.0
        %2539 = vmatmul.mubr.f32.gmra.mrb[0].mxu0 %v2419
        %v2540 = vpop.f32.mrb[0].mxu0
        %v2541 = vadd.f32 %v2404, %v2540
        %v2542 = vpop.f32.mrb[0].mxu0
        %2543 = vmatprep.mubr.f32.mxu0 0.0
        %2544 = vmatmul.mubr.f32.gmra.mrb[0].mxu0 %v2422
        %v2545 = vpop.f32.mrb[0].mxu0
        %v2546 = vadd.f32 %v2404, %v2545
        %v2547 = vpop.f32.mrb[0].mxu0
        %2548 = vmatprep.mubr.f32.mxu0 0.0
        %2549 = vmatmul.mubr.f32.gmra.mrb[0].mxu0 %v2425
        %v2550 = vpop.f32.mrb[0].mxu0
        %v2551 = vadd.f32 %v2404, %v2550
        %v2552 = vpop.f32.mrb[0].mxu0
        %2553 = vmatprep.mubr.f32.mxu0 0.0
        %2554 = vmatmul.mubr.f32.gmra.mrb[0].mxu0 %v2428
        %v2555 = vpop.f32.mrb[0].mxu0
        %v2556 = vadd.f32 %v2404, %v2555
        %v2557 = vpop.f32.mrb[0].mxu0
        %2558 = vmatprep.mubr.f32.mxu0 0.0
        %2559 = vmatmul.mubr.f32.gmra.mrb[0].mxu0 %v2431
        %v2560 = vpop.f32.mrb[0].mxu0
        %v2561 = vadd.f32 %v2404, %v2560
        %v2562 = vpop.f32.mrb[0].mxu0
        %2563 = vmatprep.mubr.f32.mxu0 0.0
        %2564 = vmatmul.mubr.f32.gmra.mrb[0].mxu0 %v2434
        %v2565 = vpop.f32.mrb[0].mxu0
        %v2566 = vadd.f32 %v2404, %v2565
        %v2567 = vpop.f32.mrb[0].mxu0
        %2568 = vmatprep.mubr.f32.mxu0 0.0
        %2569 = vmatmul.mubr.f32.gmra.mrb[0].mxu0 %v2437
        %v2570 = vpop.f32.mrb[0].mxu0
        %v2571 = vadd.f32 %v2404, %v2570
        %v2572 = vpop.f32.mrb[0].mxu0
        %2573 = vmatprep.mubr.f32.mxu0 0.0
        %2574 = vmatmul.mubr.f32.gmra.mrb[0].mxu0 %v2440
        %v2575 = vpop.f32.mrb[0].mxu0
        %v2576 = vadd.f32 %v2404, %v2575
        %v2577 = vpop.f32.mrb[0].mxu0
        %2578 = vmatprep.mubr.f32.mxu0 0.0
        %2579 = vmatmul.mubr.f32.gmra.mrb[0].mxu0 %v2443
        %v2580 = vpop.f32.mrb[0].mxu0
        %v2581 = vadd.f32 %v2404, %v2580
        %v2582 = vpop.f32.mrb[0].mxu0
        %2583 = vmatprep.mubr.f32.mxu0 0.0
        %2584 = vmatmul.mubr.f32.gmra.mrb[0].mxu0 %v2446
        %v2585 = vpop.f32.mrb[0].mxu0
        %v2586 = vadd.f32 %v2404, %v2585
        %v2587 = vpop.f32.mrb[0].mxu0
        %2588 = vmatprep.mubr.f32.mxu0 0.0
        %2589 = vmatmul.mubr.f32.gmra.mrb[0].mxu0 %v2449
        %v2590 = vpop.f32.mrb[0].mxu0
        %v2591 = vadd.f32 %v2404, %v2590
        %v2592 = vpop.f32.mrb[0].mxu0
        %2593 = vmatprep.mubr.f32.mxu0 0.0
        %2594 = vmatmul.mubr.f32.gmra.mrb[0].mxu0 %v2452
        %v2595 = vpop.f32.mrb[0].mxu0
        %v2596 = vadd.f32 %v2404, %v2595
        %v2597 = vpop.f32.mrb[0].mxu0
        %2598 = vdwg.mxu0
        %v2599 = vmax.f32 %v2521, 0.0
        %v2600 = vmax.f32 %v2526, 0.0
        %v2601 = vmax.f32 %v2531, 0.0
        %v2602 = vmax.f32 %v2536, 0.0
        %v2603 = vmax.f32 %v2541, 0.0
        %v2604 = vmax.f32 %v2546, 0.0
        %v2605 = vmax.f32 %v2551, 0.0
        %v2606 = vmax.f32 %v2556, 0.0
        %v2607 = vmax.f32 %v2561, 0.0
        %v2608 = vmax.f32 %v2566, 0.0
        %v2609 = vmax.f32 %v2571, 0.0
        %v2610 = vmax.f32 %v2576, 0.0
        %v2611 = vmax.f32 %v2581, 0.0
        %v2612 = vmax.f32 %v2586, 0.0
        %v2613 = vmax.f32 %v2591, 0.0
        %v2614 = vmax.f32 %v2596, 0.0
        %s2615 = scalar_lea.vmem %s4, 1
        %v2616 = vld [vmem:[%s2615] sm:$0x1]
        %v2618 = vlaneseq
        %v2619 = vshrl.u32 %v2618, 7
        %v2620 = vsub.s32 0, %v2619
        %v2621 = vrot.slane %v2616, %v2620
        %v2623 = vmul.f32 %v2599, %v2621
        %v2624 = vmul.f32 %v2600, %v2621
        %v2625 = vmul.f32 %v2601, %v2621
        %v2626 = vmul.f32 %v2602, %v2621
        %v2627 = vmul.f32 %v2603, %v2621
        %v2628 = vmul.f32 %v2604, %v2621
        %v2629 = vmul.f32 %v2605, %v2621
        %v2630 = vmul.f32 %v2606, %v2621
        %v2631 = vmul.f32 %v2607, %v2621
        %v2632 = vmul.f32 %v2608, %v2621
        %v2633 = vmul.f32 %v2609, %v2621
        %v2634 = vmul.f32 %v2610, %v2621
        %v2635 = vmul.f32 %v2611, %v2621
        %v2636 = vmul.f32 %v2612, %v2621
        %v2637 = vmul.f32 %v2613, %v2621
        %v2638 = vmul.f32 %v2614, %v2621
        %s2639 = scalar_lea.vmem %s5, 1
        %v2640 = vld [vmem:[%s2639] sm:$0x1]
        %v2642 = vlaneseq
        %v2643 = vshrl.u32 %v2642, 7
        %v2644 = vsub.s32 0, %v2643
        %v2645 = vrot.slane %v2640, %v2644
        %v2647 = vadd.f32 %v2623, %v2645
        %v2648 = vadd.f32 %v2624, %v2645
        %v2649 = vadd.f32 %v2625, %v2645
        %v2650 = vadd.f32 %v2626, %v2645
        %v2651 = vadd.f32 %v2627, %v2645
        %v2652 = vadd.f32 %v2628, %v2645
        %v2653 = vadd.f32 %v2629, %v2645
        %v2654 = vadd.f32 %v2630, %v2645
        %v2655 = vadd.f32 %v2631, %v2645
        %v2656 = vadd.f32 %v2632, %v2645
        %v2657 = vadd.f32 %v2633, %v2645
        %v2658 = vadd.f32 %v2634, %v2645
        %v2659 = vadd.f32 %v2635, %v2645
        %v2660 = vadd.f32 %v2636, %v2645
        %v2661 = vadd.f32 %v2637, %v2645
        %v2662 = vadd.f32 %v2638, %v2645
        %2663 = vst.msk [vmem:[%s427 + $0x1] sm:$0xff] %vm285, %v2647
        %2664 = vst.msk [vmem:[%s427 + $0x9] sm:$0xff] %vm285, %v2648
        %2665 = vst.msk [vmem:[%s427 + $0x19] sm:$0xff] %vm285, %v2649
        %2666 = vst.msk [vmem:[%s427 + $0x21] sm:$0xff] %vm285, %v2650
        %2667 = vst.msk [vmem:[%s427 + $0x31] sm:$0xff] %vm285, %v2651
        %2668 = vst.msk [vmem:[%s427 + $0x39] sm:$0xff] %vm285, %v2652
        %2669 = vst.msk [vmem:[%s427 + $0x49] sm:$0xff] %vm285, %v2653
        %2670 = vst.msk [vmem:[%s427 + $0x51] sm:$0xff] %vm285, %v2654
        %2671 = vst.msk [vmem:[%s427 + $0x61] sm:$0xff] %vm285, %v2655
        %2672 = vst.msk [vmem:[%s427 + $0x69] sm:$0xff] %vm285, %v2656
        %2673 = vst.msk [vmem:[%s427 + $0x79] sm:$0xff] %vm285, %v2657
        %2674 = vst.msk [vmem:[%s427 + $0x81] sm:$0xff] %vm285, %v2658
        %2675 = vst.msk [vmem:[%s427 + $0x91] sm:$0xff] %vm285, %v2659
        %2676 = vst.msk [vmem:[%s427 + $0x99] sm:$0xff] %vm285, %v2660
        %2677 = vst.msk [vmem:[%s427 + $0xa9] sm:$0xff] %vm285, %v2661
        %2678 = vst.msk [vmem:[%s427 + $0xb1] sm:$0xff] %vm285, %v2662
        %s2679 = scalar_lea.vmem [#allocation3], 192
        %v2680 = vld [vmem:[%s2679] sm:$0xff]
        %v2681 = vld [vmem:[%s2679 + $0x8] sm:$0xff]
        %v2682 = vld [vmem:[%s2679 + $0x18] sm:$0xff]
        %v2683 = vld [vmem:[%s2679 + $0x20] sm:$0xff]
        %v2684 = vld [vmem:[%s2679 + $0x30] sm:$0xff]
        %v2685 = vld [vmem:[%s2679 + $0x38] sm:$0xff]
        %v2686 = vld [vmem:[%s2679 + $0x48] sm:$0xff]
        %v2687 = vld [vmem:[%s2679 + $0x50] sm:$0xff]
        %v2688 = vld [vmem:[%s2679 + $0x60] sm:$0xff]
        %v2689 = vld [vmem:[%s2679 + $0x68] sm:$0xff]
        %v2690 = vld [vmem:[%s2679 + $0x78] sm:$0xff]
        %v2691 = vld [vmem:[%s2679 + $0x80] sm:$0xff]
        %v2692 = vld [vmem:[%s2679 + $0x90] sm:$0xff]
        %v2693 = vld [vmem:[%s2679 + $0x98] sm:$0xff]
        %v2694 = vld [vmem:[%s2679 + $0xa8] sm:$0xff]
        %v2695 = vld [vmem:[%s2679 + $0xb0] sm:$0xff]
        %v2696 = vmul.f32 %v2680, %v1950
        %v2697 = vmul.f32 %v2681, %v1950
        %v2698 = vmul.f32 %v2682, %v1950
        %v2699 = vmul.f32 %v2683, %v1950
        %v2700 = vmul.f32 %v2684, %v1950
        %v2701 = vmul.f32 %v2685, %v1950
        %v2702 = vmul.f32 %v2686, %v1950
        %v2703 = vmul.f32 %v2687, %v1950
        %v2704 = vmul.f32 %v2688, %v1950
        %v2705 = vmul.f32 %v2689, %v1950
        %v2706 = vmul.f32 %v2690, %v1950
        %v2707 = vmul.f32 %v2691, %v1950
        %v2708 = vmul.f32 %v2692, %v1950
        %v2709 = vmul.f32 %v2693, %v1950
        %v2710 = vmul.f32 %v2694, %v1950
        %v2711 = vmul.f32 %v2695, %v1950
        %v2712 = vadd.f32 %v2696, 0.0
        %v2713 = vadd.f32 %v2697, 0.0
        %v2714 = vadd.f32 %v2698, 0.0
        %v2715 = vadd.f32 %v2699, 0.0
        %v2716 = vadd.f32 %v2700, 0.0
        %v2717 = vadd.f32 %v2701, 0.0
        %v2718 = vadd.f32 %v2702, 0.0
        %v2719 = vadd.f32 %v2703, 0.0
        %v2720 = vadd.f32 %v2704, 0.0
        %v2721 = vadd.f32 %v2705, 0.0
        %v2722 = vadd.f32 %v2706, 0.0
        %v2723 = vadd.f32 %v2707, 0.0
        %v2724 = vadd.f32 %v2708, 0.0
        %v2725 = vadd.f32 %v2709, 0.0
        %v2726 = vadd.f32 %v2710, 0.0
        %v2727 = vadd.f32 %v2711, 0.0
        %v2728 = vld [vmem:[%s2679 + $0x1] sm:$0xff]
        %v2729 = vld [vmem:[%s2679 + $0x9] sm:$0xff]
        %v2730 = vld [vmem:[%s2679 + $0x19] sm:$0xff]
        %v2731 = vld [vmem:[%s2679 + $0x21] sm:$0xff]
        %v2732 = vld [vmem:[%s2679 + $0x31] sm:$0xff]
        %v2733 = vld [vmem:[%s2679 + $0x39] sm:$0xff]
        %v2734 = vld [vmem:[%s2679 + $0x49] sm:$0xff]
        %v2735 = vld [vmem:[%s2679 + $0x51] sm:$0xff]
        %v2736 = vld [vmem:[%s2679 + $0x61] sm:$0xff]
        %v2737 = vld [vmem:[%s2679 + $0x69] sm:$0xff]
        %v2738 = vld [vmem:[%s2679 + $0x79] sm:$0xff]
        %v2739 = vld [vmem:[%s2679 + $0x81] sm:$0xff]
        %v2740 = vld [vmem:[%s2679 + $0x91] sm:$0xff]
        %v2741 = vld [vmem:[%s2679 + $0x99] sm:$0xff]
        %v2742 = vld [vmem:[%s2679 + $0xa9] sm:$0xff]
        %v2743 = vld [vmem:[%s2679 + $0xb1] sm:$0xff]
        %v2744 = vmul.f32 %v2728, %v2002
        %v2745 = vmul.f32 %v2729, %v2002
        %v2746 = vmul.f32 %v2730, %v2002
        %v2747 = vmul.f32 %v2731, %v2002
        %v2748 = vmul.f32 %v2732, %v2002
        %v2749 = vmul.f32 %v2733, %v2002
        %v2750 = vmul.f32 %v2734, %v2002
        %v2751 = vmul.f32 %v2735, %v2002
        %v2752 = vmul.f32 %v2736, %v2002
        %v2753 = vmul.f32 %v2737, %v2002
        %v2754 = vmul.f32 %v2738, %v2002
        %v2755 = vmul.f32 %v2739, %v2002
        %v2756 = vmul.f32 %v2740, %v2002
        %v2757 = vmul.f32 %v2741, %v2002
        %v2758 = vmul.f32 %v2742, %v2002
        %v2759 = vmul.f32 %v2743, %v2002
        %v2760 = vadd.f32 %v2712, %v2744
        %v2761 = vadd.f32 %v2713, %v2745
        %v2762 = vadd.f32 %v2714, %v2746
        %v2763 = vadd.f32 %v2715, %v2747
        %v2764 = vadd.f32 %v2716, %v2748
        %v2765 = vadd.f32 %v2717, %v2749
        %v2766 = vadd.f32 %v2718, %v2750
        %v2767 = vadd.f32 %v2719, %v2751
        %v2768 = vadd.f32 %v2720, %v2752
        %v2769 = vadd.f32 %v2721, %v2753
        %v2770 = vadd.f32 %v2722, %v2754
        %v2771 = vadd.f32 %v2723, %v2755
        %v2772 = vadd.f32 %v2724, %v2756
        %v2773 = vadd.f32 %v2725, %v2757
        %v2774 = vadd.f32 %v2726, %v2758
        %v2775 = vadd.f32 %v2727, %v2759
        %v2776 = vld [vmem:[%s2679 + $0x2] sm:$0xff]
        %v2777 = vld [vmem:[%s2679 + $0xa] sm:$0xff]
        %v2778 = vld [vmem:[%s2679 + $0x1a] sm:$0xff]
        %v2779 = vld [vmem:[%s2679 + $0x22] sm:$0xff]
        %v2780 = vld [vmem:[%s2679 + $0x32] sm:$0xff]
        %v2781 = vld [vmem:[%s2679 + $0x3a] sm:$0xff]
        %v2782 = vld [vmem:[%s2679 + $0x4a] sm:$0xff]
        %v2783 = vld [vmem:[%s2679 + $0x52] sm:$0xff]
        %v2784 = vld [vmem:[%s2679 + $0x62] sm:$0xff]
        %v2785 = vld [vmem:[%s2679 + $0x6a] sm:$0xff]
        %v2786 = vld [vmem:[%s2679 + $0x7a] sm:$0xff]
        %v2787 = vld [vmem:[%s2679 + $0x82] sm:$0xff]
        %v2788 = vld [vmem:[%s2679 + $0x92] sm:$0xff]
        %v2789 = vld [vmem:[%s2679 + $0x9a] sm:$0xff]
        %v2790 = vld [vmem:[%s2679 + $0xaa] sm:$0xff]
        %v2791 = vld [vmem:[%s2679 + $0xb2] sm:$0xff]
        %v2792 = vmul.f32 %v2776, %v2054
        %v2793 = vmul.f32 %v2777, %v2054
        %v2794 = vmul.f32 %v2778, %v2054
        %v2795 = vmul.f32 %v2779, %v2054
        %v2796 = vmul.f32 %v2780, %v2054
        %v2797 = vmul.f32 %v2781, %v2054
        %v2798 = vmul.f32 %v2782, %v2054
        %v2799 = vmul.f32 %v2783, %v2054
        %v2800 = vmul.f32 %v2784, %v2054
        %v2801 = vmul.f32 %v2785, %v2054
        %v2802 = vmul.f32 %v2786, %v2054
        %v2803 = vmul.f32 %v2787, %v2054
        %v2804 = vmul.f32 %v2788, %v2054
        %v2805 = vmul.f32 %v2789, %v2054
        %v2806 = vmul.f32 %v2790, %v2054
        %v2807 = vmul.f32 %v2791, %v2054
        %v2808 = vadd.f32 %v2760, %v2792
        %v2809 = vadd.f32 %v2761, %v2793
        %v2810 = vadd.f32 %v2762, %v2794
        %v2811 = vadd.f32 %v2763, %v2795
        %v2812 = vadd.f32 %v2764, %v2796
        %v2813 = vadd.f32 %v2765, %v2797
        %v2814 = vadd.f32 %v2766, %v2798
        %v2815 = vadd.f32 %v2767, %v2799
        %v2816 = vadd.f32 %v2768, %v2800
        %v2817 = vadd.f32 %v2769, %v2801
        %v2818 = vadd.f32 %v2770, %v2802
        %v2819 = vadd.f32 %v2771, %v2803
        %v2820 = vadd.f32 %v2772, %v2804
        %v2821 = vadd.f32 %v2773, %v2805
        %v2822 = vadd.f32 %v2774, %v2806
        %v2823 = vadd.f32 %v2775, %v2807
        %v2824 = vld [vmem:[%s1904] sm:$0xff]
        %v2825 = vld [vmem:[%s1904 + $0x8] sm:$0xff]
        %v2826 = vld [vmem:[%s1904 + $0x18] sm:$0xff]
        %v2827 = vld [vmem:[%s1904 + $0x20] sm:$0xff]
        %v2828 = vld [vmem:[%s1904 + $0x30] sm:$0xff]
        %v2829 = vld [vmem:[%s1904 + $0x38] sm:$0xff]
        %v2830 = vld [vmem:[%s1904 + $0x48] sm:$0xff]
        %v2831 = vld [vmem:[%s1904 + $0x50] sm:$0xff]
        %v2832 = vld [vmem:[%s1904 + $0x60] sm:$0xff]
        %v2833 = vld [vmem:[%s1904 + $0x68] sm:$0xff]
        %v2834 = vld [vmem:[%s1904 + $0x78] sm:$0xff]
        %v2835 = vld [vmem:[%s1904 + $0x80] sm:$0xff]
        %v2836 = vld [vmem:[%s1904 + $0x90] sm:$0xff]
        %v2837 = vld [vmem:[%s1904 + $0x98] sm:$0xff]
        %v2838 = vld [vmem:[%s1904 + $0xa8] sm:$0xff]
        %v2839 = vld [vmem:[%s1904 + $0xb0] sm:$0xff]
        %v2840 = vmul.f32 %v2824, %v2106
        %v2841 = vmul.f32 %v2825, %v2106
        %v2842 = vmul.f32 %v2826, %v2106
        %v2843 = vmul.f32 %v2827, %v2106
        %v2844 = vmul.f32 %v2828, %v2106
        %v2845 = vmul.f32 %v2829, %v2106
        %v2846 = vmul.f32 %v2830, %v2106
        %v2847 = vmul.f32 %v2831, %v2106
        %v2848 = vmul.f32 %v2832, %v2106
        %v2849 = vmul.f32 %v2833, %v2106
        %v2850 = vmul.f32 %v2834, %v2106
        %v2851 = vmul.f32 %v2835, %v2106
        %v2852 = vmul.f32 %v2836, %v2106
        %v2853 = vmul.f32 %v2837, %v2106
        %v2854 = vmul.f32 %v2838, %v2106
        %v2855 = vmul.f32 %v2839, %v2106
        %v2856 = vadd.f32 %v2808, %v2840
        %v2857 = vadd.f32 %v2809, %v2841
        %v2858 = vadd.f32 %v2810, %v2842
        %v2859 = vadd.f32 %v2811, %v2843
        %v2860 = vadd.f32 %v2812, %v2844
        %v2861 = vadd.f32 %v2813, %v2845
        %v2862 = vadd.f32 %v2814, %v2846
        %v2863 = vadd.f32 %v2815, %v2847
        %v2864 = vadd.f32 %v2816, %v2848
        %v2865 = vadd.f32 %v2817, %v2849
        %v2866 = vadd.f32 %v2818, %v2850
        %v2867 = vadd.f32 %v2819, %v2851
        %v2868 = vadd.f32 %v2820, %v2852
        %v2869 = vadd.f32 %v2821, %v2853
        %v2870 = vadd.f32 %v2822, %v2854
        %v2871 = vadd.f32 %v2823, %v2855
        %v2872 = vld [vmem:[%s1904 + $0x1] sm:$0xff]
        %v2873 = vld [vmem:[%s1904 + $0x9] sm:$0xff]
        %v2874 = vld [vmem:[%s1904 + $0x19] sm:$0xff]
        %v2875 = vld [vmem:[%s1904 + $0x21] sm:$0xff]
        %v2876 = vld [vmem:[%s1904 + $0x31] sm:$0xff]
        %v2877 = vld [vmem:[%s1904 + $0x39] sm:$0xff]
        %v2878 = vld [vmem:[%s1904 + $0x49] sm:$0xff]
        %v2879 = vld [vmem:[%s1904 + $0x51] sm:$0xff]
        %v2880 = vld [vmem:[%s1904 + $0x61] sm:$0xff]
        %v2881 = vld [vmem:[%s1904 + $0x69] sm:$0xff]
        %v2882 = vld [vmem:[%s1904 + $0x79] sm:$0xff]
        %v2883 = vld [vmem:[%s1904 + $0x81] sm:$0xff]
        %v2884 = vld [vmem:[%s1904 + $0x91] sm:$0xff]
        %v2885 = vld [vmem:[%s1904 + $0x99] sm:$0xff]
        %v2886 = vld [vmem:[%s1904 + $0xa9] sm:$0xff]
        %v2887 = vld [vmem:[%s1904 + $0xb1] sm:$0xff]
        %v2888 = vmul.f32 %v2872, %v2158
        %v2889 = vmul.f32 %v2873, %v2158
        %v2890 = vmul.f32 %v2874, %v2158
        %v2891 = vmul.f32 %v2875, %v2158
        %v2892 = vmul.f32 %v2876, %v2158
        %v2893 = vmul.f32 %v2877, %v2158
        %v2894 = vmul.f32 %v2878, %v2158
        %v2895 = vmul.f32 %v2879, %v2158
        %v2896 = vmul.f32 %v2880, %v2158
        %v2897 = vmul.f32 %v2881, %v2158
        %v2898 = vmul.f32 %v2882, %v2158
        %v2899 = vmul.f32 %v2883, %v2158
        %v2900 = vmul.f32 %v2884, %v2158
        %v2901 = vmul.f32 %v2885, %v2158
        %v2902 = vmul.f32 %v2886, %v2158
        %v2903 = vmul.f32 %v2887, %v2158
        %v2904 = vadd.f32 %v2856, %v2888
        %v2905 = vadd.f32 %v2857, %v2889
        %v2906 = vadd.f32 %v2858, %v2890
        %v2907 = vadd.f32 %v2859, %v2891
        %v2908 = vadd.f32 %v2860, %v2892
        %v2909 = vadd.f32 %v2861, %v2893
        %v2910 = vadd.f32 %v2862, %v2894
        %v2911 = vadd.f32 %v2863, %v2895
        %v2912 = vadd.f32 %v2864, %v2896
        %v2913 = vadd.f32 %v2865, %v2897
        %v2914 = vadd.f32 %v2866, %v2898
        %v2915 = vadd.f32 %v2867, %v2899
        %v2916 = vadd.f32 %v2868, %v2900
        %v2917 = vadd.f32 %v2869, %v2901
        %v2918 = vadd.f32 %v2870, %v2902
        %v2919 = vadd.f32 %v2871, %v2903
        %v2920 = vld [vmem:[%s1904 + $0x2] sm:$0xff]
        %v2921 = vld [vmem:[%s1904 + $0xa] sm:$0xff]
        %v2922 = vld [vmem:[%s1904 + $0x1a] sm:$0xff]
        %v2923 = vld [vmem:[%s1904 + $0x22] sm:$0xff]
        %v2924 = vld [vmem:[%s1904 + $0x32] sm:$0xff]
        %v2925 = vld [vmem:[%s1904 + $0x3a] sm:$0xff]
        %v2926 = vld [vmem:[%s1904 + $0x4a] sm:$0xff]
        %v2927 = vld [vmem:[%s1904 + $0x52] sm:$0xff]
        %v2928 = vld [vmem:[%s1904 + $0x62] sm:$0xff]
        %v2929 = vld [vmem:[%s1904 + $0x6a] sm:$0xff]
        %v2930 = vld [vmem:[%s1904 + $0x7a] sm:$0xff]
        %v2931 = vld [vmem:[%s1904 + $0x82] sm:$0xff]
        %v2932 = vld [vmem:[%s1904 + $0x92] sm:$0xff]
        %v2933 = vld [vmem:[%s1904 + $0x9a] sm:$0xff]
        %v2934 = vld [vmem:[%s1904 + $0xaa] sm:$0xff]
        %v2935 = vld [vmem:[%s1904 + $0xb2] sm:$0xff]
        %v2936 = vmul.f32 %v2920, %v2210
        %v2937 = vmul.f32 %v2921, %v2210
        %v2938 = vmul.f32 %v2922, %v2210
        %v2939 = vmul.f32 %v2923, %v2210
        %v2940 = vmul.f32 %v2924, %v2210
        %v2941 = vmul.f32 %v2925, %v2210
        %v2942 = vmul.f32 %v2926, %v2210
        %v2943 = vmul.f32 %v2927, %v2210
        %v2944 = vmul.f32 %v2928, %v2210
        %v2945 = vmul.f32 %v2929, %v2210
        %v2946 = vmul.f32 %v2930, %v2210
        %v2947 = vmul.f32 %v2931, %v2210
        %v2948 = vmul.f32 %v2932, %v2210
        %v2949 = vmul.f32 %v2933, %v2210
        %v2950 = vmul.f32 %v2934, %v2210
        %v2951 = vmul.f32 %v2935, %v2210
        %v2952 = vadd.f32 %v2904, %v2936
        %v2953 = vadd.f32 %v2905, %v2937
        %v2954 = vadd.f32 %v2906, %v2938
        %v2955 = vadd.f32 %v2907, %v2939
        %v2956 = vadd.f32 %v2908, %v2940
        %v2957 = vadd.f32 %v2909, %v2941
        %v2958 = vadd.f32 %v2910, %v2942
        %v2959 = vadd.f32 %v2911, %v2943
        %v2960 = vadd.f32 %v2912, %v2944
        %v2961 = vadd.f32 %v2913, %v2945
        %v2962 = vadd.f32 %v2914, %v2946
        %v2963 = vadd.f32 %v2915, %v2947
        %v2964 = vadd.f32 %v2916, %v2948
        %v2965 = vadd.f32 %v2917, %v2949
        %v2966 = vadd.f32 %v2918, %v2950
        %v2967 = vadd.f32 %v2919, %v2951
        %s2968 = scalar_lea.vmem [#allocation3], 240
        %v2969 = vld [vmem:[%s2968] sm:$0xff]
        %v2970 = vld [vmem:[%s2968 + $0x8] sm:$0xff]
        %v2971 = vld [vmem:[%s2968 + $0x18] sm:$0xff]
        %v2972 = vld [vmem:[%s2968 + $0x20] sm:$0xff]
        %v2973 = vld [vmem:[%s2968 + $0x30] sm:$0xff]
        %v2974 = vld [vmem:[%s2968 + $0x38] sm:$0xff]
        %v2975 = vld [vmem:[%s2968 + $0x48] sm:$0xff]
        %v2976 = vld [vmem:[%s2968 + $0x50] sm:$0xff]
        %v2977 = vld [vmem:[%s2968 + $0x60] sm:$0xff]
        %v2978 = vld [vmem:[%s2968 + $0x68] sm:$0xff]
        %v2979 = vld [vmem:[%s2968 + $0x78] sm:$0xff]
        %v2980 = vld [vmem:[%s2968 + $0x80] sm:$0xff]
        %v2981 = vld [vmem:[%s2968 + $0x90] sm:$0xff]
        %v2982 = vld [vmem:[%s2968 + $0x98] sm:$0xff]
        %v2983 = vld [vmem:[%s2968 + $0xa8] sm:$0xff]
        %v2984 = vld [vmem:[%s2968 + $0xb0] sm:$0xff]
        %v2985 = vmul.f32 %v2969, %v2263
        %v2986 = vmul.f32 %v2970, %v2263
        %v2987 = vmul.f32 %v2971, %v2263
        %v2988 = vmul.f32 %v2972, %v2263
        %v2989 = vmul.f32 %v2973, %v2263
        %v2990 = vmul.f32 %v2974, %v2263
        %v2991 = vmul.f32 %v2975, %v2263
        %v2992 = vmul.f32 %v2976, %v2263
        %v2993 = vmul.f32 %v2977, %v2263
        %v2994 = vmul.f32 %v2978, %v2263
        %v2995 = vmul.f32 %v2979, %v2263
        %v2996 = vmul.f32 %v2980, %v2263
        %v2997 = vmul.f32 %v2981, %v2263
        %v2998 = vmul.f32 %v2982, %v2263
        %v2999 = vmul.f32 %v2983, %v2263
        %v3000 = vmul.f32 %v2984, %v2263
        %v3001 = vadd.f32 %v2952, %v2985
        %v3002 = vadd.f32 %v2953, %v2986
        %v3003 = vadd.f32 %v2954, %v2987
        %v3004 = vadd.f32 %v2955, %v2988
        %v3005 = vadd.f32 %v2956, %v2989
        %v3006 = vadd.f32 %v2957, %v2990
        %v3007 = vadd.f32 %v2958, %v2991
        %v3008 = vadd.f32 %v2959, %v2992
        %v3009 = vadd.f32 %v2960, %v2993
        %v3010 = vadd.f32 %v2961, %v2994
        %v3011 = vadd.f32 %v2962, %v2995
        %v3012 = vadd.f32 %v2963, %v2996
        %v3013 = vadd.f32 %v2964, %v2997
        %v3014 = vadd.f32 %v2965, %v2998
        %v3015 = vadd.f32 %v2966, %v2999
        %v3016 = vadd.f32 %v2967, %v3000
        %v3017 = vld [vmem:[%s2968 + $0x1] sm:$0xff]
        %v3018 = vld [vmem:[%s2968 + $0x9] sm:$0xff]
        %v3019 = vld [vmem:[%s2968 + $0x19] sm:$0xff]
        %v3020 = vld [vmem:[%s2968 + $0x21] sm:$0xff]
        %v3021 = vld [vmem:[%s2968 + $0x31] sm:$0xff]
        %v3022 = vld [vmem:[%s2968 + $0x39] sm:$0xff]
        %v3023 = vld [vmem:[%s2968 + $0x49] sm:$0xff]
        %v3024 = vld [vmem:[%s2968 + $0x51] sm:$0xff]
        %v3025 = vld [vmem:[%s2968 + $0x61] sm:$0xff]
        %v3026 = vld [vmem:[%s2968 + $0x69] sm:$0xff]
        %v3027 = vld [vmem:[%s2968 + $0x79] sm:$0xff]
        %v3028 = vld [vmem:[%s2968 + $0x81] sm:$0xff]
        %v3029 = vld [vmem:[%s2968 + $0x91] sm:$0xff]
        %v3030 = vld [vmem:[%s2968 + $0x99] sm:$0xff]
        %v3031 = vld [vmem:[%s2968 + $0xa9] sm:$0xff]
        %v3032 = vld [vmem:[%s2968 + $0xb1] sm:$0xff]
        %v3033 = vmul.f32 %v3017, %v2315
        %v3034 = vmul.f32 %v3018, %v2315
        %v3035 = vmul.f32 %v3019, %v2315
        %v3036 = vmul.f32 %v3020, %v2315
        %v3037 = vmul.f32 %v3021, %v2315
        %v3038 = vmul.f32 %v3022, %v2315
        %v3039 = vmul.f32 %v3023, %v2315
        %v3040 = vmul.f32 %v3024, %v2315
        %v3041 = vmul.f32 %v3025, %v2315
        %v3042 = vmul.f32 %v3026, %v2315
        %v3043 = vmul.f32 %v3027, %v2315
        %v3044 = vmul.f32 %v3028, %v2315
        %v3045 = vmul.f32 %v3029, %v2315
        %v3046 = vmul.f32 %v3030, %v2315
        %v3047 = vmul.f32 %v3031, %v2315
        %v3048 = vmul.f32 %v3032, %v2315
        %v3049 = vadd.f32 %v3001, %v3033
        %v3050 = vadd.f32 %v3002, %v3034
        %v3051 = vadd.f32 %v3003, %v3035
        %v3052 = vadd.f32 %v3004, %v3036
        %v3053 = vadd.f32 %v3005, %v3037
        %v3054 = vadd.f32 %v3006, %v3038
        %v3055 = vadd.f32 %v3007, %v3039
        %v3056 = vadd.f32 %v3008, %v3040
        %v3057 = vadd.f32 %v3009, %v3041
        %v3058 = vadd.f32 %v3010, %v3042
        %v3059 = vadd.f32 %v3011, %v3043
        %v3060 = vadd.f32 %v3012, %v3044
        %v3061 = vadd.f32 %v3013, %v3045
        %v3062 = vadd.f32 %v3014, %v3046
        %v3063 = vadd.f32 %v3015, %v3047
        %v3064 = vadd.f32 %v3016, %v3048
        %v3065 = vld [vmem:[%s2968 + $0x2] sm:$0xff]
        %v3066 = vld [vmem:[%s2968 + $0xa] sm:$0xff]
        %v3067 = vld [vmem:[%s2968 + $0x1a] sm:$0xff]
        %v3068 = vld [vmem:[%s2968 + $0x22] sm:$0xff]
        %v3069 = vld [vmem:[%s2968 + $0x32] sm:$0xff]
        %v3070 = vld [vmem:[%s2968 + $0x3a] sm:$0xff]
        %v3071 = vld [vmem:[%s2968 + $0x4a] sm:$0xff]
        %v3072 = vld [vmem:[%s2968 + $0x52] sm:$0xff]
        %v3073 = vld [vmem:[%s2968 + $0x62] sm:$0xff]
        %v3074 = vld [vmem:[%s2968 + $0x6a] sm:$0xff]
        %v3075 = vld [vmem:[%s2968 + $0x7a] sm:$0xff]
        %v3076 = vld [vmem:[%s2968 + $0x82] sm:$0xff]
        %v3077 = vld [vmem:[%s2968 + $0x92] sm:$0xff]
        %v3078 = vld [vmem:[%s2968 + $0x9a] sm:$0xff]
        %v3079 = vld [vmem:[%s2968 + $0xaa] sm:$0xff]
        %v3080 = vld [vmem:[%s2968 + $0xb2] sm:$0xff]
        %v3081 = vmul.f32 %v3065, %v2367
        %v3082 = vmul.f32 %v3066, %v2367
        %v3083 = vmul.f32 %v3067, %v2367
        %v3084 = vmul.f32 %v3068, %v2367
        %v3085 = vmul.f32 %v3069, %v2367
        %v3086 = vmul.f32 %v3070, %v2367
        %v3087 = vmul.f32 %v3071, %v2367
        %v3088 = vmul.f32 %v3072, %v2367
        %v3089 = vmul.f32 %v3073, %v2367
        %v3090 = vmul.f32 %v3074, %v2367
        %v3091 = vmul.f32 %v3075, %v2367
        %v3092 = vmul.f32 %v3076, %v2367
        %v3093 = vmul.f32 %v3077, %v2367
        %v3094 = vmul.f32 %v3078, %v2367
        %v3095 = vmul.f32 %v3079, %v2367
        %v3096 = vmul.f32 %v3080, %v2367
        %v3097 = vadd.f32 %v3049, %v3081
        %v3098 = vadd.f32 %v3050, %v3082
        %v3099 = vadd.f32 %v3051, %v3083
        %v3100 = vadd.f32 %v3052, %v3084
        %v3101 = vadd.f32 %v3053, %v3085
        %v3102 = vadd.f32 %v3054, %v3086
        %v3103 = vadd.f32 %v3055, %v3087
        %v3104 = vadd.f32 %v3056, %v3088
        %v3105 = vadd.f32 %v3057, %v3089
        %v3106 = vadd.f32 %v3058, %v3090
        %v3107 = vadd.f32 %v3059, %v3091
        %v3108 = vadd.f32 %v3060, %v3092
        %v3109 = vadd.f32 %v3061, %v3093
        %v3110 = vadd.f32 %v3062, %v3094
        %v3111 = vadd.f32 %v3063, %v3095
        %v3112 = vadd.f32 %v3064, %v3096
        %v3114 = vsel %vm285, %v3097, 0
        %v3117 = vsel %vm285, %v3098, 0
        %v3120 = vsel %vm285, %v3099, 0
        %v3123 = vsel %vm285, %v3100, 0
        %v3126 = vsel %vm285, %v3101, 0
        %v3129 = vsel %vm285, %v3102, 0
        %v3132 = vsel %vm285, %v3103, 0
        %v3135 = vsel %vm285, %v3104, 0
        %v3138 = vsel %vm285, %v3105, 0
        %v3141 = vsel %vm285, %v3106, 0
        %v3144 = vsel %vm285, %v3107, 0
        %v3147 = vsel %vm285, %v3108, 0
        %v3150 = vsel %vm285, %v3109, 0
        %v3153 = vsel %vm285, %v3110, 0
        %v3156 = vsel %vm285, %v3111, 0
        %v3159 = vsel %vm285, %v3112, 0
        %3161 = vmatprep.subr.mxu0 0.0
        %3162 = vmatpush1.msra.mxu0 %v1925
        %3163 = vmatprep.subr.mxu0 0.0
        %3164 = vmatpush1.msra.mxu0 %v1926
        %3165 = vmatprep.subr.mxu0 0.0
        %3166 = vmatpush1.msra.mxu0 %v1927
        %3167 = vmatprep.subr.mxu0 0.0
        %3168 = vmatpush1.msra.mxu0 %v1928
        %3169 = vmatprep.subr.mxu0 0.0
        %3170 = vmatpush1.msra.mxu0 0.0
        %3171 = vmatprep.subr.mxu0 0.0
        %3172 = vmatpush1.msra.mxu0 0.0
        %3173 = vmatprep.subr.mxu0 0.0
        %3174 = vmatpush1.msra.mxu0 0.0
        %3175 = vmatprep.subr.mxu0 0.0
        %3176 = vmatpush1.msra.mxu0 0.0
        %3177 = vmatprep.subr.mxu0 0.0
        %3178 = vmatpush1.msra.mxu0 0.0
        %3179 = vmatprep.subr.mxu0 0.0
        %3180 = vmatpush1.msra.mxu0 0.0
        %3181 = vmatprep.subr.mxu0 0.0
        %3182 = vmatpush1.msra.mxu0 0.0
        %3183 = vmatprep.subr.mxu0 0.0
        %3184 = vmatpush1.msra.mxu0 0.0
        %3185 = vmatprep.subr.mxu0 0.0
        %3186 = vmatpush1.msra.mxu0 0.0
        %3187 = vmatprep.subr.mxu0 0.0
        %3188 = vmatpush1.msra.mxu0 0.0
        %3189 = vmatprep.subr.mxu0 0.0
        %3190 = vmatpush1.msra.mxu0 0.0
        %3191 = vmatprep.subr.mxu0 0.0
        %3192 = vmatpush1.msra.mxu0 0.0
        %3193 = vmatprep.subr.mxu0 0.0
        %3194 = vmatpush1.msra.mxu0 0.0
        %3195 = vmatprep.subr.mxu0 0.0
        %3196 = vmatpush1.msra.mxu0 0.0
        %3197 = vmatprep.subr.mxu0 0.0
        %3198 = vmatpush1.msra.mxu0 0.0
        %3199 = vmatprep.subr.mxu0 0.0
        %3200 = vmatpush1.msra.mxu0 0.0
        %3201 = vmatprep.subr.mxu0 0.0
        %3202 = vmatpush1.msra.mxu0 0.0
        %3203 = vmatprep.subr.mxu0 0.0
        %3204 = vmatpush1.msra.mxu0 0.0
        %3205 = vmatprep.subr.mxu0 0.0
        %3206 = vmatpush1.msra.mxu0 0.0
        %3207 = vmatprep.subr.mxu0 0.0
        %3208 = vmatpush1.msra.mxu0 0.0
        %3209 = vmatprep.subr.mxu0 0.0
        %3210 = vmatpush1.msra.mxu0 0.0
        %3211 = vmatprep.subr.mxu0 0.0
        %3212 = vmatpush1.msra.mxu0 0.0
        %3213 = vmatprep.subr.mxu0 0.0
        %3214 = vmatpush1.msra.mxu0 0.0
        %3215 = vmatprep.subr.mxu0 0.0
        %3216 = vmatpush1.msra.mxu0 0.0
        %3217 = vmatprep.subr.mxu0 0.0
        %3218 = vmatpush1.msra.mxu0 0.0
        %3219 = vmatprep.subr.mxu0 0.0
        %3220 = vmatpush1.msra.mxu0 0.0
        %3221 = vmatprep.subr.mxu0 0.0
        %3222 = vmatpush1.msra.mxu0 0.0
        %3223 = vmatprep.subr.mxu0 0.0
        %3224 = vmatpush1.msra.mxu0 0.0
        %3225 = vmatprep.mubr.f32.mxu0 0.0
        %3226 = vmatmul.mubr.f32.gmra.mrb[0].mxu0 %v3114
        %v3227 = vpop.f32.mrb[0].mxu0
        %v3228 = vadd.f32 %v2404, %v3227
        %v3229 = vpop.f32.mrb[0].mxu0
        %3230 = vmatprep.mubr.f32.mxu0 0.0
        %3231 = vmatmul.mubr.f32.gmra.mrb[0].mxu0 %v3117
        %v3232 = vpop.f32.mrb[0].mxu0
        %v3233 = vadd.f32 %v2404, %v3232
        %v3234 = vpop.f32.mrb[0].mxu0
        %3235 = vmatprep.mubr.f32.mxu0 0.0
        %3236 = vmatmul.mubr.f32.gmra.mrb[0].mxu0 %v3120
        %v3237 = vpop.f32.mrb[0].mxu0
        %v3238 = vadd.f32 %v2404, %v3237
        %v3239 = vpop.f32.mrb[0].mxu0
        %3240 = vmatprep.mubr.f32.mxu0 0.0
        %3241 = vmatmul.mubr.f32.gmra.mrb[0].mxu0 %v3123
        %v3242 = vpop.f32.mrb[0].mxu0
        %v3243 = vadd.f32 %v2404, %v3242
        %v3244 = vpop.f32.mrb[0].mxu0
        %3245 = vmatprep.mubr.f32.mxu0 0.0
        %3246 = vmatmul.mubr.f32.gmra.mrb[0].mxu0 %v3126
        %v3247 = vpop.f32.mrb[0].mxu0
        %v3248 = vadd.f32 %v2404, %v3247
        %v3249 = vpop.f32.mrb[0].mxu0
        %3250 = vmatprep.mubr.f32.mxu0 0.0
        %3251 = vmatmul.mubr.f32.gmra.mrb[0].mxu0 %v3129
        %v3252 = vpop.f32.mrb[0].mxu0
        %v3253 = vadd.f32 %v2404, %v3252
        %v3254 = vpop.f32.mrb[0].mxu0
        %3255 = vmatprep.mubr.f32.mxu0 0.0
        %3256 = vmatmul.mubr.f32.gmra.mrb[0].mxu0 %v3132
        %v3257 = vpop.f32.mrb[0].mxu0
        %v3258 = vadd.f32 %v2404, %v3257
        %v3259 = vpop.f32.mrb[0].mxu0
        %3260 = vmatprep.mubr.f32.mxu0 0.0
        %3261 = vmatmul.mubr.f32.gmra.mrb[0].mxu0 %v3135
        %v3262 = vpop.f32.mrb[0].mxu0
        %v3263 = vadd.f32 %v2404, %v3262
        %v3264 = vpop.f32.mrb[0].mxu0
        %3265 = vmatprep.mubr.f32.mxu0 0.0
        %3266 = vmatmul.mubr.f32.gmra.mrb[0].mxu0 %v3138
        %v3267 = vpop.f32.mrb[0].mxu0
        %v3268 = vadd.f32 %v2404, %v3267
        %v3269 = vpop.f32.mrb[0].mxu0
        %3270 = vmatprep.mubr.f32.mxu0 0.0
        %3271 = vmatmul.mubr.f32.gmra.mrb[0].mxu0 %v3141
        %v3272 = vpop.f32.mrb[0].mxu0
        %v3273 = vadd.f32 %v2404, %v3272
        %v3274 = vpop.f32.mrb[0].mxu0
        %3275 = vmatprep.mubr.f32.mxu0 0.0
        %3276 = vmatmul.mubr.f32.gmra.mrb[0].mxu0 %v3144
        %v3277 = vpop.f32.mrb[0].mxu0
        %v3278 = vadd.f32 %v2404, %v3277
        %v3279 = vpop.f32.mrb[0].mxu0
        %3280 = vmatprep.mubr.f32.mxu0 0.0
        %3281 = vmatmul.mubr.f32.gmra.mrb[0].mxu0 %v3147
        %v3282 = vpop.f32.mrb[0].mxu0
        %v3283 = vadd.f32 %v2404, %v3282
        %v3284 = vpop.f32.mrb[0].mxu0
        %3285 = vmatprep.mubr.f32.mxu0 0.0
        %3286 = vmatmul.mubr.f32.gmra.mrb[0].mxu0 %v3150
        %v3287 = vpop.f32.mrb[0].mxu0
        %v3288 = vadd.f32 %v2404, %v3287
        %v3289 = vpop.f32.mrb[0].mxu0
        %3290 = vmatprep.mubr.f32.mxu0 0.0
        %3291 = vmatmul.mubr.f32.gmra.mrb[0].mxu0 %v3153
        %v3292 = vpop.f32.mrb[0].mxu0
        %v3293 = vadd.f32 %v2404, %v3292
        %v3294 = vpop.f32.mrb[0].mxu0
        %3295 = vmatprep.mubr.f32.mxu0 0.0
        %3296 = vmatmul.mubr.f32.gmra.mrb[0].mxu0 %v3156
        %v3297 = vpop.f32.mrb[0].mxu0
        %v3298 = vadd.f32 %v2404, %v3297
        %v3299 = vpop.f32.mrb[0].mxu0
        %3300 = vmatprep.mubr.f32.mxu0 0.0
        %3301 = vmatmul.mubr.f32.gmra.mrb[0].mxu0 %v3159
        %v3302 = vpop.f32.mrb[0].mxu0
        %v3303 = vadd.f32 %v2404, %v3302
        %v3304 = vpop.f32.mrb[0].mxu0
        %3305 = vdwg.mxu0
        %v3306 = vmax.f32 %v3228, 0.0
        %v3307 = vmax.f32 %v3233, 0.0
        %v3308 = vmax.f32 %v3238, 0.0
        %v3309 = vmax.f32 %v3243, 0.0
        %v3310 = vmax.f32 %v3248, 0.0
        %v3311 = vmax.f32 %v3253, 0.0
        %v3312 = vmax.f32 %v3258, 0.0
        %v3313 = vmax.f32 %v3263, 0.0
        %v3314 = vmax.f32 %v3268, 0.0
        %v3315 = vmax.f32 %v3273, 0.0
        %v3316 = vmax.f32 %v3278, 0.0
        %v3317 = vmax.f32 %v3283, 0.0
        %v3318 = vmax.f32 %v3288, 0.0
        %v3319 = vmax.f32 %v3293, 0.0
        %v3320 = vmax.f32 %v3298, 0.0
        %v3321 = vmax.f32 %v3303, 0.0
        %v3322 = vld [vmem:[%s2615] sm:$0x1]
        %v3324 = vlaneseq
        %v3325 = vshrl.u32 %v3324, 7
        %v3326 = vsub.s32 0, %v3325
        %v3327 = vrot.slane %v3322, %v3326
        %v3329 = vmul.f32 %v3306, %v3327
        %v3330 = vmul.f32 %v3307, %v3327
        %v3331 = vmul.f32 %v3308, %v3327
        %v3332 = vmul.f32 %v3309, %v3327
        %v3333 = vmul.f32 %v3310, %v3327
        %v3334 = vmul.f32 %v3311, %v3327
        %v3335 = vmul.f32 %v3312, %v3327
        %v3336 = vmul.f32 %v3313, %v3327
        %v3337 = vmul.f32 %v3314, %v3327
        %v3338 = vmul.f32 %v3315, %v3327
        %v3339 = vmul.f32 %v3316, %v3327
        %v3340 = vmul.f32 %v3317, %v3327
        %v3341 = vmul.f32 %v3318, %v3327
        %v3342 = vmul.f32 %v3319, %v3327
        %v3343 = vmul.f32 %v3320, %v3327
        %v3344 = vmul.f32 %v3321, %v3327
        %v3345 = vld [vmem:[%s2639] sm:$0x1]
        %v3347 = vlaneseq
        %v3348 = vshrl.u32 %v3347, 7
        %v3349 = vsub.s32 0, %v3348
        %v3350 = vrot.slane %v3345, %v3349
        %v3352 = vadd.f32 %v3329, %v3350
        %v3353 = vadd.f32 %v3330, %v3350
        %v3354 = vadd.f32 %v3331, %v3350
        %v3355 = vadd.f32 %v3332, %v3350
        %v3356 = vadd.f32 %v3333, %v3350
        %v3357 = vadd.f32 %v3334, %v3350
        %v3358 = vadd.f32 %v3335, %v3350
        %v3359 = vadd.f32 %v3336, %v3350
        %v3360 = vadd.f32 %v3337, %v3350
        %v3361 = vadd.f32 %v3338, %v3350
        %v3362 = vadd.f32 %v3339, %v3350
        %v3363 = vadd.f32 %v3340, %v3350
        %v3364 = vadd.f32 %v3341, %v3350
        %v3365 = vadd.f32 %v3342, %v3350
        %v3366 = vadd.f32 %v3343, %v3350
        %v3367 = vadd.f32 %v3344, %v3350
        %3368 = vst.msk [vmem:[%s1359 + $0x1] sm:$0xff] %vm285, %v3352
        %3369 = vst.msk [vmem:[%s1359 + $0x9] sm:$0xff] %vm285, %v3353
        %3370 = vst.msk [vmem:[%s1359 + $0x19] sm:$0xff] %vm285, %v3354
        %3371 = vst.msk [vmem:[%s1359 + $0x21] sm:$0xff] %vm285, %v3355
        %3372 = vst.msk [vmem:[%s1359 + $0x31] sm:$0xff] %vm285, %v3356
        %3373 = vst.msk [vmem:[%s1359 + $0x39] sm:$0xff] %vm285, %v3357
        %3374 = vst.msk [vmem:[%s1359 + $0x49] sm:$0xff] %vm285, %v3358
        %3375 = vst.msk [vmem:[%s1359 + $0x51] sm:$0xff] %vm285, %v3359
        %3376 = vst.msk [vmem:[%s1359 + $0x61] sm:$0xff] %vm285, %v3360
        %3377 = vst.msk [vmem:[%s1359 + $0x69] sm:$0xff] %vm285, %v3361
        %3378 = vst.msk [vmem:[%s1359 + $0x79] sm:$0xff] %vm285, %v3362
        %3379 = vst.msk [vmem:[%s1359 + $0x81] sm:$0xff] %vm285, %v3363
        %3380 = vst.msk [vmem:[%s1359 + $0x91] sm:$0xff] %vm285, %v3364
        %3381 = vst.msk [vmem:[%s1359 + $0x99] sm:$0xff] %vm285, %v3365
        %3382 = vst.msk [vmem:[%s1359 + $0xa9] sm:$0xff] %vm285, %v3366
        %3383 = vst.msk [vmem:[%s1359 + $0xb1] sm:$0xff] %vm285, %v3367
        %s3384 = scalar_lea.vmem %s1, 32
        %v3385 = vld [vmem:[%s3384] sm:$0xff]
        %v3386 = vld [vmem:[%s3384 + $0x8] sm:$0x1]
        %s3387 = scalar_lea.vmem [#allocation7], 64
        %v3388 = vld [vmem:[%s3387] sm:$0xff]
        %v3389 = vld [vmem:[%s3387 + $0x8] sm:$0xff]
        %v3390 = vld [vmem:[%s3387 + $0x10] sm:$0xff]
        %v3391 = vld [vmem:[%s3387 + $0x18] sm:$0xff]
        %s3392 = scalar_lea.vmem %s3, 2
        %v3393 = vld [vmem:[%s3392] sm:$0x1]
        %v3394 = vld [vmem:[#allocation2] sm:$0xff]
        %v3395 = vld [vmem:[#allocation2 + $0x8] sm:$0xff]
        %v3396 = vld [vmem:[#allocation2 + $0x18] sm:$0xff]
        %v3397 = vld [vmem:[#allocation2 + $0x20] sm:$0xff]
        %v3398 = vld [vmem:[#allocation2 + $0x30] sm:$0xff]
        %v3399 = vld [vmem:[#allocation2 + $0x38] sm:$0xff]
        %v3400 = vld [vmem:[#allocation2 + $0x48] sm:$0xff]
        %v3401 = vld [vmem:[#allocation2 + $0x50] sm:$0xff]
        %v3402 = vld [vmem:[#allocation2 + $0x60] sm:$0xff]
        %v3403 = vld [vmem:[#allocation2 + $0x68] sm:$0xff]
        %v3404 = vld [vmem:[#allocation2 + $0x78] sm:$0xff]
        %v3405 = vld [vmem:[#allocation2 + $0x80] sm:$0xff]
        %v3406 = vld [vmem:[#allocation2 + $0x90] sm:$0xff]
        %v3407 = vld [vmem:[#allocation2 + $0x98] sm:$0xff]
        %v3408 = vld [vmem:[#allocation2 + $0xa8] sm:$0xff]
        %v3409 = vld [vmem:[#allocation2 + $0xb0] sm:$0xff]
        %v3410 = vlaneseq
        %v3411 = vshrl.u32 %v3410, 7
        %v3412 = vsub.s32 0, %v3411
        %v3413 = vrot.slane %v3385, %v3412
        %v3414 = vmul.f32 %v3394, %v3413
        %v3415 = vmul.f32 %v3395, %v3413
        %v3416 = vmul.f32 %v3396, %v3413
        %v3417 = vmul.f32 %v3397, %v3413
        %v3418 = vmul.f32 %v3398, %v3413
        %v3419 = vmul.f32 %v3399, %v3413
        %v3420 = vmul.f32 %v3400, %v3413
        %v3421 = vmul.f32 %v3401, %v3413
        %v3422 = vmul.f32 %v3402, %v3413
        %v3423 = vmul.f32 %v3403, %v3413
        %v3424 = vmul.f32 %v3404, %v3413
        %v3425 = vmul.f32 %v3405, %v3413
        %v3426 = vmul.f32 %v3406, %v3413
        %v3427 = vmul.f32 %v3407, %v3413
        %v3428 = vmul.f32 %v3408, %v3413
        %v3429 = vmul.f32 %v3409, %v3413
        %v3430 = vadd.f32 %v3414, 0.0
        %v3431 = vadd.f32 %v3415, 0.0
        %v3432 = vadd.f32 %v3416, 0.0
        %v3433 = vadd.f32 %v3417, 0.0
        %v3434 = vadd.f32 %v3418, 0.0
        %v3435 = vadd.f32 %v3419, 0.0
        %v3436 = vadd.f32 %v3420, 0.0
        %v3437 = vadd.f32 %v3421, 0.0
        %v3438 = vadd.f32 %v3422, 0.0
        %v3439 = vadd.f32 %v3423, 0.0
        %v3440 = vadd.f32 %v3424, 0.0
        %v3441 = vadd.f32 %v3425, 0.0
        %v3442 = vadd.f32 %v3426, 0.0
        %v3443 = vadd.f32 %v3427, 0.0
        %v3444 = vadd.f32 %v3428, 0.0
        %v3445 = vadd.f32 %v3429, 0.0
        %v3446 = vld [vmem:[#allocation2 + $0x1] sm:$0xff]
        %v3447 = vld [vmem:[#allocation2 + $0x9] sm:$0xff]
        %v3448 = vld [vmem:[#allocation2 + $0x19] sm:$0xff]
        %v3449 = vld [vmem:[#allocation2 + $0x21] sm:$0xff]
        %v3450 = vld [vmem:[#allocation2 + $0x31] sm:$0xff]
        %v3451 = vld [vmem:[#allocation2 + $0x39] sm:$0xff]
        %v3452 = vld [vmem:[#allocation2 + $0x49] sm:$0xff]
        %v3453 = vld [vmem:[#allocation2 + $0x51] sm:$0xff]
        %v3454 = vld [vmem:[#allocation2 + $0x61] sm:$0xff]
        %v3455 = vld [vmem:[#allocation2 + $0x69] sm:$0xff]
        %v3456 = vld [vmem:[#allocation2 + $0x79] sm:$0xff]
        %v3457 = vld [vmem:[#allocation2 + $0x81] sm:$0xff]
        %v3458 = vld [vmem:[#allocation2 + $0x91] sm:$0xff]
        %v3459 = vld [vmem:[#allocation2 + $0x99] sm:$0xff]
        %v3460 = vld [vmem:[#allocation2 + $0xa9] sm:$0xff]
        %v3461 = vld [vmem:[#allocation2 + $0xb1] sm:$0xff]
        %v3462 = vlaneseq
        %v3463 = vshrl.u32 %v3462, 7
        %v3464 = vsub.s32 1, %v3463
        %v3465 = vrot.slane %v3385, %v3464
        %v3466 = vmul.f32 %v3446, %v3465
        %v3467 = vmul.f32 %v3447, %v3465
        %v3468 = vmul.f32 %v3448, %v3465
        %v3469 = vmul.f32 %v3449, %v3465
        %v3470 = vmul.f32 %v3450, %v3465
        %v3471 = vmul.f32 %v3451, %v3465
        %v3472 = vmul.f32 %v3452, %v3465
        %v3473 = vmul.f32 %v3453, %v3465
        %v3474 = vmul.f32 %v3454, %v3465
        %v3475 = vmul.f32 %v3455, %v3465
        %v3476 = vmul.f32 %v3456, %v3465
        %v3477 = vmul.f32 %v3457, %v3465
        %v3478 = vmul.f32 %v3458, %v3465
        %v3479 = vmul.f32 %v3459, %v3465
        %v3480 = vmul.f32 %v3460, %v3465
        %v3481 = vmul.f32 %v3461, %v3465
        %v3482 = vadd.f32 %v3430, %v3466
        %v3483 = vadd.f32 %v3431, %v3467
        %v3484 = vadd.f32 %v3432, %v3468
        %v3485 = vadd.f32 %v3433, %v3469
        %v3486 = vadd.f32 %v3434, %v3470
        %v3487 = vadd.f32 %v3435, %v3471
        %v3488 = vadd.f32 %v3436, %v3472
        %v3489 = vadd.f32 %v3437, %v3473
        %v3490 = vadd.f32 %v3438, %v3474
        %v3491 = vadd.f32 %v3439, %v3475
        %v3492 = vadd.f32 %v3440, %v3476
        %v3493 = vadd.f32 %v3441, %v3477
        %v3494 = vadd.f32 %v3442, %v3478
        %v3495 = vadd.f32 %v3443, %v3479
        %v3496 = vadd.f32 %v3444, %v3480
        %v3497 = vadd.f32 %v3445, %v3481
        %v3498 = vld [vmem:[#allocation2 + $0x2] sm:$0xff]
        %v3499 = vld [vmem:[#allocation2 + $0xa] sm:$0xff]
        %v3500 = vld [vmem:[#allocation2 + $0x1a] sm:$0xff]
        %v3501 = vld [vmem:[#allocation2 + $0x22] sm:$0xff]
        %v3502 = vld [vmem:[#allocation2 + $0x32] sm:$0xff]
        %v3503 = vld [vmem:[#allocation2 + $0x3a] sm:$0xff]
        %v3504 = vld [vmem:[#allocation2 + $0x4a] sm:$0xff]
        %v3505 = vld [vmem:[#allocation2 + $0x52] sm:$0xff]
        %v3506 = vld [vmem:[#allocation2 + $0x62] sm:$0xff]
        %v3507 = vld [vmem:[#allocation2 + $0x6a] sm:$0xff]
        %v3508 = vld [vmem:[#allocation2 + $0x7a] sm:$0xff]
        %v3509 = vld [vmem:[#allocation2 + $0x82] sm:$0xff]
        %v3510 = vld [vmem:[#allocation2 + $0x92] sm:$0xff]
        %v3511 = vld [vmem:[#allocation2 + $0x9a] sm:$0xff]
        %v3512 = vld [vmem:[#allocation2 + $0xaa] sm:$0xff]
        %v3513 = vld [vmem:[#allocation2 + $0xb2] sm:$0xff]
        %v3514 = vlaneseq
        %v3515 = vshrl.u32 %v3514, 7
        %v3516 = vsub.s32 2, %v3515
        %v3517 = vrot.slane %v3385, %v3516
        %v3518 = vmul.f32 %v3498, %v3517
        %v3519 = vmul.f32 %v3499, %v3517
        %v3520 = vmul.f32 %v3500, %v3517
        %v3521 = vmul.f32 %v3501, %v3517
        %v3522 = vmul.f32 %v3502, %v3517
        %v3523 = vmul.f32 %v3503, %v3517
        %v3524 = vmul.f32 %v3504, %v3517
        %v3525 = vmul.f32 %v3505, %v3517
        %v3526 = vmul.f32 %v3506, %v3517
        %v3527 = vmul.f32 %v3507, %v3517
        %v3528 = vmul.f32 %v3508, %v3517
        %v3529 = vmul.f32 %v3509, %v3517
        %v3530 = vmul.f32 %v3510, %v3517
        %v3531 = vmul.f32 %v3511, %v3517
        %v3532 = vmul.f32 %v3512, %v3517
        %v3533 = vmul.f32 %v3513, %v3517
        %v3534 = vadd.f32 %v3482, %v3518
        %v3535 = vadd.f32 %v3483, %v3519
        %v3536 = vadd.f32 %v3484, %v3520
        %v3537 = vadd.f32 %v3485, %v3521
        %v3538 = vadd.f32 %v3486, %v3522
        %v3539 = vadd.f32 %v3487, %v3523
        %v3540 = vadd.f32 %v3488, %v3524
        %v3541 = vadd.f32 %v3489, %v3525
        %v3542 = vadd.f32 %v3490, %v3526
        %v3543 = vadd.f32 %v3491, %v3527
        %v3544 = vadd.f32 %v3492, %v3528
        %v3545 = vadd.f32 %v3493, %v3529
        %v3546 = vadd.f32 %v3494, %v3530
        %v3547 = vadd.f32 %v3495, %v3531
        %v3548 = vadd.f32 %v3496, %v3532
        %v3549 = vadd.f32 %v3497, %v3533
        %v3550 = vld [vmem:[%s427] sm:$0xff]
        %v3551 = vld [vmem:[%s427 + $0x8] sm:$0xff]
        %v3552 = vld [vmem:[%s427 + $0x18] sm:$0xff]
        %v3553 = vld [vmem:[%s427 + $0x20] sm:$0xff]
        %v3554 = vld [vmem:[%s427 + $0x30] sm:$0xff]
        %v3555 = vld [vmem:[%s427 + $0x38] sm:$0xff]
        %v3556 = vld [vmem:[%s427 + $0x48] sm:$0xff]
        %v3557 = vld [vmem:[%s427 + $0x50] sm:$0xff]
        %v3558 = vld [vmem:[%s427 + $0x60] sm:$0xff]
        %v3559 = vld [vmem:[%s427 + $0x68] sm:$0xff]
        %v3560 = vld [vmem:[%s427 + $0x78] sm:$0xff]
        %v3561 = vld [vmem:[%s427 + $0x80] sm:$0xff]
        %v3562 = vld [vmem:[%s427 + $0x90] sm:$0xff]
        %v3563 = vld [vmem:[%s427 + $0x98] sm:$0xff]
        %v3564 = vld [vmem:[%s427 + $0xa8] sm:$0xff]
        %v3565 = vld [vmem:[%s427 + $0xb0] sm:$0xff]
        %v3566 = vlaneseq
        %v3567 = vshrl.u32 %v3566, 7
        %v3568 = vsub.s32 3, %v3567
        %v3569 = vrot.slane %v3385, %v3568
        %v3570 = vmul.f32 %v3550, %v3569
        %v3571 = vmul.f32 %v3551, %v3569
        %v3572 = vmul.f32 %v3552, %v3569
        %v3573 = vmul.f32 %v3553, %v3569
        %v3574 = vmul.f32 %v3554, %v3569
        %v3575 = vmul.f32 %v3555, %v3569
        %v3576 = vmul.f32 %v3556, %v3569
        %v3577 = vmul.f32 %v3557, %v3569
        %v3578 = vmul.f32 %v3558, %v3569
        %v3579 = vmul.f32 %v3559, %v3569
        %v3580 = vmul.f32 %v3560, %v3569
        %v3581 = vmul.f32 %v3561, %v3569
        %v3582 = vmul.f32 %v3562, %v3569
        %v3583 = vmul.f32 %v3563, %v3569
        %v3584 = vmul.f32 %v3564, %v3569
        %v3585 = vmul.f32 %v3565, %v3569
        %v3586 = vadd.f32 %v3534, %v3570
        %v3587 = vadd.f32 %v3535, %v3571
        %v3588 = vadd.f32 %v3536, %v3572
        %v3589 = vadd.f32 %v3537, %v3573
        %v3590 = vadd.f32 %v3538, %v3574
        %v3591 = vadd.f32 %v3539, %v3575
        %v3592 = vadd.f32 %v3540, %v3576
        %v3593 = vadd.f32 %v3541, %v3577
        %v3594 = vadd.f32 %v3542, %v3578
        %v3595 = vadd.f32 %v3543, %v3579
        %v3596 = vadd.f32 %v3544, %v3580
        %v3597 = vadd.f32 %v3545, %v3581
        %v3598 = vadd.f32 %v3546, %v3582
        %v3599 = vadd.f32 %v3547, %v3583
        %v3600 = vadd.f32 %v3548, %v3584
        %v3601 = vadd.f32 %v3549, %v3585
        %v3602 = vld [vmem:[%s427 + $0x1] sm:$0xff]
        %v3603 = vld [vmem:[%s427 + $0x9] sm:$0xff]
        %v3604 = vld [vmem:[%s427 + $0x19] sm:$0xff]
        %v3605 = vld [vmem:[%s427 + $0x21] sm:$0xff]
        %v3606 = vld [vmem:[%s427 + $0x31] sm:$0xff]
        %v3607 = vld [vmem:[%s427 + $0x39] sm:$0xff]
        %v3608 = vld [vmem:[%s427 + $0x49] sm:$0xff]
        %v3609 = vld [vmem:[%s427 + $0x51] sm:$0xff]
        %v3610 = vld [vmem:[%s427 + $0x61] sm:$0xff]
        %v3611 = vld [vmem:[%s427 + $0x69] sm:$0xff]
        %v3612 = vld [vmem:[%s427 + $0x79] sm:$0xff]
        %v3613 = vld [vmem:[%s427 + $0x81] sm:$0xff]
        %v3614 = vld [vmem:[%s427 + $0x91] sm:$0xff]
        %v3615 = vld [vmem:[%s427 + $0x99] sm:$0xff]
        %v3616 = vld [vmem:[%s427 + $0xa9] sm:$0xff]
        %v3617 = vld [vmem:[%s427 + $0xb1] sm:$0xff]
        %v3618 = vlaneseq
        %v3619 = vshrl.u32 %v3618, 7
        %v3620 = vsub.s32 4, %v3619
        %v3621 = vrot.slane %v3385, %v3620
        %v3622 = vmul.f32 %v3602, %v3621
        %v3623 = vmul.f32 %v3603, %v3621
        %v3624 = vmul.f32 %v3604, %v3621
        %v3625 = vmul.f32 %v3605, %v3621
        %v3626 = vmul.f32 %v3606, %v3621
        %v3627 = vmul.f32 %v3607, %v3621
        %v3628 = vmul.f32 %v3608, %v3621
        %v3629 = vmul.f32 %v3609, %v3621
        %v3630 = vmul.f32 %v3610, %v3621
        %v3631 = vmul.f32 %v3611, %v3621
        %v3632 = vmul.f32 %v3612, %v3621
        %v3633 = vmul.f32 %v3613, %v3621
        %v3634 = vmul.f32 %v3614, %v3621
        %v3635 = vmul.f32 %v3615, %v3621
        %v3636 = vmul.f32 %v3616, %v3621
        %v3637 = vmul.f32 %v3617, %v3621
        %v3638 = vadd.f32 %v3586, %v3622
        %v3639 = vadd.f32 %v3587, %v3623
        %v3640 = vadd.f32 %v3588, %v3624
        %v3641 = vadd.f32 %v3589, %v3625
        %v3642 = vadd.f32 %v3590, %v3626
        %v3643 = vadd.f32 %v3591, %v3627
        %v3644 = vadd.f32 %v3592, %v3628
        %v3645 = vadd.f32 %v3593, %v3629
        %v3646 = vadd.f32 %v3594, %v3630
        %v3647 = vadd.f32 %v3595, %v3631
        %v3648 = vadd.f32 %v3596, %v3632
        %v3649 = vadd.f32 %v3597, %v3633
        %v3650 = vadd.f32 %v3598, %v3634
        %v3651 = vadd.f32 %v3599, %v3635
        %v3652 = vadd.f32 %v3600, %v3636
        %v3653 = vadd.f32 %v3601, %v3637
        %v3654 = vld [vmem:[%s427 + $0x2] sm:$0xff]
        %v3655 = vld [vmem:[%s427 + $0xa] sm:$0xff]
        %v3656 = vld [vmem:[%s427 + $0x1a] sm:$0xff]
        %v3657 = vld [vmem:[%s427 + $0x22] sm:$0xff]
        %v3658 = vld [vmem:[%s427 + $0x32] sm:$0xff]
        %v3659 = vld [vmem:[%s427 + $0x3a] sm:$0xff]
        %v3660 = vld [vmem:[%s427 + $0x4a] sm:$0xff]
        %v3661 = vld [vmem:[%s427 + $0x52] sm:$0xff]
        %v3662 = vld [vmem:[%s427 + $0x62] sm:$0xff]
        %v3663 = vld [vmem:[%s427 + $0x6a] sm:$0xff]
        %v3664 = vld [vmem:[%s427 + $0x7a] sm:$0xff]
        %v3665 = vld [vmem:[%s427 + $0x82] sm:$0xff]
        %v3666 = vld [vmem:[%s427 + $0x92] sm:$0xff]
        %v3667 = vld [vmem:[%s427 + $0x9a] sm:$0xff]
        %v3668 = vld [vmem:[%s427 + $0xaa] sm:$0xff]
        %v3669 = vld [vmem:[%s427 + $0xb2] sm:$0xff]
        %v3670 = vlaneseq
        %v3671 = vshrl.u32 %v3670, 7
        %v3672 = vsub.s32 5, %v3671
        %v3673 = vrot.slane %v3385, %v3672
        %v3674 = vmul.f32 %v3654, %v3673
        %v3675 = vmul.f32 %v3655, %v3673
        %v3676 = vmul.f32 %v3656, %v3673
        %v3677 = vmul.f32 %v3657, %v3673
        %v3678 = vmul.f32 %v3658, %v3673
        %v3679 = vmul.f32 %v3659, %v3673
        %v3680 = vmul.f32 %v3660, %v3673
        %v3681 = vmul.f32 %v3661, %v3673
        %v3682 = vmul.f32 %v3662, %v3673
        %v3683 = vmul.f32 %v3663, %v3673
        %v3684 = vmul.f32 %v3664, %v3673
        %v3685 = vmul.f32 %v3665, %v3673
        %v3686 = vmul.f32 %v3666, %v3673
        %v3687 = vmul.f32 %v3667, %v3673
        %v3688 = vmul.f32 %v3668, %v3673
        %v3689 = vmul.f32 %v3669, %v3673
        %v3690 = vadd.f32 %v3638, %v3674
        %v3691 = vadd.f32 %v3639, %v3675
        %v3692 = vadd.f32 %v3640, %v3676
        %v3693 = vadd.f32 %v3641, %v3677
        %v3694 = vadd.f32 %v3642, %v3678
        %v3695 = vadd.f32 %v3643, %v3679
        %v3696 = vadd.f32 %v3644, %v3680
        %v3697 = vadd.f32 %v3645, %v3681
        %v3698 = vadd.f32 %v3646, %v3682
        %v3699 = vadd.f32 %v3647, %v3683
        %v3700 = vadd.f32 %v3648, %v3684
        %v3701 = vadd.f32 %v3649, %v3685
        %v3702 = vadd.f32 %v3650, %v3686
        %v3703 = vadd.f32 %v3651, %v3687
        %v3704 = vadd.f32 %v3652, %v3688
        %v3705 = vadd.f32 %v3653, %v3689
        %v3706 = vld [vmem:[%s779] sm:$0xff]
        %v3707 = vld [vmem:[%s779 + $0x8] sm:$0xff]
        %v3708 = vld [vmem:[%s779 + $0x18] sm:$0xff]
        %v3709 = vld [vmem:[%s779 + $0x20] sm:$0xff]
        %v3710 = vld [vmem:[%s779 + $0x30] sm:$0xff]
        %v3711 = vld [vmem:[%s779 + $0x38] sm:$0xff]
        %v3712 = vld [vmem:[%s779 + $0x48] sm:$0xff]
        %v3713 = vld [vmem:[%s779 + $0x50] sm:$0xff]
        %v3714 = vld [vmem:[%s779 + $0x60] sm:$0xff]
        %v3715 = vld [vmem:[%s779 + $0x68] sm:$0xff]
        %v3716 = vld [vmem:[%s779 + $0x78] sm:$0xff]
        %v3717 = vld [vmem:[%s779 + $0x80] sm:$0xff]
        %v3718 = vld [vmem:[%s779 + $0x90] sm:$0xff]
        %v3719 = vld [vmem:[%s779 + $0x98] sm:$0xff]
        %v3720 = vld [vmem:[%s779 + $0xa8] sm:$0xff]
        %v3721 = vld [vmem:[%s779 + $0xb0] sm:$0xff]
        %v3722 = vlaneseq
        %v3723 = vshrl.u32 %v3722, 7
        %v3724 = vsub.s32 6, %v3723
        %v3725 = vrot.slane %v3385, %v3724
        %v3726 = vmul.f32 %v3706, %v3725
        %v3727 = vmul.f32 %v3707, %v3725
        %v3728 = vmul.f32 %v3708, %v3725
        %v3729 = vmul.f32 %v3709, %v3725
        %v3730 = vmul.f32 %v3710, %v3725
        %v3731 = vmul.f32 %v3711, %v3725
        %v3732 = vmul.f32 %v3712, %v3725
        %v3733 = vmul.f32 %v3713, %v3725
        %v3734 = vmul.f32 %v3714, %v3725
        %v3735 = vmul.f32 %v3715, %v3725
        %v3736 = vmul.f32 %v3716, %v3725
        %v3737 = vmul.f32 %v3717, %v3725
        %v3738 = vmul.f32 %v3718, %v3725
        %v3739 = vmul.f32 %v3719, %v3725
        %v3740 = vmul.f32 %v3720, %v3725
        %v3741 = vmul.f32 %v3721, %v3725
        %v3742 = vadd.f32 %v3690, %v3726
        %v3743 = vadd.f32 %v3691, %v3727
        %v3744 = vadd.f32 %v3692, %v3728
        %v3745 = vadd.f32 %v3693, %v3729
        %v3746 = vadd.f32 %v3694, %v3730
        %v3747 = vadd.f32 %v3695, %v3731
        %v3748 = vadd.f32 %v3696, %v3732
        %v3749 = vadd.f32 %v3697, %v3733
        %v3750 = vadd.f32 %v3698, %v3734
        %v3751 = vadd.f32 %v3699, %v3735
        %v3752 = vadd.f32 %v3700, %v3736
        %v3753 = vadd.f32 %v3701, %v3737
        %v3754 = vadd.f32 %v3702, %v3738
        %v3755 = vadd.f32 %v3703, %v3739
        %v3756 = vadd.f32 %v3704, %v3740
        %v3757 = vadd.f32 %v3705, %v3741
        %v3758 = vld [vmem:[%s779 + $0x1] sm:$0xff]
        %v3759 = vld [vmem:[%s779 + $0x9] sm:$0xff]
        %v3760 = vld [vmem:[%s779 + $0x19] sm:$0xff]
        %v3761 = vld [vmem:[%s779 + $0x21] sm:$0xff]
        %v3762 = vld [vmem:[%s779 + $0x31] sm:$0xff]
        %v3763 = vld [vmem:[%s779 + $0x39] sm:$0xff]
        %v3764 = vld [vmem:[%s779 + $0x49] sm:$0xff]
        %v3765 = vld [vmem:[%s779 + $0x51] sm:$0xff]
        %v3766 = vld [vmem:[%s779 + $0x61] sm:$0xff]
        %v3767 = vld [vmem:[%s779 + $0x69] sm:$0xff]
        %v3768 = vld [vmem:[%s779 + $0x79] sm:$0xff]
        %v3769 = vld [vmem:[%s779 + $0x81] sm:$0xff]
        %v3770 = vld [vmem:[%s779 + $0x91] sm:$0xff]
        %v3771 = vld [vmem:[%s779 + $0x99] sm:$0xff]
        %v3772 = vld [vmem:[%s779 + $0xa9] sm:$0xff]
        %v3773 = vld [vmem:[%s779 + $0xb1] sm:$0xff]
        %v3774 = vlaneseq
        %v3775 = vshrl.u32 %v3774, 7
        %v3776 = vsub.s32 7, %v3775
        %v3777 = vrot.slane %v3385, %v3776
        %v3778 = vmul.f32 %v3758, %v3777
        %v3779 = vmul.f32 %v3759, %v3777
        %v3780 = vmul.f32 %v3760, %v3777
        %v3781 = vmul.f32 %v3761, %v3777
        %v3782 = vmul.f32 %v3762, %v3777
        %v3783 = vmul.f32 %v3763, %v3777
        %v3784 = vmul.f32 %v3764, %v3777
        %v3785 = vmul.f32 %v3765, %v3777
        %v3786 = vmul.f32 %v3766, %v3777
        %v3787 = vmul.f32 %v3767, %v3777
        %v3788 = vmul.f32 %v3768, %v3777
        %v3789 = vmul.f32 %v3769, %v3777
        %v3790 = vmul.f32 %v3770, %v3777
        %v3791 = vmul.f32 %v3771, %v3777
        %v3792 = vmul.f32 %v3772, %v3777
        %v3793 = vmul.f32 %v3773, %v3777
        %v3794 = vadd.f32 %v3742, %v3778
        %v3795 = vadd.f32 %v3743, %v3779
        %v3796 = vadd.f32 %v3744, %v3780
        %v3797 = vadd.f32 %v3745, %v3781
        %v3798 = vadd.f32 %v3746, %v3782
        %v3799 = vadd.f32 %v3747, %v3783
        %v3800 = vadd.f32 %v3748, %v3784
        %v3801 = vadd.f32 %v3749, %v3785
        %v3802 = vadd.f32 %v3750, %v3786
        %v3803 = vadd.f32 %v3751, %v3787
        %v3804 = vadd.f32 %v3752, %v3788
        %v3805 = vadd.f32 %v3753, %v3789
        %v3806 = vadd.f32 %v3754, %v3790
        %v3807 = vadd.f32 %v3755, %v3791
        %v3808 = vadd.f32 %v3756, %v3792
        %v3809 = vadd.f32 %v3757, %v3793
        %v3810 = vld [vmem:[%s779 + $0x2] sm:$0xff]
        %v3811 = vld [vmem:[%s779 + $0xa] sm:$0xff]
        %v3812 = vld [vmem:[%s779 + $0x1a] sm:$0xff]
        %v3813 = vld [vmem:[%s779 + $0x22] sm:$0xff]
        %v3814 = vld [vmem:[%s779 + $0x32] sm:$0xff]
        %v3815 = vld [vmem:[%s779 + $0x3a] sm:$0xff]
        %v3816 = vld [vmem:[%s779 + $0x4a] sm:$0xff]
        %v3817 = vld [vmem:[%s779 + $0x52] sm:$0xff]
        %v3818 = vld [vmem:[%s779 + $0x62] sm:$0xff]
        %v3819 = vld [vmem:[%s779 + $0x6a] sm:$0xff]
        %v3820 = vld [vmem:[%s779 + $0x7a] sm:$0xff]
        %v3821 = vld [vmem:[%s779 + $0x82] sm:$0xff]
        %v3822 = vld [vmem:[%s779 + $0x92] sm:$0xff]
        %v3823 = vld [vmem:[%s779 + $0x9a] sm:$0xff]
        %v3824 = vld [vmem:[%s779 + $0xaa] sm:$0xff]
        %v3825 = vld [vmem:[%s779 + $0xb2] sm:$0xff]
        %v3826 = vlaneseq
        %v3827 = vshrl.u32 %v3826, 7
        %v3828 = vsub.s32 0, %v3827
        %v3829 = vrot.slane %v3386, %v3828
        %v3830 = vmul.f32 %v3810, %v3829
        %v3831 = vmul.f32 %v3811, %v3829
        %v3832 = vmul.f32 %v3812, %v3829
        %v3833 = vmul.f32 %v3813, %v3829
        %v3834 = vmul.f32 %v3814, %v3829
        %v3835 = vmul.f32 %v3815, %v3829
        %v3836 = vmul.f32 %v3816, %v3829
        %v3837 = vmul.f32 %v3817, %v3829
        %v3838 = vmul.f32 %v3818, %v3829
        %v3839 = vmul.f32 %v3819, %v3829
        %v3840 = vmul.f32 %v3820, %v3829
        %v3841 = vmul.f32 %v3821, %v3829
        %v3842 = vmul.f32 %v3822, %v3829
        %v3843 = vmul.f32 %v3823, %v3829
        %v3844 = vmul.f32 %v3824, %v3829
        %v3845 = vmul.f32 %v3825, %v3829
        %v3846 = vadd.f32 %v3794, %v3830
        %v3847 = vadd.f32 %v3795, %v3831
        %v3848 = vadd.f32 %v3796, %v3832
        %v3849 = vadd.f32 %v3797, %v3833
        %v3850 = vadd.f32 %v3798, %v3834
        %v3851 = vadd.f32 %v3799, %v3835
        %v3852 = vadd.f32 %v3800, %v3836
        %v3853 = vadd.f32 %v3801, %v3837
        %v3854 = vadd.f32 %v3802, %v3838
        %v3855 = vadd.f32 %v3803, %v3839
        %v3856 = vadd.f32 %v3804, %v3840
        %v3857 = vadd.f32 %v3805, %v3841
        %v3858 = vadd.f32 %v3806, %v3842
        %v3859 = vadd.f32 %v3807, %v3843
        %v3860 = vadd.f32 %v3808, %v3844
        %v3861 = vadd.f32 %v3809, %v3845
        %v3863 = vlaneseq
        %v3864 = vshrl.u32 %v3863, 7
        %v3865 = vsub.s32 0, %v3864
        %v3866 = vrot.slane %v3393, %v3865
        %v3869 = vsel %vm285, %v3846, 0
        %v3872 = vsel %vm285, %v3847, 0
        %v3875 = vsel %vm285, %v3848, 0
        %v3878 = vsel %vm285, %v3849, 0
        %v3881 = vsel %vm285, %v3850, 0
        %v3884 = vsel %vm285, %v3851, 0
        %v3887 = vsel %vm285, %v3852, 0
        %v3890 = vsel %vm285, %v3853, 0
        %v3893 = vsel %vm285, %v3854, 0
        %v3896 = vsel %vm285, %v3855, 0
        %v3899 = vsel %vm285, %v3856, 0
        %v3902 = vsel %vm285, %v3857, 0
        %v3905 = vsel %vm285, %v3858, 0
        %v3908 = vsel %vm285, %v3859, 0
        %v3911 = vsel %vm285, %v3860, 0
        %v3914 = vsel %vm285, %v3861, 0
        %3916 = vmatprep.subr.mxu0 0.0
        %3917 = vmatpush1.msra.mxu0 %v3388
        %3918 = vmatprep.subr.mxu0 0.0
        %3919 = vmatpush1.msra.mxu0 %v3389
        %3920 = vmatprep.subr.mxu0 0.0
        %3921 = vmatpush1.msra.mxu0 %v3390
        %3922 = vmatprep.subr.mxu0 0.0
        %3923 = vmatpush1.msra.mxu0 %v3391
        %3924 = vmatprep.subr.mxu0 0.0
        %3925 = vmatpush1.msra.mxu0 0.0
        %3926 = vmatprep.subr.mxu0 0.0
        %3927 = vmatpush1.msra.mxu0 0.0
        %3928 = vmatprep.subr.mxu0 0.0
        %3929 = vmatpush1.msra.mxu0 0.0
        %3930 = vmatprep.subr.mxu0 0.0
        %3931 = vmatpush1.msra.mxu0 0.0
        %3932 = vmatprep.subr.mxu0 0.0
        %3933 = vmatpush1.msra.mxu0 0.0
        %3934 = vmatprep.subr.mxu0 0.0
        %3935 = vmatpush1.msra.mxu0 0.0
        %3936 = vmatprep.subr.mxu0 0.0
        %3937 = vmatpush1.msra.mxu0 0.0
        %3938 = vmatprep.subr.mxu0 0.0
        %3939 = vmatpush1.msra.mxu0 0.0
        %3940 = vmatprep.subr.mxu0 0.0
        %3941 = vmatpush1.msra.mxu0 0.0
        %3942 = vmatprep.subr.mxu0 0.0
        %3943 = vmatpush1.msra.mxu0 0.0
        %3944 = vmatprep.subr.mxu0 0.0
        %3945 = vmatpush1.msra.mxu0 0.0
        %3946 = vmatprep.subr.mxu0 0.0
        %3947 = vmatpush1.msra.mxu0 0.0
        %3948 = vmatprep.subr.mxu0 0.0
        %3949 = vmatpush1.msra.mxu0 0.0
        %3950 = vmatprep.subr.mxu0 0.0
        %3951 = vmatpush1.msra.mxu0 0.0
        %3952 = vmatprep.subr.mxu0 0.0
        %3953 = vmatpush1.msra.mxu0 0.0
        %3954 = vmatprep.subr.mxu0 0.0
        %3955 = vmatpush1.msra.mxu0 0.0
        %3956 = vmatprep.subr.mxu0 0.0
        %3957 = vmatpush1.msra.mxu0 0.0
        %3958 = vmatprep.subr.mxu0 0.0
        %3959 = vmatpush1.msra.mxu0 0.0
        %3960 = vmatprep.subr.mxu0 0.0
        %3961 = vmatpush1.msra.mxu0 0.0
        %3962 = vmatprep.subr.mxu0 0.0
        %3963 = vmatpush1.msra.mxu0 0.0
        %3964 = vmatprep.subr.mxu0 0.0
        %3965 = vmatpush1.msra.mxu0 0.0
        %3966 = vmatprep.subr.mxu0 0.0
        %3967 = vmatpush1.msra.mxu0 0.0
        %3968 = vmatprep.subr.mxu0 0.0
        %3969 = vmatpush1.msra.mxu0 0.0
        %3970 = vmatprep.subr.mxu0 0.0
        %3971 = vmatpush1.msra.mxu0 0.0
        %3972 = vmatprep.subr.mxu0 0.0
        %3973 = vmatpush1.msra.mxu0 0.0
        %3974 = vmatprep.subr.mxu0 0.0
        %3975 = vmatpush1.msra.mxu0 0.0
        %3976 = vmatprep.subr.mxu0 0.0
        %3977 = vmatpush1.msra.mxu0 0.0
        %3978 = vmatprep.subr.mxu0 0.0
        %3979 = vmatpush1.msra.mxu0 0.0
        %3980 = vmatprep.mubr.f32.mxu0 0.0
        %3981 = vmatmul.mubr.f32.gmra.mrb[0].mxu0 %v3869
        %v3982 = vpop.f32.mrb[0].mxu0
        %v3983 = vadd.f32 %v3866, %v3982
        %v3984 = vpop.f32.mrb[0].mxu0
        %3985 = vmatprep.mubr.f32.mxu0 0.0
        %3986 = vmatmul.mubr.f32.gmra.mrb[0].mxu0 %v3872
        %v3987 = vpop.f32.mrb[0].mxu0
        %v3988 = vadd.f32 %v3866, %v3987
        %v3989 = vpop.f32.mrb[0].mxu0
        %3990 = vmatprep.mubr.f32.mxu0 0.0
        %3991 = vmatmul.mubr.f32.gmra.mrb[0].mxu0 %v3875
        %v3992 = vpop.f32.mrb[0].mxu0
        %v3993 = vadd.f32 %v3866, %v3992
        %v3994 = vpop.f32.mrb[0].mxu0
        %3995 = vmatprep.mubr.f32.mxu0 0.0
        %3996 = vmatmul.mubr.f32.gmra.mrb[0].mxu0 %v3878
        %v3997 = vpop.f32.mrb[0].mxu0
        %v3998 = vadd.f32 %v3866, %v3997
        %v3999 = vpop.f32.mrb[0].mxu0
        %4000 = vmatprep.mubr.f32.mxu0 0.0
        %4001 = vmatmul.mubr.f32.gmra.mrb[0].mxu0 %v3881
        %v4002 = vpop.f32.mrb[0].mxu0
        %v4003 = vadd.f32 %v3866, %v4002
        %v4004 = vpop.f32.mrb[0].mxu0
        %4005 = vmatprep.mubr.f32.mxu0 0.0
        %4006 = vmatmul.mubr.f32.gmra.mrb[0].mxu0 %v3884
        %v4007 = vpop.f32.mrb[0].mxu0
        %v4008 = vadd.f32 %v3866, %v4007
        %v4009 = vpop.f32.mrb[0].mxu0
        %4010 = vmatprep.mubr.f32.mxu0 0.0
        %4011 = vmatmul.mubr.f32.gmra.mrb[0].mxu0 %v3887
        %v4012 = vpop.f32.mrb[0].mxu0
        %v4013 = vadd.f32 %v3866, %v4012
        %v4014 = vpop.f32.mrb[0].mxu0
        %4015 = vmatprep.mubr.f32.mxu0 0.0
        %4016 = vmatmul.mubr.f32.gmra.mrb[0].mxu0 %v3890
        %v4017 = vpop.f32.mrb[0].mxu0
        %v4018 = vadd.f32 %v3866, %v4017
        %v4019 = vpop.f32.mrb[0].mxu0
        %4020 = vmatprep.mubr.f32.mxu0 0.0
        %4021 = vmatmul.mubr.f32.gmra.mrb[0].mxu0 %v3893
        %v4022 = vpop.f32.mrb[0].mxu0
        %v4023 = vadd.f32 %v3866, %v4022
        %v4024 = vpop.f32.mrb[0].mxu0
        %4025 = vmatprep.mubr.f32.mxu0 0.0
        %4026 = vmatmul.mubr.f32.gmra.mrb[0].mxu0 %v3896
        %v4027 = vpop.f32.mrb[0].mxu0
        %v4028 = vadd.f32 %v3866, %v4027
        %v4029 = vpop.f32.mrb[0].mxu0
        %4030 = vmatprep.mubr.f32.mxu0 0.0
        %4031 = vmatmul.mubr.f32.gmra.mrb[0].mxu0 %v3899
        %v4032 = vpop.f32.mrb[0].mxu0
        %v4033 = vadd.f32 %v3866, %v4032
        %v4034 = vpop.f32.mrb[0].mxu0
        %4035 = vmatprep.mubr.f32.mxu0 0.0
        %4036 = vmatmul.mubr.f32.gmra.mrb[0].mxu0 %v3902
        %v4037 = vpop.f32.mrb[0].mxu0
        %v4038 = vadd.f32 %v3866, %v4037
        %v4039 = vpop.f32.mrb[0].mxu0
        %4040 = vmatprep.mubr.f32.mxu0 0.0
        %4041 = vmatmul.mubr.f32.gmra.mrb[0].mxu0 %v3905
        %v4042 = vpop.f32.mrb[0].mxu0
        %v4043 = vadd.f32 %v3866, %v4042
        %v4044 = vpop.f32.mrb[0].mxu0
        %4045 = vmatprep.mubr.f32.mxu0 0.0
        %4046 = vmatmul.mubr.f32.gmra.mrb[0].mxu0 %v3908
        %v4047 = vpop.f32.mrb[0].mxu0
        %v4048 = vadd.f32 %v3866, %v4047
        %v4049 = vpop.f32.mrb[0].mxu0
        %4050 = vmatprep.mubr.f32.mxu0 0.0
        %4051 = vmatmul.mubr.f32.gmra.mrb[0].mxu0 %v3911
        %v4052 = vpop.f32.mrb[0].mxu0
        %v4053 = vadd.f32 %v3866, %v4052
        %v4054 = vpop.f32.mrb[0].mxu0
        %4055 = vmatprep.mubr.f32.mxu0 0.0
        %4056 = vmatmul.mubr.f32.gmra.mrb[0].mxu0 %v3914
        %v4057 = vpop.f32.mrb[0].mxu0
        %v4058 = vadd.f32 %v3866, %v4057
        %v4059 = vpop.f32.mrb[0].mxu0
        %4060 = vdwg.mxu0
        %v4061 = vmax.f32 %v3983, 0.0
        %v4062 = vmax.f32 %v3988, 0.0
        %v4063 = vmax.f32 %v3993, 0.0
        %v4064 = vmax.f32 %v3998, 0.0
        %v4065 = vmax.f32 %v4003, 0.0
        %v4066 = vmax.f32 %v4008, 0.0
        %v4067 = vmax.f32 %v4013, 0.0
        %v4068 = vmax.f32 %v4018, 0.0
        %v4069 = vmax.f32 %v4023, 0.0
        %v4070 = vmax.f32 %v4028, 0.0
        %v4071 = vmax.f32 %v4033, 0.0
        %v4072 = vmax.f32 %v4038, 0.0
        %v4073 = vmax.f32 %v4043, 0.0
        %v4074 = vmax.f32 %v4048, 0.0
        %v4075 = vmax.f32 %v4053, 0.0
        %v4076 = vmax.f32 %v4058, 0.0
        %s4077 = scalar_lea.vmem %s4, 2
        %v4078 = vld [vmem:[%s4077] sm:$0x1]
        %v4080 = vlaneseq
        %v4081 = vshrl.u32 %v4080, 7
        %v4082 = vsub.s32 0, %v4081
        %v4083 = vrot.slane %v4078, %v4082
        %v4085 = vmul.f32 %v4061, %v4083
        %v4086 = vmul.f32 %v4062, %v4083
        %v4087 = vmul.f32 %v4063, %v4083
        %v4088 = vmul.f32 %v4064, %v4083
        %v4089 = vmul.f32 %v4065, %v4083
        %v4090 = vmul.f32 %v4066, %v4083
        %v4091 = vmul.f32 %v4067, %v4083
        %v4092 = vmul.f32 %v4068, %v4083
        %v4093 = vmul.f32 %v4069, %v4083
        %v4094 = vmul.f32 %v4070, %v4083
        %v4095 = vmul.f32 %v4071, %v4083
        %v4096 = vmul.f32 %v4072, %v4083
        %v4097 = vmul.f32 %v4073, %v4083
        %v4098 = vmul.f32 %v4074, %v4083
        %v4099 = vmul.f32 %v4075, %v4083
        %v4100 = vmul.f32 %v4076, %v4083
        %s4101 = scalar_lea.vmem %s5, 2
        %v4102 = vld [vmem:[%s4101] sm:$0x1]
        %v4104 = vlaneseq
        %v4105 = vshrl.u32 %v4104, 7
        %v4106 = vsub.s32 0, %v4105
        %v4107 = vrot.slane %v4102, %v4106
        %v4109 = vadd.f32 %v4085, %v4107
        %v4110 = vadd.f32 %v4086, %v4107
        %v4111 = vadd.f32 %v4087, %v4107
        %v4112 = vadd.f32 %v4088, %v4107
        %v4113 = vadd.f32 %v4089, %v4107
        %v4114 = vadd.f32 %v4090, %v4107
        %v4115 = vadd.f32 %v4091, %v4107
        %v4116 = vadd.f32 %v4092, %v4107
        %v4117 = vadd.f32 %v4093, %v4107
        %v4118 = vadd.f32 %v4094, %v4107
        %v4119 = vadd.f32 %v4095, %v4107
        %v4120 = vadd.f32 %v4096, %v4107
        %v4121 = vadd.f32 %v4097, %v4107
        %v4122 = vadd.f32 %v4098, %v4107
        %v4123 = vadd.f32 %v4099, %v4107
        %v4124 = vadd.f32 %v4100, %v4107
        %4125 = vst.msk [vmem:[%s1197 + $0x1] sm:$0xff] %vm285, %v4109
        %4126 = vst.msk [vmem:[%s1197 + $0x9] sm:$0xff] %vm285, %v4110
        %4127 = vst.msk [vmem:[%s1197 + $0x19] sm:$0xff] %vm285, %v4111
        %4128 = vst.msk [vmem:[%s1197 + $0x21] sm:$0xff] %vm285, %v4112
        %4129 = vst.msk [vmem:[%s1197 + $0x31] sm:$0xff] %vm285, %v4113
        %4130 = vst.msk [vmem:[%s1197 + $0x39] sm:$0xff] %vm285, %v4114
        %4131 = vst.msk [vmem:[%s1197 + $0x49] sm:$0xff] %vm285, %v4115
        %4132 = vst.msk [vmem:[%s1197 + $0x51] sm:$0xff] %vm285, %v4116
        %4133 = vst.msk [vmem:[%s1197 + $0x61] sm:$0xff] %vm285, %v4117
        %4134 = vst.msk [vmem:[%s1197 + $0x69] sm:$0xff] %vm285, %v4118
        %4135 = vst.msk [vmem:[%s1197 + $0x79] sm:$0xff] %vm285, %v4119
        %4136 = vst.msk [vmem:[%s1197 + $0x81] sm:$0xff] %vm285, %v4120
        %4137 = vst.msk [vmem:[%s1197 + $0x91] sm:$0xff] %vm285, %v4121
        %4138 = vst.msk [vmem:[%s1197 + $0x99] sm:$0xff] %vm285, %v4122
        %4139 = vst.msk [vmem:[%s1197 + $0xa9] sm:$0xff] %vm285, %v4123
        %4140 = vst.msk [vmem:[%s1197 + $0xb1] sm:$0xff] %vm285, %v4124
        %v4141 = vld [vmem:[%s1214] sm:$0xff]
        %v4142 = vld [vmem:[%s1214 + $0x8] sm:$0xff]
        %v4143 = vld [vmem:[%s1214 + $0x18] sm:$0xff]
        %v4144 = vld [vmem:[%s1214 + $0x20] sm:$0xff]
        %v4145 = vld [vmem:[%s1214 + $0x30] sm:$0xff]
        %v4146 = vld [vmem:[%s1214 + $0x38] sm:$0xff]
        %v4147 = vld [vmem:[%s1214 + $0x48] sm:$0xff]
        %v4148 = vld [vmem:[%s1214 + $0x50] sm:$0xff]
        %v4149 = vld [vmem:[%s1214 + $0x60] sm:$0xff]
        %v4150 = vld [vmem:[%s1214 + $0x68] sm:$0xff]
        %v4151 = vld [vmem:[%s1214 + $0x78] sm:$0xff]
        %v4152 = vld [vmem:[%s1214 + $0x80] sm:$0xff]
        %v4153 = vld [vmem:[%s1214 + $0x90] sm:$0xff]
        %v4154 = vld [vmem:[%s1214 + $0x98] sm:$0xff]
        %v4155 = vld [vmem:[%s1214 + $0xa8] sm:$0xff]
        %v4156 = vld [vmem:[%s1214 + $0xb0] sm:$0xff]
        %v4157 = vmul.f32 %v4141, %v3413
        %v4158 = vmul.f32 %v4142, %v3413
        %v4159 = vmul.f32 %v4143, %v3413
        %v4160 = vmul.f32 %v4144, %v3413
        %v4161 = vmul.f32 %v4145, %v3413
        %v4162 = vmul.f32 %v4146, %v3413
        %v4163 = vmul.f32 %v4147, %v3413
        %v4164 = vmul.f32 %v4148, %v3413
        %v4165 = vmul.f32 %v4149, %v3413
        %v4166 = vmul.f32 %v4150, %v3413
        %v4167 = vmul.f32 %v4151, %v3413
        %v4168 = vmul.f32 %v4152, %v3413
        %v4169 = vmul.f32 %v4153, %v3413
        %v4170 = vmul.f32 %v4154, %v3413
        %v4171 = vmul.f32 %v4155, %v3413
        %v4172 = vmul.f32 %v4156, %v3413
        %v4173 = vadd.f32 %v4157, 0.0
        %v4174 = vadd.f32 %v4158, 0.0
        %v4175 = vadd.f32 %v4159, 0.0
        %v4176 = vadd.f32 %v4160, 0.0
        %v4177 = vadd.f32 %v4161, 0.0
        %v4178 = vadd.f32 %v4162, 0.0
        %v4179 = vadd.f32 %v4163, 0.0
        %v4180 = vadd.f32 %v4164, 0.0
        %v4181 = vadd.f32 %v4165, 0.0
        %v4182 = vadd.f32 %v4166, 0.0
        %v4183 = vadd.f32 %v4167, 0.0
        %v4184 = vadd.f32 %v4168, 0.0
        %v4185 = vadd.f32 %v4169, 0.0
        %v4186 = vadd.f32 %v4170, 0.0
        %v4187 = vadd.f32 %v4171, 0.0
        %v4188 = vadd.f32 %v4172, 0.0
        %v4189 = vld [vmem:[%s1214 + $0x1] sm:$0xff]
        %v4190 = vld [vmem:[%s1214 + $0x9] sm:$0xff]
        %v4191 = vld [vmem:[%s1214 + $0x19] sm:$0xff]
        %v4192 = vld [vmem:[%s1214 + $0x21] sm:$0xff]
        %v4193 = vld [vmem:[%s1214 + $0x31] sm:$0xff]
        %v4194 = vld [vmem:[%s1214 + $0x39] sm:$0xff]
        %v4195 = vld [vmem:[%s1214 + $0x49] sm:$0xff]
        %v4196 = vld [vmem:[%s1214 + $0x51] sm:$0xff]
        %v4197 = vld [vmem:[%s1214 + $0x61] sm:$0xff]
        %v4198 = vld [vmem:[%s1214 + $0x69] sm:$0xff]
        %v4199 = vld [vmem:[%s1214 + $0x79] sm:$0xff]
        %v4200 = vld [vmem:[%s1214 + $0x81] sm:$0xff]
        %v4201 = vld [vmem:[%s1214 + $0x91] sm:$0xff]
        %v4202 = vld [vmem:[%s1214 + $0x99] sm:$0xff]
        %v4203 = vld [vmem:[%s1214 + $0xa9] sm:$0xff]
        %v4204 = vld [vmem:[%s1214 + $0xb1] sm:$0xff]
        %v4205 = vmul.f32 %v4189, %v3465
        %v4206 = vmul.f32 %v4190, %v3465
        %v4207 = vmul.f32 %v4191, %v3465
        %v4208 = vmul.f32 %v4192, %v3465
        %v4209 = vmul.f32 %v4193, %v3465
        %v4210 = vmul.f32 %v4194, %v3465
        %v4211 = vmul.f32 %v4195, %v3465
        %v4212 = vmul.f32 %v4196, %v3465
        %v4213 = vmul.f32 %v4197, %v3465
        %v4214 = vmul.f32 %v4198, %v3465
        %v4215 = vmul.f32 %v4199, %v3465
        %v4216 = vmul.f32 %v4200, %v3465
        %v4217 = vmul.f32 %v4201, %v3465
        %v4218 = vmul.f32 %v4202, %v3465
        %v4219 = vmul.f32 %v4203, %v3465
        %v4220 = vmul.f32 %v4204, %v3465
        %v4221 = vadd.f32 %v4173, %v4205
        %v4222 = vadd.f32 %v4174, %v4206
        %v4223 = vadd.f32 %v4175, %v4207
        %v4224 = vadd.f32 %v4176, %v4208
        %v4225 = vadd.f32 %v4177, %v4209
        %v4226 = vadd.f32 %v4178, %v4210
        %v4227 = vadd.f32 %v4179, %v4211
        %v4228 = vadd.f32 %v4180, %v4212
        %v4229 = vadd.f32 %v4181, %v4213
        %v4230 = vadd.f32 %v4182, %v4214
        %v4231 = vadd.f32 %v4183, %v4215
        %v4232 = vadd.f32 %v4184, %v4216
        %v4233 = vadd.f32 %v4185, %v4217
        %v4234 = vadd.f32 %v4186, %v4218
        %v4235 = vadd.f32 %v4187, %v4219
        %v4236 = vadd.f32 %v4188, %v4220
        %v4237 = vld [vmem:[%s1214 + $0x2] sm:$0xff]
        %v4238 = vld [vmem:[%s1214 + $0xa] sm:$0xff]
        %v4239 = vld [vmem:[%s1214 + $0x1a] sm:$0xff]
        %v4240 = vld [vmem:[%s1214 + $0x22] sm:$0xff]
        %v4241 = vld [vmem:[%s1214 + $0x32] sm:$0xff]
        %v4242 = vld [vmem:[%s1214 + $0x3a] sm:$0xff]
        %v4243 = vld [vmem:[%s1214 + $0x4a] sm:$0xff]
        %v4244 = vld [vmem:[%s1214 + $0x52] sm:$0xff]
        %v4245 = vld [vmem:[%s1214 + $0x62] sm:$0xff]
        %v4246 = vld [vmem:[%s1214 + $0x6a] sm:$0xff]
        %v4247 = vld [vmem:[%s1214 + $0x7a] sm:$0xff]
        %v4248 = vld [vmem:[%s1214 + $0x82] sm:$0xff]
        %v4249 = vld [vmem:[%s1214 + $0x92] sm:$0xff]
        %v4250 = vld [vmem:[%s1214 + $0x9a] sm:$0xff]
        %v4251 = vld [vmem:[%s1214 + $0xaa] sm:$0xff]
        %v4252 = vld [vmem:[%s1214 + $0xb2] sm:$0xff]
        %v4253 = vmul.f32 %v4237, %v3517
        %v4254 = vmul.f32 %v4238, %v3517
        %v4255 = vmul.f32 %v4239, %v3517
        %v4256 = vmul.f32 %v4240, %v3517
        %v4257 = vmul.f32 %v4241, %v3517
        %v4258 = vmul.f32 %v4242, %v3517
        %v4259 = vmul.f32 %v4243, %v3517
        %v4260 = vmul.f32 %v4244, %v3517
        %v4261 = vmul.f32 %v4245, %v3517
        %v4262 = vmul.f32 %v4246, %v3517
        %v4263 = vmul.f32 %v4247, %v3517
        %v4264 = vmul.f32 %v4248, %v3517
        %v4265 = vmul.f32 %v4249, %v3517
        %v4266 = vmul.f32 %v4250, %v3517
        %v4267 = vmul.f32 %v4251, %v3517
        %v4268 = vmul.f32 %v4252, %v3517
        %v4269 = vadd.f32 %v4221, %v4253
        %v4270 = vadd.f32 %v4222, %v4254
        %v4271 = vadd.f32 %v4223, %v4255
        %v4272 = vadd.f32 %v4224, %v4256
        %v4273 = vadd.f32 %v4225, %v4257
        %v4274 = vadd.f32 %v4226, %v4258
        %v4275 = vadd.f32 %v4227, %v4259
        %v4276 = vadd.f32 %v4228, %v4260
        %v4277 = vadd.f32 %v4229, %v4261
        %v4278 = vadd.f32 %v4230, %v4262
        %v4279 = vadd.f32 %v4231, %v4263
        %v4280 = vadd.f32 %v4232, %v4264
        %v4281 = vadd.f32 %v4233, %v4265
        %v4282 = vadd.f32 %v4234, %v4266
        %v4283 = vadd.f32 %v4235, %v4267
        %v4284 = vadd.f32 %v4236, %v4268
        %v4285 = vld [vmem:[%s1359] sm:$0xff]
        %v4286 = vld [vmem:[%s1359 + $0x8] sm:$0xff]
        %v4287 = vld [vmem:[%s1359 + $0x18] sm:$0xff]
        %v4288 = vld [vmem:[%s1359 + $0x20] sm:$0xff]
        %v4289 = vld [vmem:[%s1359 + $0x30] sm:$0xff]
        %v4290 = vld [vmem:[%s1359 + $0x38] sm:$0xff]
        %v4291 = vld [vmem:[%s1359 + $0x48] sm:$0xff]
        %v4292 = vld [vmem:[%s1359 + $0x50] sm:$0xff]
        %v4293 = vld [vmem:[%s1359 + $0x60] sm:$0xff]
        %v4294 = vld [vmem:[%s1359 + $0x68] sm:$0xff]
        %v4295 = vld [vmem:[%s1359 + $0x78] sm:$0xff]
        %v4296 = vld [vmem:[%s1359 + $0x80] sm:$0xff]
        %v4297 = vld [vmem:[%s1359 + $0x90] sm:$0xff]
        %v4298 = vld [vmem:[%s1359 + $0x98] sm:$0xff]
        %v4299 = vld [vmem:[%s1359 + $0xa8] sm:$0xff]
        %v4300 = vld [vmem:[%s1359 + $0xb0] sm:$0xff]
        %v4301 = vmul.f32 %v4285, %v3569
        %v4302 = vmul.f32 %v4286, %v3569
        %v4303 = vmul.f32 %v4287, %v3569
        %v4304 = vmul.f32 %v4288, %v3569
        %v4305 = vmul.f32 %v4289, %v3569
        %v4306 = vmul.f32 %v4290, %v3569
        %v4307 = vmul.f32 %v4291, %v3569
        %v4308 = vmul.f32 %v4292, %v3569
        %v4309 = vmul.f32 %v4293, %v3569
        %v4310 = vmul.f32 %v4294, %v3569
        %v4311 = vmul.f32 %v4295, %v3569
        %v4312 = vmul.f32 %v4296, %v3569
        %v4313 = vmul.f32 %v4297, %v3569
        %v4314 = vmul.f32 %v4298, %v3569
        %v4315 = vmul.f32 %v4299, %v3569
        %v4316 = vmul.f32 %v4300, %v3569
        %v4317 = vadd.f32 %v4269, %v4301
        %v4318 = vadd.f32 %v4270, %v4302
        %v4319 = vadd.f32 %v4271, %v4303
        %v4320 = vadd.f32 %v4272, %v4304
        %v4321 = vadd.f32 %v4273, %v4305
        %v4322 = vadd.f32 %v4274, %v4306
        %v4323 = vadd.f32 %v4275, %v4307
        %v4324 = vadd.f32 %v4276, %v4308
        %v4325 = vadd.f32 %v4277, %v4309
        %v4326 = vadd.f32 %v4278, %v4310
        %v4327 = vadd.f32 %v4279, %v4311
        %v4328 = vadd.f32 %v4280, %v4312
        %v4329 = vadd.f32 %v4281, %v4313
        %v4330 = vadd.f32 %v4282, %v4314
        %v4331 = vadd.f32 %v4283, %v4315
        %v4332 = vadd.f32 %v4284, %v4316
        %v4333 = vld [vmem:[%s1359 + $0x1] sm:$0xff]
        %v4334 = vld [vmem:[%s1359 + $0x9] sm:$0xff]
        %v4335 = vld [vmem:[%s1359 + $0x19] sm:$0xff]
        %v4336 = vld [vmem:[%s1359 + $0x21] sm:$0xff]
        %v4337 = vld [vmem:[%s1359 + $0x31] sm:$0xff]
        %v4338 = vld [vmem:[%s1359 + $0x39] sm:$0xff]
        %v4339 = vld [vmem:[%s1359 + $0x49] sm:$0xff]
        %v4340 = vld [vmem:[%s1359 + $0x51] sm:$0xff]
        %v4341 = vld [vmem:[%s1359 + $0x61] sm:$0xff]
        %v4342 = vld [vmem:[%s1359 + $0x69] sm:$0xff]
        %v4343 = vld [vmem:[%s1359 + $0x79] sm:$0xff]
        %v4344 = vld [vmem:[%s1359 + $0x81] sm:$0xff]
        %v4345 = vld [vmem:[%s1359 + $0x91] sm:$0xff]
        %v4346 = vld [vmem:[%s1359 + $0x99] sm:$0xff]
        %v4347 = vld [vmem:[%s1359 + $0xa9] sm:$0xff]
        %v4348 = vld [vmem:[%s1359 + $0xb1] sm:$0xff]
        %v4349 = vmul.f32 %v4333, %v3621
        %v4350 = vmul.f32 %v4334, %v3621
        %v4351 = vmul.f32 %v4335, %v3621
        %v4352 = vmul.f32 %v4336, %v3621
        %v4353 = vmul.f32 %v4337, %v3621
        %v4354 = vmul.f32 %v4338, %v3621
        %v4355 = vmul.f32 %v4339, %v3621
        %v4356 = vmul.f32 %v4340, %v3621
        %v4357 = vmul.f32 %v4341, %v3621
        %v4358 = vmul.f32 %v4342, %v3621
        %v4359 = vmul.f32 %v4343, %v3621
        %v4360 = vmul.f32 %v4344, %v3621
        %v4361 = vmul.f32 %v4345, %v3621
        %v4362 = vmul.f32 %v4346, %v3621
        %v4363 = vmul.f32 %v4347, %v3621
        %v4364 = vmul.f32 %v4348, %v3621
        %v4365 = vadd.f32 %v4317, %v4349
        %v4366 = vadd.f32 %v4318, %v4350
        %v4367 = vadd.f32 %v4319, %v4351
        %v4368 = vadd.f32 %v4320, %v4352
        %v4369 = vadd.f32 %v4321, %v4353
        %v4370 = vadd.f32 %v4322, %v4354
        %v4371 = vadd.f32 %v4323, %v4355
        %v4372 = vadd.f32 %v4324, %v4356
        %v4373 = vadd.f32 %v4325, %v4357
        %v4374 = vadd.f32 %v4326, %v4358
        %v4375 = vadd.f32 %v4327, %v4359
        %v4376 = vadd.f32 %v4328, %v4360
        %v4377 = vadd.f32 %v4329, %v4361
        %v4378 = vadd.f32 %v4330, %v4362
        %v4379 = vadd.f32 %v4331, %v4363
        %v4380 = vadd.f32 %v4332, %v4364
        %v4381 = vld [vmem:[%s1359 + $0x2] sm:$0xff]
        %v4382 = vld [vmem:[%s1359 + $0xa] sm:$0xff]
        %v4383 = vld [vmem:[%s1359 + $0x1a] sm:$0xff]
        %v4384 = vld [vmem:[%s1359 + $0x22] sm:$0xff]
        %v4385 = vld [vmem:[%s1359 + $0x32] sm:$0xff]
        %v4386 = vld [vmem:[%s1359 + $0x3a] sm:$0xff]
        %v4387 = vld [vmem:[%s1359 + $0x4a] sm:$0xff]
        %v4388 = vld [vmem:[%s1359 + $0x52] sm:$0xff]
        %v4389 = vld [vmem:[%s1359 + $0x62] sm:$0xff]
        %v4390 = vld [vmem:[%s1359 + $0x6a] sm:$0xff]
        %v4391 = vld [vmem:[%s1359 + $0x7a] sm:$0xff]
        %v4392 = vld [vmem:[%s1359 + $0x82] sm:$0xff]
        %v4393 = vld [vmem:[%s1359 + $0x92] sm:$0xff]
        %v4394 = vld [vmem:[%s1359 + $0x9a] sm:$0xff]
        %v4395 = vld [vmem:[%s1359 + $0xaa] sm:$0xff]
        %v4396 = vld [vmem:[%s1359 + $0xb2] sm:$0xff]
        %v4397 = vmul.f32 %v4381, %v3673
        %v4398 = vmul.f32 %v4382, %v3673
        %v4399 = vmul.f32 %v4383, %v3673
        %v4400 = vmul.f32 %v4384, %v3673
        %v4401 = vmul.f32 %v4385, %v3673
        %v4402 = vmul.f32 %v4386, %v3673
        %v4403 = vmul.f32 %v4387, %v3673
        %v4404 = vmul.f32 %v4388, %v3673
        %v4405 = vmul.f32 %v4389, %v3673
        %v4406 = vmul.f32 %v4390, %v3673
        %v4407 = vmul.f32 %v4391, %v3673
        %v4408 = vmul.f32 %v4392, %v3673
        %v4409 = vmul.f32 %v4393, %v3673
        %v4410 = vmul.f32 %v4394, %v3673
        %v4411 = vmul.f32 %v4395, %v3673
        %v4412 = vmul.f32 %v4396, %v3673
        %v4413 = vadd.f32 %v4365, %v4397
        %v4414 = vadd.f32 %v4366, %v4398
        %v4415 = vadd.f32 %v4367, %v4399
        %v4416 = vadd.f32 %v4368, %v4400
        %v4417 = vadd.f32 %v4369, %v4401
        %v4418 = vadd.f32 %v4370, %v4402
        %v4419 = vadd.f32 %v4371, %v4403
        %v4420 = vadd.f32 %v4372, %v4404
        %v4421 = vadd.f32 %v4373, %v4405
        %v4422 = vadd.f32 %v4374, %v4406
        %v4423 = vadd.f32 %v4375, %v4407
        %v4424 = vadd.f32 %v4376, %v4408
        %v4425 = vadd.f32 %v4377, %v4409
        %v4426 = vadd.f32 %v4378, %v4410
        %v4427 = vadd.f32 %v4379, %v4411
        %v4428 = vadd.f32 %v4380, %v4412
        %v4429 = vld [vmem:[%s1504] sm:$0xff]
        %v4430 = vld [vmem:[%s1504 + $0x8] sm:$0xff]
        %v4431 = vld [vmem:[%s1504 + $0x18] sm:$0xff]
        %v4432 = vld [vmem:[%s1504 + $0x20] sm:$0xff]
        %v4433 = vld [vmem:[%s1504 + $0x30] sm:$0xff]
        %v4434 = vld [vmem:[%s1504 + $0x38] sm:$0xff]
        %v4435 = vld [vmem:[%s1504 + $0x48] sm:$0xff]
        %v4436 = vld [vmem:[%s1504 + $0x50] sm:$0xff]
        %v4437 = vld [vmem:[%s1504 + $0x60] sm:$0xff]
        %v4438 = vld [vmem:[%s1504 + $0x68] sm:$0xff]
        %v4439 = vld [vmem:[%s1504 + $0x78] sm:$0xff]
        %v4440 = vld [vmem:[%s1504 + $0x80] sm:$0xff]
        %v4441 = vld [vmem:[%s1504 + $0x90] sm:$0xff]
        %v4442 = vld [vmem:[%s1504 + $0x98] sm:$0xff]
        %v4443 = vld [vmem:[%s1504 + $0xa8] sm:$0xff]
        %v4444 = vld [vmem:[%s1504 + $0xb0] sm:$0xff]
        %v4445 = vmul.f32 %v4429, %v3725
        %v4446 = vmul.f32 %v4430, %v3725
        %v4447 = vmul.f32 %v4431, %v3725
        %v4448 = vmul.f32 %v4432, %v3725
        %v4449 = vmul.f32 %v4433, %v3725
        %v4450 = vmul.f32 %v4434, %v3725
        %v4451 = vmul.f32 %v4435, %v3725
        %v4452 = vmul.f32 %v4436, %v3725
        %v4453 = vmul.f32 %v4437, %v3725
        %v4454 = vmul.f32 %v4438, %v3725
        %v4455 = vmul.f32 %v4439, %v3725
        %v4456 = vmul.f32 %v4440, %v3725
        %v4457 = vmul.f32 %v4441, %v3725
        %v4458 = vmul.f32 %v4442, %v3725
        %v4459 = vmul.f32 %v4443, %v3725
        %v4460 = vmul.f32 %v4444, %v3725
        %v4461 = vadd.f32 %v4413, %v4445
        %v4462 = vadd.f32 %v4414, %v4446
        %v4463 = vadd.f32 %v4415, %v4447
        %v4464 = vadd.f32 %v4416, %v4448
        %v4465 = vadd.f32 %v4417, %v4449
        %v4466 = vadd.f32 %v4418, %v4450
        %v4467 = vadd.f32 %v4419, %v4451
        %v4468 = vadd.f32 %v4420, %v4452
        %v4469 = vadd.f32 %v4421, %v4453
        %v4470 = vadd.f32 %v4422, %v4454
        %v4471 = vadd.f32 %v4423, %v4455
        %v4472 = vadd.f32 %v4424, %v4456
        %v4473 = vadd.f32 %v4425, %v4457
        %v4474 = vadd.f32 %v4426, %v4458
        %v4475 = vadd.f32 %v4427, %v4459
        %v4476 = vadd.f32 %v4428, %v4460
        %v4477 = vld [vmem:[%s1504 + $0x1] sm:$0xff]
        %v4478 = vld [vmem:[%s1504 + $0x9] sm:$0xff]
        %v4479 = vld [vmem:[%s1504 + $0x19] sm:$0xff]
        %v4480 = vld [vmem:[%s1504 + $0x21] sm:$0xff]
        %v4481 = vld [vmem:[%s1504 + $0x31] sm:$0xff]
        %v4482 = vld [vmem:[%s1504 + $0x39] sm:$0xff]
        %v4483 = vld [vmem:[%s1504 + $0x49] sm:$0xff]
        %v4484 = vld [vmem:[%s1504 + $0x51] sm:$0xff]
        %v4485 = vld [vmem:[%s1504 + $0x61] sm:$0xff]
        %v4486 = vld [vmem:[%s1504 + $0x69] sm:$0xff]
        %v4487 = vld [vmem:[%s1504 + $0x79] sm:$0xff]
        %v4488 = vld [vmem:[%s1504 + $0x81] sm:$0xff]
        %v4489 = vld [vmem:[%s1504 + $0x91] sm:$0xff]
        %v4490 = vld [vmem:[%s1504 + $0x99] sm:$0xff]
        %v4491 = vld [vmem:[%s1504 + $0xa9] sm:$0xff]
        %v4492 = vld [vmem:[%s1504 + $0xb1] sm:$0xff]
        %v4493 = vmul.f32 %v4477, %v3777
        %v4494 = vmul.f32 %v4478, %v3777
        %v4495 = vmul.f32 %v4479, %v3777
        %v4496 = vmul.f32 %v4480, %v3777
        %v4497 = vmul.f32 %v4481, %v3777
        %v4498 = vmul.f32 %v4482, %v3777
        %v4499 = vmul.f32 %v4483, %v3777
        %v4500 = vmul.f32 %v4484, %v3777
        %v4501 = vmul.f32 %v4485, %v3777
        %v4502 = vmul.f32 %v4486, %v3777
        %v4503 = vmul.f32 %v4487, %v3777
        %v4504 = vmul.f32 %v4488, %v3777
        %v4505 = vmul.f32 %v4489, %v3777
        %v4506 = vmul.f32 %v4490, %v3777
        %v4507 = vmul.f32 %v4491, %v3777
        %v4508 = vmul.f32 %v4492, %v3777
        %v4509 = vadd.f32 %v4461, %v4493
        %v4510 = vadd.f32 %v4462, %v4494
        %v4511 = vadd.f32 %v4463, %v4495
        %v4512 = vadd.f32 %v4464, %v4496
        %v4513 = vadd.f32 %v4465, %v4497
        %v4514 = vadd.f32 %v4466, %v4498
        %v4515 = vadd.f32 %v4467, %v4499
        %v4516 = vadd.f32 %v4468, %v4500
        %v4517 = vadd.f32 %v4469, %v4501
        %v4518 = vadd.f32 %v4470, %v4502
        %v4519 = vadd.f32 %v4471, %v4503
        %v4520 = vadd.f32 %v4472, %v4504
        %v4521 = vadd.f32 %v4473, %v4505
        %v4522 = vadd.f32 %v4474, %v4506
        %v4523 = vadd.f32 %v4475, %v4507
        %v4524 = vadd.f32 %v4476, %v4508
        %v4525 = vld [vmem:[%s1504 + $0x2] sm:$0xff]
        %v4526 = vld [vmem:[%s1504 + $0xa] sm:$0xff]
        %v4527 = vld [vmem:[%s1504 + $0x1a] sm:$0xff]
        %v4528 = vld [vmem:[%s1504 + $0x22] sm:$0xff]
        %v4529 = vld [vmem:[%s1504 + $0x32] sm:$0xff]
        %v4530 = vld [vmem:[%s1504 + $0x3a] sm:$0xff]
        %v4531 = vld [vmem:[%s1504 + $0x4a] sm:$0xff]
        %v4532 = vld [vmem:[%s1504 + $0x52] sm:$0xff]
        %v4533 = vld [vmem:[%s1504 + $0x62] sm:$0xff]
        %v4534 = vld [vmem:[%s1504 + $0x6a] sm:$0xff]
        %v4535 = vld [vmem:[%s1504 + $0x7a] sm:$0xff]
        %v4536 = vld [vmem:[%s1504 + $0x82] sm:$0xff]
        %v4537 = vld [vmem:[%s1504 + $0x92] sm:$0xff]
        %v4538 = vld [vmem:[%s1504 + $0x9a] sm:$0xff]
        %v4539 = vld [vmem:[%s1504 + $0xaa] sm:$0xff]
        %v4540 = vld [vmem:[%s1504 + $0xb2] sm:$0xff]
        %v4541 = vmul.f32 %v4525, %v3829
        %v4542 = vmul.f32 %v4526, %v3829
        %v4543 = vmul.f32 %v4527, %v3829
        %v4544 = vmul.f32 %v4528, %v3829
        %v4545 = vmul.f32 %v4529, %v3829
        %v4546 = vmul.f32 %v4530, %v3829
        %v4547 = vmul.f32 %v4531, %v3829
        %v4548 = vmul.f32 %v4532, %v3829
        %v4549 = vmul.f32 %v4533, %v3829
        %v4550 = vmul.f32 %v4534, %v3829
        %v4551 = vmul.f32 %v4535, %v3829
        %v4552 = vmul.f32 %v4536, %v3829
        %v4553 = vmul.f32 %v4537, %v3829
        %v4554 = vmul.f32 %v4538, %v3829
        %v4555 = vmul.f32 %v4539, %v3829
        %v4556 = vmul.f32 %v4540, %v3829
        %v4557 = vadd.f32 %v4509, %v4541
        %v4558 = vadd.f32 %v4510, %v4542
        %v4559 = vadd.f32 %v4511, %v4543
        %v4560 = vadd.f32 %v4512, %v4544
        %v4561 = vadd.f32 %v4513, %v4545
        %v4562 = vadd.f32 %v4514, %v4546
        %v4563 = vadd.f32 %v4515, %v4547
        %v4564 = vadd.f32 %v4516, %v4548
        %v4565 = vadd.f32 %v4517, %v4549
        %v4566 = vadd.f32 %v4518, %v4550
        %v4567 = vadd.f32 %v4519, %v4551
        %v4568 = vadd.f32 %v4520, %v4552
        %v4569 = vadd.f32 %v4521, %v4553
        %v4570 = vadd.f32 %v4522, %v4554
        %v4571 = vadd.f32 %v4523, %v4555
        %v4572 = vadd.f32 %v4524, %v4556
        %v4574 = vsel %vm285, %v4557, 0
        %v4577 = vsel %vm285, %v4558, 0
        %v4580 = vsel %vm285, %v4559, 0
        %v4583 = vsel %vm285, %v4560, 0
        %v4586 = vsel %vm285, %v4561, 0
        %v4589 = vsel %vm285, %v4562, 0
        %v4592 = vsel %vm285, %v4563, 0
        %v4595 = vsel %vm285, %v4564, 0
        %v4598 = vsel %vm285, %v4565, 0
        %v4601 = vsel %vm285, %v4566, 0
        %v4604 = vsel %vm285, %v4567, 0
        %v4607 = vsel %vm285, %v4568, 0
        %v4610 = vsel %vm285, %v4569, 0
        %v4613 = vsel %vm285, %v4570, 0
        %v4616 = vsel %vm285, %v4571, 0
        %v4619 = vsel %vm285, %v4572, 0
        %4621 = vmatprep.subr.mxu0 0.0
        %4622 = vmatpush1.msra.mxu0 %v3388
        %4623 = vmatprep.subr.mxu0 0.0
        %4624 = vmatpush1.msra.mxu0 %v3389
        %4625 = vmatprep.subr.mxu0 0.0
        %4626 = vmatpush1.msra.mxu0 %v3390
        %4627 = vmatprep.subr.mxu0 0.0
        %4628 = vmatpush1.msra.mxu0 %v3391
        %4629 = vmatprep.subr.mxu0 0.0
        %4630 = vmatpush1.msra.mxu0 0.0
        %4631 = vmatprep.subr.mxu0 0.0
        %4632 = vmatpush1.msra.mxu0 0.0
        %4633 = vmatprep.subr.mxu0 0.0
        %4634 = vmatpush1.msra.mxu0 0.0
        %4635 = vmatprep.subr.mxu0 0.0
        %4636 = vmatpush1.msra.mxu0 0.0
        %4637 = vmatprep.subr.mxu0 0.0
        %4638 = vmatpush1.msra.mxu0 0.0
        %4639 = vmatprep.subr.mxu0 0.0
        %4640 = vmatpush1.msra.mxu0 0.0
        %4641 = vmatprep.subr.mxu0 0.0
        %4642 = vmatpush1.msra.mxu0 0.0
        %4643 = vmatprep.subr.mxu0 0.0
        %4644 = vmatpush1.msra.mxu0 0.0
        %4645 = vmatprep.subr.mxu0 0.0
        %4646 = vmatpush1.msra.mxu0 0.0
        %4647 = vmatprep.subr.mxu0 0.0
        %4648 = vmatpush1.msra.mxu0 0.0
        %4649 = vmatprep.subr.mxu0 0.0
        %4650 = vmatpush1.msra.mxu0 0.0
        %4651 = vmatprep.subr.mxu0 0.0
        %4652 = vmatpush1.msra.mxu0 0.0
        %4653 = vmatprep.subr.mxu0 0.0
        %4654 = vmatpush1.msra.mxu0 0.0
        %4655 = vmatprep.subr.mxu0 0.0
        %4656 = vmatpush1.msra.mxu0 0.0
        %4657 = vmatprep.subr.mxu0 0.0
        %4658 = vmatpush1.msra.mxu0 0.0
        %4659 = vmatprep.subr.mxu0 0.0
        %4660 = vmatpush1.msra.mxu0 0.0
        %4661 = vmatprep.subr.mxu0 0.0
        %4662 = vmatpush1.msra.mxu0 0.0
        %4663 = vmatprep.subr.mxu0 0.0
        %4664 = vmatpush1.msra.mxu0 0.0
        %4665 = vmatprep.subr.mxu0 0.0
        %4666 = vmatpush1.msra.mxu0 0.0
        %4667 = vmatprep.subr.mxu0 0.0
        %4668 = vmatpush1.msra.mxu0 0.0
        %4669 = vmatprep.subr.mxu0 0.0
        %4670 = vmatpush1.msra.mxu0 0.0
        %4671 = vmatprep.subr.mxu0 0.0
        %4672 = vmatpush1.msra.mxu0 0.0
        %4673 = vmatprep.subr.mxu0 0.0
        %4674 = vmatpush1.msra.mxu0 0.0
        %4675 = vmatprep.subr.mxu0 0.0
        %4676 = vmatpush1.msra.mxu0 0.0
        %4677 = vmatprep.subr.mxu0 0.0
        %4678 = vmatpush1.msra.mxu0 0.0
        %4679 = vmatprep.subr.mxu0 0.0
        %4680 = vmatpush1.msra.mxu0 0.0
        %4681 = vmatprep.subr.mxu0 0.0
        %4682 = vmatpush1.msra.mxu0 0.0
        %4683 = vmatprep.subr.mxu0 0.0
        %4684 = vmatpush1.msra.mxu0 0.0
        %4685 = vmatprep.mubr.f32.mxu0 0.0
        %4686 = vmatmul.mubr.f32.gmra.mrb[0].mxu0 %v4574
        %v4687 = vpop.f32.mrb[0].mxu0
        %v4688 = vadd.f32 %v3866, %v4687
        %v4689 = vpop.f32.mrb[0].mxu0
        %4690 = vmatprep.mubr.f32.mxu0 0.0
        %4691 = vmatmul.mubr.f32.gmra.mrb[0].mxu0 %v4577
        %v4692 = vpop.f32.mrb[0].mxu0
        %v4693 = vadd.f32 %v3866, %v4692
        %v4694 = vpop.f32.mrb[0].mxu0
        %4695 = vmatprep.mubr.f32.mxu0 0.0
        %4696 = vmatmul.mubr.f32.gmra.mrb[0].mxu0 %v4580
        %v4697 = vpop.f32.mrb[0].mxu0
        %v4698 = vadd.f32 %v3866, %v4697
        %v4699 = vpop.f32.mrb[0].mxu0
        %4700 = vmatprep.mubr.f32.mxu0 0.0
        %4701 = vmatmul.mubr.f32.gmra.mrb[0].mxu0 %v4583
        %v4702 = vpop.f32.mrb[0].mxu0
        %v4703 = vadd.f32 %v3866, %v4702
        %v4704 = vpop.f32.mrb[0].mxu0
        %4705 = vmatprep.mubr.f32.mxu0 0.0
        %4706 = vmatmul.mubr.f32.gmra.mrb[0].mxu0 %v4586
        %v4707 = vpop.f32.mrb[0].mxu0
        %v4708 = vadd.f32 %v3866, %v4707
        %v4709 = vpop.f32.mrb[0].mxu0
        %4710 = vmatprep.mubr.f32.mxu0 0.0
        %4711 = vmatmul.mubr.f32.gmra.mrb[0].mxu0 %v4589
        %v4712 = vpop.f32.mrb[0].mxu0
        %v4713 = vadd.f32 %v3866, %v4712
        %v4714 = vpop.f32.mrb[0].mxu0
        %4715 = vmatprep.mubr.f32.mxu0 0.0
        %4716 = vmatmul.mubr.f32.gmra.mrb[0].mxu0 %v4592
        %v4717 = vpop.f32.mrb[0].mxu0
        %v4718 = vadd.f32 %v3866, %v4717
        %v4719 = vpop.f32.mrb[0].mxu0
        %4720 = vmatprep.mubr.f32.mxu0 0.0
        %4721 = vmatmul.mubr.f32.gmra.mrb[0].mxu0 %v4595
        %v4722 = vpop.f32.mrb[0].mxu0
        %v4723 = vadd.f32 %v3866, %v4722
        %v4724 = vpop.f32.mrb[0].mxu0
        %4725 = vmatprep.mubr.f32.mxu0 0.0
        %4726 = vmatmul.mubr.f32.gmra.mrb[0].mxu0 %v4598
        %v4727 = vpop.f32.mrb[0].mxu0
        %v4728 = vadd.f32 %v3866, %v4727
        %v4729 = vpop.f32.mrb[0].mxu0
        %4730 = vmatprep.mubr.f32.mxu0 0.0
        %4731 = vmatmul.mubr.f32.gmra.mrb[0].mxu0 %v4601
        %v4732 = vpop.f32.mrb[0].mxu0
        %v4733 = vadd.f32 %v3866, %v4732
        %v4734 = vpop.f32.mrb[0].mxu0
        %4735 = vmatprep.mubr.f32.mxu0 0.0
        %4736 = vmatmul.mubr.f32.gmra.mrb[0].mxu0 %v4604
        %v4737 = vpop.f32.mrb[0].mxu0
        %v4738 = vadd.f32 %v3866, %v4737
        %v4739 = vpop.f32.mrb[0].mxu0
        %4740 = vmatprep.mubr.f32.mxu0 0.0
        %4741 = vmatmul.mubr.f32.gmra.mrb[0].mxu0 %v4607
        %v4742 = vpop.f32.mrb[0].mxu0
        %v4743 = vadd.f32 %v3866, %v4742
        %v4744 = vpop.f32.mrb[0].mxu0
        %4745 = vmatprep.mubr.f32.mxu0 0.0
        %4746 = vmatmul.mubr.f32.gmra.mrb[0].mxu0 %v4610
        %v4747 = vpop.f32.mrb[0].mxu0
        %v4748 = vadd.f32 %v3866, %v4747
        %v4749 = vpop.f32.mrb[0].mxu0
        %4750 = vmatprep.mubr.f32.mxu0 0.0
        %4751 = vmatmul.mubr.f32.gmra.mrb[0].mxu0 %v4613
        %v4752 = vpop.f32.mrb[0].mxu0
        %v4753 = vadd.f32 %v3866, %v4752
        %v4754 = vpop.f32.mrb[0].mxu0
        %4755 = vmatprep.mubr.f32.mxu0 0.0
        %4756 = vmatmul.mubr.f32.gmra.mrb[0].mxu0 %v4616
        %v4757 = vpop.f32.mrb[0].mxu0
        %v4758 = vadd.f32 %v3866, %v4757
        %v4759 = vpop.f32.mrb[0].mxu0
        %4760 = vmatprep.mubr.f32.mxu0 0.0
        %4761 = vmatmul.mubr.f32.gmra.mrb[0].mxu0 %v4619
        %v4762 = vpop.f32.mrb[0].mxu0
        %v4763 = vadd.f32 %v3866, %v4762
        %v4764 = vpop.f32.mrb[0].mxu0
        %4765 = vdwg.mxu0
        %v4766 = vmax.f32 %v4688, 0.0
        %v4767 = vmax.f32 %v4693, 0.0
        %v4768 = vmax.f32 %v4698, 0.0
        %v4769 = vmax.f32 %v4703, 0.0
        %v4770 = vmax.f32 %v4708, 0.0
        %v4771 = vmax.f32 %v4713, 0.0
        %v4772 = vmax.f32 %v4718, 0.0
        %v4773 = vmax.f32 %v4723, 0.0
        %v4774 = vmax.f32 %v4728, 0.0
        %v4775 = vmax.f32 %v4733, 0.0
        %v4776 = vmax.f32 %v4738, 0.0
        %v4777 = vmax.f32 %v4743, 0.0
        %v4778 = vmax.f32 %v4748, 0.0
        %v4779 = vmax.f32 %v4753, 0.0
        %v4780 = vmax.f32 %v4758, 0.0
        %v4781 = vmax.f32 %v4763, 0.0
        %v4782 = vld [vmem:[%s4077] sm:$0x1]
        %v4784 = vlaneseq
        %v4785 = vshrl.u32 %v4784, 7
        %v4786 = vsub.s32 0, %v4785
        %v4787 = vrot.slane %v4782, %v4786
        %v4789 = vmul.f32 %v4766, %v4787
        %v4790 = vmul.f32 %v4767, %v4787
        %v4791 = vmul.f32 %v4768, %v4787
        %v4792 = vmul.f32 %v4769, %v4787
        %v4793 = vmul.f32 %v4770, %v4787
        %v4794 = vmul.f32 %v4771, %v4787
        %v4795 = vmul.f32 %v4772, %v4787
        %v4796 = vmul.f32 %v4773, %v4787
        %v4797 = vmul.f32 %v4774, %v4787
        %v4798 = vmul.f32 %v4775, %v4787
        %v4799 = vmul.f32 %v4776, %v4787
        %v4800 = vmul.f32 %v4777, %v4787
        %v4801 = vmul.f32 %v4778, %v4787
        %v4802 = vmul.f32 %v4779, %v4787
        %v4803 = vmul.f32 %v4780, %v4787
        %v4804 = vmul.f32 %v4781, %v4787
        %v4805 = vld [vmem:[%s4101] sm:$0x1]
        %v4807 = vlaneseq
        %v4808 = vshrl.u32 %v4807, 7
        %v4809 = vsub.s32 0, %v4808
        %v4810 = vrot.slane %v4805, %v4809
        %v4812 = vadd.f32 %v4789, %v4810
        %v4813 = vadd.f32 %v4790, %v4810
        %v4814 = vadd.f32 %v4791, %v4810
        %v4815 = vadd.f32 %v4792, %v4810
        %v4816 = vadd.f32 %v4793, %v4810
        %v4817 = vadd.f32 %v4794, %v4810
        %v4818 = vadd.f32 %v4795, %v4810
        %v4819 = vadd.f32 %v4796, %v4810
        %v4820 = vadd.f32 %v4797, %v4810
        %v4821 = vadd.f32 %v4798, %v4810
        %v4822 = vadd.f32 %v4799, %v4810
        %v4823 = vadd.f32 %v4800, %v4810
        %v4824 = vadd.f32 %v4801, %v4810
        %v4825 = vadd.f32 %v4802, %v4810
        %v4826 = vadd.f32 %v4803, %v4810
        %v4827 = vadd.f32 %v4804, %v4810
        %4828 = vst.msk [vmem:[%s1904 + $0x1] sm:$0xff] %vm285, %v4812
        %4829 = vst.msk [vmem:[%s1904 + $0x9] sm:$0xff] %vm285, %v4813
        %4830 = vst.msk [vmem:[%s1904 + $0x19] sm:$0xff] %vm285, %v4814
        %4831 = vst.msk [vmem:[%s1904 + $0x21] sm:$0xff] %vm285, %v4815
        %4832 = vst.msk [vmem:[%s1904 + $0x31] sm:$0xff] %vm285, %v4816
        %4833 = vst.msk [vmem:[%s1904 + $0x39] sm:$0xff] %vm285, %v4817
        %4834 = vst.msk [vmem:[%s1904 + $0x49] sm:$0xff] %vm285, %v4818
        %4835 = vst.msk [vmem:[%s1904 + $0x51] sm:$0xff] %vm285, %v4819
        %4836 = vst.msk [vmem:[%s1904 + $0x61] sm:$0xff] %vm285, %v4820
        %4837 = vst.msk [vmem:[%s1904 + $0x69] sm:$0xff] %vm285, %v4821
        %4838 = vst.msk [vmem:[%s1904 + $0x79] sm:$0xff] %vm285, %v4822
        %4839 = vst.msk [vmem:[%s1904 + $0x81] sm:$0xff] %vm285, %v4823
        %4840 = vst.msk [vmem:[%s1904 + $0x91] sm:$0xff] %vm285, %v4824
        %4841 = vst.msk [vmem:[%s1904 + $0x99] sm:$0xff] %vm285, %v4825
        %4842 = vst.msk [vmem:[%s1904 + $0xa9] sm:$0xff] %vm285, %v4826
        %4843 = vst.msk [vmem:[%s1904 + $0xb1] sm:$0xff] %vm285, %v4827
        %s4844 = scalar_lea.vmem %s1, 48
        %v4845 = vld [vmem:[%s4844] sm:$0xff]
        %v4846 = vld [vmem:[%s4844 + $0x8] sm:$0x1]
        %s4847 = scalar_lea.vmem [#allocation7], 96
        %v4848 = vld [vmem:[%s4847] sm:$0xff]
        %v4849 = vld [vmem:[%s4847 + $0x8] sm:$0xff]
        %v4850 = vld [vmem:[%s4847 + $0x10] sm:$0xff]
        %v4851 = vld [vmem:[%s4847 + $0x18] sm:$0xff]
        %s4852 = scalar_lea.vmem %s3, 3
        %v4853 = vld [vmem:[%s4852] sm:$0x1]
        %v4854 = vld [vmem:[#allocation3] sm:$0xff]
        %v4855 = vld [vmem:[#allocation3 + $0x8] sm:$0xff]
        %v4856 = vld [vmem:[#allocation3 + $0x18] sm:$0xff]
        %v4857 = vld [vmem:[#allocation3 + $0x20] sm:$0xff]
        %v4858 = vld [vmem:[#allocation3 + $0x30] sm:$0xff]
        %v4859 = vld [vmem:[#allocation3 + $0x38] sm:$0xff]
        %v4860 = vld [vmem:[#allocation3 + $0x48] sm:$0xff]
        %v4861 = vld [vmem:[#allocation3 + $0x50] sm:$0xff]
        %v4862 = vld [vmem:[#allocation3 + $0x60] sm:$0xff]
        %v4863 = vld [vmem:[#allocation3 + $0x68] sm:$0xff]
        %v4864 = vld [vmem:[#allocation3 + $0x78] sm:$0xff]
        %v4865 = vld [vmem:[#allocation3 + $0x80] sm:$0xff]
        %v4866 = vld [vmem:[#allocation3 + $0x90] sm:$0xff]
        %v4867 = vld [vmem:[#allocation3 + $0x98] sm:$0xff]
        %v4868 = vld [vmem:[#allocation3 + $0xa8] sm:$0xff]
        %v4869 = vld [vmem:[#allocation3 + $0xb0] sm:$0xff]
        %v4870 = vlaneseq
        %v4871 = vshrl.u32 %v4870, 7
        %v4872 = vsub.s32 0, %v4871
        %v4873 = vrot.slane %v4845, %v4872
        %v4874 = vmul.f32 %v4854, %v4873
        %v4875 = vmul.f32 %v4855, %v4873
        %v4876 = vmul.f32 %v4856, %v4873
        %v4877 = vmul.f32 %v4857, %v4873
        %v4878 = vmul.f32 %v4858, %v4873
        %v4879 = vmul.f32 %v4859, %v4873
        %v4880 = vmul.f32 %v4860, %v4873
        %v4881 = vmul.f32 %v4861, %v4873
        %v4882 = vmul.f32 %v4862, %v4873
        %v4883 = vmul.f32 %v4863, %v4873
        %v4884 = vmul.f32 %v4864, %v4873
        %v4885 = vmul.f32 %v4865, %v4873
        %v4886 = vmul.f32 %v4866, %v4873
        %v4887 = vmul.f32 %v4867, %v4873
        %v4888 = vmul.f32 %v4868, %v4873
        %v4889 = vmul.f32 %v4869, %v4873
        %v4890 = vadd.f32 %v4874, 0.0
        %v4891 = vadd.f32 %v4875, 0.0
        %v4892 = vadd.f32 %v4876, 0.0
        %v4893 = vadd.f32 %v4877, 0.0
        %v4894 = vadd.f32 %v4878, 0.0
        %v4895 = vadd.f32 %v4879, 0.0
        %v4896 = vadd.f32 %v4880, 0.0
        %v4897 = vadd.f32 %v4881, 0.0
        %v4898 = vadd.f32 %v4882, 0.0
        %v4899 = vadd.f32 %v4883, 0.0
        %v4900 = vadd.f32 %v4884, 0.0
        %v4901 = vadd.f32 %v4885, 0.0
        %v4902 = vadd.f32 %v4886, 0.0
        %v4903 = vadd.f32 %v4887, 0.0
        %v4904 = vadd.f32 %v4888, 0.0
        %v4905 = vadd.f32 %v4889, 0.0
        %v4906 = vld [vmem:[#allocation3 + $0x1] sm:$0xff]
        %v4907 = vld [vmem:[#allocation3 + $0x9] sm:$0xff]
        %v4908 = vld [vmem:[#allocation3 + $0x19] sm:$0xff]
        %v4909 = vld [vmem:[#allocation3 + $0x21] sm:$0xff]
        %v4910 = vld [vmem:[#allocation3 + $0x31] sm:$0xff]
        %v4911 = vld [vmem:[#allocation3 + $0x39] sm:$0xff]
        %v4912 = vld [vmem:[#allocation3 + $0x49] sm:$0xff]
        %v4913 = vld [vmem:[#allocation3 + $0x51] sm:$0xff]
        %v4914 = vld [vmem:[#allocation3 + $0x61] sm:$0xff]
        %v4915 = vld [vmem:[#allocation3 + $0x69] sm:$0xff]
        %v4916 = vld [vmem:[#allocation3 + $0x79] sm:$0xff]
        %v4917 = vld [vmem:[#allocation3 + $0x81] sm:$0xff]
        %v4918 = vld [vmem:[#allocation3 + $0x91] sm:$0xff]
        %v4919 = vld [vmem:[#allocation3 + $0x99] sm:$0xff]
        %v4920 = vld [vmem:[#allocation3 + $0xa9] sm:$0xff]
        %v4921 = vld [vmem:[#allocation3 + $0xb1] sm:$0xff]
        %v4922 = vlaneseq
        %v4923 = vshrl.u32 %v4922, 7
        %v4924 = vsub.s32 1, %v4923
        %v4925 = vrot.slane %v4845, %v4924
        %v4926 = vmul.f32 %v4906, %v4925
        %v4927 = vmul.f32 %v4907, %v4925
        %v4928 = vmul.f32 %v4908, %v4925
        %v4929 = vmul.f32 %v4909, %v4925
        %v4930 = vmul.f32 %v4910, %v4925
        %v4931 = vmul.f32 %v4911, %v4925
        %v4932 = vmul.f32 %v4912, %v4925
        %v4933 = vmul.f32 %v4913, %v4925
        %v4934 = vmul.f32 %v4914, %v4925
        %v4935 = vmul.f32 %v4915, %v4925
        %v4936 = vmul.f32 %v4916, %v4925
        %v4937 = vmul.f32 %v4917, %v4925
        %v4938 = vmul.f32 %v4918, %v4925
        %v4939 = vmul.f32 %v4919, %v4925
        %v4940 = vmul.f32 %v4920, %v4925
        %v4941 = vmul.f32 %v4921, %v4925
        %v4942 = vadd.f32 %v4890, %v4926
        %v4943 = vadd.f32 %v4891, %v4927
        %v4944 = vadd.f32 %v4892, %v4928
        %v4945 = vadd.f32 %v4893, %v4929
        %v4946 = vadd.f32 %v4894, %v4930
        %v4947 = vadd.f32 %v4895, %v4931
        %v4948 = vadd.f32 %v4896, %v4932
        %v4949 = vadd.f32 %v4897, %v4933
        %v4950 = vadd.f32 %v4898, %v4934
        %v4951 = vadd.f32 %v4899, %v4935
        %v4952 = vadd.f32 %v4900, %v4936
        %v4953 = vadd.f32 %v4901, %v4937
        %v4954 = vadd.f32 %v4902, %v4938
        %v4955 = vadd.f32 %v4903, %v4939
        %v4956 = vadd.f32 %v4904, %v4940
        %v4957 = vadd.f32 %v4905, %v4941
        %v4958 = vld [vmem:[#allocation3 + $0x2] sm:$0xff]
        %v4959 = vld [vmem:[#allocation3 + $0xa] sm:$0xff]
        %v4960 = vld [vmem:[#allocation3 + $0x1a] sm:$0xff]
        %v4961 = vld [vmem:[#allocation3 + $0x22] sm:$0xff]
        %v4962 = vld [vmem:[#allocation3 + $0x32] sm:$0xff]
        %v4963 = vld [vmem:[#allocation3 + $0x3a] sm:$0xff]
        %v4964 = vld [vmem:[#allocation3 + $0x4a] sm:$0xff]
        %v4965 = vld [vmem:[#allocation3 + $0x52] sm:$0xff]
        %v4966 = vld [vmem:[#allocation3 + $0x62] sm:$0xff]
        %v4967 = vld [vmem:[#allocation3 + $0x6a] sm:$0xff]
        %v4968 = vld [vmem:[#allocation3 + $0x7a] sm:$0xff]
        %v4969 = vld [vmem:[#allocation3 + $0x82] sm:$0xff]
        %v4970 = vld [vmem:[#allocation3 + $0x92] sm:$0xff]
        %v4971 = vld [vmem:[#allocation3 + $0x9a] sm:$0xff]
        %v4972 = vld [vmem:[#allocation3 + $0xaa] sm:$0xff]
        %v4973 = vld [vmem:[#allocation3 + $0xb2] sm:$0xff]
        %v4974 = vlaneseq
        %v4975 = vshrl.u32 %v4974, 7
        %v4976 = vsub.s32 2, %v4975
        %v4977 = vrot.slane %v4845, %v4976
        %v4978 = vmul.f32 %v4958, %v4977
        %v4979 = vmul.f32 %v4959, %v4977
        %v4980 = vmul.f32 %v4960, %v4977
        %v4981 = vmul.f32 %v4961, %v4977
        %v4982 = vmul.f32 %v4962, %v4977
        %v4983 = vmul.f32 %v4963, %v4977
        %v4984 = vmul.f32 %v4964, %v4977
        %v4985 = vmul.f32 %v4965, %v4977
        %v4986 = vmul.f32 %v4966, %v4977
        %v4987 = vmul.f32 %v4967, %v4977
        %v4988 = vmul.f32 %v4968, %v4977
        %v4989 = vmul.f32 %v4969, %v4977
        %v4990 = vmul.f32 %v4970, %v4977
        %v4991 = vmul.f32 %v4971, %v4977
        %v4992 = vmul.f32 %v4972, %v4977
        %v4993 = vmul.f32 %v4973, %v4977
        %v4994 = vadd.f32 %v4942, %v4978
        %v4995 = vadd.f32 %v4943, %v4979
        %v4996 = vadd.f32 %v4944, %v4980
        %v4997 = vadd.f32 %v4945, %v4981
        %v4998 = vadd.f32 %v4946, %v4982
        %v4999 = vadd.f32 %v4947, %v4983
        %v5000 = vadd.f32 %v4948, %v4984
        %v5001 = vadd.f32 %v4949, %v4985
        %v5002 = vadd.f32 %v4950, %v4986
        %v5003 = vadd.f32 %v4951, %v4987
        %v5004 = vadd.f32 %v4952, %v4988
        %v5005 = vadd.f32 %v4953, %v4989
        %v5006 = vadd.f32 %v4954, %v4990
        %v5007 = vadd.f32 %v4955, %v4991
        %v5008 = vadd.f32 %v4956, %v4992
        %v5009 = vadd.f32 %v4957, %v4993
        %v5010 = vld [vmem:[%s1197] sm:$0xff]
        %v5011 = vld [vmem:[%s1197 + $0x8] sm:$0xff]
        %v5012 = vld [vmem:[%s1197 + $0x18] sm:$0xff]
        %v5013 = vld [vmem:[%s1197 + $0x20] sm:$0xff]
        %v5014 = vld [vmem:[%s1197 + $0x30] sm:$0xff]
        %v5015 = vld [vmem:[%s1197 + $0x38] sm:$0xff]
        %v5016 = vld [vmem:[%s1197 + $0x48] sm:$0xff]
        %v5017 = vld [vmem:[%s1197 + $0x50] sm:$0xff]
        %v5018 = vld [vmem:[%s1197 + $0x60] sm:$0xff]
        %v5019 = vld [vmem:[%s1197 + $0x68] sm:$0xff]
        %v5020 = vld [vmem:[%s1197 + $0x78] sm:$0xff]
        %v5021 = vld [vmem:[%s1197 + $0x80] sm:$0xff]
        %v5022 = vld [vmem:[%s1197 + $0x90] sm:$0xff]
        %v5023 = vld [vmem:[%s1197 + $0x98] sm:$0xff]
        %v5024 = vld [vmem:[%s1197 + $0xa8] sm:$0xff]
        %v5025 = vld [vmem:[%s1197 + $0xb0] sm:$0xff]
        %v5026 = vlaneseq
        %v5027 = vshrl.u32 %v5026, 7
        %v5028 = vsub.s32 3, %v5027
        %v5029 = vrot.slane %v4845, %v5028
        %v5030 = vmul.f32 %v5010, %v5029
        %v5031 = vmul.f32 %v5011, %v5029
        %v5032 = vmul.f32 %v5012, %v5029
        %v5033 = vmul.f32 %v5013, %v5029
        %v5034 = vmul.f32 %v5014, %v5029
        %v5035 = vmul.f32 %v5015, %v5029
        %v5036 = vmul.f32 %v5016, %v5029
        %v5037 = vmul.f32 %v5017, %v5029
        %v5038 = vmul.f32 %v5018, %v5029
        %v5039 = vmul.f32 %v5019, %v5029
        %v5040 = vmul.f32 %v5020, %v5029
        %v5041 = vmul.f32 %v5021, %v5029
        %v5042 = vmul.f32 %v5022, %v5029
        %v5043 = vmul.f32 %v5023, %v5029
        %v5044 = vmul.f32 %v5024, %v5029
        %v5045 = vmul.f32 %v5025, %v5029
        %v5046 = vadd.f32 %v4994, %v5030
        %v5047 = vadd.f32 %v4995, %v5031
        %v5048 = vadd.f32 %v4996, %v5032
        %v5049 = vadd.f32 %v4997, %v5033
        %v5050 = vadd.f32 %v4998, %v5034
        %v5051 = vadd.f32 %v4999, %v5035
        %v5052 = vadd.f32 %v5000, %v5036
        %v5053 = vadd.f32 %v5001, %v5037
        %v5054 = vadd.f32 %v5002, %v5038
        %v5055 = vadd.f32 %v5003, %v5039
        %v5056 = vadd.f32 %v5004, %v5040
        %v5057 = vadd.f32 %v5005, %v5041
        %v5058 = vadd.f32 %v5006, %v5042
        %v5059 = vadd.f32 %v5007, %v5043
        %v5060 = vadd.f32 %v5008, %v5044
        %v5061 = vadd.f32 %v5009, %v5045
        %v5062 = vld [vmem:[%s1197 + $0x1] sm:$0xff]
        %v5063 = vld [vmem:[%s1197 + $0x9] sm:$0xff]
        %v5064 = vld [vmem:[%s1197 + $0x19] sm:$0xff]
        %v5065 = vld [vmem:[%s1197 + $0x21] sm:$0xff]
        %v5066 = vld [vmem:[%s1197 + $0x31] sm:$0xff]
        %v5067 = vld [vmem:[%s1197 + $0x39] sm:$0xff]
        %v5068 = vld [vmem:[%s1197 + $0x49] sm:$0xff]
        %v5069 = vld [vmem:[%s1197 + $0x51] sm:$0xff]
        %v5070 = vld [vmem:[%s1197 + $0x61] sm:$0xff]
        %v5071 = vld [vmem:[%s1197 + $0x69] sm:$0xff]
        %v5072 = vld [vmem:[%s1197 + $0x79] sm:$0xff]
        %v5073 = vld [vmem:[%s1197 + $0x81] sm:$0xff]
        %v5074 = vld [vmem:[%s1197 + $0x91] sm:$0xff]
        %v5075 = vld [vmem:[%s1197 + $0x99] sm:$0xff]
        %v5076 = vld [vmem:[%s1197 + $0xa9] sm:$0xff]
        %v5077 = vld [vmem:[%s1197 + $0xb1] sm:$0xff]
        %v5078 = vlaneseq
        %v5079 = vshrl.u32 %v5078, 7
        %v5080 = vsub.s32 4, %v5079
        %v5081 = vrot.slane %v4845, %v5080
        %v5082 = vmul.f32 %v5062, %v5081
        %v5083 = vmul.f32 %v5063, %v5081
        %v5084 = vmul.f32 %v5064, %v5081
        %v5085 = vmul.f32 %v5065, %v5081
        %v5086 = vmul.f32 %v5066, %v5081
        %v5087 = vmul.f32 %v5067, %v5081
        %v5088 = vmul.f32 %v5068, %v5081
        %v5089 = vmul.f32 %v5069, %v5081
        %v5090 = vmul.f32 %v5070, %v5081
        %v5091 = vmul.f32 %v5071, %v5081
        %v5092 = vmul.f32 %v5072, %v5081
        %v5093 = vmul.f32 %v5073, %v5081
        %v5094 = vmul.f32 %v5074, %v5081
        %v5095 = vmul.f32 %v5075, %v5081
        %v5096 = vmul.f32 %v5076, %v5081
        %v5097 = vmul.f32 %v5077, %v5081
        %v5098 = vadd.f32 %v5046, %v5082
        %v5099 = vadd.f32 %v5047, %v5083
        %v5100 = vadd.f32 %v5048, %v5084
        %v5101 = vadd.f32 %v5049, %v5085
        %v5102 = vadd.f32 %v5050, %v5086
        %v5103 = vadd.f32 %v5051, %v5087
        %v5104 = vadd.f32 %v5052, %v5088
        %v5105 = vadd.f32 %v5053, %v5089
        %v5106 = vadd.f32 %v5054, %v5090
        %v5107 = vadd.f32 %v5055, %v5091
        %v5108 = vadd.f32 %v5056, %v5092
        %v5109 = vadd.f32 %v5057, %v5093
        %v5110 = vadd.f32 %v5058, %v5094
        %v5111 = vadd.f32 %v5059, %v5095
        %v5112 = vadd.f32 %v5060, %v5096
        %v5113 = vadd.f32 %v5061, %v5097
        %v5114 = vld [vmem:[%s1197 + $0x2] sm:$0xff]
        %v5115 = vld [vmem:[%s1197 + $0xa] sm:$0xff]
        %v5116 = vld [vmem:[%s1197 + $0x1a] sm:$0xff]
        %v5117 = vld [vmem:[%s1197 + $0x22] sm:$0xff]
        %v5118 = vld [vmem:[%s1197 + $0x32] sm:$0xff]
        %v5119 = vld [vmem:[%s1197 + $0x3a] sm:$0xff]
        %v5120 = vld [vmem:[%s1197 + $0x4a] sm:$0xff]
        %v5121 = vld [vmem:[%s1197 + $0x52] sm:$0xff]
        %v5122 = vld [vmem:[%s1197 + $0x62] sm:$0xff]
        %v5123 = vld [vmem:[%s1197 + $0x6a] sm:$0xff]
        %v5124 = vld [vmem:[%s1197 + $0x7a] sm:$0xff]
        %v5125 = vld [vmem:[%s1197 + $0x82] sm:$0xff]
        %v5126 = vld [vmem:[%s1197 + $0x92] sm:$0xff]
        %v5127 = vld [vmem:[%s1197 + $0x9a] sm:$0xff]
        %v5128 = vld [vmem:[%s1197 + $0xaa] sm:$0xff]
        %v5129 = vld [vmem:[%s1197 + $0xb2] sm:$0xff]
        %v5130 = vlaneseq
        %v5131 = vshrl.u32 %v5130, 7
        %v5132 = vsub.s32 5, %v5131
        %v5133 = vrot.slane %v4845, %v5132
        %v5134 = vmul.f32 %v5114, %v5133
        %v5135 = vmul.f32 %v5115, %v5133
        %v5136 = vmul.f32 %v5116, %v5133
        %v5137 = vmul.f32 %v5117, %v5133
        %v5138 = vmul.f32 %v5118, %v5133
        %v5139 = vmul.f32 %v5119, %v5133
        %v5140 = vmul.f32 %v5120, %v5133
        %v5141 = vmul.f32 %v5121, %v5133
        %v5142 = vmul.f32 %v5122, %v5133
        %v5143 = vmul.f32 %v5123, %v5133
        %v5144 = vmul.f32 %v5124, %v5133
        %v5145 = vmul.f32 %v5125, %v5133
        %v5146 = vmul.f32 %v5126, %v5133
        %v5147 = vmul.f32 %v5127, %v5133
        %v5148 = vmul.f32 %v5128, %v5133
        %v5149 = vmul.f32 %v5129, %v5133
        %v5150 = vadd.f32 %v5098, %v5134
        %v5151 = vadd.f32 %v5099, %v5135
        %v5152 = vadd.f32 %v5100, %v5136
        %v5153 = vadd.f32 %v5101, %v5137
        %v5154 = vadd.f32 %v5102, %v5138
        %v5155 = vadd.f32 %v5103, %v5139
        %v5156 = vadd.f32 %v5104, %v5140
        %v5157 = vadd.f32 %v5105, %v5141
        %v5158 = vadd.f32 %v5106, %v5142
        %v5159 = vadd.f32 %v5107, %v5143
        %v5160 = vadd.f32 %v5108, %v5144
        %v5161 = vadd.f32 %v5109, %v5145
        %v5162 = vadd.f32 %v5110, %v5146
        %v5163 = vadd.f32 %v5111, %v5147
        %v5164 = vadd.f32 %v5112, %v5148
        %v5165 = vadd.f32 %v5113, %v5149
        %v5166 = vld [vmem:[%s2243] sm:$0xff]
        %v5167 = vld [vmem:[%s2243 + $0x8] sm:$0xff]
        %v5168 = vld [vmem:[%s2243 + $0x18] sm:$0xff]
        %v5169 = vld [vmem:[%s2243 + $0x20] sm:$0xff]
        %v5170 = vld [vmem:[%s2243 + $0x30] sm:$0xff]
        %v5171 = vld [vmem:[%s2243 + $0x38] sm:$0xff]
        %v5172 = vld [vmem:[%s2243 + $0x48] sm:$0xff]
        %v5173 = vld [vmem:[%s2243 + $0x50] sm:$0xff]
        %v5174 = vld [vmem:[%s2243 + $0x60] sm:$0xff]
        %v5175 = vld [vmem:[%s2243 + $0x68] sm:$0xff]
        %v5176 = vld [vmem:[%s2243 + $0x78] sm:$0xff]
        %v5177 = vld [vmem:[%s2243 + $0x80] sm:$0xff]
        %v5178 = vld [vmem:[%s2243 + $0x90] sm:$0xff]
        %v5179 = vld [vmem:[%s2243 + $0x98] sm:$0xff]
        %v5180 = vld [vmem:[%s2243 + $0xa8] sm:$0xff]
        %v5181 = vld [vmem:[%s2243 + $0xb0] sm:$0xff]
        %v5182 = vlaneseq
        %v5183 = vshrl.u32 %v5182, 7
        %v5184 = vsub.s32 6, %v5183
        %v5185 = vrot.slane %v4845, %v5184
        %v5186 = vmul.f32 %v5166, %v5185
        %v5187 = vmul.f32 %v5167, %v5185
        %v5188 = vmul.f32 %v5168, %v5185
        %v5189 = vmul.f32 %v5169, %v5185
        %v5190 = vmul.f32 %v5170, %v5185
        %v5191 = vmul.f32 %v5171, %v5185
        %v5192 = vmul.f32 %v5172, %v5185
        %v5193 = vmul.f32 %v5173, %v5185
        %v5194 = vmul.f32 %v5174, %v5185
        %v5195 = vmul.f32 %v5175, %v5185
        %v5196 = vmul.f32 %v5176, %v5185
        %v5197 = vmul.f32 %v5177, %v5185
        %v5198 = vmul.f32 %v5178, %v5185
        %v5199 = vmul.f32 %v5179, %v5185
        %v5200 = vmul.f32 %v5180, %v5185
        %v5201 = vmul.f32 %v5181, %v5185
        %v5202 = vadd.f32 %v5150, %v5186
        %v5203 = vadd.f32 %v5151, %v5187
        %v5204 = vadd.f32 %v5152, %v5188
        %v5205 = vadd.f32 %v5153, %v5189
        %v5206 = vadd.f32 %v5154, %v5190
        %v5207 = vadd.f32 %v5155, %v5191
        %v5208 = vadd.f32 %v5156, %v5192
        %v5209 = vadd.f32 %v5157, %v5193
        %v5210 = vadd.f32 %v5158, %v5194
        %v5211 = vadd.f32 %v5159, %v5195
        %v5212 = vadd.f32 %v5160, %v5196
        %v5213 = vadd.f32 %v5161, %v5197
        %v5214 = vadd.f32 %v5162, %v5198
        %v5215 = vadd.f32 %v5163, %v5199
        %v5216 = vadd.f32 %v5164, %v5200
        %v5217 = vadd.f32 %v5165, %v5201
        %v5218 = vld [vmem:[%s2243 + $0x1] sm:$0xff]
        %v5219 = vld [vmem:[%s2243 + $0x9] sm:$0xff]
        %v5220 = vld [vmem:[%s2243 + $0x19] sm:$0xff]
        %v5221 = vld [vmem:[%s2243 + $0x21] sm:$0xff]
        %v5222 = vld [vmem:[%s2243 + $0x31] sm:$0xff]
        %v5223 = vld [vmem:[%s2243 + $0x39] sm:$0xff]
        %v5224 = vld [vmem:[%s2243 + $0x49] sm:$0xff]
        %v5225 = vld [vmem:[%s2243 + $0x51] sm:$0xff]
        %v5226 = vld [vmem:[%s2243 + $0x61] sm:$0xff]
        %v5227 = vld [vmem:[%s2243 + $0x69] sm:$0xff]
        %v5228 = vld [vmem:[%s2243 + $0x79] sm:$0xff]
        %v5229 = vld [vmem:[%s2243 + $0x81] sm:$0xff]
        %v5230 = vld [vmem:[%s2243 + $0x91] sm:$0xff]
        %v5231 = vld [vmem:[%s2243 + $0x99] sm:$0xff]
        %v5232 = vld [vmem:[%s2243 + $0xa9] sm:$0xff]
        %v5233 = vld [vmem:[%s2243 + $0xb1] sm:$0xff]
        %v5234 = vlaneseq
        %v5235 = vshrl.u32 %v5234, 7
        %v5236 = vsub.s32 7, %v5235
        %v5237 = vrot.slane %v4845, %v5236
        %v5238 = vmul.f32 %v5218, %v5237
        %v5239 = vmul.f32 %v5219, %v5237
        %v5240 = vmul.f32 %v5220, %v5237
        %v5241 = vmul.f32 %v5221, %v5237
        %v5242 = vmul.f32 %v5222, %v5237
        %v5243 = vmul.f32 %v5223, %v5237
        %v5244 = vmul.f32 %v5224, %v5237
        %v5245 = vmul.f32 %v5225, %v5237
        %v5246 = vmul.f32 %v5226, %v5237
        %v5247 = vmul.f32 %v5227, %v5237
        %v5248 = vmul.f32 %v5228, %v5237
        %v5249 = vmul.f32 %v5229, %v5237
        %v5250 = vmul.f32 %v5230, %v5237
        %v5251 = vmul.f32 %v5231, %v5237
        %v5252 = vmul.f32 %v5232, %v5237
        %v5253 = vmul.f32 %v5233, %v5237
        %v5254 = vadd.f32 %v5202, %v5238
        %v5255 = vadd.f32 %v5203, %v5239
        %v5256 = vadd.f32 %v5204, %v5240
        %v5257 = vadd.f32 %v5205, %v5241
        %v5258 = vadd.f32 %v5206, %v5242
        %v5259 = vadd.f32 %v5207, %v5243
        %v5260 = vadd.f32 %v5208, %v5244
        %v5261 = vadd.f32 %v5209, %v5245
        %v5262 = vadd.f32 %v5210, %v5246
        %v5263 = vadd.f32 %v5211, %v5247
        %v5264 = vadd.f32 %v5212, %v5248
        %v5265 = vadd.f32 %v5213, %v5249
        %v5266 = vadd.f32 %v5214, %v5250
        %v5267 = vadd.f32 %v5215, %v5251
        %v5268 = vadd.f32 %v5216, %v5252
        %v5269 = vadd.f32 %v5217, %v5253
        %v5270 = vld [vmem:[%s2243 + $0x2] sm:$0xff]
        %v5271 = vld [vmem:[%s2243 + $0xa] sm:$0xff]
        %v5272 = vld [vmem:[%s2243 + $0x1a] sm:$0xff]
        %v5273 = vld [vmem:[%s2243 + $0x22] sm:$0xff]
        %v5274 = vld [vmem:[%s2243 + $0x32] sm:$0xff]
        %v5275 = vld [vmem:[%s2243 + $0x3a] sm:$0xff]
        %v5276 = vld [vmem:[%s2243 + $0x4a] sm:$0xff]
        %v5277 = vld [vmem:[%s2243 + $0x52] sm:$0xff]
        %v5278 = vld [vmem:[%s2243 + $0x62] sm:$0xff]
        %v5279 = vld [vmem:[%s2243 + $0x6a] sm:$0xff]
        %v5280 = vld [vmem:[%s2243 + $0x7a] sm:$0xff]
        %v5281 = vld [vmem:[%s2243 + $0x82] sm:$0xff]
        %v5282 = vld [vmem:[%s2243 + $0x92] sm:$0xff]
        %v5283 = vld [vmem:[%s2243 + $0x9a] sm:$0xff]
        %v5284 = vld [vmem:[%s2243 + $0xaa] sm:$0xff]
        %v5285 = vld [vmem:[%s2243 + $0xb2] sm:$0xff]
        %v5286 = vlaneseq
        %v5287 = vshrl.u32 %v5286, 7
        %v5288 = vsub.s32 0, %v5287
        %v5289 = vrot.slane %v4846, %v5288
        %v5290 = vmul.f32 %v5270, %v5289
        %v5291 = vmul.f32 %v5271, %v5289
        %v5292 = vmul.f32 %v5272, %v5289
        %v5293 = vmul.f32 %v5273, %v5289
        %v5294 = vmul.f32 %v5274, %v5289
        %v5295 = vmul.f32 %v5275, %v5289
        %v5296 = vmul.f32 %v5276, %v5289
        %v5297 = vmul.f32 %v5277, %v5289
        %v5298 = vmul.f32 %v5278, %v5289
        %v5299 = vmul.f32 %v5279, %v5289
        %v5300 = vmul.f32 %v5280, %v5289
        %v5301 = vmul.f32 %v5281, %v5289
        %v5302 = vmul.f32 %v5282, %v5289
        %v5303 = vmul.f32 %v5283, %v5289
        %v5304 = vmul.f32 %v5284, %v5289
        %v5305 = vmul.f32 %v5285, %v5289
        %v5306 = vadd.f32 %v5254, %v5290
        %v5307 = vadd.f32 %v5255, %v5291
        %v5308 = vadd.f32 %v5256, %v5292
        %v5309 = vadd.f32 %v5257, %v5293
        %v5310 = vadd.f32 %v5258, %v5294
        %v5311 = vadd.f32 %v5259, %v5295
        %v5312 = vadd.f32 %v5260, %v5296
        %v5313 = vadd.f32 %v5261, %v5297
        %v5314 = vadd.f32 %v5262, %v5298
        %v5315 = vadd.f32 %v5263, %v5299
        %v5316 = vadd.f32 %v5264, %v5300
        %v5317 = vadd.f32 %v5265, %v5301
        %v5318 = vadd.f32 %v5266, %v5302
        %v5319 = vadd.f32 %v5267, %v5303
        %v5320 = vadd.f32 %v5268, %v5304
        %v5321 = vadd.f32 %v5269, %v5305
        %v5323 = vlaneseq
        %v5324 = vshrl.u32 %v5323, 7
        %v5325 = vsub.s32 0, %v5324
        %v5326 = vrot.slane %v4853, %v5325
        %v5329 = vsel %vm285, %v5306, 0
        %v5332 = vsel %vm285, %v5307, 0
        %v5335 = vsel %vm285, %v5308, 0
        %v5338 = vsel %vm285, %v5309, 0
        %v5341 = vsel %vm285, %v5310, 0
        %v5344 = vsel %vm285, %v5311, 0
        %v5347 = vsel %vm285, %v5312, 0
        %v5350 = vsel %vm285, %v5313, 0
        %v5353 = vsel %vm285, %v5314, 0
        %v5356 = vsel %vm285, %v5315, 0
        %v5359 = vsel %vm285, %v5316, 0
        %v5362 = vsel %vm285, %v5317, 0
        %v5365 = vsel %vm285, %v5318, 0
        %v5368 = vsel %vm285, %v5319, 0
        %v5371 = vsel %vm285, %v5320, 0
        %v5374 = vsel %vm285, %v5321, 0
        %5376 = vmatprep.subr.mxu0 0.0
        %5377 = vmatpush1.msra.mxu0 %v4848
        %5378 = vmatprep.subr.mxu0 0.0
        %5379 = vmatpush1.msra.mxu0 %v4849
        %5380 = vmatprep.subr.mxu0 0.0
        %5381 = vmatpush1.msra.mxu0 %v4850
        %5382 = vmatprep.subr.mxu0 0.0
        %5383 = vmatpush1.msra.mxu0 %v4851
        %5384 = vmatprep.subr.mxu0 0.0
        %5385 = vmatpush1.msra.mxu0 0.0
        %5386 = vmatprep.subr.mxu0 0.0
        %5387 = vmatpush1.msra.mxu0 0.0
        %5388 = vmatprep.subr.mxu0 0.0
        %5389 = vmatpush1.msra.mxu0 0.0
        %5390 = vmatprep.subr.mxu0 0.0
        %5391 = vmatpush1.msra.mxu0 0.0
        %5392 = vmatprep.subr.mxu0 0.0
        %5393 = vmatpush1.msra.mxu0 0.0
        %5394 = vmatprep.subr.mxu0 0.0
        %5395 = vmatpush1.msra.mxu0 0.0
        %5396 = vmatprep.subr.mxu0 0.0
        %5397 = vmatpush1.msra.mxu0 0.0
        %5398 = vmatprep.subr.mxu0 0.0
        %5399 = vmatpush1.msra.mxu0 0.0
        %5400 = vmatprep.subr.mxu0 0.0
        %5401 = vmatpush1.msra.mxu0 0.0
        %5402 = vmatprep.subr.mxu0 0.0
        %5403 = vmatpush1.msra.mxu0 0.0
        %5404 = vmatprep.subr.mxu0 0.0
        %5405 = vmatpush1.msra.mxu0 0.0
        %5406 = vmatprep.subr.mxu0 0.0
        %5407 = vmatpush1.msra.mxu0 0.0
        %5408 = vmatprep.subr.mxu0 0.0
        %5409 = vmatpush1.msra.mxu0 0.0
        %5410 = vmatprep.subr.mxu0 0.0
        %5411 = vmatpush1.msra.mxu0 0.0
        %5412 = vmatprep.subr.mxu0 0.0
        %5413 = vmatpush1.msra.mxu0 0.0
        %5414 = vmatprep.subr.mxu0 0.0
        %5415 = vmatpush1.msra.mxu0 0.0
        %5416 = vmatprep.subr.mxu0 0.0
        %5417 = vmatpush1.msra.mxu0 0.0
        %5418 = vmatprep.subr.mxu0 0.0
        %5419 = vmatpush1.msra.mxu0 0.0
        %5420 = vmatprep.subr.mxu0 0.0
        %5421 = vmatpush1.msra.mxu0 0.0
        %5422 = vmatprep.subr.mxu0 0.0
        %5423 = vmatpush1.msra.mxu0 0.0
        %5424 = vmatprep.subr.mxu0 0.0
        %5425 = vmatpush1.msra.mxu0 0.0
        %5426 = vmatprep.subr.mxu0 0.0
        %5427 = vmatpush1.msra.mxu0 0.0
        %5428 = vmatprep.subr.mxu0 0.0
        %5429 = vmatpush1.msra.mxu0 0.0
        %5430 = vmatprep.subr.mxu0 0.0
        %5431 = vmatpush1.msra.mxu0 0.0
        %5432 = vmatprep.subr.mxu0 0.0
        %5433 = vmatpush1.msra.mxu0 0.0
        %5434 = vmatprep.subr.mxu0 0.0
        %5435 = vmatpush1.msra.mxu0 0.0
        %5436 = vmatprep.subr.mxu0 0.0
        %5437 = vmatpush1.msra.mxu0 0.0
        %5438 = vmatprep.subr.mxu0 0.0
        %5439 = vmatpush1.msra.mxu0 0.0
        %5440 = vmatprep.mubr.f32.mxu0 0.0
        %5441 = vmatmul.mubr.f32.gmra.mrb[0].mxu0 %v5329
        %v5442 = vpop.f32.mrb[0].mxu0
        %v5443 = vadd.f32 %v5326, %v5442
        %v5444 = vpop.f32.mrb[0].mxu0
        %5445 = vmatprep.mubr.f32.mxu0 0.0
        %5446 = vmatmul.mubr.f32.gmra.mrb[0].mxu0 %v5332
        %v5447 = vpop.f32.mrb[0].mxu0
        %v5448 = vadd.f32 %v5326, %v5447
        %v5449 = vpop.f32.mrb[0].mxu0
        %5450 = vmatprep.mubr.f32.mxu0 0.0
        %5451 = vmatmul.mubr.f32.gmra.mrb[0].mxu0 %v5335
        %v5452 = vpop.f32.mrb[0].mxu0
        %v5453 = vadd.f32 %v5326, %v5452
        %v5454 = vpop.f32.mrb[0].mxu0
        %5455 = vmatprep.mubr.f32.mxu0 0.0
        %5456 = vmatmul.mubr.f32.gmra.mrb[0].mxu0 %v5338
        %v5457 = vpop.f32.mrb[0].mxu0
        %v5458 = vadd.f32 %v5326, %v5457
        %v5459 = vpop.f32.mrb[0].mxu0
        %5460 = vmatprep.mubr.f32.mxu0 0.0
        %5461 = vmatmul.mubr.f32.gmra.mrb[0].mxu0 %v5341
        %v5462 = vpop.f32.mrb[0].mxu0
        %v5463 = vadd.f32 %v5326, %v5462
        %v5464 = vpop.f32.mrb[0].mxu0
        %5465 = vmatprep.mubr.f32.mxu0 0.0
        %5466 = vmatmul.mubr.f32.gmra.mrb[0].mxu0 %v5344
        %v5467 = vpop.f32.mrb[0].mxu0
        %v5468 = vadd.f32 %v5326, %v5467
        %v5469 = vpop.f32.mrb[0].mxu0
        %5470 = vmatprep.mubr.f32.mxu0 0.0
        %5471 = vmatmul.mubr.f32.gmra.mrb[0].mxu0 %v5347
        %v5472 = vpop.f32.mrb[0].mxu0
        %v5473 = vadd.f32 %v5326, %v5472
        %v5474 = vpop.f32.mrb[0].mxu0
        %5475 = vmatprep.mubr.f32.mxu0 0.0
        %5476 = vmatmul.mubr.f32.gmra.mrb[0].mxu0 %v5350
        %v5477 = vpop.f32.mrb[0].mxu0
        %v5478 = vadd.f32 %v5326, %v5477
        %v5479 = vpop.f32.mrb[0].mxu0
        %5480 = vmatprep.mubr.f32.mxu0 0.0
        %5481 = vmatmul.mubr.f32.gmra.mrb[0].mxu0 %v5353
        %v5482 = vpop.f32.mrb[0].mxu0
        %v5483 = vadd.f32 %v5326, %v5482
        %v5484 = vpop.f32.mrb[0].mxu0
        %5485 = vmatprep.mubr.f32.mxu0 0.0
        %5486 = vmatmul.mubr.f32.gmra.mrb[0].mxu0 %v5356
        %v5487 = vpop.f32.mrb[0].mxu0
        %v5488 = vadd.f32 %v5326, %v5487
        %v5489 = vpop.f32.mrb[0].mxu0
        %5490 = vmatprep.mubr.f32.mxu0 0.0
        %5491 = vmatmul.mubr.f32.gmra.mrb[0].mxu0 %v5359
        %v5492 = vpop.f32.mrb[0].mxu0
        %v5493 = vadd.f32 %v5326, %v5492
        %v5494 = vpop.f32.mrb[0].mxu0
        %5495 = vmatprep.mubr.f32.mxu0 0.0
        %5496 = vmatmul.mubr.f32.gmra.mrb[0].mxu0 %v5362
        %v5497 = vpop.f32.mrb[0].mxu0
        %v5498 = vadd.f32 %v5326, %v5497
        %v5499 = vpop.f32.mrb[0].mxu0
        %5500 = vmatprep.mubr.f32.mxu0 0.0
        %5501 = vmatmul.mubr.f32.gmra.mrb[0].mxu0 %v5365
        %v5502 = vpop.f32.mrb[0].mxu0
        %v5503 = vadd.f32 %v5326, %v5502
        %v5504 = vpop.f32.mrb[0].mxu0
        %5505 = vmatprep.mubr.f32.mxu0 0.0
        %5506 = vmatmul.mubr.f32.gmra.mrb[0].mxu0 %v5368
        %v5507 = vpop.f32.mrb[0].mxu0
        %v5508 = vadd.f32 %v5326, %v5507
        %v5509 = vpop.f32.mrb[0].mxu0
        %5510 = vmatprep.mubr.f32.mxu0 0.0
        %5511 = vmatmul.mubr.f32.gmra.mrb[0].mxu0 %v5371
        %v5512 = vpop.f32.mrb[0].mxu0
        %v5513 = vadd.f32 %v5326, %v5512
        %v5514 = vpop.f32.mrb[0].mxu0
        %5515 = vmatprep.mubr.f32.mxu0 0.0
        %5516 = vmatmul.mubr.f32.gmra.mrb[0].mxu0 %v5374
        %v5517 = vpop.f32.mrb[0].mxu0
        %v5518 = vadd.f32 %v5326, %v5517
        %v5519 = vpop.f32.mrb[0].mxu0
        %5520 = vdwg.mxu0
        %5521 = vst.msk [vmem:[%s284] sm:$0xff] %vm285, %v5443
        %5522 = vst.msk [vmem:[%s284 + $0x8] sm:$0xff] %vm285, %v5448
        %5523 = vst.msk [vmem:[%s284 + $0x10] sm:$0xff] %vm285, %v5453
        %5524 = vst.msk [vmem:[%s284 + $0x18] sm:$0xff] %vm285, %v5458
        %5525 = vst.msk [vmem:[%s284 + $0x20] sm:$0xff] %vm285, %v5463
        %5526 = vst.msk [vmem:[%s284 + $0x28] sm:$0xff] %vm285, %v5468
        %5527 = vst.msk [vmem:[%s284 + $0x30] sm:$0xff] %vm285, %v5473
        %5528 = vst.msk [vmem:[%s284 + $0x38] sm:$0xff] %vm285, %v5478
        %5529 = vst.msk [vmem:[%s284 + $0x40] sm:$0xff] %vm285, %v5483
        %5530 = vst.msk [vmem:[%s284 + $0x48] sm:$0xff] %vm285, %v5488
        %5531 = vst.msk [vmem:[%s284 + $0x50] sm:$0xff] %vm285, %v5493
        %5532 = vst.msk [vmem:[%s284 + $0x58] sm:$0xff] %vm285, %v5498
        %5533 = vst.msk [vmem:[%s284 + $0x60] sm:$0xff] %vm285, %v5503
        %5534 = vst.msk [vmem:[%s284 + $0x68] sm:$0xff] %vm285, %v5508
        %5535 = vst.msk [vmem:[%s284 + $0x70] sm:$0xff] %vm285, %v5513
        %5536 = vst.msk [vmem:[%s284 + $0x78] sm:$0xff] %vm285, %v5518
        %v5537 = vld [vmem:[%s2679] sm:$0xff]
        %v5538 = vld [vmem:[%s2679 + $0x8] sm:$0xff]
        %v5539 = vld [vmem:[%s2679 + $0x18] sm:$0xff]
        %v5540 = vld [vmem:[%s2679 + $0x20] sm:$0xff]
        %v5541 = vld [vmem:[%s2679 + $0x30] sm:$0xff]
        %v5542 = vld [vmem:[%s2679 + $0x38] sm:$0xff]
        %v5543 = vld [vmem:[%s2679 + $0x48] sm:$0xff]
        %v5544 = vld [vmem:[%s2679 + $0x50] sm:$0xff]
        %v5545 = vld [vmem:[%s2679 + $0x60] sm:$0xff]
        %v5546 = vld [vmem:[%s2679 + $0x68] sm:$0xff]
        %v5547 = vld [vmem:[%s2679 + $0x78] sm:$0xff]
        %v5548 = vld [vmem:[%s2679 + $0x80] sm:$0xff]
        %v5549 = vld [vmem:[%s2679 + $0x90] sm:$0xff]
        %v5550 = vld [vmem:[%s2679 + $0x98] sm:$0xff]
        %v5551 = vld [vmem:[%s2679 + $0xa8] sm:$0xff]
        %v5552 = vld [vmem:[%s2679 + $0xb0] sm:$0xff]
        %v5553 = vmul.f32 %v5537, %v4873
        %v5554 = vmul.f32 %v5538, %v4873
        %v5555 = vmul.f32 %v5539, %v4873
        %v5556 = vmul.f32 %v5540, %v4873
        %v5557 = vmul.f32 %v5541, %v4873
        %v5558 = vmul.f32 %v5542, %v4873
        %v5559 = vmul.f32 %v5543, %v4873
        %v5560 = vmul.f32 %v5544, %v4873
        %v5561 = vmul.f32 %v5545, %v4873
        %v5562 = vmul.f32 %v5546, %v4873
        %v5563 = vmul.f32 %v5547, %v4873
        %v5564 = vmul.f32 %v5548, %v4873
        %v5565 = vmul.f32 %v5549, %v4873
        %v5566 = vmul.f32 %v5550, %v4873
        %v5567 = vmul.f32 %v5551, %v4873
        %v5568 = vmul.f32 %v5552, %v4873
        %v5569 = vadd.f32 %v5553, 0.0
        %v5570 = vadd.f32 %v5554, 0.0
        %v5571 = vadd.f32 %v5555, 0.0
        %v5572 = vadd.f32 %v5556, 0.0
        %v5573 = vadd.f32 %v5557, 0.0
        %v5574 = vadd.f32 %v5558, 0.0
        %v5575 = vadd.f32 %v5559, 0.0
        %v5576 = vadd.f32 %v5560, 0.0
        %v5577 = vadd.f32 %v5561, 0.0
        %v5578 = vadd.f32 %v5562, 0.0
        %v5579 = vadd.f32 %v5563, 0.0
        %v5580 = vadd.f32 %v5564, 0.0
        %v5581 = vadd.f32 %v5565, 0.0
        %v5582 = vadd.f32 %v5566, 0.0
        %v5583 = vadd.f32 %v5567, 0.0
        %v5584 = vadd.f32 %v5568, 0.0
        %v5585 = vld [vmem:[%s2679 + $0x1] sm:$0xff]
        %v5586 = vld [vmem:[%s2679 + $0x9] sm:$0xff]
        %v5587 = vld [vmem:[%s2679 + $0x19] sm:$0xff]
        %v5588 = vld [vmem:[%s2679 + $0x21] sm:$0xff]
        %v5589 = vld [vmem:[%s2679 + $0x31] sm:$0xff]
        %v5590 = vld [vmem:[%s2679 + $0x39] sm:$0xff]
        %v5591 = vld [vmem:[%s2679 + $0x49] sm:$0xff]
        %v5592 = vld [vmem:[%s2679 + $0x51] sm:$0xff]
        %v5593 = vld [vmem:[%s2679 + $0x61] sm:$0xff]
        %v5594 = vld [vmem:[%s2679 + $0x69] sm:$0xff]
        %v5595 = vld [vmem:[%s2679 + $0x79] sm:$0xff]
        %v5596 = vld [vmem:[%s2679 + $0x81] sm:$0xff]
        %v5597 = vld [vmem:[%s2679 + $0x91] sm:$0xff]
        %v5598 = vld [vmem:[%s2679 + $0x99] sm:$0xff]
        %v5599 = vld [vmem:[%s2679 + $0xa9] sm:$0xff]
        %v5600 = vld [vmem:[%s2679 + $0xb1] sm:$0xff]
        %v5601 = vmul.f32 %v5585, %v4925
        %v5602 = vmul.f32 %v5586, %v4925
        %v5603 = vmul.f32 %v5587, %v4925
        %v5604 = vmul.f32 %v5588, %v4925
        %v5605 = vmul.f32 %v5589, %v4925
        %v5606 = vmul.f32 %v5590, %v4925
        %v5607 = vmul.f32 %v5591, %v4925
        %v5608 = vmul.f32 %v5592, %v4925
        %v5609 = vmul.f32 %v5593, %v4925
        %v5610 = vmul.f32 %v5594, %v4925
        %v5611 = vmul.f32 %v5595, %v4925
        %v5612 = vmul.f32 %v5596, %v4925
        %v5613 = vmul.f32 %v5597, %v4925
        %v5614 = vmul.f32 %v5598, %v4925
        %v5615 = vmul.f32 %v5599, %v4925
        %v5616 = vmul.f32 %v5600, %v4925
        %v5617 = vadd.f32 %v5569, %v5601
        %v5618 = vadd.f32 %v5570, %v5602
        %v5619 = vadd.f32 %v5571, %v5603
        %v5620 = vadd.f32 %v5572, %v5604
        %v5621 = vadd.f32 %v5573, %v5605
        %v5622 = vadd.f32 %v5574, %v5606
        %v5623 = vadd.f32 %v5575, %v5607
        %v5624 = vadd.f32 %v5576, %v5608
        %v5625 = vadd.f32 %v5577, %v5609
        %v5626 = vadd.f32 %v5578, %v5610
        %v5627 = vadd.f32 %v5579, %v5611
        %v5628 = vadd.f32 %v5580, %v5612
        %v5629 = vadd.f32 %v5581, %v5613
        %v5630 = vadd.f32 %v5582, %v5614
        %v5631 = vadd.f32 %v5583, %v5615
        %v5632 = vadd.f32 %v5584, %v5616
        %v5633 = vld [vmem:[%s2679 + $0x2] sm:$0xff]
        %v5634 = vld [vmem:[%s2679 + $0xa] sm:$0xff]
        %v5635 = vld [vmem:[%s2679 + $0x1a] sm:$0xff]
        %v5636 = vld [vmem:[%s2679 + $0x22] sm:$0xff]
        %v5637 = vld [vmem:[%s2679 + $0x32] sm:$0xff]
        %v5638 = vld [vmem:[%s2679 + $0x3a] sm:$0xff]
        %v5639 = vld [vmem:[%s2679 + $0x4a] sm:$0xff]
        %v5640 = vld [vmem:[%s2679 + $0x52] sm:$0xff]
        %v5641 = vld [vmem:[%s2679 + $0x62] sm:$0xff]
        %v5642 = vld [vmem:[%s2679 + $0x6a] sm:$0xff]
        %v5643 = vld [vmem:[%s2679 + $0x7a] sm:$0xff]
        %v5644 = vld [vmem:[%s2679 + $0x82] sm:$0xff]
        %v5645 = vld [vmem:[%s2679 + $0x92] sm:$0xff]
        %v5646 = vld [vmem:[%s2679 + $0x9a] sm:$0xff]
        %v5647 = vld [vmem:[%s2679 + $0xaa] sm:$0xff]
        %v5648 = vld [vmem:[%s2679 + $0xb2] sm:$0xff]
        %v5649 = vmul.f32 %v5633, %v4977
        %v5650 = vmul.f32 %v5634, %v4977
        %v5651 = vmul.f32 %v5635, %v4977
        %v5652 = vmul.f32 %v5636, %v4977
        %v5653 = vmul.f32 %v5637, %v4977
        %v5654 = vmul.f32 %v5638, %v4977
        %v5655 = vmul.f32 %v5639, %v4977
        %v5656 = vmul.f32 %v5640, %v4977
        %v5657 = vmul.f32 %v5641, %v4977
        %v5658 = vmul.f32 %v5642, %v4977
        %v5659 = vmul.f32 %v5643, %v4977
        %v5660 = vmul.f32 %v5644, %v4977
        %v5661 = vmul.f32 %v5645, %v4977
        %v5662 = vmul.f32 %v5646, %v4977
        %v5663 = vmul.f32 %v5647, %v4977
        %v5664 = vmul.f32 %v5648, %v4977
        %v5665 = vadd.f32 %v5617, %v5649
        %v5666 = vadd.f32 %v5618, %v5650
        %v5667 = vadd.f32 %v5619, %v5651
        %v5668 = vadd.f32 %v5620, %v5652
        %v5669 = vadd.f32 %v5621, %v5653
        %v5670 = vadd.f32 %v5622, %v5654
        %v5671 = vadd.f32 %v5623, %v5655
        %v5672 = vadd.f32 %v5624, %v5656
        %v5673 = vadd.f32 %v5625, %v5657
        %v5674 = vadd.f32 %v5626, %v5658
        %v5675 = vadd.f32 %v5627, %v5659
        %v5676 = vadd.f32 %v5628, %v5660
        %v5677 = vadd.f32 %v5629, %v5661
        %v5678 = vadd.f32 %v5630, %v5662
        %v5679 = vadd.f32 %v5631, %v5663
        %v5680 = vadd.f32 %v5632, %v5664
        %v5681 = vld [vmem:[%s1904] sm:$0xff]
        %v5682 = vld [vmem:[%s1904 + $0x8] sm:$0xff]
        %v5683 = vld [vmem:[%s1904 + $0x18] sm:$0xff]
        %v5684 = vld [vmem:[%s1904 + $0x20] sm:$0xff]
        %v5685 = vld [vmem:[%s1904 + $0x30] sm:$0xff]
        %v5686 = vld [vmem:[%s1904 + $0x38] sm:$0xff]
        %v5687 = vld [vmem:[%s1904 + $0x48] sm:$0xff]
        %v5688 = vld [vmem:[%s1904 + $0x50] sm:$0xff]
        %v5689 = vld [vmem:[%s1904 + $0x60] sm:$0xff]
        %v5690 = vld [vmem:[%s1904 + $0x68] sm:$0xff]
        %v5691 = vld [vmem:[%s1904 + $0x78] sm:$0xff]
        %v5692 = vld [vmem:[%s1904 + $0x80] sm:$0xff]
        %v5693 = vld [vmem:[%s1904 + $0x90] sm:$0xff]
        %v5694 = vld [vmem:[%s1904 + $0x98] sm:$0xff]
        %v5695 = vld [vmem:[%s1904 + $0xa8] sm:$0xff]
        %v5696 = vld [vmem:[%s1904 + $0xb0] sm:$0xff]
        %v5697 = vmul.f32 %v5681, %v5029
        %v5698 = vmul.f32 %v5682, %v5029
        %v5699 = vmul.f32 %v5683, %v5029
        %v5700 = vmul.f32 %v5684, %v5029
        %v5701 = vmul.f32 %v5685, %v5029
        %v5702 = vmul.f32 %v5686, %v5029
        %v5703 = vmul.f32 %v5687, %v5029
        %v5704 = vmul.f32 %v5688, %v5029
        %v5705 = vmul.f32 %v5689, %v5029
        %v5706 = vmul.f32 %v5690, %v5029
        %v5707 = vmul.f32 %v5691, %v5029
        %v5708 = vmul.f32 %v5692, %v5029
        %v5709 = vmul.f32 %v5693, %v5029
        %v5710 = vmul.f32 %v5694, %v5029
        %v5711 = vmul.f32 %v5695, %v5029
        %v5712 = vmul.f32 %v5696, %v5029
        %v5713 = vadd.f32 %v5665, %v5697
        %v5714 = vadd.f32 %v5666, %v5698
        %v5715 = vadd.f32 %v5667, %v5699
        %v5716 = vadd.f32 %v5668, %v5700
        %v5717 = vadd.f32 %v5669, %v5701
        %v5718 = vadd.f32 %v5670, %v5702
        %v5719 = vadd.f32 %v5671, %v5703
        %v5720 = vadd.f32 %v5672, %v5704
        %v5721 = vadd.f32 %v5673, %v5705
        %v5722 = vadd.f32 %v5674, %v5706
        %v5723 = vadd.f32 %v5675, %v5707
        %v5724 = vadd.f32 %v5676, %v5708
        %v5725 = vadd.f32 %v5677, %v5709
        %v5726 = vadd.f32 %v5678, %v5710
        %v5727 = vadd.f32 %v5679, %v5711
        %v5728 = vadd.f32 %v5680, %v5712
        %v5729 = vld [vmem:[%s1904 + $0x1] sm:$0xff]
        %v5730 = vld [vmem:[%s1904 + $0x9] sm:$0xff]
        %v5731 = vld [vmem:[%s1904 + $0x19] sm:$0xff]
        %v5732 = vld [vmem:[%s1904 + $0x21] sm:$0xff]
        %v5733 = vld [vmem:[%s1904 + $0x31] sm:$0xff]
        %v5734 = vld [vmem:[%s1904 + $0x39] sm:$0xff]
        %v5735 = vld [vmem:[%s1904 + $0x49] sm:$0xff]
        %v5736 = vld [vmem:[%s1904 + $0x51] sm:$0xff]
        %v5737 = vld [vmem:[%s1904 + $0x61] sm:$0xff]
        %v5738 = vld [vmem:[%s1904 + $0x69] sm:$0xff]
        %v5739 = vld [vmem:[%s1904 + $0x79] sm:$0xff]
        %v5740 = vld [vmem:[%s1904 + $0x81] sm:$0xff]
        %v5741 = vld [vmem:[%s1904 + $0x91] sm:$0xff]
        %v5742 = vld [vmem:[%s1904 + $0x99] sm:$0xff]
        %v5743 = vld [vmem:[%s1904 + $0xa9] sm:$0xff]
        %v5744 = vld [vmem:[%s1904 + $0xb1] sm:$0xff]
        %v5745 = vmul.f32 %v5729, %v5081
        %v5746 = vmul.f32 %v5730, %v5081
        %v5747 = vmul.f32 %v5731, %v5081
        %v5748 = vmul.f32 %v5732, %v5081
        %v5749 = vmul.f32 %v5733, %v5081
        %v5750 = vmul.f32 %v5734, %v5081
        %v5751 = vmul.f32 %v5735, %v5081
        %v5752 = vmul.f32 %v5736, %v5081
        %v5753 = vmul.f32 %v5737, %v5081
        %v5754 = vmul.f32 %v5738, %v5081
        %v5755 = vmul.f32 %v5739, %v5081
        %v5756 = vmul.f32 %v5740, %v5081
        %v5757 = vmul.f32 %v5741, %v5081
        %v5758 = vmul.f32 %v5742, %v5081
        %v5759 = vmul.f32 %v5743, %v5081
        %v5760 = vmul.f32 %v5744, %v5081
        %v5761 = vadd.f32 %v5713, %v5745
        %v5762 = vadd.f32 %v5714, %v5746
        %v5763 = vadd.f32 %v5715, %v5747
        %v5764 = vadd.f32 %v5716, %v5748
        %v5765 = vadd.f32 %v5717, %v5749
        %v5766 = vadd.f32 %v5718, %v5750
        %v5767 = vadd.f32 %v5719, %v5751
        %v5768 = vadd.f32 %v5720, %v5752
        %v5769 = vadd.f32 %v5721, %v5753
        %v5770 = vadd.f32 %v5722, %v5754
        %v5771 = vadd.f32 %v5723, %v5755
        %v5772 = vadd.f32 %v5724, %v5756
        %v5773 = vadd.f32 %v5725, %v5757
        %v5774 = vadd.f32 %v5726, %v5758
        %v5775 = vadd.f32 %v5727, %v5759
        %v5776 = vadd.f32 %v5728, %v5760
        %v5777 = vld [vmem:[%s1904 + $0x2] sm:$0xff]
        %v5778 = vld [vmem:[%s1904 + $0xa] sm:$0xff]
        %v5779 = vld [vmem:[%s1904 + $0x1a] sm:$0xff]
        %v5780 = vld [vmem:[%s1904 + $0x22] sm:$0xff]
        %v5781 = vld [vmem:[%s1904 + $0x32] sm:$0xff]
        %v5782 = vld [vmem:[%s1904 + $0x3a] sm:$0xff]
        %v5783 = vld [vmem:[%s1904 + $0x4a] sm:$0xff]
        %v5784 = vld [vmem:[%s1904 + $0x52] sm:$0xff]
        %v5785 = vld [vmem:[%s1904 + $0x62] sm:$0xff]
        %v5786 = vld [vmem:[%s1904 + $0x6a] sm:$0xff]
        %v5787 = vld [vmem:[%s1904 + $0x7a] sm:$0xff]
        %v5788 = vld [vmem:[%s1904 + $0x82] sm:$0xff]
        %v5789 = vld [vmem:[%s1904 + $0x92] sm:$0xff]
        %v5790 = vld [vmem:[%s1904 + $0x9a] sm:$0xff]
        %v5791 = vld [vmem:[%s1904 + $0xaa] sm:$0xff]
        %v5792 = vld [vmem:[%s1904 + $0xb2] sm:$0xff]
        %v5793 = vmul.f32 %v5777, %v5133
        %v5794 = vmul.f32 %v5778, %v5133
        %v5795 = vmul.f32 %v5779, %v5133
        %v5796 = vmul.f32 %v5780, %v5133
        %v5797 = vmul.f32 %v5781, %v5133
        %v5798 = vmul.f32 %v5782, %v5133
        %v5799 = vmul.f32 %v5783, %v5133
        %v5800 = vmul.f32 %v5784, %v5133
        %v5801 = vmul.f32 %v5785, %v5133
        %v5802 = vmul.f32 %v5786, %v5133
        %v5803 = vmul.f32 %v5787, %v5133
        %v5804 = vmul.f32 %v5788, %v5133
        %v5805 = vmul.f32 %v5789, %v5133
        %v5806 = vmul.f32 %v5790, %v5133
        %v5807 = vmul.f32 %v5791, %v5133
        %v5808 = vmul.f32 %v5792, %v5133
        %v5809 = vadd.f32 %v5761, %v5793
        %v5810 = vadd.f32 %v5762, %v5794
        %v5811 = vadd.f32 %v5763, %v5795
        %v5812 = vadd.f32 %v5764, %v5796
        %v5813 = vadd.f32 %v5765, %v5797
        %v5814 = vadd.f32 %v5766, %v5798
        %v5815 = vadd.f32 %v5767, %v5799
        %v5816 = vadd.f32 %v5768, %v5800
        %v5817 = vadd.f32 %v5769, %v5801
        %v5818 = vadd.f32 %v5770, %v5802
        %v5819 = vadd.f32 %v5771, %v5803
        %v5820 = vadd.f32 %v5772, %v5804
        %v5821 = vadd.f32 %v5773, %v5805
        %v5822 = vadd.f32 %v5774, %v5806
        %v5823 = vadd.f32 %v5775, %v5807
        %v5824 = vadd.f32 %v5776, %v5808
        %v5825 = vld [vmem:[%s2968] sm:$0xff]
        %v5826 = vld [vmem:[%s2968 + $0x8] sm:$0xff]
        %v5827 = vld [vmem:[%s2968 + $0x18] sm:$0xff]
        %v5828 = vld [vmem:[%s2968 + $0x20] sm:$0xff]
        %v5829 = vld [vmem:[%s2968 + $0x30] sm:$0xff]
        %v5830 = vld [vmem:[%s2968 + $0x38] sm:$0xff]
        %v5831 = vld [vmem:[%s2968 + $0x48] sm:$0xff]
        %v5832 = vld [vmem:[%s2968 + $0x50] sm:$0xff]
        %v5833 = vld [vmem:[%s2968 + $0x60] sm:$0xff]
        %v5834 = vld [vmem:[%s2968 + $0x68] sm:$0xff]
        %v5835 = vld [vmem:[%s2968 + $0x78] sm:$0xff]
        %v5836 = vld [vmem:[%s2968 + $0x80] sm:$0xff]
        %v5837 = vld [vmem:[%s2968 + $0x90] sm:$0xff]
        %v5838 = vld [vmem:[%s2968 + $0x98] sm:$0xff]
        %v5839 = vld [vmem:[%s2968 + $0xa8] sm:$0xff]
        %v5840 = vld [vmem:[%s2968 + $0xb0] sm:$0xff]
        %v5841 = vmul.f32 %v5825, %v5185
        %v5842 = vmul.f32 %v5826, %v5185
        %v5843 = vmul.f32 %v5827, %v5185
        %v5844 = vmul.f32 %v5828, %v5185
        %v5845 = vmul.f32 %v5829, %v5185
        %v5846 = vmul.f32 %v5830, %v5185
        %v5847 = vmul.f32 %v5831, %v5185
        %v5848 = vmul.f32 %v5832, %v5185
        %v5849 = vmul.f32 %v5833, %v5185
        %v5850 = vmul.f32 %v5834, %v5185
        %v5851 = vmul.f32 %v5835, %v5185
        %v5852 = vmul.f32 %v5836, %v5185
        %v5853 = vmul.f32 %v5837, %v5185
        %v5854 = vmul.f32 %v5838, %v5185
        %v5855 = vmul.f32 %v5839, %v5185
        %v5856 = vmul.f32 %v5840, %v5185
        %v5857 = vadd.f32 %v5809, %v5841
        %v5858 = vadd.f32 %v5810, %v5842
        %v5859 = vadd.f32 %v5811, %v5843
        %v5860 = vadd.f32 %v5812, %v5844
        %v5861 = vadd.f32 %v5813, %v5845
        %v5862 = vadd.f32 %v5814, %v5846
        %v5863 = vadd.f32 %v5815, %v5847
        %v5864 = vadd.f32 %v5816, %v5848
        %v5865 = vadd.f32 %v5817, %v5849
        %v5866 = vadd.f32 %v5818, %v5850
        %v5867 = vadd.f32 %v5819, %v5851
        %v5868 = vadd.f32 %v5820, %v5852
        %v5869 = vadd.f32 %v5821, %v5853
        %v5870 = vadd.f32 %v5822, %v5854
        %v5871 = vadd.f32 %v5823, %v5855
        %v5872 = vadd.f32 %v5824, %v5856
        %v5873 = vld [vmem:[%s2968 + $0x1] sm:$0xff]
        %v5874 = vld [vmem:[%s2968 + $0x9] sm:$0xff]
        %v5875 = vld [vmem:[%s2968 + $0x19] sm:$0xff]
        %v5876 = vld [vmem:[%s2968 + $0x21] sm:$0xff]
        %v5877 = vld [vmem:[%s2968 + $0x31] sm:$0xff]
        %v5878 = vld [vmem:[%s2968 + $0x39] sm:$0xff]
        %v5879 = vld [vmem:[%s2968 + $0x49] sm:$0xff]
        %v5880 = vld [vmem:[%s2968 + $0x51] sm:$0xff]
        %v5881 = vld [vmem:[%s2968 + $0x61] sm:$0xff]
        %v5882 = vld [vmem:[%s2968 + $0x69] sm:$0xff]
        %v5883 = vld [vmem:[%s2968 + $0x79] sm:$0xff]
        %v5884 = vld [vmem:[%s2968 + $0x81] sm:$0xff]
        %v5885 = vld [vmem:[%s2968 + $0x91] sm:$0xff]
        %v5886 = vld [vmem:[%s2968 + $0x99] sm:$0xff]
        %v5887 = vld [vmem:[%s2968 + $0xa9] sm:$0xff]
        %v5888 = vld [vmem:[%s2968 + $0xb1] sm:$0xff]
        %v5889 = vmul.f32 %v5873, %v5237
        %v5890 = vmul.f32 %v5874, %v5237
        %v5891 = vmul.f32 %v5875, %v5237
        %v5892 = vmul.f32 %v5876, %v5237
        %v5893 = vmul.f32 %v5877, %v5237
        %v5894 = vmul.f32 %v5878, %v5237
        %v5895 = vmul.f32 %v5879, %v5237
        %v5896 = vmul.f32 %v5880, %v5237
        %v5897 = vmul.f32 %v5881, %v5237
        %v5898 = vmul.f32 %v5882, %v5237
        %v5899 = vmul.f32 %v5883, %v5237
        %v5900 = vmul.f32 %v5884, %v5237
        %v5901 = vmul.f32 %v5885, %v5237
        %v5902 = vmul.f32 %v5886, %v5237
        %v5903 = vmul.f32 %v5887, %v5237
        %v5904 = vmul.f32 %v5888, %v5237
        %v5905 = vadd.f32 %v5857, %v5889
        %v5906 = vadd.f32 %v5858, %v5890
        %v5907 = vadd.f32 %v5859, %v5891
        %v5908 = vadd.f32 %v5860, %v5892
        %v5909 = vadd.f32 %v5861, %v5893
        %v5910 = vadd.f32 %v5862, %v5894
        %v5911 = vadd.f32 %v5863, %v5895
        %v5912 = vadd.f32 %v5864, %v5896
        %v5913 = vadd.f32 %v5865, %v5897
        %v5914 = vadd.f32 %v5866, %v5898
        %v5915 = vadd.f32 %v5867, %v5899
        %v5916 = vadd.f32 %v5868, %v5900
        %v5917 = vadd.f32 %v5869, %v5901
        %v5918 = vadd.f32 %v5870, %v5902
        %v5919 = vadd.f32 %v5871, %v5903
        %v5920 = vadd.f32 %v5872, %v5904
        %v5921 = vld [vmem:[%s2968 + $0x2] sm:$0xff]
        %v5922 = vld [vmem:[%s2968 + $0xa] sm:$0xff]
        %v5923 = vld [vmem:[%s2968 + $0x1a] sm:$0xff]
        %v5924 = vld [vmem:[%s2968 + $0x22] sm:$0xff]
        %v5925 = vld [vmem:[%s2968 + $0x32] sm:$0xff]
        %v5926 = vld [vmem:[%s2968 + $0x3a] sm:$0xff]
        %v5927 = vld [vmem:[%s2968 + $0x4a] sm:$0xff]
        %v5928 = vld [vmem:[%s2968 + $0x52] sm:$0xff]
        %v5929 = vld [vmem:[%s2968 + $0x62] sm:$0xff]
        %v5930 = vld [vmem:[%s2968 + $0x6a] sm:$0xff]
        %v5931 = vld [vmem:[%s2968 + $0x7a] sm:$0xff]
        %v5932 = vld [vmem:[%s2968 + $0x82] sm:$0xff]
        %v5933 = vld [vmem:[%s2968 + $0x92] sm:$0xff]
        %v5934 = vld [vmem:[%s2968 + $0x9a] sm:$0xff]
        %v5935 = vld [vmem:[%s2968 + $0xaa] sm:$0xff]
        %v5936 = vld [vmem:[%s2968 + $0xb2] sm:$0xff]
        %v5937 = vmul.f32 %v5921, %v5289
        %v5938 = vmul.f32 %v5922, %v5289
        %v5939 = vmul.f32 %v5923, %v5289
        %v5940 = vmul.f32 %v5924, %v5289
        %v5941 = vmul.f32 %v5925, %v5289
        %v5942 = vmul.f32 %v5926, %v5289
        %v5943 = vmul.f32 %v5927, %v5289
        %v5944 = vmul.f32 %v5928, %v5289
        %v5945 = vmul.f32 %v5929, %v5289
        %v5946 = vmul.f32 %v5930, %v5289
        %v5947 = vmul.f32 %v5931, %v5289
        %v5948 = vmul.f32 %v5932, %v5289
        %v5949 = vmul.f32 %v5933, %v5289
        %v5950 = vmul.f32 %v5934, %v5289
        %v5951 = vmul.f32 %v5935, %v5289
        %v5952 = vmul.f32 %v5936, %v5289
        %v5953 = vadd.f32 %v5905, %v5937
        %v5954 = vadd.f32 %v5906, %v5938
        %v5955 = vadd.f32 %v5907, %v5939
        %v5956 = vadd.f32 %v5908, %v5940
        %v5957 = vadd.f32 %v5909, %v5941
        %v5958 = vadd.f32 %v5910, %v5942
        %v5959 = vadd.f32 %v5911, %v5943
        %v5960 = vadd.f32 %v5912, %v5944
        %v5961 = vadd.f32 %v5913, %v5945
        %v5962 = vadd.f32 %v5914, %v5946
        %v5963 = vadd.f32 %v5915, %v5947
        %v5964 = vadd.f32 %v5916, %v5948
        %v5965 = vadd.f32 %v5917, %v5949
        %v5966 = vadd.f32 %v5918, %v5950
        %v5967 = vadd.f32 %v5919, %v5951
        %v5968 = vadd.f32 %v5920, %v5952
        %v5970 = vsel %vm285, %v5953, 0
        %v5973 = vsel %vm285, %v5954, 0
        %v5976 = vsel %vm285, %v5955, 0
        %v5979 = vsel %vm285, %v5956, 0
        %v5982 = vsel %vm285, %v5957, 0
        %v5985 = vsel %vm285, %v5958, 0
        %v5988 = vsel %vm285, %v5959, 0
        %v5991 = vsel %vm285, %v5960, 0
        %v5994 = vsel %vm285, %v5961, 0
        %v5997 = vsel %vm285, %v5962, 0
        %v6000 = vsel %vm285, %v5963, 0
        %v6003 = vsel %vm285, %v5964, 0
        %v6006 = vsel %vm285, %v5965, 0
        %v6009 = vsel %vm285, %v5966, 0
        %v6012 = vsel %vm285, %v5967, 0
        %v6015 = vsel %vm285, %v5968, 0
        %6017 = vmatprep.subr.mxu0 0.0
        %6018 = vmatpush1.msra.mxu0 %v4848
        %6019 = vmatprep.subr.mxu0 0.0
        %6020 = vmatpush1.msra.mxu0 %v4849
        %6021 = vmatprep.subr.mxu0 0.0
        %6022 = vmatpush1.msra.mxu0 %v4850
        %6023 = vmatprep.subr.mxu0 0.0
        %6024 = vmatpush1.msra.mxu0 %v4851
        %6025 = vmatprep.subr.mxu0 0.0
        %6026 = vmatpush1.msra.mxu0 0.0
        %6027 = vmatprep.subr.mxu0 0.0
        %6028 = vmatpush1.msra.mxu0 0.0
        %6029 = vmatprep.subr.mxu0 0.0
        %6030 = vmatpush1.msra.mxu0 0.0
        %6031 = vmatprep.subr.mxu0 0.0
        %6032 = vmatpush1.msra.mxu0 0.0
        %6033 = vmatprep.subr.mxu0 0.0
        %6034 = vmatpush1.msra.mxu0 0.0
        %6035 = vmatprep.subr.mxu0 0.0
        %6036 = vmatpush1.msra.mxu0 0.0
        %6037 = vmatprep.subr.mxu0 0.0
        %6038 = vmatpush1.msra.mxu0 0.0
        %6039 = vmatprep.subr.mxu0 0.0
        %6040 = vmatpush1.msra.mxu0 0.0
        %6041 = vmatprep.subr.mxu0 0.0
        %6042 = vmatpush1.msra.mxu0 0.0
        %6043 = vmatprep.subr.mxu0 0.0
        %6044 = vmatpush1.msra.mxu0 0.0
        %6045 = vmatprep.subr.mxu0 0.0
        %6046 = vmatpush1.msra.mxu0 0.0
        %6047 = vmatprep.subr.mxu0 0.0
        %6048 = vmatpush1.msra.mxu0 0.0
        %6049 = vmatprep.subr.mxu0 0.0
        %6050 = vmatpush1.msra.mxu0 0.0
        %6051 = vmatprep.subr.mxu0 0.0
        %6052 = vmatpush1.msra.mxu0 0.0
        %6053 = vmatprep.subr.mxu0 0.0
        %6054 = vmatpush1.msra.mxu0 0.0
        %6055 = vmatprep.subr.mxu0 0.0
        %6056 = vmatpush1.msra.mxu0 0.0
        %6057 = vmatprep.subr.mxu0 0.0
        %6058 = vmatpush1.msra.mxu0 0.0
        %6059 = vmatprep.subr.mxu0 0.0
        %6060 = vmatpush1.msra.mxu0 0.0
        %6061 = vmatprep.subr.mxu0 0.0
        %6062 = vmatpush1.msra.mxu0 0.0
        %6063 = vmatprep.subr.mxu0 0.0
        %6064 = vmatpush1.msra.mxu0 0.0
        %6065 = vmatprep.subr.mxu0 0.0
        %6066 = vmatpush1.msra.mxu0 0.0
        %6067 = vmatprep.subr.mxu0 0.0
        %6068 = vmatpush1.msra.mxu0 0.0
        %6069 = vmatprep.subr.mxu0 0.0
        %6070 = vmatpush1.msra.mxu0 0.0
        %6071 = vmatprep.subr.mxu0 0.0
        %6072 = vmatpush1.msra.mxu0 0.0
        %6073 = vmatprep.subr.mxu0 0.0
        %6074 = vmatpush1.msra.mxu0 0.0
        %6075 = vmatprep.subr.mxu0 0.0
        %6076 = vmatpush1.msra.mxu0 0.0
        %6077 = vmatprep.subr.mxu0 0.0
        %6078 = vmatpush1.msra.mxu0 0.0
        %6079 = vmatprep.subr.mxu0 0.0
        %6080 = vmatpush1.msra.mxu0 0.0
        %6081 = vmatprep.mubr.f32.mxu0 0.0
        %6082 = vmatmul.mubr.f32.gmra.mrb[0].mxu0 %v5970
        %v6083 = vpop.f32.mrb[0].mxu0
        %v6084 = vadd.f32 %v5326, %v6083
        %v6085 = vpop.f32.mrb[0].mxu0
        %6086 = vmatprep.mubr.f32.mxu0 0.0
        %6087 = vmatmul.mubr.f32.gmra.mrb[0].mxu0 %v5973
        %v6088 = vpop.f32.mrb[0].mxu0
        %v6089 = vadd.f32 %v5326, %v6088
        %v6090 = vpop.f32.mrb[0].mxu0
        %6091 = vmatprep.mubr.f32.mxu0 0.0
        %6092 = vmatmul.mubr.f32.gmra.mrb[0].mxu0 %v5976
        %v6093 = vpop.f32.mrb[0].mxu0
        %v6094 = vadd.f32 %v5326, %v6093
        %v6095 = vpop.f32.mrb[0].mxu0
        %6096 = vmatprep.mubr.f32.mxu0 0.0
        %6097 = vmatmul.mubr.f32.gmra.mrb[0].mxu0 %v5979
        %v6098 = vpop.f32.mrb[0].mxu0
        %v6099 = vadd.f32 %v5326, %v6098
        %v6100 = vpop.f32.mrb[0].mxu0
        %6101 = vmatprep.mubr.f32.mxu0 0.0
        %6102 = vmatmul.mubr.f32.gmra.mrb[0].mxu0 %v5982
        %v6103 = vpop.f32.mrb[0].mxu0
        %v6104 = vadd.f32 %v5326, %v6103
        %v6105 = vpop.f32.mrb[0].mxu0
        %6106 = vmatprep.mubr.f32.mxu0 0.0
        %6107 = vmatmul.mubr.f32.gmra.mrb[0].mxu0 %v5985
        %v6108 = vpop.f32.mrb[0].mxu0
        %v6109 = vadd.f32 %v5326, %v6108
        %v6110 = vpop.f32.mrb[0].mxu0
        %6111 = vmatprep.mubr.f32.mxu0 0.0
        %6112 = vmatmul.mubr.f32.gmra.mrb[0].mxu0 %v5988
        %v6113 = vpop.f32.mrb[0].mxu0
        %v6114 = vadd.f32 %v5326, %v6113
        %v6115 = vpop.f32.mrb[0].mxu0
        %6116 = vmatprep.mubr.f32.mxu0 0.0
        %6117 = vmatmul.mubr.f32.gmra.mrb[0].mxu0 %v5991
        %v6118 = vpop.f32.mrb[0].mxu0
        %v6119 = vadd.f32 %v5326, %v6118
        %v6120 = vpop.f32.mrb[0].mxu0
        %6121 = vmatprep.mubr.f32.mxu0 0.0
        %6122 = vmatmul.mubr.f32.gmra.mrb[0].mxu0 %v5994
        %v6123 = vpop.f32.mrb[0].mxu0
        %v6124 = vadd.f32 %v5326, %v6123
        %v6125 = vpop.f32.mrb[0].mxu0
        %6126 = vmatprep.mubr.f32.mxu0 0.0
        %6127 = vmatmul.mubr.f32.gmra.mrb[0].mxu0 %v5997
        %v6128 = vpop.f32.mrb[0].mxu0
        %v6129 = vadd.f32 %v5326, %v6128
        %v6130 = vpop.f32.mrb[0].mxu0
        %6131 = vmatprep.mubr.f32.mxu0 0.0
        %6132 = vmatmul.mubr.f32.gmra.mrb[0].mxu0 %v6000
        %v6133 = vpop.f32.mrb[0].mxu0
        %v6134 = vadd.f32 %v5326, %v6133
        %v6135 = vpop.f32.mrb[0].mxu0
        %6136 = vmatprep.mubr.f32.mxu0 0.0
        %6137 = vmatmul.mubr.f32.gmra.mrb[0].mxu0 %v6003
        %v6138 = vpop.f32.mrb[0].mxu0
        %v6139 = vadd.f32 %v5326, %v6138
        %v6140 = vpop.f32.mrb[0].mxu0
        %6141 = vmatprep.mubr.f32.mxu0 0.0
        %6142 = vmatmul.mubr.f32.gmra.mrb[0].mxu0 %v6006
        %v6143 = vpop.f32.mrb[0].mxu0
        %v6144 = vadd.f32 %v5326, %v6143
        %v6145 = vpop.f32.mrb[0].mxu0
        %6146 = vmatprep.mubr.f32.mxu0 0.0
        %6147 = vmatmul.mubr.f32.gmra.mrb[0].mxu0 %v6009
        %v6148 = vpop.f32.mrb[0].mxu0
        %v6149 = vadd.f32 %v5326, %v6148
        %v6150 = vpop.f32.mrb[0].mxu0
        %6151 = vmatprep.mubr.f32.mxu0 0.0
        %6152 = vmatmul.mubr.f32.gmra.mrb[0].mxu0 %v6012
        %v6153 = vpop.f32.mrb[0].mxu0
        %v6154 = vadd.f32 %v5326, %v6153
        %v6155 = vpop.f32.mrb[0].mxu0
        %6156 = vmatprep.mubr.f32.mxu0 0.0
        %6157 = vmatmul.mubr.f32.gmra.mrb[0].mxu0 %v6015
        %v6158 = vpop.f32.mrb[0].mxu0
        %v6159 = vadd.f32 %v5326, %v6158
        %v6160 = vpop.f32.mrb[0].mxu0
        %6161 = vdwg.mxu0
        %s6162 = scalar_lea.vmem %s284, 128 [#allocation9]
        %6163 = vst.msk [vmem:[%s6162] sm:$0xff] %vm285, %v6084
        %6164 = vst.msk [vmem:[%s6162 + $0x8] sm:$0xff] %vm285, %v6089
        %6165 = vst.msk [vmem:[%s6162 + $0x10] sm:$0xff] %vm285, %v6094
        %6166 = vst.msk [vmem:[%s6162 + $0x18] sm:$0xff] %vm285, %v6099
        %6167 = vst.msk [vmem:[%s6162 + $0x20] sm:$0xff] %vm285, %v6104
        %6168 = vst.msk [vmem:[%s6162 + $0x28] sm:$0xff] %vm285, %v6109
        %6169 = vst.msk [vmem:[%s6162 + $0x30] sm:$0xff] %vm285, %v6114
        %6170 = vst.msk [vmem:[%s6162 + $0x38] sm:$0xff] %vm285, %v6119
        %6171 = vst.msk [vmem:[%s6162 + $0x40] sm:$0xff] %vm285, %v6124
        %6172 = vst.msk [vmem:[%s6162 + $0x48] sm:$0xff] %vm285, %v6129
        %6173 = vst.msk [vmem:[%s6162 + $0x50] sm:$0xff] %vm285, %v6134
        %6174 = vst.msk [vmem:[%s6162 + $0x58] sm:$0xff] %vm285, %v6139
        %6175 = vst.msk [vmem:[%s6162 + $0x60] sm:$0xff] %vm285, %v6144
        %6176 = vst.msk [vmem:[%s6162 + $0x68] sm:$0xff] %vm285, %v6149
        %6177 = vst.msk [vmem:[%s6162 + $0x70] sm:$0xff] %vm285, %v6154
        %6178 = vst.msk [vmem:[%s6162 + $0x78] sm:$0xff] %vm285, %v6159
        %s6179 = sand.u32 %s163, 1
        %s6180 = scalar_lea.sflag [#allocation6], %s6179
        %s6181 = sand.u32 %s163, 1
        %s6182 = smul.addr %s6181, 256
        %s6183 = scalar_lea.vmem [#allocation9], %s6182
        // Predicated region
        $region53: #{tpu_custom_call.1} parent=43 // pred_check
          %p6184 = pneg %p173
        $region54: #{tpu_custom_call.1} parent=43 // pred_check_branch
          %6186 = sbr.rel (%p6184) target = $region56
        $region55: #{tpu_custom_call.1} parent=43 // pred_region
          %s6188 = ssub.s32 4096, 4096
          %6189 = vsyncadd %s6180, %s6188
          %s6190 = smul.addr %s24, 32
          %s6191 = smul.addr %s6190, 128
          %s6192 = scalar_lea.hbm %s6, %s6191
          %s6193 = sshll.u32 %s6183, 4
          %s6194 = int_to_ptr.vmem [resolvable:$true] %s6193
          %6199 = dma.vmem_to_hbm [thread:$0]  %s6194, 4096, %s6192, %s6180, 128, 128, 8
        $region56: #{tpu_custom_call.1} parent=43 // pred_fallthru
          _
      $region44: #{tpu_custom_call.1} parent=5 // pred_fallthru
        _
      %p6200 = scmp.le.s32.totalorder 2, %s19
      // Predicated region
      $region57: #{tpu_custom_call.1} parent=5 // pred_check
        %p6201 = pneg %p6200
      $region58: #{tpu_custom_call.1} parent=5 // pred_check_branch
        %6203 = sbr.rel (%p6201) target = $region60
      $region59: #{tpu_custom_call.1} parent=5 // pred_region
        %s6204 = ssub.s32 %s19, 2
        // Predicated region
        $region61: #{tpu_custom_call.1} parent=59 // pred_check
          %p6205 = pneg %p179
        $region62: #{tpu_custom_call.1} parent=59 // pred_check_branch
          %6207 = sbr.rel (%p6205) target = $region64
        $region63: #{tpu_custom_call.1} parent=59 // pred_region
          %s6208 = sand.u32 %s164, 1
          %s6209 = scalar_lea.sflag [#allocation6], %s6208
          %s6210 = sand.u32 %s164, 1
          %s6211 = smul.addr %s6210, 256
          %s6212 = scalar_lea.vmem [#allocation9], %s6211
          %6213 = dma.done %s6209, 4096
        $region64: #{tpu_custom_call.1} parent=59 // pred_fallthru
          _
      $region60: #{tpu_custom_call.1} parent=5 // pred_fallthru
        _
    $region6: #{tpu_custom_call.1} parent=1 // loop_footer
      %s23 = sadd.s32 1, %s19
    $region7: #{tpu_custom_call.1} parent=1 // loop_footer_branch
      %18 = sbr.rel target = $region3
    $region8: #{tpu_custom_call.1} parent=1 // loop_exit
      _
    %6214 = vsyncpa [#allocation5], 1
    %s6215 = scalar_lea.sflag [#allocation5], 1
    %6216 = vsyncpa %s6215, 1
    %6217 = vsyncpa [#allocation8], 1
    %6218 = vsyncpa [#allocation6], 1
    %s6219 = scalar_lea.sflag [#allocation6], 1
    %6220 = vsyncpa %s6219, 1

</llo_original>
